<compile_context>
chip_gen: v6e
topology: v6e:2x2x1
jax: 0.10.0
libtpu: 0.0.40
codegen_flags: <defaults>
</compile_context>

<pallas_src>
import functools

import jax
import jax.numpy as jnp
from jax.experimental import pallas as pl
from jax.experimental.pallas import tpu as pltpu


# ----------------------------------------------------------------------------
# Relative-position helpers (shared by the kernel wrapper and the reference).
# ----------------------------------------------------------------------------
def get_relative_positions(window_size):
    coords = jnp.stack(jnp.meshgrid(jnp.arange(window_size),
                                    jnp.arange(window_size), indexing='ij'))
    cf = coords.reshape(2, -1)
    rel = cf[:, :, None] - cf[:, None, :]
    rel = jnp.transpose(rel, (1, 2, 0)).astype(jnp.float32)
    return jnp.sign(rel) * jnp.log1p(jnp.abs(rel))


def _relative_position_bias(params, window_size, num_heads):
    n = window_size * window_size
    relpos = get_relative_positions(window_size).reshape(n * n, 2)
    hid = jax.nn.relu(relpos @ params['meta1_w'] + params['meta1_b'])
    bias = hid @ params['meta2_w'] + params['meta2_b']          # (N*N, H)
    bias = jnp.transpose(bias.reshape(n, n, num_heads), (2, 0, 1))
    return bias.astype(jnp.float32)                             # (H, N, N)


# ----------------------------------------------------------------------------
# Pallas kernel: dual-stream window attention, WB windows per grid step.
# x_ref block: (6*H, wb, N, hd), axis-0 layout [q_i | q_m | k | km | v | vm]
#              (each group holds H heads; stream order = [ivif, mfif]).
# bias_ref:    (H, N, N) f32, resident across the grid.
# o_ref block: (wb, N, 2*dim), lanes = [ivif h0..H-1 | mfif h0..H-1].
# ----------------------------------------------------------------------------
def _window_attn_kernel(x_ref, bias_ref, o_ref, *, num_heads, head_dim, scale):
    H, hd = num_heads, head_dim
    wb, n_tok, _ = o_ref.shape

    x = x_ref[...]                                   # (6H, wb, N, hd), bf16
    q = x[:2 * H]                                    # (2H, wb, N, hd)
    k = x[2 * H:4 * H]
    v = x[4 * H:]
    bias = bias_ref[...]                             # (H, N, N) f32

    # One batched matmul for both streams, all heads and all windows.
    b = 2 * H * wb
    qb = (q * scale).reshape(b, n_tok, hd)
    kb = k.reshape(b, n_tok, hd)
    vb = v.reshape(b, n_tok, hd)

    logits = jnp.einsum('bnd,bmd->bnm', qb, kb,
                        preferred_element_type=jnp.float32)
    logits = logits.reshape(2, H, wb, n_tok, n_tok) + bias[None, :, None]

    m = jnp.max(logits, axis=-1, keepdims=True)
    e = jnp.exp(logits - m)
    # Reciprocal on the EUP slot (effectively free) instead of a VALU divide.
    p = e * pl.reciprocal(jnp.sum(e, axis=-1, keepdims=True), approx=True)

    pb = p.reshape(b, n_tok, n_tok).astype(vb.dtype)
    out = jnp.einsum('bnm,bmd->bnd', pb, vb,
                     preferred_element_type=jnp.float32)
    out = out.reshape(2, H, wb, n_tok, hd)

    # Assemble heads + streams into lanes and store once (lane-dense store).
    chunks = [out[s, h] for s in range(2) for h in range(H)]
    o_ref[...] = jnp.concatenate(chunks, axis=-1).astype(o_ref.dtype)


# ----------------------------------------------------------------------------
# Block-size / VMEM policy
# ----------------------------------------------------------------------------
def _vmem_capacity_bytes():
    try:
        return int(pltpu.get_tpu_info().vmem_capacity_bytes)
    except Exception:
        return 64 * 1024 * 1024                       # conservative (v7x)


def _lane_pad(n):
    return ((n + 127) // 128) * 128


def _pick_window_block(num_windows, n_tokens, dim, num_heads,
                       in_itemsize, out_itemsize, head_dim):
    """Largest windows-per-step wb whose (lane-padded) per-step VMEM footprint
    fits a generation-aware budget, keeping >=4 grid steps (>=2 per v7x
    TensorCore) when the batch allows.  No divisor requirement: the wrapper
    pads the window count."""
    vmem_cap = _vmem_capacity_bytes()
    budget = min(vmem_cap // 2, 64 * 1024 * 1024)
    # Per-window footprint (lane-padded VMEM tiles):
    x_blk = 2 * 6 * num_heads * n_tokens * _lane_pad(head_dim) * in_itemsize
    out_blk = 2 * n_tokens * _lane_pad(2 * dim) * out_itemsize
    interm = 4 * 2 * num_heads * n_tokens * _lane_pad(n_tokens) * 4
    per_win = x_blk + out_blk + interm
    resident = 2 * num_heads * n_tokens * _lane_pad(n_tokens) * 4   # bias
    cap_budget = max(1, (budget - resident) // per_win)
    if num_windows >= 4:
        cap_steps = num_windows // 4
    elif num_windows >= 2:
        cap_steps = num_windows // 2
    else:
        cap_steps = 1
    wb = max(1, min(cap_budget, cap_steps, num_windows))
    footprint = resident + wb * per_win
    vmem_limit = int(min(vmem_cap * 9 // 10,
                         max(32 * 1024 * 1024, footprint + 8 * 1024 * 1024)))
    return wb, vmem_limit


# ----------------------------------------------------------------------------
# Wrapper
# ----------------------------------------------------------------------------
def window_attention_forward(params, qkv, qkv_mfif, *, num_heads, window_size,
                             shift_size, training_tag,
                             mxu_dtype=jnp.bfloat16):
    """WindowAttention.forward.  qkv/qkv_mfif: (B_, N, 3*dim)."""
    assert training_tag in (1, 2)
    B_, N, C3 = qkv.shape
    dim = C3 // 3
    assert dim % num_heads == 0
    assert N == window_size * window_size
    head_dim = dim // num_heads
    scale = head_dim ** (-0.5)

    # Bias meta-MLP in plain XLA (activation-independent, MXU-hostile).
    bias = _relative_position_bias(params, window_size, num_heads)  # (H,N,N)

    # Wrapper-side layout plumbing: pre-split per stream & head, stack into
    # one input so the kernel does zero lane slicing and one DMA per step.
    def split(arr):                   # (B_, N, 3*dim) -> (3, H, B_, N, hd)
        return jnp.transpose(arr.reshape(B_, N, 3, num_heads, head_dim),
                             (2, 3, 0, 1, 4))

    q, k, v = split(qkv)
    qm, km, vm = split(qkv_mfif)
    # trainingTag / shift_size statically select which Q feeds each branch.
    if training_tag == 1:
        q_i, q_m = q, (q if shift_size == 0 else qm)
    else:                                              # training_tag == 2
        q_i, q_m = (qm if shift_size == 0 else q), qm
    x = jnp.concatenate([q_i, q_m, k, km, v, vm], axis=0)   # (6H, B_, N, hd)
    x = x.astype(mxu_dtype)

    wb, vmem_limit = _pick_window_block(
        B_, N, dim, num_heads, x.dtype.itemsize, qkv.dtype.itemsize, head_dim)
    n_steps = pl.cdiv(B_, wb)
    B_pad = n_steps * wb
    if B_pad != B_:
        x = jnp.pad(x, ((0, 0), (0, B_pad - B_), (0, 0), (0, 0)))

    kernel = functools.partial(_window_attn_kernel, num_heads=num_heads,
                               head_dim=head_dim, scale=scale)

    cost = pl.CostEstimate(
        flops=8 * B_pad * num_heads * N * N * head_dim,       # QK^T + PV, 2 streams
        transcendentals=2 * B_pad * num_heads * N * N,        # exp
        bytes_accessed=(x.size * x.dtype.itemsize
                        + bias.size * 4
                        + B_pad * N * 2 * dim * qkv.dtype.itemsize))

    out = pl.pallas_call(
        kernel,
        out_shape=jax.ShapeDtypeStruct((B_pad, N, 2 * dim), qkv.dtype),
        grid_spec=pltpu.PrefetchScalarGridSpec(
            num_scalar_prefetch=0,
            grid=(n_steps,),
            in_specs=[
                pl.BlockSpec((6 * num_heads, wb, N, head_dim),
                             lambda i: (0, i, 0, 0)),
                pl.BlockSpec((num_heads, N, N), lambda i: (0, 0, 0)),
            ],
            out_specs=pl.BlockSpec((wb, N, 2 * dim), lambda i: (i, 0, 0)),
        ),
        compiler_params=pltpu.CompilerParams(
            dimension_semantics=("parallel",),
            vmem_limit_bytes=vmem_limit),
        cost_estimate=cost,
    )(x, bias)

    out = out[:B_]
    return out[..., :dim], out[..., dim:]


# ----------------------------------------------------------------------------
# Pure-JAX reference (mirrors the PyTorch forward exactly, f32 math).
# ----------------------------------------------------------------------------
def window_attention_reference(params, qkv, qkv_mfif, *, num_heads,
                               window_size, shift_size, training_tag):
    B_, N, C3 = qkv.shape
    dim = C3 // 3
    hd = dim // num_heads
    scale = hd ** (-0.5)

    def split(arr):                   # -> (3, B_, H, N, hd)
        return jnp.transpose(arr.reshape(B_, N, 3, num_heads, hd),
                             (2, 0, 3, 1, 4))

    q, k, v = split(qkv)
    qm, km, vm = split(qkv_mfif)
    q = q * scale
    qm = qm * scale
    if training_tag == 1:
        attn = q @ jnp.swapaxes(k, -2, -1)
        attn_m = (q if shift_size == 0 else qm) @ jnp.swapaxes(km, -2, -1)
    else:
        attn = (qm if shift_size == 0 else q) @ jnp.swapaxes(k, -2, -1)
        attn_m = qm @ jnp.swapaxes(km, -2, -1)
    bias = _relative_position_bias(params, window_size, num_heads)[None]
    attn = jax.nn.softmax(attn + bias, axis=-1)
    attn_m = jax.nn.softmax(attn_m + bias, axis=-1)
    x_ivif = jnp.swapaxes(attn @ v, 1, 2).reshape(B_, N, dim)
    x_mfif = jnp.swapaxes(attn_m @ vm, 1, 2).reshape(B_, N, dim)
    return x_ivif, x_mfif


# ----------------------------------------------------------------------------
# Deterministic parameter init (meta MLP only — the module's only parameters)
# ----------------------------------------------------------------------------
def init_params(key, num_heads, hidden=256):
    k1, k2 = jax.random.split(key, 2)
    return {
        'meta1_w': jax.random.normal(k1, (2, hidden), jnp.float32) * 0.02,
        'meta1_b': jnp.zeros((hidden,), jnp.float32),
        'meta2_w': jax.random.normal(k2, (hidden, num_heads), jnp.float32) * 0.02,
        'meta2_b': jnp.zeros((num_heads,), jnp.float32),
    }


# ----------------------------------------------------------------------------
if __name__ == "__main__":
    dim, num_heads = 16, 4
    window_size = 8
    N = window_size * window_size          # 64 tokens per window

    key = jax.random.PRNGKey(0)
    k_data, k_p = jax.random.split(key, 2)
    params = init_params(k_p, num_heads)

    # (num_windows, shift_size, trainingTag) — exercises all Q-selection
    # branches; the 9-window cases also exercise the window-count padding path.
    configs = [(8, 0, 1), (8, 0, 2), (9, 4, 1), (9, 4, 2)]

    for num_windows, shift_size, tag in configs:
        kq, kqm = jax.random.split(
            jax.random.fold_in(k_data, 100 * num_windows + shift_size), 2)
        qkv = jax.random.normal(kq, (num_windows, N, 3 * dim), jnp.float32)
        qkv_mfif = jax.random.normal(kqm, (num_windows, N, 3 * dim), jnp.float32)

        fwd = jax.jit(functools.partial(
            window_attention_forward, num_heads=num_heads,
            window_size=window_size, shift_size=shift_size, training_tag=tag))
        x_ivif, x_mfif = fwd(params, qkv, qkv_mfif)
        jax.block_until_ready((x_ivif, x_mfif))

        assert x_ivif.shape == (num_windows, N, dim)
        assert x_mfif.shape == (num_windows, N, dim)

        # Tolerance test gating the bf16 MXU operands + approx reciprocal.
        r_ivif, r_mfif = window_attention_reference(
            params, qkv, qkv_mfif, num_heads=num_heads,
            window_size=window_size, shift_size=shift_size, training_tag=tag)
        ok = (bool(jnp.allclose(x_ivif, r_ivif, rtol=5e-2, atol=5e-2)) and
              bool(jnp.allclose(x_mfif, r_mfif, rtol=5e-2, atol=5e-2)))
        err = max(float(jnp.max(jnp.abs(x_ivif - r_ivif))),
                  float(jnp.max(jnp.abs(x_mfif - r_mfif))))
        assert ok, f"tolerance exceeded (max abs err {err:.4f}) for cfg " \
                   f"(windows={num_windows}, shift={shift_size}, tag={tag})"

    print("KERNEL_OK")
</pallas_src>

<mosaic_0001>
module attributes {stable_mosaic.version = 11 : i64} {
  func.func @_window_attn_kernel(%arg0: i32, %arg1: memref<24x2x64x4xbf16, #tpu.memory_space<vmem>>, %arg2: memref<4x64x64xf32, #tpu.memory_space<vmem>>, %arg3: memref<2x64x32xf32, #tpu.memory_space<vmem>>) attributes {dimension_semantics = [#tpu.dimension_semantics<parallel>], iteration_bounds = array<i64: 4>, scalar_prefetch = 0 : i64, scratch_operands = 0 : i64, tpu.core_type = #tpu.core_type<tc>, window_params = [{transform_indices = @transform_0, window_bounds = array<i64: 24, 2, 64, 4>}, {pipeline_mode = #tpu.pipeline_mode<synchronous>, transform_indices = @transform_1, window_bounds = array<i64: 4, 64, 64>}, {transform_indices = @transform_2, window_bounds = array<i64: 2, 64, 32>}]} {
    %c0 = arith.constant 0 : index
    %c0_0 = arith.constant 0 : index
    %c0_1 = arith.constant 0 : index
    %c0_2 = arith.constant 0 : index
    %0 = vector.load %arg1[%c0, %c0_0, %c0_1, %c0_2] : memref<24x2x64x4xbf16, #tpu.memory_space<vmem>>, vector<24x2x64x4xbf16>
    %1 = vector.extract_strided_slice %0 {offsets = [0, 0, 0, 0], sizes = [8, 2, 64, 4], strides = [1, 1, 1, 1]} : vector<24x2x64x4xbf16> to vector<8x2x64x4xbf16>
    %2 = vector.extract_strided_slice %0 {offsets = [8, 0, 0, 0], sizes = [8, 2, 64, 4], strides = [1, 1, 1, 1]} : vector<24x2x64x4xbf16> to vector<8x2x64x4xbf16>
    %3 = vector.extract_strided_slice %0 {offsets = [16, 0, 0, 0], sizes = [8, 2, 64, 4], strides = [1, 1, 1, 1]} : vector<24x2x64x4xbf16> to vector<8x2x64x4xbf16>
    %c0_3 = arith.constant 0 : index
    %c0_4 = arith.constant 0 : index
    %c0_5 = arith.constant 0 : index
    %4 = vector.load %arg2[%c0_3, %c0_4, %c0_5] : memref<4x64x64xf32, #tpu.memory_space<vmem>>, vector<4x64x64xf32>
    %cst = arith.constant 5.000000e-01 : bf16
    %5 = vector.broadcast %cst : bf16 to vector<8x2x64x4xbf16>
    %6 = arith.mulf %1, %5 : vector<8x2x64x4xbf16>
    %7 = vector.shape_cast %6 : vector<8x2x64x4xbf16> to vector<16x64x4xbf16>
    %8 = vector.shape_cast %2 : vector<8x2x64x4xbf16> to vector<16x64x4xbf16>
    %9 = vector.shape_cast %3 : vector<8x2x64x4xbf16> to vector<16x64x4xbf16>
    "tpu.trace_start"() <{level = 10 : i32, message = "bnd,bmd->bnm"}> : () -> ()
    %cst_6 = arith.constant dense<0.000000e+00> : vector<16x64x64xf32>
    %10 = tpu.matmul %7, %8, %cst_6 {dimension_numbers = #tpu.dot_dimension_numbers<[2], [2], [1], [1], [0, 0, 0, 1, 1, 1], [0], [0]>} : vector<16x64x4xbf16>, vector<16x64x4xbf16>, vector<16x64x64xf32> -> vector<16x64x64xf32>
    "tpu.trace_stop"() : () -> ()
    %11 = vector.shape_cast %10 : vector<16x64x64xf32> to vector<2x4x2x64x64xf32>
    %12 = vector.shape_cast %4 : vector<4x64x64xf32> to vector<1x4x1x64x64xf32>
    %13 = vector.broadcast %12 : vector<1x4x1x64x64xf32> to vector<2x4x2x64x64xf32>
    %14 = arith.addf %11, %13 : vector<2x4x2x64x64xf32>
    %cst_7 = arith.constant dense<0xFF800000> : vector<2x4x2x64xf32>
    %15 = vector.multi_reduction <maximumf>, %14, %cst_7 [4] : vector<2x4x2x64x64xf32> to vector<2x4x2x64xf32>
    %16 = vector.shape_cast %15 : vector<2x4x2x64xf32> to vector<2x4x2x64x1xf32>
    %17 = vector.broadcast %16 : vector<2x4x2x64x1xf32> to vector<2x4x2x64x64xf32>
    %18 = arith.subf %14, %17 : vector<2x4x2x64x64xf32>
    %19 = math.exp %18 : vector<2x4x2x64x64xf32>
    %cst_8 = arith.constant dense<0.000000e+00> : vector<2x4x2x64xf32>
    %20 = vector.multi_reduction <add>, %19, %cst_8 [4] : vector<2x4x2x64x64xf32> to vector<2x4x2x64xf32>
    %21 = vector.shape_cast %20 : vector<2x4x2x64xf32> to vector<2x4x2x64x1xf32>
    %22 = tpu.reciprocal %21 {approx = true} : vector<2x4x2x64x1xf32> -> vector<2x4x2x64x1xf32>
    %23 = vector.broadcast %22 : vector<2x4x2x64x1xf32> to vector<2x4x2x64x64xf32>
    %24 = arith.mulf %19, %23 : vector<2x4x2x64x64xf32>
    %25 = vector.shape_cast %24 : vector<2x4x2x64x64xf32> to vector<16x64x64xf32>
    %26 = arith.truncf %25 : vector<16x64x64xf32> to vector<16x64x64xbf16>
    "tpu.trace_start"() <{level = 10 : i32, message = "bnm,bmd->bnd"}> : () -> ()
    %cst_9 = arith.constant dense<0.000000e+00> : vector<16x64x4xf32>
    %27 = tpu.matmul %26, %9, %cst_9 {dimension_numbers = #tpu.dot_dimension_numbers<[2], [1], [1], [2], [0, 0, 0, 1, 1, 2], [0], [0]>} : vector<16x64x64xbf16>, vector<16x64x4xbf16>, vector<16x64x4xf32> -> vector<16x64x4xf32>
    "tpu.trace_stop"() : () -> ()
    %28 = vector.shape_cast %27 : vector<16x64x4xf32> to vector<2x4x2x64x4xf32>
    %29 = vector.extract_strided_slice %28 {offsets = [0, 0, 0, 0, 0], sizes = [1, 1, 2, 64, 4], strides = [1, 1, 1, 1, 1]} : vector<2x4x2x64x4xf32> to vector<1x1x2x64x4xf32>
    %30 = vector.shape_cast %29 : vector<1x1x2x64x4xf32> to vector<2x64x4xf32>
    %31 = vector.extract_strided_slice %28 {offsets = [0, 1, 0, 0, 0], sizes = [1, 1, 2, 64, 4], strides = [1, 1, 1, 1, 1]} : vector<2x4x2x64x4xf32> to vector<1x1x2x64x4xf32>
    %32 = vector.shape_cast %31 : vector<1x1x2x64x4xf32> to vector<2x64x4xf32>
    %33 = vector.extract_strided_slice %28 {offsets = [0, 2, 0, 0, 0], sizes = [1, 1, 2, 64, 4], strides = [1, 1, 1, 1, 1]} : vector<2x4x2x64x4xf32> to vector<1x1x2x64x4xf32>
    %34 = vector.shape_cast %33 : vector<1x1x2x64x4xf32> to vector<2x64x4xf32>
    %35 = vector.extract_strided_slice %28 {offsets = [0, 3, 0, 0, 0], sizes = [1, 1, 2, 64, 4], strides = [1, 1, 1, 1, 1]} : vector<2x4x2x64x4xf32> to vector<1x1x2x64x4xf32>
    %36 = vector.shape_cast %35 : vector<1x1x2x64x4xf32> to vector<2x64x4xf32>
    %37 = vector.extract_strided_slice %28 {offsets = [1, 0, 0, 0, 0], sizes = [1, 1, 2, 64, 4], strides = [1, 1, 1, 1, 1]} : vector<2x4x2x64x4xf32> to vector<1x1x2x64x4xf32>
    %38 = vector.shape_cast %37 : vector<1x1x2x64x4xf32> to vector<2x64x4xf32>
    %39 = vector.extract_strided_slice %28 {offsets = [1, 1, 0, 0, 0], sizes = [1, 1, 2, 64, 4], strides = [1, 1, 1, 1, 1]} : vector<2x4x2x64x4xf32> to vector<1x1x2x64x4xf32>
    %40 = vector.shape_cast %39 : vector<1x1x2x64x4xf32> to vector<2x64x4xf32>
    %41 = vector.extract_strided_slice %28 {offsets = [1, 2, 0, 0, 0], sizes = [1, 1, 2, 64, 4], strides = [1, 1, 1, 1, 1]} : vector<2x4x2x64x4xf32> to vector<1x1x2x64x4xf32>
    %42 = vector.shape_cast %41 : vector<1x1x2x64x4xf32> to vector<2x64x4xf32>
    %43 = vector.extract_strided_slice %28 {offsets = [1, 3, 0, 0, 0], sizes = [1, 1, 2, 64, 4], strides = [1, 1, 1, 1, 1]} : vector<2x4x2x64x4xf32> to vector<1x1x2x64x4xf32>
    %44 = vector.shape_cast %43 : vector<1x1x2x64x4xf32> to vector<2x64x4xf32>
    %45 = tpu.concatenate %30, %32, %34, %36, %38, %40, %42, %44 in 2 : vector<2x64x4xf32>, vector<2x64x4xf32>, vector<2x64x4xf32>, vector<2x64x4xf32>, vector<2x64x4xf32>, vector<2x64x4xf32>, vector<2x64x4xf32>, vector<2x64x4xf32> -> vector<2x64x32xf32>
    %c0_10 = arith.constant 0 : index
    %c0_11 = arith.constant 0 : index
    %c0_12 = arith.constant 0 : index
    %46 = vector.load %arg3[%c0_10, %c0_11, %c0_12] : memref<2x64x32xf32, #tpu.memory_space<vmem>>, vector<2x64x32xf32>
    tpu.vector_store %arg3[%c0_10, %c0_11, %c0_12], %45 {strides = array<i32>} : memref<2x64x32xf32, #tpu.memory_space<vmem>>, vector<2x64x32xf32>,
    return
  }
  func.func @transform_0(%arg0: i32) -> (i32, i32, i32, i32) {
    %c0_i32 = arith.constant 0 : i32
    %c0_i32_0 = arith.constant 0 : i32
    %c0_i32_1 = arith.constant 0 : i32
    %c0_i32_2 = arith.constant 0 : i32
    return %c0_i32, %arg0, %c0_i32_0, %c0_i32_1 : i32, i32, i32, i32
  }
  func.func @transform_1(%arg0: i32) -> (i32, i32, i32) {
    %c0_i32 = arith.constant 0 : i32
    %c0_i32_0 = arith.constant 0 : i32
    %c0_i32_1 = arith.constant 0 : i32
    %c0_i32_2 = arith.constant 0 : i32
    return %c0_i32, %c0_i32_0, %c0_i32_1 : i32, i32, i32
  }
  func.func @transform_2(%arg0: i32) -> (i32, i32, i32) {
    %c0_i32 = arith.constant 0 : i32
    %c0_i32_0 = arith.constant 0 : i32
    %c0_i32_1 = arith.constant 0 : i32
    return %arg0, %c0_i32, %c0_i32_0 : i32, i32, i32
  }
}

</mosaic_0001>

<llo_original>
// kernel: sub.8
$region0: #{sub.8}
  %s0 = inlined_call_operand.vmem [shape: s32[2,8,8], index: 0, kind: input, shape index: {}]
  %s1 = inlined_call_operand.vmem [shape: s32[2,64], index: 1, kind: output, shape index: {}]
  $region1: #{sub.8} parent=0
    #allocation0 [shape = 'u8[4096]{0}', space=vmem, size = 0x1000, scoped, tag = 'scoped mem for output reshape']
    %s2 = smov 3
    %v3 = vld [vmem:[%s0] ss:$8 sm:%s2]
    %vm4 = vcmask 64512
    %5 = vst.msk [vmem:[#allocation0] sm:$0x3] %vm4, %v3
    %s6 = scalar_lea.vmem %s0, 7
    %s7 = smov 3
    %v8 = vld [vmem:[%s6] ss:$8 sm:%s7]
    %9 = vrot.lane.b32.xlu0 %v8, 56
    %v10 = vpop.permute.xlu0 %9
    %vm11 = vcmask 523712
    %12 = vst.msk [vmem:[#allocation0] sm:$0x3] %vm11, %v10
    %s13 = scalar_lea.vmem %s0, 6
    %s14 = smov 3
    %v15 = vld [vmem:[%s13] ss:$8 sm:%s14]
    %16 = vrot.lane.b32.xlu0 %v15, 48
    %v17 = vpop.permute.xlu0 %16
    %vm18 = vcmask 458112
    %19 = vst.msk [vmem:[#allocation0] sm:$0x3] %vm18, %v17
    %s20 = scalar_lea.vmem %s0, 5
    %s21 = smov 3
    %v22 = vld [vmem:[%s20] ss:$8 sm:%s21]
    %23 = vrot.lane.b32.xlu0 %v22, 40
    %v24 = vpop.permute.xlu0 %23
    %vm25 = vcmask 392512
    %26 = vst.msk [vmem:[#allocation0] sm:$0x3] %vm25, %v24
    %s27 = scalar_lea.vmem %s0, 4
    %s28 = smov 3
    %v29 = vld [vmem:[%s27] ss:$8 sm:%s28]
    %30 = vrot.lane.b32.xlu0 %v29, 32
    %v31 = vpop.permute.xlu0 %30
    %vm32 = vcmask 326912
    %33 = vst.msk [vmem:[#allocation0] sm:$0x3] %vm32, %v31
    %s34 = scalar_lea.vmem %s0, 3
    %s35 = smov 3
    %v36 = vld [vmem:[%s34] ss:$8 sm:%s35]
    %37 = vrot.lane.b32.xlu0 %v36, 24
    %v38 = vpop.permute.xlu0 %37
    %vm39 = vcmask 261312
    %40 = vst.msk [vmem:[#allocation0] sm:$0x3] %vm39, %v38
    %s41 = scalar_lea.vmem %s0, 2
    %s42 = smov 3
    %v43 = vld [vmem:[%s41] ss:$8 sm:%s42]
    %44 = vrot.lane.b32.xlu0 %v43, 16
    %v45 = vpop.permute.xlu0 %44
    %vm46 = vcmask 195712
    %47 = vst.msk [vmem:[#allocation0] sm:$0x3] %vm46, %v45
    %s48 = scalar_lea.vmem %s0, 1
    %s49 = smov 3
    %v50 = vld [vmem:[%s48] ss:$8 sm:%s49]
    %51 = vrot.lane.b32.xlu0 %v50, 8
    %v52 = vpop.permute.xlu0 %51
    %vm53 = vcmask 130112
    %54 = vst.msk [vmem:[#allocation0] sm:$0x3] %vm53, %v52
    %s56 = sshll.u32 1, 2
    %s57 = ssub.s32 %s56, 1
    %v59 = vld [vmem:[#allocation0] sm:%s57]
    %s60 = sshll.u32 1, 2
    %s61 = ssub.s32 %s60, 1
    %62 = vst [vmem:[%s1] sm:%s61] %v59

// kernel: window_attention_forward.1
$region0: #{window_attention_forward.1}
  #allocation0 [shape = 'u32[]', space=smem, size = 0x4, offset = 0x4, fixed_abs, tag = 'smem constant byte address 0x4 - core index']
  #allocation1 [shape = 'u32[144,128]{1,0:T(1,128)}', space=vmem, size = 0x12000, scoped, tag = 'internal scratch']
  %s0 = inlined_call_operand.vmem [shape: bf16[24,8,64,4], index: 0, kind: input, shape index: {}]
  %s1 = inlined_call_operand.vmem [shape: f32[4,64,64], index: 1, kind: input, shape index: {}]
  %s2 = inlined_call_operand.vmem [shape: f32[8,64,32], index: 2, kind: output, shape index: {}]
  %s3 = sld [smem:[#allocation0]]
  $region82: #{window_attention_forward.1} parent=0
    _
  %s5 = ssub.s32 1, %s3
  %s6 = scalar_select 0, %s5, %s3
  $region1: #{window_attention_forward.1} parent=0
    #allocation2 [shape = 'u8[1572864]{0}', space=vmem, size = 0x180000, scoped, tag = 'input window, operand 0']
    loop: start=0, step=1, limit=6
    $region2: #{window_attention_forward.1} parent=1 // loop_pre_header
      _
    $region3: #{window_attention_forward.1} parent=1 // loop_header
      %s8 = sphi 0, %s12
      %p9 = scmp.ge.s32.totalorder %s8, 6
      %s18 = sphi 0, %s20
      %s21 = sphi 0, %s18
      %s22 = sphi 0, %s21
      %s38 = sphi 0, %s22
      %s42 = sphi 0, %s42
      %s44 = sphi 0, %s42
      %s45 = sphi 0, %s44
      %s59 = sphi 0, %s45
      %s65 = sphi 0, %s67
      %s68 = sphi 0, %s65
      %s69 = sphi 0, %s68
      %s85 = sphi 0, %s69
    $region4: #{window_attention_forward.1} parent=1 // loop_header_branch
      %11 = sbr.rel (%p9) target = $region8
    $region5: #{window_attention_forward.1} parent=1 // loop_body
      %s13 = ssub.s32 %s8, 1
      %s14 = ssub.s32 %s8, 2
      %s15 = sadd.s32 %s8, 1
      %s16 = ssub.s32 %s8, %s15
      %p17 = scmp.eq.s32.totalorder %s16, 0
      %s19 = sadd.s32 %s18, 1
      %s20 = scalar_select %p17, %s18, %s19
      %p23 = pneg %p17
      %p24 = scmp.eq.s32.totalorder %s8, 3
      %p25 = por %p23, %p24
      %p26 = scmp.ne.s32.totalorder %s18, %s21
      %p27 = scmp.eq.s32.totalorder %s8, 0
      %p28 = por %p26, %p27
      %p29 = scmp.ne.s32.totalorder %s18, %s21
      %p30 = scmp.eq.s32.totalorder %s13, 3
      %p31 = por %p29, %p30
      %p32 = scmp.ne.s32.totalorder %s21, %s22
      %p33 = scmp.eq.s32.totalorder %s13, 0
      %p34 = por %p32, %p33
      %p35 = scmp.ne.s32.totalorder %s21, %s22
      %p36 = scmp.eq.s32.totalorder %s14, 3
      %p37 = por %p35, %p36
      %p39 = scmp.ne.s32.totalorder %s22, %s38
      %p40 = scmp.eq.s32.totalorder %s14, 0
      %p41 = por %p39, %p40
      %s43 = sadd.s32 %s42, 1
      %p46 = scmp.eq.s32.totalorder %s8, 3
      %p47 = scmp.ne.s32.totalorder %s42, %s44
      %p48 = scmp.eq.s32.totalorder %s8, 0
      %p49 = por %p47, %p48
      %p50 = scmp.ne.s32.totalorder %s42, %s44
      %p51 = scmp.eq.s32.totalorder %s13, 3
      %p52 = por %p50, %p51
      %p53 = scmp.ne.s32.totalorder %s44, %s45
      %p54 = scmp.eq.s32.totalorder %s13, 0
      %p55 = por %p53, %p54
      %p56 = scmp.ne.s32.totalorder %s44, %s45
      %p57 = scmp.eq.s32.totalorder %s14, 3
      %p58 = por %p56, %p57
      %p60 = scmp.ne.s32.totalorder %s45, %s59
      %p61 = scmp.eq.s32.totalorder %s14, 0
      %p62 = por %p60, %p61
      %s63 = ssub.s32 %s8, %s15
      %p64 = scmp.eq.s32.totalorder %s63, 0
      %s66 = sadd.s32 %s65, 1
      %s67 = scalar_select %p64, %s65, %s66
      %p70 = pneg %p64
      %p71 = scmp.eq.s32.totalorder %s8, 3
      %p72 = por %p70, %p71
      %p73 = scmp.ne.s32.totalorder %s65, %s68
      %p74 = scmp.eq.s32.totalorder %s8, 0
      %p75 = por %p73, %p74
      %p76 = scmp.ne.s32.totalorder %s65, %s68
      %p77 = scmp.eq.s32.totalorder %s13, 3
      %p78 = por %p76, %p77
      %p79 = scmp.ne.s32.totalorder %s68, %s69
      %p80 = scmp.eq.s32.totalorder %s13, 0
      %p81 = por %p79, %p80
      %p82 = scmp.ne.s32.totalorder %s68, %s69
      %p83 = scmp.eq.s32.totalorder %s14, 3
      %p84 = por %p82, %p83
      %p86 = scmp.ne.s32.totalorder %s69, %s85
      %p87 = scmp.eq.s32.totalorder %s14, 0
      %p88 = por %p86, %p87
      %p89 = scmp.le.s32.totalorder 1, %s8
      %p90 = scmp.lt.s32.totalorder %s8, 5
      %p91 = pnand %p89, %p90
      %p92 = pneg %p91
      // Predicated region
      $region9: #{window_attention_forward.1} parent=5 // pred_check
        _
      $region10: #{window_attention_forward.1} parent=5 // pred_check_branch
        %94 = sbr.rel (%p91) target = $region12
      $region11: #{window_attention_forward.1} parent=5 // pred_region
        %s95 = ssub.s32 %s8, 1
        // Predicated region
        $region13: #{window_attention_forward.1} parent=11 // pred_check
          %p96 = pneg %p55
        $region14: #{window_attention_forward.1} parent=11 // pred_check_branch
          %98 = sbr.rel (%p96) target = $region16
        $region15: #{window_attention_forward.1} parent=11 // pred_region
          _
        $region16: #{window_attention_forward.1} parent=11 // pred_fallthru
          _
      $region12: #{window_attention_forward.1} parent=5 // pred_fallthru
        _
      %p99 = scmp.lt.s32.totalorder %s8, 4
      // Predicated region
      $region17: #{window_attention_forward.1} parent=5 // pred_check
        %p100 = pneg %p99
      $region18: #{window_attention_forward.1} parent=5 // pred_check_branch
        %102 = sbr.rel (%p100) target = $region20
      $region19: #{window_attention_forward.1} parent=5 // pred_region
        // Predicated region
        $region21: #{window_attention_forward.1} parent=19 // pred_check
          %p103 = pneg %p28
        $region22: #{window_attention_forward.1} parent=19 // pred_check_branch
          %105 = sbr.rel (%p103) target = $region24
        $region23: #{window_attention_forward.1} parent=19 // pred_region
          %s106 = sand.u32 %s18, 1
          %s107 = sand.u32 %s18, 1
          %s108 = smul.addr %s107, 1536
          %s109 = scalar_lea.vmem [#allocation2], %s108
          %s110 = smul.u32 2, %s8
          %s111 = smul.addr %s110, 8
          %s112 = smul.addr %s111, 4
          %s113 = scalar_lea.vmem %s0, %s112
          // Predicated region
          $region25: #{window_attention_forward.1} parent=23 // pred_check
            _
          $region26: #{window_attention_forward.1} parent=23 // pred_check_branch
            %115 = sbr.rel (0) target = $region28
          $region27: #{window_attention_forward.1} parent=23 // pred_region
            // Predicated region
            $region29: #{window_attention_forward.1} parent=27 // pred_check
              _
            $region30: #{window_attention_forward.1} parent=27 // pred_check_branch
              %117 = sbr.rel target = $region32
            $region31: #{window_attention_forward.1} parent=27 // pred_region
              // Predicated region
              $region44: #{window_attention_forward.1} parent=31 // pred_check
                _
              $region45: #{window_attention_forward.1} parent=31 // pred_check_branch
                %899 = sbr.rel (0) target = $region47
              $region46: #{window_attention_forward.1} parent=31 // pred_region
                loop: start=0, step=1, limit=1
                $region48: #{window_attention_forward.1} parent=46 // loop_pre_header
                  _
                $region49: #{window_attention_forward.1} parent=46 // loop_header
                  %s901 = sphi 0, %s905
                  %p902 = scmp.ge.s32.totalorder %s901, 1
                  %s906 = sphi %s113, %s113
                  %s907 = sphi %s109, %s109
                $region50: #{window_attention_forward.1} parent=46 // loop_header_branch
                  %904 = sbr.rel (%p902) target = $region54
                $region51: #{window_attention_forward.1} parent=46 // loop_body
                  _
                $region52: #{window_attention_forward.1} parent=46 // loop_footer
                  %s905 = sadd.s32 1, %s901
                $region53: #{window_attention_forward.1} parent=46 // loop_footer_branch
                  %900 = sbr.rel target = $region49
                $region54: #{window_attention_forward.1} parent=46 // loop_exit
                  _
                %s909 = ssub.s32 16, 1
                loop: start=0, step=1, limit=1
                $region55: #{window_attention_forward.1} parent=46 // loop_pre_header
                  _
                $region56: #{window_attention_forward.1} parent=46 // loop_header
                  %s911 = sphi 0, %s915
                  %p912 = scmp.ge.s32.totalorder %s911, 1
                  %s916 = sphi %s113, %s113
                  %s917 = sphi %s109, %s109
                $region57: #{window_attention_forward.1} parent=46 // loop_header_branch
                  %914 = sbr.rel (%p912) target = $region61
                $region58: #{window_attention_forward.1} parent=46 // loop_body
                  %v918 = vld [vmem:[%s916] sm:%s909]
                  %919 = vst [vmem:[%s917] sm:%s909] %v918
                  %v920 = vld [vmem:[%s916 + $0x4] sm:%s909]
                  %921 = vst [vmem:[%s917 + $0x4] sm:%s909] %v920
                  %v922 = vld [vmem:[%s916 + $0x8] sm:%s909]
                  %923 = vst [vmem:[%s917 + $0x8] sm:%s909] %v922
                  %v924 = vld [vmem:[%s916 + $0xc] sm:%s909]
                  %925 = vst [vmem:[%s917 + $0xc] sm:%s909] %v924
                  %v926 = vld [vmem:[%s916 + $0x10] sm:%s909]
                  %927 = vst [vmem:[%s917 + $0x10] sm:%s909] %v926
                  %v928 = vld [vmem:[%s916 + $0x14] sm:%s909]
                  %929 = vst [vmem:[%s917 + $0x14] sm:%s909] %v928
                  %v930 = vld [vmem:[%s916 + $0x18] sm:%s909]
                  %931 = vst [vmem:[%s917 + $0x18] sm:%s909] %v930
                  %v932 = vld [vmem:[%s916 + $0x1c] sm:%s909]
                  %933 = vst [vmem:[%s917 + $0x1c] sm:%s909] %v932
                  %v934 = vld [vmem:[%s916 + $0x20] sm:%s909]
                  %935 = vst [vmem:[%s917 + $0x20] sm:%s909] %v934
                  %v936 = vld [vmem:[%s916 + $0x24] sm:%s909]
                  %937 = vst [vmem:[%s917 + $0x24] sm:%s909] %v936
                  %v938 = vld [vmem:[%s916 + $0x28] sm:%s909]
                  %939 = vst [vmem:[%s917 + $0x28] sm:%s909] %v938
                  %v940 = vld [vmem:[%s916 + $0x2c] sm:%s909]
                  %941 = vst [vmem:[%s917 + $0x2c] sm:%s909] %v940
                  %v942 = vld [vmem:[%s916 + $0x30] sm:%s909]
                  %943 = vst [vmem:[%s917 + $0x30] sm:%s909] %v942
                  %v944 = vld [vmem:[%s916 + $0x34] sm:%s909]
                  %945 = vst [vmem:[%s917 + $0x34] sm:%s909] %v944
                  %v946 = vld [vmem:[%s916 + $0x38] sm:%s909]
                  %947 = vst [vmem:[%s917 + $0x38] sm:%s909] %v946
                  %v948 = vld [vmem:[%s916 + $0x3c] sm:%s909]
                  %949 = vst [vmem:[%s917 + $0x3c] sm:%s909] %v948
                  %v950 = vld [vmem:[%s916 + $0x100] sm:%s909]
                  %951 = vst [vmem:[%s917 + $0x40] sm:%s909] %v950
                  %v952 = vld [vmem:[%s916 + $0x104] sm:%s909]
                  %953 = vst [vmem:[%s917 + $0x44] sm:%s909] %v952
                  %v954 = vld [vmem:[%s916 + $0x108] sm:%s909]
                  %955 = vst [vmem:[%s917 + $0x48] sm:%s909] %v954
                  %v956 = vld [vmem:[%s916 + $0x10c] sm:%s909]
                  %957 = vst [vmem:[%s917 + $0x4c] sm:%s909] %v956
                  %v958 = vld [vmem:[%s916 + $0x110] sm:%s909]
                  %959 = vst [vmem:[%s917 + $0x50] sm:%s909] %v958
                  %v960 = vld [vmem:[%s916 + $0x114] sm:%s909]
                  %961 = vst [vmem:[%s917 + $0x54] sm:%s909] %v960
                  %v962 = vld [vmem:[%s916 + $0x118] sm:%s909]
                  %963 = vst [vmem:[%s917 + $0x58] sm:%s909] %v962
                  %v964 = vld [vmem:[%s916 + $0x11c] sm:%s909]
                  %965 = vst [vmem:[%s917 + $0x5c] sm:%s909] %v964
                  %v966 = vld [vmem:[%s916 + $0x120] sm:%s909]
                  %967 = vst [vmem:[%s917 + $0x60] sm:%s909] %v966
                  %v968 = vld [vmem:[%s916 + $0x124] sm:%s909]
                  %969 = vst [vmem:[%s917 + $0x64] sm:%s909] %v968
                  %v970 = vld [vmem:[%s916 + $0x128] sm:%s909]
                  %971 = vst [vmem:[%s917 + $0x68] sm:%s909] %v970
                  %v972 = vld [vmem:[%s916 + $0x12c] sm:%s909]
                  %973 = vst [vmem:[%s917 + $0x6c] sm:%s909] %v972
                  %v974 = vld [vmem:[%s916 + $0x130] sm:%s909]
                  %975 = vst [vmem:[%s917 + $0x70] sm:%s909] %v974
                  %v976 = vld [vmem:[%s916 + $0x134] sm:%s909]
                  %977 = vst [vmem:[%s917 + $0x74] sm:%s909] %v976
                  %v978 = vld [vmem:[%s916 + $0x138] sm:%s909]
                  %979 = vst [vmem:[%s917 + $0x78] sm:%s909] %v978
                  %v980 = vld [vmem:[%s916 + $0x13c] sm:%s909]
                  %981 = vst [vmem:[%s917 + $0x7c] sm:%s909] %v980
                  %v982 = vld [vmem:[%s916 + $0x200] sm:%s909]
                  %983 = vst [vmem:[%s917 + $0x80] sm:%s909] %v982
                  %v984 = vld [vmem:[%s916 + $0x204] sm:%s909]
                  %985 = vst [vmem:[%s917 + $0x84] sm:%s909] %v984
                  %v986 = vld [vmem:[%s916 + $0x208] sm:%s909]
                  %987 = vst [vmem:[%s917 + $0x88] sm:%s909] %v986
                  %v988 = vld [vmem:[%s916 + $0x20c] sm:%s909]
                  %989 = vst [vmem:[%s917 + $0x8c] sm:%s909] %v988
                  %v990 = vld [vmem:[%s916 + $0x210] sm:%s909]
                  %991 = vst [vmem:[%s917 + $0x90] sm:%s909] %v990
                  %v992 = vld [vmem:[%s916 + $0x214] sm:%s909]
                  %993 = vst [vmem:[%s917 + $0x94] sm:%s909] %v992
                  %v994 = vld [vmem:[%s916 + $0x218] sm:%s909]
                  %995 = vst [vmem:[%s917 + $0x98] sm:%s909] %v994
                  %v996 = vld [vmem:[%s916 + $0x21c] sm:%s909]
                  %997 = vst [vmem:[%s917 + $0x9c] sm:%s909] %v996
                  %v998 = vld [vmem:[%s916 + $0x220] sm:%s909]
                  %999 = vst [vmem:[%s917 + $0xa0] sm:%s909] %v998
                  %v1000 = vld [vmem:[%s916 + $0x224] sm:%s909]
                  %1001 = vst [vmem:[%s917 + $0xa4] sm:%s909] %v1000
                  %v1002 = vld [vmem:[%s916 + $0x228] sm:%s909]
                  %1003 = vst [vmem:[%s917 + $0xa8] sm:%s909] %v1002
                  %v1004 = vld [vmem:[%s916 + $0x22c] sm:%s909]
                  %1005 = vst [vmem:[%s917 + $0xac] sm:%s909] %v1004
                  %v1006 = vld [vmem:[%s916 + $0x230] sm:%s909]
                  %1007 = vst [vmem:[%s917 + $0xb0] sm:%s909] %v1006
                  %v1008 = vld [vmem:[%s916 + $0x234] sm:%s909]
                  %1009 = vst [vmem:[%s917 + $0xb4] sm:%s909] %v1008
                  %v1010 = vld [vmem:[%s916 + $0x238] sm:%s909]
                  %1011 = vst [vmem:[%s917 + $0xb8] sm:%s909] %v1010
                  %v1012 = vld [vmem:[%s916 + $0x23c] sm:%s909]
                  %1013 = vst [vmem:[%s917 + $0xbc] sm:%s909] %v1012
                  %v1014 = vld [vmem:[%s916 + $0x300] sm:%s909]
                  %1015 = vst [vmem:[%s917 + $0xc0] sm:%s909] %v1014
                  %v1016 = vld [vmem:[%s916 + $0x304] sm:%s909]
                  %1017 = vst [vmem:[%s917 + $0xc4] sm:%s909] %v1016
                  %v1018 = vld [vmem:[%s916 + $0x308] sm:%s909]
                  %1019 = vst [vmem:[%s917 + $0xc8] sm:%s909] %v1018
                  %v1020 = vld [vmem:[%s916 + $0x30c] sm:%s909]
                  %1021 = vst [vmem:[%s917 + $0xcc] sm:%s909] %v1020
                  %v1022 = vld [vmem:[%s916 + $0x310] sm:%s909]
                  %1023 = vst [vmem:[%s917 + $0xd0] sm:%s909] %v1022
                  %v1024 = vld [vmem:[%s916 + $0x314] sm:%s909]
                  %1025 = vst [vmem:[%s917 + $0xd4] sm:%s909] %v1024
                  %v1026 = vld [vmem:[%s916 + $0x318] sm:%s909]
                  %1027 = vst [vmem:[%s917 + $0xd8] sm:%s909] %v1026
                  %v1028 = vld [vmem:[%s916 + $0x31c] sm:%s909]
                  %1029 = vst [vmem:[%s917 + $0xdc] sm:%s909] %v1028
                  %v1030 = vld [vmem:[%s916 + $0x320] sm:%s909]
                  %1031 = vst [vmem:[%s917 + $0xe0] sm:%s909] %v1030
                  %v1032 = vld [vmem:[%s916 + $0x324] sm:%s909]
                  %1033 = vst [vmem:[%s917 + $0xe4] sm:%s909] %v1032
                  %v1034 = vld [vmem:[%s916 + $0x328] sm:%s909]
                  %1035 = vst [vmem:[%s917 + $0xe8] sm:%s909] %v1034
                  %v1036 = vld [vmem:[%s916 + $0x32c] sm:%s909]
                  %1037 = vst [vmem:[%s917 + $0xec] sm:%s909] %v1036
                  %v1038 = vld [vmem:[%s916 + $0x330] sm:%s909]
                  %1039 = vst [vmem:[%s917 + $0xf0] sm:%s909] %v1038
                  %v1040 = vld [vmem:[%s916 + $0x334] sm:%s909]
                  %1041 = vst [vmem:[%s917 + $0xf4] sm:%s909] %v1040
                  %v1042 = vld [vmem:[%s916 + $0x338] sm:%s909]
                  %1043 = vst [vmem:[%s917 + $0xf8] sm:%s909] %v1042
                  %v1044 = vld [vmem:[%s916 + $0x33c] sm:%s909]
                  %1045 = vst [vmem:[%s917 + $0xfc] sm:%s909] %v1044
                  %v1046 = vld [vmem:[%s916 + $0x400] sm:%s909]
                  %1047 = vst [vmem:[%s917 + $0x100] sm:%s909] %v1046
                  %v1048 = vld [vmem:[%s916 + $0x404] sm:%s909]
                  %1049 = vst [vmem:[%s917 + $0x104] sm:%s909] %v1048
                  %v1050 = vld [vmem:[%s916 + $0x408] sm:%s909]
                  %1051 = vst [vmem:[%s917 + $0x108] sm:%s909] %v1050
                  %v1052 = vld [vmem:[%s916 + $0x40c] sm:%s909]
                  %1053 = vst [vmem:[%s917 + $0x10c] sm:%s909] %v1052
                  %v1054 = vld [vmem:[%s916 + $0x410] sm:%s909]
                  %1055 = vst [vmem:[%s917 + $0x110] sm:%s909] %v1054
                  %v1056 = vld [vmem:[%s916 + $0x414] sm:%s909]
                  %1057 = vst [vmem:[%s917 + $0x114] sm:%s909] %v1056
                  %v1058 = vld [vmem:[%s916 + $0x418] sm:%s909]
                  %1059 = vst [vmem:[%s917 + $0x118] sm:%s909] %v1058
                  %v1060 = vld [vmem:[%s916 + $0x41c] sm:%s909]
                  %1061 = vst [vmem:[%s917 + $0x11c] sm:%s909] %v1060
                  %v1062 = vld [vmem:[%s916 + $0x420] sm:%s909]
                  %1063 = vst [vmem:[%s917 + $0x120] sm:%s909] %v1062
                  %v1064 = vld [vmem:[%s916 + $0x424] sm:%s909]
                  %1065 = vst [vmem:[%s917 + $0x124] sm:%s909] %v1064
                  %v1066 = vld [vmem:[%s916 + $0x428] sm:%s909]
                  %1067 = vst [vmem:[%s917 + $0x128] sm:%s909] %v1066
                  %v1068 = vld [vmem:[%s916 + $0x42c] sm:%s909]
                  %1069 = vst [vmem:[%s917 + $0x12c] sm:%s909] %v1068
                  %v1070 = vld [vmem:[%s916 + $0x430] sm:%s909]
                  %1071 = vst [vmem:[%s917 + $0x130] sm:%s909] %v1070
                  %v1072 = vld [vmem:[%s916 + $0x434] sm:%s909]
                  %1073 = vst [vmem:[%s917 + $0x134] sm:%s909] %v1072
                  %v1074 = vld [vmem:[%s916 + $0x438] sm:%s909]
                  %1075 = vst [vmem:[%s917 + $0x138] sm:%s909] %v1074
                  %v1076 = vld [vmem:[%s916 + $0x43c] sm:%s909]
                  %1077 = vst [vmem:[%s917 + $0x13c] sm:%s909] %v1076
                  %v1078 = vld [vmem:[%s916 + $0x500] sm:%s909]
                  %1079 = vst [vmem:[%s917 + $0x140] sm:%s909] %v1078
                  %v1080 = vld [vmem:[%s916 + $0x504] sm:%s909]
                  %1081 = vst [vmem:[%s917 + $0x144] sm:%s909] %v1080
                  %v1082 = vld [vmem:[%s916 + $0x508] sm:%s909]
                  %1083 = vst [vmem:[%s917 + $0x148] sm:%s909] %v1082
                  %v1084 = vld [vmem:[%s916 + $0x50c] sm:%s909]
                  %1085 = vst [vmem:[%s917 + $0x14c] sm:%s909] %v1084
                  %v1086 = vld [vmem:[%s916 + $0x510] sm:%s909]
                  %1087 = vst [vmem:[%s917 + $0x150] sm:%s909] %v1086
                  %v1088 = vld [vmem:[%s916 + $0x514] sm:%s909]
                  %1089 = vst [vmem:[%s917 + $0x154] sm:%s909] %v1088
                  %v1090 = vld [vmem:[%s916 + $0x518] sm:%s909]
                  %1091 = vst [vmem:[%s917 + $0x158] sm:%s909] %v1090
                  %v1092 = vld [vmem:[%s916 + $0x51c] sm:%s909]
                  %1093 = vst [vmem:[%s917 + $0x15c] sm:%s909] %v1092
                  %v1094 = vld [vmem:[%s916 + $0x520] sm:%s909]
                  %1095 = vst [vmem:[%s917 + $0x160] sm:%s909] %v1094
                  %v1096 = vld [vmem:[%s916 + $0x524] sm:%s909]
                  %1097 = vst [vmem:[%s917 + $0x164] sm:%s909] %v1096
                  %v1098 = vld [vmem:[%s916 + $0x528] sm:%s909]
                  %1099 = vst [vmem:[%s917 + $0x168] sm:%s909] %v1098
                  %v1100 = vld [vmem:[%s916 + $0x52c] sm:%s909]
                  %1101 = vst [vmem:[%s917 + $0x16c] sm:%s909] %v1100
                  %v1102 = vld [vmem:[%s916 + $0x530] sm:%s909]
                  %1103 = vst [vmem:[%s917 + $0x170] sm:%s909] %v1102
                  %v1104 = vld [vmem:[%s916 + $0x534] sm:%s909]
                  %1105 = vst [vmem:[%s917 + $0x174] sm:%s909] %v1104
                  %v1106 = vld [vmem:[%s916 + $0x538] sm:%s909]
                  %1107 = vst [vmem:[%s917 + $0x178] sm:%s909] %v1106
                  %v1108 = vld [vmem:[%s916 + $0x53c] sm:%s909]
                  %1109 = vst [vmem:[%s917 + $0x17c] sm:%s909] %v1108
                  %v1110 = vld [vmem:[%s916 + $0x600] sm:%s909]
                  %1111 = vst [vmem:[%s917 + $0x180] sm:%s909] %v1110
                  %v1112 = vld [vmem:[%s916 + $0x604] sm:%s909]
                  %1113 = vst [vmem:[%s917 + $0x184] sm:%s909] %v1112
                  %v1114 = vld [vmem:[%s916 + $0x608] sm:%s909]
                  %1115 = vst [vmem:[%s917 + $0x188] sm:%s909] %v1114
                  %v1116 = vld [vmem:[%s916 + $0x60c] sm:%s909]
                  %1117 = vst [vmem:[%s917 + $0x18c] sm:%s909] %v1116
                  %v1118 = vld [vmem:[%s916 + $0x610] sm:%s909]
                  %1119 = vst [vmem:[%s917 + $0x190] sm:%s909] %v1118
                  %v1120 = vld [vmem:[%s916 + $0x614] sm:%s909]
                  %1121 = vst [vmem:[%s917 + $0x194] sm:%s909] %v1120
                  %v1122 = vld [vmem:[%s916 + $0x618] sm:%s909]
                  %1123 = vst [vmem:[%s917 + $0x198] sm:%s909] %v1122
                  %v1124 = vld [vmem:[%s916 + $0x61c] sm:%s909]
                  %1125 = vst [vmem:[%s917 + $0x19c] sm:%s909] %v1124
                  %v1126 = vld [vmem:[%s916 + $0x620] sm:%s909]
                  %1127 = vst [vmem:[%s917 + $0x1a0] sm:%s909] %v1126
                  %v1128 = vld [vmem:[%s916 + $0x624] sm:%s909]
                  %1129 = vst [vmem:[%s917 + $0x1a4] sm:%s909] %v1128
                  %v1130 = vld [vmem:[%s916 + $0x628] sm:%s909]
                  %1131 = vst [vmem:[%s917 + $0x1a8] sm:%s909] %v1130
                  %v1132 = vld [vmem:[%s916 + $0x62c] sm:%s909]
                  %1133 = vst [vmem:[%s917 + $0x1ac] sm:%s909] %v1132
                  %v1134 = vld [vmem:[%s916 + $0x630] sm:%s909]
                  %1135 = vst [vmem:[%s917 + $0x1b0] sm:%s909] %v1134
                  %v1136 = vld [vmem:[%s916 + $0x634] sm:%s909]
                  %1137 = vst [vmem:[%s917 + $0x1b4] sm:%s909] %v1136
                  %v1138 = vld [vmem:[%s916 + $0x638] sm:%s909]
                  %1139 = vst [vmem:[%s917 + $0x1b8] sm:%s909] %v1138
                  %v1140 = vld [vmem:[%s916 + $0x63c] sm:%s909]
                  %1141 = vst [vmem:[%s917 + $0x1bc] sm:%s909] %v1140
                  %v1142 = vld [vmem:[%s916 + $0x700] sm:%s909]
                  %1143 = vst [vmem:[%s917 + $0x1c0] sm:%s909] %v1142
                  %v1144 = vld [vmem:[%s916 + $0x704] sm:%s909]
                  %1145 = vst [vmem:[%s917 + $0x1c4] sm:%s909] %v1144
                  %v1146 = vld [vmem:[%s916 + $0x708] sm:%s909]
                  %1147 = vst [vmem:[%s917 + $0x1c8] sm:%s909] %v1146
                  %v1148 = vld [vmem:[%s916 + $0x70c] sm:%s909]
                  %1149 = vst [vmem:[%s917 + $0x1cc] sm:%s909] %v1148
                  %v1150 = vld [vmem:[%s916 + $0x710] sm:%s909]
                  %1151 = vst [vmem:[%s917 + $0x1d0] sm:%s909] %v1150
                  %v1152 = vld [vmem:[%s916 + $0x714] sm:%s909]
                  %1153 = vst [vmem:[%s917 + $0x1d4] sm:%s909] %v1152
                  %v1154 = vld [vmem:[%s916 + $0x718] sm:%s909]
                  %1155 = vst [vmem:[%s917 + $0x1d8] sm:%s909] %v1154
                  %v1156 = vld [vmem:[%s916 + $0x71c] sm:%s909]
                  %1157 = vst [vmem:[%s917 + $0x1dc] sm:%s909] %v1156
                  %v1158 = vld [vmem:[%s916 + $0x720] sm:%s909]
                  %1159 = vst [vmem:[%s917 + $0x1e0] sm:%s909] %v1158
                  %v1160 = vld [vmem:[%s916 + $0x724] sm:%s909]
                  %1161 = vst [vmem:[%s917 + $0x1e4] sm:%s909] %v1160
                  %v1162 = vld [vmem:[%s916 + $0x728] sm:%s909]
                  %1163 = vst [vmem:[%s917 + $0x1e8] sm:%s909] %v1162
                  %v1164 = vld [vmem:[%s916 + $0x72c] sm:%s909]
                  %1165 = vst [vmem:[%s917 + $0x1ec] sm:%s909] %v1164
                  %v1166 = vld [vmem:[%s916 + $0x730] sm:%s909]
                  %1167 = vst [vmem:[%s917 + $0x1f0] sm:%s909] %v1166
                  %v1168 = vld [vmem:[%s916 + $0x734] sm:%s909]
                  %1169 = vst [vmem:[%s917 + $0x1f4] sm:%s909] %v1168
                  %v1170 = vld [vmem:[%s916 + $0x738] sm:%s909]
                  %1171 = vst [vmem:[%s917 + $0x1f8] sm:%s909] %v1170
                  %v1172 = vld [vmem:[%s916 + $0x73c] sm:%s909]
                  %1173 = vst [vmem:[%s917 + $0x1fc] sm:%s909] %v1172
                  %v1174 = vld [vmem:[%s916 + $0x800] sm:%s909]
                  %1175 = vst [vmem:[%s917 + $0x200] sm:%s909] %v1174
                  %v1176 = vld [vmem:[%s916 + $0x804] sm:%s909]
                  %1177 = vst [vmem:[%s917 + $0x204] sm:%s909] %v1176
                  %v1178 = vld [vmem:[%s916 + $0x808] sm:%s909]
                  %1179 = vst [vmem:[%s917 + $0x208] sm:%s909] %v1178
                  %v1180 = vld [vmem:[%s916 + $0x80c] sm:%s909]
                  %1181 = vst [vmem:[%s917 + $0x20c] sm:%s909] %v1180
                  %v1182 = vld [vmem:[%s916 + $0x810] sm:%s909]
                  %1183 = vst [vmem:[%s917 + $0x210] sm:%s909] %v1182
                  %v1184 = vld [vmem:[%s916 + $0x814] sm:%s909]
                  %1185 = vst [vmem:[%s917 + $0x214] sm:%s909] %v1184
                  %v1186 = vld [vmem:[%s916 + $0x818] sm:%s909]
                  %1187 = vst [vmem:[%s917 + $0x218] sm:%s909] %v1186
                  %v1188 = vld [vmem:[%s916 + $0x81c] sm:%s909]
                  %1189 = vst [vmem:[%s917 + $0x21c] sm:%s909] %v1188
                  %v1190 = vld [vmem:[%s916 + $0x820] sm:%s909]
                  %1191 = vst [vmem:[%s917 + $0x220] sm:%s909] %v1190
                  %v1192 = vld [vmem:[%s916 + $0x824] sm:%s909]
                  %1193 = vst [vmem:[%s917 + $0x224] sm:%s909] %v1192
                  %v1194 = vld [vmem:[%s916 + $0x828] sm:%s909]
                  %1195 = vst [vmem:[%s917 + $0x228] sm:%s909] %v1194
                  %v1196 = vld [vmem:[%s916 + $0x82c] sm:%s909]
                  %1197 = vst [vmem:[%s917 + $0x22c] sm:%s909] %v1196
                  %v1198 = vld [vmem:[%s916 + $0x830] sm:%s909]
                  %1199 = vst [vmem:[%s917 + $0x230] sm:%s909] %v1198
                  %v1200 = vld [vmem:[%s916 + $0x834] sm:%s909]
                  %1201 = vst [vmem:[%s917 + $0x234] sm:%s909] %v1200
                  %v1202 = vld [vmem:[%s916 + $0x838] sm:%s909]
                  %1203 = vst [vmem:[%s917 + $0x238] sm:%s909] %v1202
                  %v1204 = vld [vmem:[%s916 + $0x83c] sm:%s909]
                  %1205 = vst [vmem:[%s917 + $0x23c] sm:%s909] %v1204
                  %v1206 = vld [vmem:[%s916 + $0x900] sm:%s909]
                  %1207 = vst [vmem:[%s917 + $0x240] sm:%s909] %v1206
                  %v1208 = vld [vmem:[%s916 + $0x904] sm:%s909]
                  %1209 = vst [vmem:[%s917 + $0x244] sm:%s909] %v1208
                  %v1210 = vld [vmem:[%s916 + $0x908] sm:%s909]
                  %1211 = vst [vmem:[%s917 + $0x248] sm:%s909] %v1210
                  %v1212 = vld [vmem:[%s916 + $0x90c] sm:%s909]
                  %1213 = vst [vmem:[%s917 + $0x24c] sm:%s909] %v1212
                  %v1214 = vld [vmem:[%s916 + $0x910] sm:%s909]
                  %1215 = vst [vmem:[%s917 + $0x250] sm:%s909] %v1214
                  %v1216 = vld [vmem:[%s916 + $0x914] sm:%s909]
                  %1217 = vst [vmem:[%s917 + $0x254] sm:%s909] %v1216
                  %v1218 = vld [vmem:[%s916 + $0x918] sm:%s909]
                  %1219 = vst [vmem:[%s917 + $0x258] sm:%s909] %v1218
                  %v1220 = vld [vmem:[%s916 + $0x91c] sm:%s909]
                  %1221 = vst [vmem:[%s917 + $0x25c] sm:%s909] %v1220
                  %v1222 = vld [vmem:[%s916 + $0x920] sm:%s909]
                  %1223 = vst [vmem:[%s917 + $0x260] sm:%s909] %v1222
                  %v1224 = vld [vmem:[%s916 + $0x924] sm:%s909]
                  %1225 = vst [vmem:[%s917 + $0x264] sm:%s909] %v1224
                  %v1226 = vld [vmem:[%s916 + $0x928] sm:%s909]
                  %1227 = vst [vmem:[%s917 + $0x268] sm:%s909] %v1226
                  %v1228 = vld [vmem:[%s916 + $0x92c] sm:%s909]
                  %1229 = vst [vmem:[%s917 + $0x26c] sm:%s909] %v1228
                  %v1230 = vld [vmem:[%s916 + $0x930] sm:%s909]
                  %1231 = vst [vmem:[%s917 + $0x270] sm:%s909] %v1230
                  %v1232 = vld [vmem:[%s916 + $0x934] sm:%s909]
                  %1233 = vst [vmem:[%s917 + $0x274] sm:%s909] %v1232
                  %v1234 = vld [vmem:[%s916 + $0x938] sm:%s909]
                  %1235 = vst [vmem:[%s917 + $0x278] sm:%s909] %v1234
                  %v1236 = vld [vmem:[%s916 + $0x93c] sm:%s909]
                  %1237 = vst [vmem:[%s917 + $0x27c] sm:%s909] %v1236
                  %v1238 = vld [vmem:[%s916 + $0xa00] sm:%s909]
                  %1239 = vst [vmem:[%s917 + $0x280] sm:%s909] %v1238
                  %v1240 = vld [vmem:[%s916 + $0xa04] sm:%s909]
                  %1241 = vst [vmem:[%s917 + $0x284] sm:%s909] %v1240
                  %v1242 = vld [vmem:[%s916 + $0xa08] sm:%s909]
                  %1243 = vst [vmem:[%s917 + $0x288] sm:%s909] %v1242
                  %v1244 = vld [vmem:[%s916 + $0xa0c] sm:%s909]
                  %1245 = vst [vmem:[%s917 + $0x28c] sm:%s909] %v1244
                  %v1246 = vld [vmem:[%s916 + $0xa10] sm:%s909]
                  %1247 = vst [vmem:[%s917 + $0x290] sm:%s909] %v1246
                  %v1248 = vld [vmem:[%s916 + $0xa14] sm:%s909]
                  %1249 = vst [vmem:[%s917 + $0x294] sm:%s909] %v1248
                  %v1250 = vld [vmem:[%s916 + $0xa18] sm:%s909]
                  %1251 = vst [vmem:[%s917 + $0x298] sm:%s909] %v1250
                  %v1252 = vld [vmem:[%s916 + $0xa1c] sm:%s909]
                  %1253 = vst [vmem:[%s917 + $0x29c] sm:%s909] %v1252
                  %v1254 = vld [vmem:[%s916 + $0xa20] sm:%s909]
                  %1255 = vst [vmem:[%s917 + $0x2a0] sm:%s909] %v1254
                  %v1256 = vld [vmem:[%s916 + $0xa24] sm:%s909]
                  %1257 = vst [vmem:[%s917 + $0x2a4] sm:%s909] %v1256
                  %v1258 = vld [vmem:[%s916 + $0xa28] sm:%s909]
                  %1259 = vst [vmem:[%s917 + $0x2a8] sm:%s909] %v1258
                  %v1260 = vld [vmem:[%s916 + $0xa2c] sm:%s909]
                  %1261 = vst [vmem:[%s917 + $0x2ac] sm:%s909] %v1260
                  %v1262 = vld [vmem:[%s916 + $0xa30] sm:%s909]
                  %1263 = vst [vmem:[%s917 + $0x2b0] sm:%s909] %v1262
                  %v1264 = vld [vmem:[%s916 + $0xa34] sm:%s909]
                  %1265 = vst [vmem:[%s917 + $0x2b4] sm:%s909] %v1264
                  %v1266 = vld [vmem:[%s916 + $0xa38] sm:%s909]
                  %1267 = vst [vmem:[%s917 + $0x2b8] sm:%s909] %v1266
                  %v1268 = vld [vmem:[%s916 + $0xa3c] sm:%s909]
                  %1269 = vst [vmem:[%s917 + $0x2bc] sm:%s909] %v1268
                  %v1270 = vld [vmem:[%s916 + $0xb00] sm:%s909]
                  %1271 = vst [vmem:[%s917 + $0x2c0] sm:%s909] %v1270
                  %v1272 = vld [vmem:[%s916 + $0xb04] sm:%s909]
                  %1273 = vst [vmem:[%s917 + $0x2c4] sm:%s909] %v1272
                  %v1274 = vld [vmem:[%s916 + $0xb08] sm:%s909]
                  %1275 = vst [vmem:[%s917 + $0x2c8] sm:%s909] %v1274
                  %v1276 = vld [vmem:[%s916 + $0xb0c] sm:%s909]
                  %1277 = vst [vmem:[%s917 + $0x2cc] sm:%s909] %v1276
                  %v1278 = vld [vmem:[%s916 + $0xb10] sm:%s909]
                  %1279 = vst [vmem:[%s917 + $0x2d0] sm:%s909] %v1278
                  %v1280 = vld [vmem:[%s916 + $0xb14] sm:%s909]
                  %1281 = vst [vmem:[%s917 + $0x2d4] sm:%s909] %v1280
                  %v1282 = vld [vmem:[%s916 + $0xb18] sm:%s909]
                  %1283 = vst [vmem:[%s917 + $0x2d8] sm:%s909] %v1282
                  %v1284 = vld [vmem:[%s916 + $0xb1c] sm:%s909]
                  %1285 = vst [vmem:[%s917 + $0x2dc] sm:%s909] %v1284
                  %v1286 = vld [vmem:[%s916 + $0xb20] sm:%s909]
                  %1287 = vst [vmem:[%s917 + $0x2e0] sm:%s909] %v1286
                  %v1288 = vld [vmem:[%s916 + $0xb24] sm:%s909]
                  %1289 = vst [vmem:[%s917 + $0x2e4] sm:%s909] %v1288
                  %v1290 = vld [vmem:[%s916 + $0xb28] sm:%s909]
                  %1291 = vst [vmem:[%s917 + $0x2e8] sm:%s909] %v1290
                  %v1292 = vld [vmem:[%s916 + $0xb2c] sm:%s909]
                  %1293 = vst [vmem:[%s917 + $0x2ec] sm:%s909] %v1292
                  %v1294 = vld [vmem:[%s916 + $0xb30] sm:%s909]
                  %1295 = vst [vmem:[%s917 + $0x2f0] sm:%s909] %v1294
                  %v1296 = vld [vmem:[%s916 + $0xb34] sm:%s909]
                  %1297 = vst [vmem:[%s917 + $0x2f4] sm:%s909] %v1296
                  %v1298 = vld [vmem:[%s916 + $0xb38] sm:%s909]
                  %1299 = vst [vmem:[%s917 + $0x2f8] sm:%s909] %v1298
                  %v1300 = vld [vmem:[%s916 + $0xb3c] sm:%s909]
                  %1301 = vst [vmem:[%s917 + $0x2fc] sm:%s909] %v1300
                  %v1302 = vld [vmem:[%s916 + $0xc00] sm:%s909]
                  %1303 = vst [vmem:[%s917 + $0x300] sm:%s909] %v1302
                  %v1304 = vld [vmem:[%s916 + $0xc04] sm:%s909]
                  %1305 = vst [vmem:[%s917 + $0x304] sm:%s909] %v1304
                  %v1306 = vld [vmem:[%s916 + $0xc08] sm:%s909]
                  %1307 = vst [vmem:[%s917 + $0x308] sm:%s909] %v1306
                  %v1308 = vld [vmem:[%s916 + $0xc0c] sm:%s909]
                  %1309 = vst [vmem:[%s917 + $0x30c] sm:%s909] %v1308
                  %v1310 = vld [vmem:[%s916 + $0xc10] sm:%s909]
                  %1311 = vst [vmem:[%s917 + $0x310] sm:%s909] %v1310
                  %v1312 = vld [vmem:[%s916 + $0xc14] sm:%s909]
                  %1313 = vst [vmem:[%s917 + $0x314] sm:%s909] %v1312
                  %v1314 = vld [vmem:[%s916 + $0xc18] sm:%s909]
                  %1315 = vst [vmem:[%s917 + $0x318] sm:%s909] %v1314
                  %v1316 = vld [vmem:[%s916 + $0xc1c] sm:%s909]
                  %1317 = vst [vmem:[%s917 + $0x31c] sm:%s909] %v1316
                  %v1318 = vld [vmem:[%s916 + $0xc20] sm:%s909]
                  %1319 = vst [vmem:[%s917 + $0x320] sm:%s909] %v1318
                  %v1320 = vld [vmem:[%s916 + $0xc24] sm:%s909]
                  %1321 = vst [vmem:[%s917 + $0x324] sm:%s909] %v1320
                  %v1322 = vld [vmem:[%s916 + $0xc28] sm:%s909]
                  %1323 = vst [vmem:[%s917 + $0x328] sm:%s909] %v1322
                  %v1324 = vld [vmem:[%s916 + $0xc2c] sm:%s909]
                  %1325 = vst [vmem:[%s917 + $0x32c] sm:%s909] %v1324
                  %v1326 = vld [vmem:[%s916 + $0xc30] sm:%s909]
                  %1327 = vst [vmem:[%s917 + $0x330] sm:%s909] %v1326
                  %v1328 = vld [vmem:[%s916 + $0xc34] sm:%s909]
                  %1329 = vst [vmem:[%s917 + $0x334] sm:%s909] %v1328
                  %v1330 = vld [vmem:[%s916 + $0xc38] sm:%s909]
                  %1331 = vst [vmem:[%s917 + $0x338] sm:%s909] %v1330
                  %v1332 = vld [vmem:[%s916 + $0xc3c] sm:%s909]
                  %1333 = vst [vmem:[%s917 + $0x33c] sm:%s909] %v1332
                  %v1334 = vld [vmem:[%s916 + $0xd00] sm:%s909]
                  %1335 = vst [vmem:[%s917 + $0x340] sm:%s909] %v1334
                  %v1336 = vld [vmem:[%s916 + $0xd04] sm:%s909]
                  %1337 = vst [vmem:[%s917 + $0x344] sm:%s909] %v1336
                  %v1338 = vld [vmem:[%s916 + $0xd08] sm:%s909]
                  %1339 = vst [vmem:[%s917 + $0x348] sm:%s909] %v1338
                  %v1340 = vld [vmem:[%s916 + $0xd0c] sm:%s909]
                  %1341 = vst [vmem:[%s917 + $0x34c] sm:%s909] %v1340
                  %v1342 = vld [vmem:[%s916 + $0xd10] sm:%s909]
                  %1343 = vst [vmem:[%s917 + $0x350] sm:%s909] %v1342
                  %v1344 = vld [vmem:[%s916 + $0xd14] sm:%s909]
                  %1345 = vst [vmem:[%s917 + $0x354] sm:%s909] %v1344
                  %v1346 = vld [vmem:[%s916 + $0xd18] sm:%s909]
                  %1347 = vst [vmem:[%s917 + $0x358] sm:%s909] %v1346
                  %v1348 = vld [vmem:[%s916 + $0xd1c] sm:%s909]
                  %1349 = vst [vmem:[%s917 + $0x35c] sm:%s909] %v1348
                  %v1350 = vld [vmem:[%s916 + $0xd20] sm:%s909]
                  %1351 = vst [vmem:[%s917 + $0x360] sm:%s909] %v1350
                  %v1352 = vld [vmem:[%s916 + $0xd24] sm:%s909]
                  %1353 = vst [vmem:[%s917 + $0x364] sm:%s909] %v1352
                  %v1354 = vld [vmem:[%s916 + $0xd28] sm:%s909]
                  %1355 = vst [vmem:[%s917 + $0x368] sm:%s909] %v1354
                  %v1356 = vld [vmem:[%s916 + $0xd2c] sm:%s909]
                  %1357 = vst [vmem:[%s917 + $0x36c] sm:%s909] %v1356
                  %v1358 = vld [vmem:[%s916 + $0xd30] sm:%s909]
                  %1359 = vst [vmem:[%s917 + $0x370] sm:%s909] %v1358
                  %v1360 = vld [vmem:[%s916 + $0xd34] sm:%s909]
                  %1361 = vst [vmem:[%s917 + $0x374] sm:%s909] %v1360
                  %v1362 = vld [vmem:[%s916 + $0xd38] sm:%s909]
                  %1363 = vst [vmem:[%s917 + $0x378] sm:%s909] %v1362
                  %v1364 = vld [vmem:[%s916 + $0xd3c] sm:%s909]
                  %1365 = vst [vmem:[%s917 + $0x37c] sm:%s909] %v1364
                  %v1366 = vld [vmem:[%s916 + $0xe00] sm:%s909]
                  %1367 = vst [vmem:[%s917 + $0x380] sm:%s909] %v1366
                  %v1368 = vld [vmem:[%s916 + $0xe04] sm:%s909]
                  %1369 = vst [vmem:[%s917 + $0x384] sm:%s909] %v1368
                  %v1370 = vld [vmem:[%s916 + $0xe08] sm:%s909]
                  %1371 = vst [vmem:[%s917 + $0x388] sm:%s909] %v1370
                  %v1372 = vld [vmem:[%s916 + $0xe0c] sm:%s909]
                  %1373 = vst [vmem:[%s917 + $0x38c] sm:%s909] %v1372
                  %v1374 = vld [vmem:[%s916 + $0xe10] sm:%s909]
                  %1375 = vst [vmem:[%s917 + $0x390] sm:%s909] %v1374
                  %v1376 = vld [vmem:[%s916 + $0xe14] sm:%s909]
                  %1377 = vst [vmem:[%s917 + $0x394] sm:%s909] %v1376
                  %v1378 = vld [vmem:[%s916 + $0xe18] sm:%s909]
                  %1379 = vst [vmem:[%s917 + $0x398] sm:%s909] %v1378
                  %v1380 = vld [vmem:[%s916 + $0xe1c] sm:%s909]
                  %1381 = vst [vmem:[%s917 + $0x39c] sm:%s909] %v1380
                  %v1382 = vld [vmem:[%s916 + $0xe20] sm:%s909]
                  %1383 = vst [vmem:[%s917 + $0x3a0] sm:%s909] %v1382
                  %v1384 = vld [vmem:[%s916 + $0xe24] sm:%s909]
                  %1385 = vst [vmem:[%s917 + $0x3a4] sm:%s909] %v1384
                  %v1386 = vld [vmem:[%s916 + $0xe28] sm:%s909]
                  %1387 = vst [vmem:[%s917 + $0x3a8] sm:%s909] %v1386
                  %v1388 = vld [vmem:[%s916 + $0xe2c] sm:%s909]
                  %1389 = vst [vmem:[%s917 + $0x3ac] sm:%s909] %v1388
                  %v1390 = vld [vmem:[%s916 + $0xe30] sm:%s909]
                  %1391 = vst [vmem:[%s917 + $0x3b0] sm:%s909] %v1390
                  %v1392 = vld [vmem:[%s916 + $0xe34] sm:%s909]
                  %1393 = vst [vmem:[%s917 + $0x3b4] sm:%s909] %v1392
                  %v1394 = vld [vmem:[%s916 + $0xe38] sm:%s909]
                  %1395 = vst [vmem:[%s917 + $0x3b8] sm:%s909] %v1394
                  %v1396 = vld [vmem:[%s916 + $0xe3c] sm:%s909]
                  %1397 = vst [vmem:[%s917 + $0x3bc] sm:%s909] %v1396
                  %v1398 = vld [vmem:[%s916 + $0xf00] sm:%s909]
                  %1399 = vst [vmem:[%s917 + $0x3c0] sm:%s909] %v1398
                  %v1400 = vld [vmem:[%s916 + $0xf04] sm:%s909]
                  %1401 = vst [vmem:[%s917 + $0x3c4] sm:%s909] %v1400
                  %v1402 = vld [vmem:[%s916 + $0xf08] sm:%s909]
                  %1403 = vst [vmem:[%s917 + $0x3c8] sm:%s909] %v1402
                  %v1404 = vld [vmem:[%s916 + $0xf0c] sm:%s909]
                  %1405 = vst [vmem:[%s917 + $0x3cc] sm:%s909] %v1404
                  %v1406 = vld [vmem:[%s916 + $0xf10] sm:%s909]
                  %1407 = vst [vmem:[%s917 + $0x3d0] sm:%s909] %v1406
                  %v1408 = vld [vmem:[%s916 + $0xf14] sm:%s909]
                  %1409 = vst [vmem:[%s917 + $0x3d4] sm:%s909] %v1408
                  %v1410 = vld [vmem:[%s916 + $0xf18] sm:%s909]
                  %1411 = vst [vmem:[%s917 + $0x3d8] sm:%s909] %v1410
                  %v1412 = vld [vmem:[%s916 + $0xf1c] sm:%s909]
                  %1413 = vst [vmem:[%s917 + $0x3dc] sm:%s909] %v1412
                  %v1414 = vld [vmem:[%s916 + $0xf20] sm:%s909]
                  %1415 = vst [vmem:[%s917 + $0x3e0] sm:%s909] %v1414
                  %v1416 = vld [vmem:[%s916 + $0xf24] sm:%s909]
                  %1417 = vst [vmem:[%s917 + $0x3e4] sm:%s909] %v1416
                  %v1418 = vld [vmem:[%s916 + $0xf28] sm:%s909]
                  %1419 = vst [vmem:[%s917 + $0x3e8] sm:%s909] %v1418
                  %v1420 = vld [vmem:[%s916 + $0xf2c] sm:%s909]
                  %1421 = vst [vmem:[%s917 + $0x3ec] sm:%s909] %v1420
                  %v1422 = vld [vmem:[%s916 + $0xf30] sm:%s909]
                  %1423 = vst [vmem:[%s917 + $0x3f0] sm:%s909] %v1422
                  %v1424 = vld [vmem:[%s916 + $0xf34] sm:%s909]
                  %1425 = vst [vmem:[%s917 + $0x3f4] sm:%s909] %v1424
                  %v1426 = vld [vmem:[%s916 + $0xf38] sm:%s909]
                  %1427 = vst [vmem:[%s917 + $0x3f8] sm:%s909] %v1426
                  %v1428 = vld [vmem:[%s916 + $0xf3c] sm:%s909]
                  %1429 = vst [vmem:[%s917 + $0x3fc] sm:%s909] %v1428
                  %v1430 = vld [vmem:[%s916 + $0x1000] sm:%s909]
                  %1431 = vst [vmem:[%s917 + $0x400] sm:%s909] %v1430
                  %v1432 = vld [vmem:[%s916 + $0x1004] sm:%s909]
                  %1433 = vst [vmem:[%s917 + $0x404] sm:%s909] %v1432
                  %v1434 = vld [vmem:[%s916 + $0x1008] sm:%s909]
                  %1435 = vst [vmem:[%s917 + $0x408] sm:%s909] %v1434
                  %v1436 = vld [vmem:[%s916 + $0x100c] sm:%s909]
                  %1437 = vst [vmem:[%s917 + $0x40c] sm:%s909] %v1436
                  %v1438 = vld [vmem:[%s916 + $0x1010] sm:%s909]
                  %1439 = vst [vmem:[%s917 + $0x410] sm:%s909] %v1438
                  %v1440 = vld [vmem:[%s916 + $0x1014] sm:%s909]
                  %1441 = vst [vmem:[%s917 + $0x414] sm:%s909] %v1440
                  %v1442 = vld [vmem:[%s916 + $0x1018] sm:%s909]
                  %1443 = vst [vmem:[%s917 + $0x418] sm:%s909] %v1442
                  %v1444 = vld [vmem:[%s916 + $0x101c] sm:%s909]
                  %1445 = vst [vmem:[%s917 + $0x41c] sm:%s909] %v1444
                  %v1446 = vld [vmem:[%s916 + $0x1020] sm:%s909]
                  %1447 = vst [vmem:[%s917 + $0x420] sm:%s909] %v1446
                  %v1448 = vld [vmem:[%s916 + $0x1024] sm:%s909]
                  %1449 = vst [vmem:[%s917 + $0x424] sm:%s909] %v1448
                  %v1450 = vld [vmem:[%s916 + $0x1028] sm:%s909]
                  %1451 = vst [vmem:[%s917 + $0x428] sm:%s909] %v1450
                  %v1452 = vld [vmem:[%s916 + $0x102c] sm:%s909]
                  %1453 = vst [vmem:[%s917 + $0x42c] sm:%s909] %v1452
                  %v1454 = vld [vmem:[%s916 + $0x1030] sm:%s909]
                  %1455 = vst [vmem:[%s917 + $0x430] sm:%s909] %v1454
                  %v1456 = vld [vmem:[%s916 + $0x1034] sm:%s909]
                  %1457 = vst [vmem:[%s917 + $0x434] sm:%s909] %v1456
                  %v1458 = vld [vmem:[%s916 + $0x1038] sm:%s909]
                  %1459 = vst [vmem:[%s917 + $0x438] sm:%s909] %v1458
                  %v1460 = vld [vmem:[%s916 + $0x103c] sm:%s909]
                  %1461 = vst [vmem:[%s917 + $0x43c] sm:%s909] %v1460
                  %v1462 = vld [vmem:[%s916 + $0x1100] sm:%s909]
                  %1463 = vst [vmem:[%s917 + $0x440] sm:%s909] %v1462
                  %v1464 = vld [vmem:[%s916 + $0x1104] sm:%s909]
                  %1465 = vst [vmem:[%s917 + $0x444] sm:%s909] %v1464
                  %v1466 = vld [vmem:[%s916 + $0x1108] sm:%s909]
                  %1467 = vst [vmem:[%s917 + $0x448] sm:%s909] %v1466
                  %v1468 = vld [vmem:[%s916 + $0x110c] sm:%s909]
                  %1469 = vst [vmem:[%s917 + $0x44c] sm:%s909] %v1468
                  %v1470 = vld [vmem:[%s916 + $0x1110] sm:%s909]
                  %1471 = vst [vmem:[%s917 + $0x450] sm:%s909] %v1470
                  %v1472 = vld [vmem:[%s916 + $0x1114] sm:%s909]
                  %1473 = vst [vmem:[%s917 + $0x454] sm:%s909] %v1472
                  %v1474 = vld [vmem:[%s916 + $0x1118] sm:%s909]
                  %1475 = vst [vmem:[%s917 + $0x458] sm:%s909] %v1474
                  %v1476 = vld [vmem:[%s916 + $0x111c] sm:%s909]
                  %1477 = vst [vmem:[%s917 + $0x45c] sm:%s909] %v1476
                  %v1478 = vld [vmem:[%s916 + $0x1120] sm:%s909]
                  %1479 = vst [vmem:[%s917 + $0x460] sm:%s909] %v1478
                  %v1480 = vld [vmem:[%s916 + $0x1124] sm:%s909]
                  %1481 = vst [vmem:[%s917 + $0x464] sm:%s909] %v1480
                  %v1482 = vld [vmem:[%s916 + $0x1128] sm:%s909]
                  %1483 = vst [vmem:[%s917 + $0x468] sm:%s909] %v1482
                  %v1484 = vld [vmem:[%s916 + $0x112c] sm:%s909]
                  %1485 = vst [vmem:[%s917 + $0x46c] sm:%s909] %v1484
                  %v1486 = vld [vmem:[%s916 + $0x1130] sm:%s909]
                  %1487 = vst [vmem:[%s917 + $0x470] sm:%s909] %v1486
                  %v1488 = vld [vmem:[%s916 + $0x1134] sm:%s909]
                  %1489 = vst [vmem:[%s917 + $0x474] sm:%s909] %v1488
                  %v1490 = vld [vmem:[%s916 + $0x1138] sm:%s909]
                  %1491 = vst [vmem:[%s917 + $0x478] sm:%s909] %v1490
                  %v1492 = vld [vmem:[%s916 + $0x113c] sm:%s909]
                  %1493 = vst [vmem:[%s917 + $0x47c] sm:%s909] %v1492
                  %v1494 = vld [vmem:[%s916 + $0x1200] sm:%s909]
                  %1495 = vst [vmem:[%s917 + $0x480] sm:%s909] %v1494
                  %v1496 = vld [vmem:[%s916 + $0x1204] sm:%s909]
                  %1497 = vst [vmem:[%s917 + $0x484] sm:%s909] %v1496
                  %v1498 = vld [vmem:[%s916 + $0x1208] sm:%s909]
                  %1499 = vst [vmem:[%s917 + $0x488] sm:%s909] %v1498
                  %v1500 = vld [vmem:[%s916 + $0x120c] sm:%s909]
                  %1501 = vst [vmem:[%s917 + $0x48c] sm:%s909] %v1500
                  %v1502 = vld [vmem:[%s916 + $0x1210] sm:%s909]
                  %1503 = vst [vmem:[%s917 + $0x490] sm:%s909] %v1502
                  %v1504 = vld [vmem:[%s916 + $0x1214] sm:%s909]
                  %1505 = vst [vmem:[%s917 + $0x494] sm:%s909] %v1504
                  %v1506 = vld [vmem:[%s916 + $0x1218] sm:%s909]
                  %1507 = vst [vmem:[%s917 + $0x498] sm:%s909] %v1506
                  %v1508 = vld [vmem:[%s916 + $0x121c] sm:%s909]
                  %1509 = vst [vmem:[%s917 + $0x49c] sm:%s909] %v1508
                  %v1510 = vld [vmem:[%s916 + $0x1220] sm:%s909]
                  %1511 = vst [vmem:[%s917 + $0x4a0] sm:%s909] %v1510
                  %v1512 = vld [vmem:[%s916 + $0x1224] sm:%s909]
                  %1513 = vst [vmem:[%s917 + $0x4a4] sm:%s909] %v1512
                  %v1514 = vld [vmem:[%s916 + $0x1228] sm:%s909]
                  %1515 = vst [vmem:[%s917 + $0x4a8] sm:%s909] %v1514
                  %v1516 = vld [vmem:[%s916 + $0x122c] sm:%s909]
                  %1517 = vst [vmem:[%s917 + $0x4ac] sm:%s909] %v1516
                  %v1518 = vld [vmem:[%s916 + $0x1230] sm:%s909]
                  %1519 = vst [vmem:[%s917 + $0x4b0] sm:%s909] %v1518
                  %v1520 = vld [vmem:[%s916 + $0x1234] sm:%s909]
                  %1521 = vst [vmem:[%s917 + $0x4b4] sm:%s909] %v1520
                  %v1522 = vld [vmem:[%s916 + $0x1238] sm:%s909]
                  %1523 = vst [vmem:[%s917 + $0x4b8] sm:%s909] %v1522
                  %v1524 = vld [vmem:[%s916 + $0x123c] sm:%s909]
                  %1525 = vst [vmem:[%s917 + $0x4bc] sm:%s909] %v1524
                  %v1526 = vld [vmem:[%s916 + $0x1300] sm:%s909]
                  %1527 = vst [vmem:[%s917 + $0x4c0] sm:%s909] %v1526
                  %v1528 = vld [vmem:[%s916 + $0x1304] sm:%s909]
                  %1529 = vst [vmem:[%s917 + $0x4c4] sm:%s909] %v1528
                  %v1530 = vld [vmem:[%s916 + $0x1308] sm:%s909]
                  %1531 = vst [vmem:[%s917 + $0x4c8] sm:%s909] %v1530
                  %v1532 = vld [vmem:[%s916 + $0x130c] sm:%s909]
                  %1533 = vst [vmem:[%s917 + $0x4cc] sm:%s909] %v1532
                  %v1534 = vld [vmem:[%s916 + $0x1310] sm:%s909]
                  %1535 = vst [vmem:[%s917 + $0x4d0] sm:%s909] %v1534
                  %v1536 = vld [vmem:[%s916 + $0x1314] sm:%s909]
                  %1537 = vst [vmem:[%s917 + $0x4d4] sm:%s909] %v1536
                  %v1538 = vld [vmem:[%s916 + $0x1318] sm:%s909]
                  %1539 = vst [vmem:[%s917 + $0x4d8] sm:%s909] %v1538
                  %v1540 = vld [vmem:[%s916 + $0x131c] sm:%s909]
                  %1541 = vst [vmem:[%s917 + $0x4dc] sm:%s909] %v1540
                  %v1542 = vld [vmem:[%s916 + $0x1320] sm:%s909]
                  %1543 = vst [vmem:[%s917 + $0x4e0] sm:%s909] %v1542
                  %v1544 = vld [vmem:[%s916 + $0x1324] sm:%s909]
                  %1545 = vst [vmem:[%s917 + $0x4e4] sm:%s909] %v1544
                  %v1546 = vld [vmem:[%s916 + $0x1328] sm:%s909]
                  %1547 = vst [vmem:[%s917 + $0x4e8] sm:%s909] %v1546
                  %v1548 = vld [vmem:[%s916 + $0x132c] sm:%s909]
                  %1549 = vst [vmem:[%s917 + $0x4ec] sm:%s909] %v1548
                  %v1550 = vld [vmem:[%s916 + $0x1330] sm:%s909]
                  %1551 = vst [vmem:[%s917 + $0x4f0] sm:%s909] %v1550
                  %v1552 = vld [vmem:[%s916 + $0x1334] sm:%s909]
                  %1553 = vst [vmem:[%s917 + $0x4f4] sm:%s909] %v1552
                  %v1554 = vld [vmem:[%s916 + $0x1338] sm:%s909]
                  %1555 = vst [vmem:[%s917 + $0x4f8] sm:%s909] %v1554
                  %v1556 = vld [vmem:[%s916 + $0x133c] sm:%s909]
                  %1557 = vst [vmem:[%s917 + $0x4fc] sm:%s909] %v1556
                  %v1558 = vld [vmem:[%s916 + $0x1400] sm:%s909]
                  %1559 = vst [vmem:[%s917 + $0x500] sm:%s909] %v1558
                  %v1560 = vld [vmem:[%s916 + $0x1404] sm:%s909]
                  %1561 = vst [vmem:[%s917 + $0x504] sm:%s909] %v1560
                  %v1562 = vld [vmem:[%s916 + $0x1408] sm:%s909]
                  %1563 = vst [vmem:[%s917 + $0x508] sm:%s909] %v1562
                  %v1564 = vld [vmem:[%s916 + $0x140c] sm:%s909]
                  %1565 = vst [vmem:[%s917 + $0x50c] sm:%s909] %v1564
                  %v1566 = vld [vmem:[%s916 + $0x1410] sm:%s909]
                  %1567 = vst [vmem:[%s917 + $0x510] sm:%s909] %v1566
                  %v1568 = vld [vmem:[%s916 + $0x1414] sm:%s909]
                  %1569 = vst [vmem:[%s917 + $0x514] sm:%s909] %v1568
                  %v1570 = vld [vmem:[%s916 + $0x1418] sm:%s909]
                  %1571 = vst [vmem:[%s917 + $0x518] sm:%s909] %v1570
                  %v1572 = vld [vmem:[%s916 + $0x141c] sm:%s909]
                  %1573 = vst [vmem:[%s917 + $0x51c] sm:%s909] %v1572
                  %v1574 = vld [vmem:[%s916 + $0x1420] sm:%s909]
                  %1575 = vst [vmem:[%s917 + $0x520] sm:%s909] %v1574
                  %v1576 = vld [vmem:[%s916 + $0x1424] sm:%s909]
                  %1577 = vst [vmem:[%s917 + $0x524] sm:%s909] %v1576
                  %v1578 = vld [vmem:[%s916 + $0x1428] sm:%s909]
                  %1579 = vst [vmem:[%s917 + $0x528] sm:%s909] %v1578
                  %v1580 = vld [vmem:[%s916 + $0x142c] sm:%s909]
                  %1581 = vst [vmem:[%s917 + $0x52c] sm:%s909] %v1580
                  %v1582 = vld [vmem:[%s916 + $0x1430] sm:%s909]
                  %1583 = vst [vmem:[%s917 + $0x530] sm:%s909] %v1582
                  %v1584 = vld [vmem:[%s916 + $0x1434] sm:%s909]
                  %1585 = vst [vmem:[%s917 + $0x534] sm:%s909] %v1584
                  %v1586 = vld [vmem:[%s916 + $0x1438] sm:%s909]
                  %1587 = vst [vmem:[%s917 + $0x538] sm:%s909] %v1586
                  %v1588 = vld [vmem:[%s916 + $0x143c] sm:%s909]
                  %1589 = vst [vmem:[%s917 + $0x53c] sm:%s909] %v1588
                  %v1590 = vld [vmem:[%s916 + $0x1500] sm:%s909]
                  %1591 = vst [vmem:[%s917 + $0x540] sm:%s909] %v1590
                  %v1592 = vld [vmem:[%s916 + $0x1504] sm:%s909]
                  %1593 = vst [vmem:[%s917 + $0x544] sm:%s909] %v1592
                  %v1594 = vld [vmem:[%s916 + $0x1508] sm:%s909]
                  %1595 = vst [vmem:[%s917 + $0x548] sm:%s909] %v1594
                  %v1596 = vld [vmem:[%s916 + $0x150c] sm:%s909]
                  %1597 = vst [vmem:[%s917 + $0x54c] sm:%s909] %v1596
                  %v1598 = vld [vmem:[%s916 + $0x1510] sm:%s909]
                  %1599 = vst [vmem:[%s917 + $0x550] sm:%s909] %v1598
                  %v1600 = vld [vmem:[%s916 + $0x1514] sm:%s909]
                  %1601 = vst [vmem:[%s917 + $0x554] sm:%s909] %v1600
                  %v1602 = vld [vmem:[%s916 + $0x1518] sm:%s909]
                  %1603 = vst [vmem:[%s917 + $0x558] sm:%s909] %v1602
                  %v1604 = vld [vmem:[%s916 + $0x151c] sm:%s909]
                  %1605 = vst [vmem:[%s917 + $0x55c] sm:%s909] %v1604
                  %v1606 = vld [vmem:[%s916 + $0x1520] sm:%s909]
                  %1607 = vst [vmem:[%s917 + $0x560] sm:%s909] %v1606
                  %v1608 = vld [vmem:[%s916 + $0x1524] sm:%s909]
                  %1609 = vst [vmem:[%s917 + $0x564] sm:%s909] %v1608
                  %v1610 = vld [vmem:[%s916 + $0x1528] sm:%s909]
                  %1611 = vst [vmem:[%s917 + $0x568] sm:%s909] %v1610
                  %v1612 = vld [vmem:[%s916 + $0x152c] sm:%s909]
                  %1613 = vst [vmem:[%s917 + $0x56c] sm:%s909] %v1612
                  %v1614 = vld [vmem:[%s916 + $0x1530] sm:%s909]
                  %1615 = vst [vmem:[%s917 + $0x570] sm:%s909] %v1614
                  %v1616 = vld [vmem:[%s916 + $0x1534] sm:%s909]
                  %1617 = vst [vmem:[%s917 + $0x574] sm:%s909] %v1616
                  %v1618 = vld [vmem:[%s916 + $0x1538] sm:%s909]
                  %1619 = vst [vmem:[%s917 + $0x578] sm:%s909] %v1618
                  %v1620 = vld [vmem:[%s916 + $0x153c] sm:%s909]
                  %1621 = vst [vmem:[%s917 + $0x57c] sm:%s909] %v1620
                  %v1622 = vld [vmem:[%s916 + $0x1600] sm:%s909]
                  %1623 = vst [vmem:[%s917 + $0x580] sm:%s909] %v1622
                  %v1624 = vld [vmem:[%s916 + $0x1604] sm:%s909]
                  %1625 = vst [vmem:[%s917 + $0x584] sm:%s909] %v1624
                  %v1626 = vld [vmem:[%s916 + $0x1608] sm:%s909]
                  %1627 = vst [vmem:[%s917 + $0x588] sm:%s909] %v1626
                  %v1628 = vld [vmem:[%s916 + $0x160c] sm:%s909]
                  %1629 = vst [vmem:[%s917 + $0x58c] sm:%s909] %v1628
                  %v1630 = vld [vmem:[%s916 + $0x1610] sm:%s909]
                  %1631 = vst [vmem:[%s917 + $0x590] sm:%s909] %v1630
                  %v1632 = vld [vmem:[%s916 + $0x1614] sm:%s909]
                  %1633 = vst [vmem:[%s917 + $0x594] sm:%s909] %v1632
                  %v1634 = vld [vmem:[%s916 + $0x1618] sm:%s909]
                  %1635 = vst [vmem:[%s917 + $0x598] sm:%s909] %v1634
                  %v1636 = vld [vmem:[%s916 + $0x161c] sm:%s909]
                  %1637 = vst [vmem:[%s917 + $0x59c] sm:%s909] %v1636
                  %v1638 = vld [vmem:[%s916 + $0x1620] sm:%s909]
                  %1639 = vst [vmem:[%s917 + $0x5a0] sm:%s909] %v1638
                  %v1640 = vld [vmem:[%s916 + $0x1624] sm:%s909]
                  %1641 = vst [vmem:[%s917 + $0x5a4] sm:%s909] %v1640
                  %v1642 = vld [vmem:[%s916 + $0x1628] sm:%s909]
                  %1643 = vst [vmem:[%s917 + $0x5a8] sm:%s909] %v1642
                  %v1644 = vld [vmem:[%s916 + $0x162c] sm:%s909]
                  %1645 = vst [vmem:[%s917 + $0x5ac] sm:%s909] %v1644
                  %v1646 = vld [vmem:[%s916 + $0x1630] sm:%s909]
                  %1647 = vst [vmem:[%s917 + $0x5b0] sm:%s909] %v1646
                  %v1648 = vld [vmem:[%s916 + $0x1634] sm:%s909]
                  %1649 = vst [vmem:[%s917 + $0x5b4] sm:%s909] %v1648
                  %v1650 = vld [vmem:[%s916 + $0x1638] sm:%s909]
                  %1651 = vst [vmem:[%s917 + $0x5b8] sm:%s909] %v1650
                  %v1652 = vld [vmem:[%s916 + $0x163c] sm:%s909]
                  %1653 = vst [vmem:[%s917 + $0x5bc] sm:%s909] %v1652
                  %v1654 = vld [vmem:[%s916 + $0x1700] sm:%s909]
                  %1655 = vst [vmem:[%s917 + $0x5c0] sm:%s909] %v1654
                  %v1656 = vld [vmem:[%s916 + $0x1704] sm:%s909]
                  %1657 = vst [vmem:[%s917 + $0x5c4] sm:%s909] %v1656
                  %v1658 = vld [vmem:[%s916 + $0x1708] sm:%s909]
                  %1659 = vst [vmem:[%s917 + $0x5c8] sm:%s909] %v1658
                  %v1660 = vld [vmem:[%s916 + $0x170c] sm:%s909]
                  %1661 = vst [vmem:[%s917 + $0x5cc] sm:%s909] %v1660
                  %v1662 = vld [vmem:[%s916 + $0x1710] sm:%s909]
                  %1663 = vst [vmem:[%s917 + $0x5d0] sm:%s909] %v1662
                  %v1664 = vld [vmem:[%s916 + $0x1714] sm:%s909]
                  %1665 = vst [vmem:[%s917 + $0x5d4] sm:%s909] %v1664
                  %v1666 = vld [vmem:[%s916 + $0x1718] sm:%s909]
                  %1667 = vst [vmem:[%s917 + $0x5d8] sm:%s909] %v1666
                  %v1668 = vld [vmem:[%s916 + $0x171c] sm:%s909]
                  %1669 = vst [vmem:[%s917 + $0x5dc] sm:%s909] %v1668
                  %v1670 = vld [vmem:[%s916 + $0x1720] sm:%s909]
                  %1671 = vst [vmem:[%s917 + $0x5e0] sm:%s909] %v1670
                  %v1672 = vld [vmem:[%s916 + $0x1724] sm:%s909]
                  %1673 = vst [vmem:[%s917 + $0x5e4] sm:%s909] %v1672
                  %v1674 = vld [vmem:[%s916 + $0x1728] sm:%s909]
                  %1675 = vst [vmem:[%s917 + $0x5e8] sm:%s909] %v1674
                  %v1676 = vld [vmem:[%s916 + $0x172c] sm:%s909]
                  %1677 = vst [vmem:[%s917 + $0x5ec] sm:%s909] %v1676
                  %v1678 = vld [vmem:[%s916 + $0x1730] sm:%s909]
                  %1679 = vst [vmem:[%s917 + $0x5f0] sm:%s909] %v1678
                  %v1680 = vld [vmem:[%s916 + $0x1734] sm:%s909]
                  %1681 = vst [vmem:[%s917 + $0x5f4] sm:%s909] %v1680
                  %v1682 = vld [vmem:[%s916 + $0x1738] sm:%s909]
                  %1683 = vst [vmem:[%s917 + $0x5f8] sm:%s909] %v1682
                  %v1684 = vld [vmem:[%s916 + $0x173c] sm:%s909]
                  %1685 = vst [vmem:[%s917 + $0x5fc] sm:%s909] %v1684
                $region59: #{window_attention_forward.1} parent=46 // loop_footer
                  %s915 = sadd.s32 1, %s911
                $region60: #{window_attention_forward.1} parent=46 // loop_footer_branch
                  %910 = sbr.rel target = $region56
                $region61: #{window_attention_forward.1} parent=46 // loop_exit
                  _
              $region47: #{window_attention_forward.1} parent=31 // pred_fallthru
                _
            $region32: #{window_attention_forward.1} parent=27 // pred_fallthru
              _
            // Predicated region
            $region33: #{window_attention_forward.1} parent=27 // pred_check
              _
            $region34: #{window_attention_forward.1} parent=27 // pred_check_branch
              %119 = sbr.rel (0) target = $region36
            $region35: #{window_attention_forward.1} parent=27 // pred_region
              %s121 = ssub.s32 16, 1
              loop: start=0, step=1, limit=1
              $region37: #{window_attention_forward.1} parent=35 // loop_pre_header
                _
              $region38: #{window_attention_forward.1} parent=35 // loop_header
                %s123 = sphi 0, %s127
                %p124 = scmp.ge.s32.totalorder %s123, 1
                %s128 = sphi %s113, %s113
                %s129 = sphi %s109, %s109
              $region39: #{window_attention_forward.1} parent=35 // loop_header_branch
                %126 = sbr.rel (%p124) target = $region43
              $region40: #{window_attention_forward.1} parent=35 // loop_body
                %v130 = vld [vmem:[%s128] sm:%s121]
                %131 = vst [vmem:[%s129] sm:%s121] %v130
                %v132 = vld [vmem:[%s128 + $0x4] sm:%s121]
                %133 = vst [vmem:[%s129 + $0x4] sm:%s121] %v132
                %v134 = vld [vmem:[%s128 + $0x8] sm:%s121]
                %135 = vst [vmem:[%s129 + $0x8] sm:%s121] %v134
                %v136 = vld [vmem:[%s128 + $0xc] sm:%s121]
                %137 = vst [vmem:[%s129 + $0xc] sm:%s121] %v136
                %v138 = vld [vmem:[%s128 + $0x10] sm:%s121]
                %139 = vst [vmem:[%s129 + $0x10] sm:%s121] %v138
                %v140 = vld [vmem:[%s128 + $0x14] sm:%s121]
                %141 = vst [vmem:[%s129 + $0x14] sm:%s121] %v140
                %v142 = vld [vmem:[%s128 + $0x18] sm:%s121]
                %143 = vst [vmem:[%s129 + $0x18] sm:%s121] %v142
                %v144 = vld [vmem:[%s128 + $0x1c] sm:%s121]
                %145 = vst [vmem:[%s129 + $0x1c] sm:%s121] %v144
                %v146 = vld [vmem:[%s128 + $0x20] sm:%s121]
                %147 = vst [vmem:[%s129 + $0x20] sm:%s121] %v146
                %v148 = vld [vmem:[%s128 + $0x24] sm:%s121]
                %149 = vst [vmem:[%s129 + $0x24] sm:%s121] %v148
                %v150 = vld [vmem:[%s128 + $0x28] sm:%s121]
                %151 = vst [vmem:[%s129 + $0x28] sm:%s121] %v150
                %v152 = vld [vmem:[%s128 + $0x2c] sm:%s121]
                %153 = vst [vmem:[%s129 + $0x2c] sm:%s121] %v152
                %v154 = vld [vmem:[%s128 + $0x30] sm:%s121]
                %155 = vst [vmem:[%s129 + $0x30] sm:%s121] %v154
                %v156 = vld [vmem:[%s128 + $0x34] sm:%s121]
                %157 = vst [vmem:[%s129 + $0x34] sm:%s121] %v156
                %v158 = vld [vmem:[%s128 + $0x38] sm:%s121]
                %159 = vst [vmem:[%s129 + $0x38] sm:%s121] %v158
                %v160 = vld [vmem:[%s128 + $0x3c] sm:%s121]
                %161 = vst [vmem:[%s129 + $0x3c] sm:%s121] %v160
                %v162 = vld [vmem:[%s128 + $0x100] sm:%s121]
                %163 = vst [vmem:[%s129 + $0x40] sm:%s121] %v162
                %v164 = vld [vmem:[%s128 + $0x104] sm:%s121]
                %165 = vst [vmem:[%s129 + $0x44] sm:%s121] %v164
                %v166 = vld [vmem:[%s128 + $0x108] sm:%s121]
                %167 = vst [vmem:[%s129 + $0x48] sm:%s121] %v166
                %v168 = vld [vmem:[%s128 + $0x10c] sm:%s121]
                %169 = vst [vmem:[%s129 + $0x4c] sm:%s121] %v168
                %v170 = vld [vmem:[%s128 + $0x110] sm:%s121]
                %171 = vst [vmem:[%s129 + $0x50] sm:%s121] %v170
                %v172 = vld [vmem:[%s128 + $0x114] sm:%s121]
                %173 = vst [vmem:[%s129 + $0x54] sm:%s121] %v172
                %v174 = vld [vmem:[%s128 + $0x118] sm:%s121]
                %175 = vst [vmem:[%s129 + $0x58] sm:%s121] %v174
                %v176 = vld [vmem:[%s128 + $0x11c] sm:%s121]
                %177 = vst [vmem:[%s129 + $0x5c] sm:%s121] %v176
                %v178 = vld [vmem:[%s128 + $0x120] sm:%s121]
                %179 = vst [vmem:[%s129 + $0x60] sm:%s121] %v178
                %v180 = vld [vmem:[%s128 + $0x124] sm:%s121]
                %181 = vst [vmem:[%s129 + $0x64] sm:%s121] %v180
                %v182 = vld [vmem:[%s128 + $0x128] sm:%s121]
                %183 = vst [vmem:[%s129 + $0x68] sm:%s121] %v182
                %v184 = vld [vmem:[%s128 + $0x12c] sm:%s121]
                %185 = vst [vmem:[%s129 + $0x6c] sm:%s121] %v184
                %v186 = vld [vmem:[%s128 + $0x130] sm:%s121]
                %187 = vst [vmem:[%s129 + $0x70] sm:%s121] %v186
                %v188 = vld [vmem:[%s128 + $0x134] sm:%s121]
                %189 = vst [vmem:[%s129 + $0x74] sm:%s121] %v188
                %v190 = vld [vmem:[%s128 + $0x138] sm:%s121]
                %191 = vst [vmem:[%s129 + $0x78] sm:%s121] %v190
                %v192 = vld [vmem:[%s128 + $0x13c] sm:%s121]
                %193 = vst [vmem:[%s129 + $0x7c] sm:%s121] %v192
                %v194 = vld [vmem:[%s128 + $0x200] sm:%s121]
                %195 = vst [vmem:[%s129 + $0x80] sm:%s121] %v194
                %v196 = vld [vmem:[%s128 + $0x204] sm:%s121]
                %197 = vst [vmem:[%s129 + $0x84] sm:%s121] %v196
                %v198 = vld [vmem:[%s128 + $0x208] sm:%s121]
                %199 = vst [vmem:[%s129 + $0x88] sm:%s121] %v198
                %v200 = vld [vmem:[%s128 + $0x20c] sm:%s121]
                %201 = vst [vmem:[%s129 + $0x8c] sm:%s121] %v200
                %v202 = vld [vmem:[%s128 + $0x210] sm:%s121]
                %203 = vst [vmem:[%s129 + $0x90] sm:%s121] %v202
                %v204 = vld [vmem:[%s128 + $0x214] sm:%s121]
                %205 = vst [vmem:[%s129 + $0x94] sm:%s121] %v204
                %v206 = vld [vmem:[%s128 + $0x218] sm:%s121]
                %207 = vst [vmem:[%s129 + $0x98] sm:%s121] %v206
                %v208 = vld [vmem:[%s128 + $0x21c] sm:%s121]
                %209 = vst [vmem:[%s129 + $0x9c] sm:%s121] %v208
                %v210 = vld [vmem:[%s128 + $0x220] sm:%s121]
                %211 = vst [vmem:[%s129 + $0xa0] sm:%s121] %v210
                %v212 = vld [vmem:[%s128 + $0x224] sm:%s121]
                %213 = vst [vmem:[%s129 + $0xa4] sm:%s121] %v212
                %v214 = vld [vmem:[%s128 + $0x228] sm:%s121]
                %215 = vst [vmem:[%s129 + $0xa8] sm:%s121] %v214
                %v216 = vld [vmem:[%s128 + $0x22c] sm:%s121]
                %217 = vst [vmem:[%s129 + $0xac] sm:%s121] %v216
                %v218 = vld [vmem:[%s128 + $0x230] sm:%s121]
                %219 = vst [vmem:[%s129 + $0xb0] sm:%s121] %v218
                %v220 = vld [vmem:[%s128 + $0x234] sm:%s121]
                %221 = vst [vmem:[%s129 + $0xb4] sm:%s121] %v220
                %v222 = vld [vmem:[%s128 + $0x238] sm:%s121]
                %223 = vst [vmem:[%s129 + $0xb8] sm:%s121] %v222
                %v224 = vld [vmem:[%s128 + $0x23c] sm:%s121]
                %225 = vst [vmem:[%s129 + $0xbc] sm:%s121] %v224
                %v226 = vld [vmem:[%s128 + $0x300] sm:%s121]
                %227 = vst [vmem:[%s129 + $0xc0] sm:%s121] %v226
                %v228 = vld [vmem:[%s128 + $0x304] sm:%s121]
                %229 = vst [vmem:[%s129 + $0xc4] sm:%s121] %v228
                %v230 = vld [vmem:[%s128 + $0x308] sm:%s121]
                %231 = vst [vmem:[%s129 + $0xc8] sm:%s121] %v230
                %v232 = vld [vmem:[%s128 + $0x30c] sm:%s121]
                %233 = vst [vmem:[%s129 + $0xcc] sm:%s121] %v232
                %v234 = vld [vmem:[%s128 + $0x310] sm:%s121]
                %235 = vst [vmem:[%s129 + $0xd0] sm:%s121] %v234
                %v236 = vld [vmem:[%s128 + $0x314] sm:%s121]
                %237 = vst [vmem:[%s129 + $0xd4] sm:%s121] %v236
                %v238 = vld [vmem:[%s128 + $0x318] sm:%s121]
                %239 = vst [vmem:[%s129 + $0xd8] sm:%s121] %v238
                %v240 = vld [vmem:[%s128 + $0x31c] sm:%s121]
                %241 = vst [vmem:[%s129 + $0xdc] sm:%s121] %v240
                %v242 = vld [vmem:[%s128 + $0x320] sm:%s121]
                %243 = vst [vmem:[%s129 + $0xe0] sm:%s121] %v242
                %v244 = vld [vmem:[%s128 + $0x324] sm:%s121]
                %245 = vst [vmem:[%s129 + $0xe4] sm:%s121] %v244
                %v246 = vld [vmem:[%s128 + $0x328] sm:%s121]
                %247 = vst [vmem:[%s129 + $0xe8] sm:%s121] %v246
                %v248 = vld [vmem:[%s128 + $0x32c] sm:%s121]
                %249 = vst [vmem:[%s129 + $0xec] sm:%s121] %v248
                %v250 = vld [vmem:[%s128 + $0x330] sm:%s121]
                %251 = vst [vmem:[%s129 + $0xf0] sm:%s121] %v250
                %v252 = vld [vmem:[%s128 + $0x334] sm:%s121]
                %253 = vst [vmem:[%s129 + $0xf4] sm:%s121] %v252
                %v254 = vld [vmem:[%s128 + $0x338] sm:%s121]
                %255 = vst [vmem:[%s129 + $0xf8] sm:%s121] %v254
                %v256 = vld [vmem:[%s128 + $0x33c] sm:%s121]
                %257 = vst [vmem:[%s129 + $0xfc] sm:%s121] %v256
                %v258 = vld [vmem:[%s128 + $0x400] sm:%s121]
                %259 = vst [vmem:[%s129 + $0x100] sm:%s121] %v258
                %v260 = vld [vmem:[%s128 + $0x404] sm:%s121]
                %261 = vst [vmem:[%s129 + $0x104] sm:%s121] %v260
                %v262 = vld [vmem:[%s128 + $0x408] sm:%s121]
                %263 = vst [vmem:[%s129 + $0x108] sm:%s121] %v262
                %v264 = vld [vmem:[%s128 + $0x40c] sm:%s121]
                %265 = vst [vmem:[%s129 + $0x10c] sm:%s121] %v264
                %v266 = vld [vmem:[%s128 + $0x410] sm:%s121]
                %267 = vst [vmem:[%s129 + $0x110] sm:%s121] %v266
                %v268 = vld [vmem:[%s128 + $0x414] sm:%s121]
                %269 = vst [vmem:[%s129 + $0x114] sm:%s121] %v268
                %v270 = vld [vmem:[%s128 + $0x418] sm:%s121]
                %271 = vst [vmem:[%s129 + $0x118] sm:%s121] %v270
                %v272 = vld [vmem:[%s128 + $0x41c] sm:%s121]
                %273 = vst [vmem:[%s129 + $0x11c] sm:%s121] %v272
                %v274 = vld [vmem:[%s128 + $0x420] sm:%s121]
                %275 = vst [vmem:[%s129 + $0x120] sm:%s121] %v274
                %v276 = vld [vmem:[%s128 + $0x424] sm:%s121]
                %277 = vst [vmem:[%s129 + $0x124] sm:%s121] %v276
                %v278 = vld [vmem:[%s128 + $0x428] sm:%s121]
                %279 = vst [vmem:[%s129 + $0x128] sm:%s121] %v278
                %v280 = vld [vmem:[%s128 + $0x42c] sm:%s121]
                %281 = vst [vmem:[%s129 + $0x12c] sm:%s121] %v280
                %v282 = vld [vmem:[%s128 + $0x430] sm:%s121]
                %283 = vst [vmem:[%s129 + $0x130] sm:%s121] %v282
                %v284 = vld [vmem:[%s128 + $0x434] sm:%s121]
                %285 = vst [vmem:[%s129 + $0x134] sm:%s121] %v284
                %v286 = vld [vmem:[%s128 + $0x438] sm:%s121]
                %287 = vst [vmem:[%s129 + $0x138] sm:%s121] %v286
                %v288 = vld [vmem:[%s128 + $0x43c] sm:%s121]
                %289 = vst [vmem:[%s129 + $0x13c] sm:%s121] %v288
                %v290 = vld [vmem:[%s128 + $0x500] sm:%s121]
                %291 = vst [vmem:[%s129 + $0x140] sm:%s121] %v290
                %v292 = vld [vmem:[%s128 + $0x504] sm:%s121]
                %293 = vst [vmem:[%s129 + $0x144] sm:%s121] %v292
                %v294 = vld [vmem:[%s128 + $0x508] sm:%s121]
                %295 = vst [vmem:[%s129 + $0x148] sm:%s121] %v294
                %v296 = vld [vmem:[%s128 + $0x50c] sm:%s121]
                %297 = vst [vmem:[%s129 + $0x14c] sm:%s121] %v296
                %v298 = vld [vmem:[%s128 + $0x510] sm:%s121]
                %299 = vst [vmem:[%s129 + $0x150] sm:%s121] %v298
                %v300 = vld [vmem:[%s128 + $0x514] sm:%s121]
                %301 = vst [vmem:[%s129 + $0x154] sm:%s121] %v300
                %v302 = vld [vmem:[%s128 + $0x518] sm:%s121]
                %303 = vst [vmem:[%s129 + $0x158] sm:%s121] %v302
                %v304 = vld [vmem:[%s128 + $0x51c] sm:%s121]
                %305 = vst [vmem:[%s129 + $0x15c] sm:%s121] %v304
                %v306 = vld [vmem:[%s128 + $0x520] sm:%s121]
                %307 = vst [vmem:[%s129 + $0x160] sm:%s121] %v306
                %v308 = vld [vmem:[%s128 + $0x524] sm:%s121]
                %309 = vst [vmem:[%s129 + $0x164] sm:%s121] %v308
                %v310 = vld [vmem:[%s128 + $0x528] sm:%s121]
                %311 = vst [vmem:[%s129 + $0x168] sm:%s121] %v310
                %v312 = vld [vmem:[%s128 + $0x52c] sm:%s121]
                %313 = vst [vmem:[%s129 + $0x16c] sm:%s121] %v312
                %v314 = vld [vmem:[%s128 + $0x530] sm:%s121]
                %315 = vst [vmem:[%s129 + $0x170] sm:%s121] %v314
                %v316 = vld [vmem:[%s128 + $0x534] sm:%s121]
                %317 = vst [vmem:[%s129 + $0x174] sm:%s121] %v316
                %v318 = vld [vmem:[%s128 + $0x538] sm:%s121]
                %319 = vst [vmem:[%s129 + $0x178] sm:%s121] %v318
                %v320 = vld [vmem:[%s128 + $0x53c] sm:%s121]
                %321 = vst [vmem:[%s129 + $0x17c] sm:%s121] %v320
                %v322 = vld [vmem:[%s128 + $0x600] sm:%s121]
                %323 = vst [vmem:[%s129 + $0x180] sm:%s121] %v322
                %v324 = vld [vmem:[%s128 + $0x604] sm:%s121]
                %325 = vst [vmem:[%s129 + $0x184] sm:%s121] %v324
                %v326 = vld [vmem:[%s128 + $0x608] sm:%s121]
                %327 = vst [vmem:[%s129 + $0x188] sm:%s121] %v326
                %v328 = vld [vmem:[%s128 + $0x60c] sm:%s121]
                %329 = vst [vmem:[%s129 + $0x18c] sm:%s121] %v328
                %v330 = vld [vmem:[%s128 + $0x610] sm:%s121]
                %331 = vst [vmem:[%s129 + $0x190] sm:%s121] %v330
                %v332 = vld [vmem:[%s128 + $0x614] sm:%s121]
                %333 = vst [vmem:[%s129 + $0x194] sm:%s121] %v332
                %v334 = vld [vmem:[%s128 + $0x618] sm:%s121]
                %335 = vst [vmem:[%s129 + $0x198] sm:%s121] %v334
                %v336 = vld [vmem:[%s128 + $0x61c] sm:%s121]
                %337 = vst [vmem:[%s129 + $0x19c] sm:%s121] %v336
                %v338 = vld [vmem:[%s128 + $0x620] sm:%s121]
                %339 = vst [vmem:[%s129 + $0x1a0] sm:%s121] %v338
                %v340 = vld [vmem:[%s128 + $0x624] sm:%s121]
                %341 = vst [vmem:[%s129 + $0x1a4] sm:%s121] %v340
                %v342 = vld [vmem:[%s128 + $0x628] sm:%s121]
                %343 = vst [vmem:[%s129 + $0x1a8] sm:%s121] %v342
                %v344 = vld [vmem:[%s128 + $0x62c] sm:%s121]
                %345 = vst [vmem:[%s129 + $0x1ac] sm:%s121] %v344
                %v346 = vld [vmem:[%s128 + $0x630] sm:%s121]
                %347 = vst [vmem:[%s129 + $0x1b0] sm:%s121] %v346
                %v348 = vld [vmem:[%s128 + $0x634] sm:%s121]
                %349 = vst [vmem:[%s129 + $0x1b4] sm:%s121] %v348
                %v350 = vld [vmem:[%s128 + $0x638] sm:%s121]
                %351 = vst [vmem:[%s129 + $0x1b8] sm:%s121] %v350
                %v352 = vld [vmem:[%s128 + $0x63c] sm:%s121]
                %353 = vst [vmem:[%s129 + $0x1bc] sm:%s121] %v352
                %v354 = vld [vmem:[%s128 + $0x700] sm:%s121]
                %355 = vst [vmem:[%s129 + $0x1c0] sm:%s121] %v354
                %v356 = vld [vmem:[%s128 + $0x704] sm:%s121]
                %357 = vst [vmem:[%s129 + $0x1c4] sm:%s121] %v356
                %v358 = vld [vmem:[%s128 + $0x708] sm:%s121]
                %359 = vst [vmem:[%s129 + $0x1c8] sm:%s121] %v358
                %v360 = vld [vmem:[%s128 + $0x70c] sm:%s121]
                %361 = vst [vmem:[%s129 + $0x1cc] sm:%s121] %v360
                %v362 = vld [vmem:[%s128 + $0x710] sm:%s121]
                %363 = vst [vmem:[%s129 + $0x1d0] sm:%s121] %v362
                %v364 = vld [vmem:[%s128 + $0x714] sm:%s121]
                %365 = vst [vmem:[%s129 + $0x1d4] sm:%s121] %v364
                %v366 = vld [vmem:[%s128 + $0x718] sm:%s121]
                %367 = vst [vmem:[%s129 + $0x1d8] sm:%s121] %v366
                %v368 = vld [vmem:[%s128 + $0x71c] sm:%s121]
                %369 = vst [vmem:[%s129 + $0x1dc] sm:%s121] %v368
                %v370 = vld [vmem:[%s128 + $0x720] sm:%s121]
                %371 = vst [vmem:[%s129 + $0x1e0] sm:%s121] %v370
                %v372 = vld [vmem:[%s128 + $0x724] sm:%s121]
                %373 = vst [vmem:[%s129 + $0x1e4] sm:%s121] %v372
                %v374 = vld [vmem:[%s128 + $0x728] sm:%s121]
                %375 = vst [vmem:[%s129 + $0x1e8] sm:%s121] %v374
                %v376 = vld [vmem:[%s128 + $0x72c] sm:%s121]
                %377 = vst [vmem:[%s129 + $0x1ec] sm:%s121] %v376
                %v378 = vld [vmem:[%s128 + $0x730] sm:%s121]
                %379 = vst [vmem:[%s129 + $0x1f0] sm:%s121] %v378
                %v380 = vld [vmem:[%s128 + $0x734] sm:%s121]
                %381 = vst [vmem:[%s129 + $0x1f4] sm:%s121] %v380
                %v382 = vld [vmem:[%s128 + $0x738] sm:%s121]
                %383 = vst [vmem:[%s129 + $0x1f8] sm:%s121] %v382
                %v384 = vld [vmem:[%s128 + $0x73c] sm:%s121]
                %385 = vst [vmem:[%s129 + $0x1fc] sm:%s121] %v384
                %v386 = vld [vmem:[%s128 + $0x800] sm:%s121]
                %387 = vst [vmem:[%s129 + $0x200] sm:%s121] %v386
                %v388 = vld [vmem:[%s128 + $0x804] sm:%s121]
                %389 = vst [vmem:[%s129 + $0x204] sm:%s121] %v388
                %v390 = vld [vmem:[%s128 + $0x808] sm:%s121]
                %391 = vst [vmem:[%s129 + $0x208] sm:%s121] %v390
                %v392 = vld [vmem:[%s128 + $0x80c] sm:%s121]
                %393 = vst [vmem:[%s129 + $0x20c] sm:%s121] %v392
                %v394 = vld [vmem:[%s128 + $0x810] sm:%s121]
                %395 = vst [vmem:[%s129 + $0x210] sm:%s121] %v394
                %v396 = vld [vmem:[%s128 + $0x814] sm:%s121]
                %397 = vst [vmem:[%s129 + $0x214] sm:%s121] %v396
                %v398 = vld [vmem:[%s128 + $0x818] sm:%s121]
                %399 = vst [vmem:[%s129 + $0x218] sm:%s121] %v398
                %v400 = vld [vmem:[%s128 + $0x81c] sm:%s121]
                %401 = vst [vmem:[%s129 + $0x21c] sm:%s121] %v400
                %v402 = vld [vmem:[%s128 + $0x820] sm:%s121]
                %403 = vst [vmem:[%s129 + $0x220] sm:%s121] %v402
                %v404 = vld [vmem:[%s128 + $0x824] sm:%s121]
                %405 = vst [vmem:[%s129 + $0x224] sm:%s121] %v404
                %v406 = vld [vmem:[%s128 + $0x828] sm:%s121]
                %407 = vst [vmem:[%s129 + $0x228] sm:%s121] %v406
                %v408 = vld [vmem:[%s128 + $0x82c] sm:%s121]
                %409 = vst [vmem:[%s129 + $0x22c] sm:%s121] %v408
                %v410 = vld [vmem:[%s128 + $0x830] sm:%s121]
                %411 = vst [vmem:[%s129 + $0x230] sm:%s121] %v410
                %v412 = vld [vmem:[%s128 + $0x834] sm:%s121]
                %413 = vst [vmem:[%s129 + $0x234] sm:%s121] %v412
                %v414 = vld [vmem:[%s128 + $0x838] sm:%s121]
                %415 = vst [vmem:[%s129 + $0x238] sm:%s121] %v414
                %v416 = vld [vmem:[%s128 + $0x83c] sm:%s121]
                %417 = vst [vmem:[%s129 + $0x23c] sm:%s121] %v416
                %v418 = vld [vmem:[%s128 + $0x900] sm:%s121]
                %419 = vst [vmem:[%s129 + $0x240] sm:%s121] %v418
                %v420 = vld [vmem:[%s128 + $0x904] sm:%s121]
                %421 = vst [vmem:[%s129 + $0x244] sm:%s121] %v420
                %v422 = vld [vmem:[%s128 + $0x908] sm:%s121]
                %423 = vst [vmem:[%s129 + $0x248] sm:%s121] %v422
                %v424 = vld [vmem:[%s128 + $0x90c] sm:%s121]
                %425 = vst [vmem:[%s129 + $0x24c] sm:%s121] %v424
                %v426 = vld [vmem:[%s128 + $0x910] sm:%s121]
                %427 = vst [vmem:[%s129 + $0x250] sm:%s121] %v426
                %v428 = vld [vmem:[%s128 + $0x914] sm:%s121]
                %429 = vst [vmem:[%s129 + $0x254] sm:%s121] %v428
                %v430 = vld [vmem:[%s128 + $0x918] sm:%s121]
                %431 = vst [vmem:[%s129 + $0x258] sm:%s121] %v430
                %v432 = vld [vmem:[%s128 + $0x91c] sm:%s121]
                %433 = vst [vmem:[%s129 + $0x25c] sm:%s121] %v432
                %v434 = vld [vmem:[%s128 + $0x920] sm:%s121]
                %435 = vst [vmem:[%s129 + $0x260] sm:%s121] %v434
                %v436 = vld [vmem:[%s128 + $0x924] sm:%s121]
                %437 = vst [vmem:[%s129 + $0x264] sm:%s121] %v436
                %v438 = vld [vmem:[%s128 + $0x928] sm:%s121]
                %439 = vst [vmem:[%s129 + $0x268] sm:%s121] %v438
                %v440 = vld [vmem:[%s128 + $0x92c] sm:%s121]
                %441 = vst [vmem:[%s129 + $0x26c] sm:%s121] %v440
                %v442 = vld [vmem:[%s128 + $0x930] sm:%s121]
                %443 = vst [vmem:[%s129 + $0x270] sm:%s121] %v442
                %v444 = vld [vmem:[%s128 + $0x934] sm:%s121]
                %445 = vst [vmem:[%s129 + $0x274] sm:%s121] %v444
                %v446 = vld [vmem:[%s128 + $0x938] sm:%s121]
                %447 = vst [vmem:[%s129 + $0x278] sm:%s121] %v446
                %v448 = vld [vmem:[%s128 + $0x93c] sm:%s121]
                %449 = vst [vmem:[%s129 + $0x27c] sm:%s121] %v448
                %v450 = vld [vmem:[%s128 + $0xa00] sm:%s121]
                %451 = vst [vmem:[%s129 + $0x280] sm:%s121] %v450
                %v452 = vld [vmem:[%s128 + $0xa04] sm:%s121]
                %453 = vst [vmem:[%s129 + $0x284] sm:%s121] %v452
                %v454 = vld [vmem:[%s128 + $0xa08] sm:%s121]
                %455 = vst [vmem:[%s129 + $0x288] sm:%s121] %v454
                %v456 = vld [vmem:[%s128 + $0xa0c] sm:%s121]
                %457 = vst [vmem:[%s129 + $0x28c] sm:%s121] %v456
                %v458 = vld [vmem:[%s128 + $0xa10] sm:%s121]
                %459 = vst [vmem:[%s129 + $0x290] sm:%s121] %v458
                %v460 = vld [vmem:[%s128 + $0xa14] sm:%s121]
                %461 = vst [vmem:[%s129 + $0x294] sm:%s121] %v460
                %v462 = vld [vmem:[%s128 + $0xa18] sm:%s121]
                %463 = vst [vmem:[%s129 + $0x298] sm:%s121] %v462
                %v464 = vld [vmem:[%s128 + $0xa1c] sm:%s121]
                %465 = vst [vmem:[%s129 + $0x29c] sm:%s121] %v464
                %v466 = vld [vmem:[%s128 + $0xa20] sm:%s121]
                %467 = vst [vmem:[%s129 + $0x2a0] sm:%s121] %v466
                %v468 = vld [vmem:[%s128 + $0xa24] sm:%s121]
                %469 = vst [vmem:[%s129 + $0x2a4] sm:%s121] %v468
                %v470 = vld [vmem:[%s128 + $0xa28] sm:%s121]
                %471 = vst [vmem:[%s129 + $0x2a8] sm:%s121] %v470
                %v472 = vld [vmem:[%s128 + $0xa2c] sm:%s121]
                %473 = vst [vmem:[%s129 + $0x2ac] sm:%s121] %v472
                %v474 = vld [vmem:[%s128 + $0xa30] sm:%s121]
                %475 = vst [vmem:[%s129 + $0x2b0] sm:%s121] %v474
                %v476 = vld [vmem:[%s128 + $0xa34] sm:%s121]
                %477 = vst [vmem:[%s129 + $0x2b4] sm:%s121] %v476
                %v478 = vld [vmem:[%s128 + $0xa38] sm:%s121]
                %479 = vst [vmem:[%s129 + $0x2b8] sm:%s121] %v478
                %v480 = vld [vmem:[%s128 + $0xa3c] sm:%s121]
                %481 = vst [vmem:[%s129 + $0x2bc] sm:%s121] %v480
                %v482 = vld [vmem:[%s128 + $0xb00] sm:%s121]
                %483 = vst [vmem:[%s129 + $0x2c0] sm:%s121] %v482
                %v484 = vld [vmem:[%s128 + $0xb04] sm:%s121]
                %485 = vst [vmem:[%s129 + $0x2c4] sm:%s121] %v484
                %v486 = vld [vmem:[%s128 + $0xb08] sm:%s121]
                %487 = vst [vmem:[%s129 + $0x2c8] sm:%s121] %v486
                %v488 = vld [vmem:[%s128 + $0xb0c] sm:%s121]
                %489 = vst [vmem:[%s129 + $0x2cc] sm:%s121] %v488
                %v490 = vld [vmem:[%s128 + $0xb10] sm:%s121]
                %491 = vst [vmem:[%s129 + $0x2d0] sm:%s121] %v490
                %v492 = vld [vmem:[%s128 + $0xb14] sm:%s121]
                %493 = vst [vmem:[%s129 + $0x2d4] sm:%s121] %v492
                %v494 = vld [vmem:[%s128 + $0xb18] sm:%s121]
                %495 = vst [vmem:[%s129 + $0x2d8] sm:%s121] %v494
                %v496 = vld [vmem:[%s128 + $0xb1c] sm:%s121]
                %497 = vst [vmem:[%s129 + $0x2dc] sm:%s121] %v496
                %v498 = vld [vmem:[%s128 + $0xb20] sm:%s121]
                %499 = vst [vmem:[%s129 + $0x2e0] sm:%s121] %v498
                %v500 = vld [vmem:[%s128 + $0xb24] sm:%s121]
                %501 = vst [vmem:[%s129 + $0x2e4] sm:%s121] %v500
                %v502 = vld [vmem:[%s128 + $0xb28] sm:%s121]
                %503 = vst [vmem:[%s129 + $0x2e8] sm:%s121] %v502
                %v504 = vld [vmem:[%s128 + $0xb2c] sm:%s121]
                %505 = vst [vmem:[%s129 + $0x2ec] sm:%s121] %v504
                %v506 = vld [vmem:[%s128 + $0xb30] sm:%s121]
                %507 = vst [vmem:[%s129 + $0x2f0] sm:%s121] %v506
                %v508 = vld [vmem:[%s128 + $0xb34] sm:%s121]
                %509 = vst [vmem:[%s129 + $0x2f4] sm:%s121] %v508
                %v510 = vld [vmem:[%s128 + $0xb38] sm:%s121]
                %511 = vst [vmem:[%s129 + $0x2f8] sm:%s121] %v510
                %v512 = vld [vmem:[%s128 + $0xb3c] sm:%s121]
                %513 = vst [vmem:[%s129 + $0x2fc] sm:%s121] %v512
                %v514 = vld [vmem:[%s128 + $0xc00] sm:%s121]
                %515 = vst [vmem:[%s129 + $0x300] sm:%s121] %v514
                %v516 = vld [vmem:[%s128 + $0xc04] sm:%s121]
                %517 = vst [vmem:[%s129 + $0x304] sm:%s121] %v516
                %v518 = vld [vmem:[%s128 + $0xc08] sm:%s121]
                %519 = vst [vmem:[%s129 + $0x308] sm:%s121] %v518
                %v520 = vld [vmem:[%s128 + $0xc0c] sm:%s121]
                %521 = vst [vmem:[%s129 + $0x30c] sm:%s121] %v520
                %v522 = vld [vmem:[%s128 + $0xc10] sm:%s121]
                %523 = vst [vmem:[%s129 + $0x310] sm:%s121] %v522
                %v524 = vld [vmem:[%s128 + $0xc14] sm:%s121]
                %525 = vst [vmem:[%s129 + $0x314] sm:%s121] %v524
                %v526 = vld [vmem:[%s128 + $0xc18] sm:%s121]
                %527 = vst [vmem:[%s129 + $0x318] sm:%s121] %v526
                %v528 = vld [vmem:[%s128 + $0xc1c] sm:%s121]
                %529 = vst [vmem:[%s129 + $0x31c] sm:%s121] %v528
                %v530 = vld [vmem:[%s128 + $0xc20] sm:%s121]
                %531 = vst [vmem:[%s129 + $0x320] sm:%s121] %v530
                %v532 = vld [vmem:[%s128 + $0xc24] sm:%s121]
                %533 = vst [vmem:[%s129 + $0x324] sm:%s121] %v532
                %v534 = vld [vmem:[%s128 + $0xc28] sm:%s121]
                %535 = vst [vmem:[%s129 + $0x328] sm:%s121] %v534
                %v536 = vld [vmem:[%s128 + $0xc2c] sm:%s121]
                %537 = vst [vmem:[%s129 + $0x32c] sm:%s121] %v536
                %v538 = vld [vmem:[%s128 + $0xc30] sm:%s121]
                %539 = vst [vmem:[%s129 + $0x330] sm:%s121] %v538
                %v540 = vld [vmem:[%s128 + $0xc34] sm:%s121]
                %541 = vst [vmem:[%s129 + $0x334] sm:%s121] %v540
                %v542 = vld [vmem:[%s128 + $0xc38] sm:%s121]
                %543 = vst [vmem:[%s129 + $0x338] sm:%s121] %v542
                %v544 = vld [vmem:[%s128 + $0xc3c] sm:%s121]
                %545 = vst [vmem:[%s129 + $0x33c] sm:%s121] %v544
                %v546 = vld [vmem:[%s128 + $0xd00] sm:%s121]
                %547 = vst [vmem:[%s129 + $0x340] sm:%s121] %v546
                %v548 = vld [vmem:[%s128 + $0xd04] sm:%s121]
                %549 = vst [vmem:[%s129 + $0x344] sm:%s121] %v548
                %v550 = vld [vmem:[%s128 + $0xd08] sm:%s121]
                %551 = vst [vmem:[%s129 + $0x348] sm:%s121] %v550
                %v552 = vld [vmem:[%s128 + $0xd0c] sm:%s121]
                %553 = vst [vmem:[%s129 + $0x34c] sm:%s121] %v552
                %v554 = vld [vmem:[%s128 + $0xd10] sm:%s121]
                %555 = vst [vmem:[%s129 + $0x350] sm:%s121] %v554
                %v556 = vld [vmem:[%s128 + $0xd14] sm:%s121]
                %557 = vst [vmem:[%s129 + $0x354] sm:%s121] %v556
                %v558 = vld [vmem:[%s128 + $0xd18] sm:%s121]
                %559 = vst [vmem:[%s129 + $0x358] sm:%s121] %v558
                %v560 = vld [vmem:[%s128 + $0xd1c] sm:%s121]
                %561 = vst [vmem:[%s129 + $0x35c] sm:%s121] %v560
                %v562 = vld [vmem:[%s128 + $0xd20] sm:%s121]
                %563 = vst [vmem:[%s129 + $0x360] sm:%s121] %v562
                %v564 = vld [vmem:[%s128 + $0xd24] sm:%s121]
                %565 = vst [vmem:[%s129 + $0x364] sm:%s121] %v564
                %v566 = vld [vmem:[%s128 + $0xd28] sm:%s121]
                %567 = vst [vmem:[%s129 + $0x368] sm:%s121] %v566
                %v568 = vld [vmem:[%s128 + $0xd2c] sm:%s121]
                %569 = vst [vmem:[%s129 + $0x36c] sm:%s121] %v568
                %v570 = vld [vmem:[%s128 + $0xd30] sm:%s121]
                %571 = vst [vmem:[%s129 + $0x370] sm:%s121] %v570
                %v572 = vld [vmem:[%s128 + $0xd34] sm:%s121]
                %573 = vst [vmem:[%s129 + $0x374] sm:%s121] %v572
                %v574 = vld [vmem:[%s128 + $0xd38] sm:%s121]
                %575 = vst [vmem:[%s129 + $0x378] sm:%s121] %v574
                %v576 = vld [vmem:[%s128 + $0xd3c] sm:%s121]
                %577 = vst [vmem:[%s129 + $0x37c] sm:%s121] %v576
                %v578 = vld [vmem:[%s128 + $0xe00] sm:%s121]
                %579 = vst [vmem:[%s129 + $0x380] sm:%s121] %v578
                %v580 = vld [vmem:[%s128 + $0xe04] sm:%s121]
                %581 = vst [vmem:[%s129 + $0x384] sm:%s121] %v580
                %v582 = vld [vmem:[%s128 + $0xe08] sm:%s121]
                %583 = vst [vmem:[%s129 + $0x388] sm:%s121] %v582
                %v584 = vld [vmem:[%s128 + $0xe0c] sm:%s121]
                %585 = vst [vmem:[%s129 + $0x38c] sm:%s121] %v584
                %v586 = vld [vmem:[%s128 + $0xe10] sm:%s121]
                %587 = vst [vmem:[%s129 + $0x390] sm:%s121] %v586
                %v588 = vld [vmem:[%s128 + $0xe14] sm:%s121]
                %589 = vst [vmem:[%s129 + $0x394] sm:%s121] %v588
                %v590 = vld [vmem:[%s128 + $0xe18] sm:%s121]
                %591 = vst [vmem:[%s129 + $0x398] sm:%s121] %v590
                %v592 = vld [vmem:[%s128 + $0xe1c] sm:%s121]
                %593 = vst [vmem:[%s129 + $0x39c] sm:%s121] %v592
                %v594 = vld [vmem:[%s128 + $0xe20] sm:%s121]
                %595 = vst [vmem:[%s129 + $0x3a0] sm:%s121] %v594
                %v596 = vld [vmem:[%s128 + $0xe24] sm:%s121]
                %597 = vst [vmem:[%s129 + $0x3a4] sm:%s121] %v596
                %v598 = vld [vmem:[%s128 + $0xe28] sm:%s121]
                %599 = vst [vmem:[%s129 + $0x3a8] sm:%s121] %v598
                %v600 = vld [vmem:[%s128 + $0xe2c] sm:%s121]
                %601 = vst [vmem:[%s129 + $0x3ac] sm:%s121] %v600
                %v602 = vld [vmem:[%s128 + $0xe30] sm:%s121]
                %603 = vst [vmem:[%s129 + $0x3b0] sm:%s121] %v602
                %v604 = vld [vmem:[%s128 + $0xe34] sm:%s121]
                %605 = vst [vmem:[%s129 + $0x3b4] sm:%s121] %v604
                %v606 = vld [vmem:[%s128 + $0xe38] sm:%s121]
                %607 = vst [vmem:[%s129 + $0x3b8] sm:%s121] %v606
                %v608 = vld [vmem:[%s128 + $0xe3c] sm:%s121]
                %609 = vst [vmem:[%s129 + $0x3bc] sm:%s121] %v608
                %v610 = vld [vmem:[%s128 + $0xf00] sm:%s121]
                %611 = vst [vmem:[%s129 + $0x3c0] sm:%s121] %v610
                %v612 = vld [vmem:[%s128 + $0xf04] sm:%s121]
                %613 = vst [vmem:[%s129 + $0x3c4] sm:%s121] %v612
                %v614 = vld [vmem:[%s128 + $0xf08] sm:%s121]
                %615 = vst [vmem:[%s129 + $0x3c8] sm:%s121] %v614
                %v616 = vld [vmem:[%s128 + $0xf0c] sm:%s121]
                %617 = vst [vmem:[%s129 + $0x3cc] sm:%s121] %v616
                %v618 = vld [vmem:[%s128 + $0xf10] sm:%s121]
                %619 = vst [vmem:[%s129 + $0x3d0] sm:%s121] %v618
                %v620 = vld [vmem:[%s128 + $0xf14] sm:%s121]
                %621 = vst [vmem:[%s129 + $0x3d4] sm:%s121] %v620
                %v622 = vld [vmem:[%s128 + $0xf18] sm:%s121]
                %623 = vst [vmem:[%s129 + $0x3d8] sm:%s121] %v622
                %v624 = vld [vmem:[%s128 + $0xf1c] sm:%s121]
                %625 = vst [vmem:[%s129 + $0x3dc] sm:%s121] %v624
                %v626 = vld [vmem:[%s128 + $0xf20] sm:%s121]
                %627 = vst [vmem:[%s129 + $0x3e0] sm:%s121] %v626
                %v628 = vld [vmem:[%s128 + $0xf24] sm:%s121]
                %629 = vst [vmem:[%s129 + $0x3e4] sm:%s121] %v628
                %v630 = vld [vmem:[%s128 + $0xf28] sm:%s121]
                %631 = vst [vmem:[%s129 + $0x3e8] sm:%s121] %v630
                %v632 = vld [vmem:[%s128 + $0xf2c] sm:%s121]
                %633 = vst [vmem:[%s129 + $0x3ec] sm:%s121] %v632
                %v634 = vld [vmem:[%s128 + $0xf30] sm:%s121]
                %635 = vst [vmem:[%s129 + $0x3f0] sm:%s121] %v634
                %v636 = vld [vmem:[%s128 + $0xf34] sm:%s121]
                %637 = vst [vmem:[%s129 + $0x3f4] sm:%s121] %v636
                %v638 = vld [vmem:[%s128 + $0xf38] sm:%s121]
                %639 = vst [vmem:[%s129 + $0x3f8] sm:%s121] %v638
                %v640 = vld [vmem:[%s128 + $0xf3c] sm:%s121]
                %641 = vst [vmem:[%s129 + $0x3fc] sm:%s121] %v640
                %v642 = vld [vmem:[%s128 + $0x1000] sm:%s121]
                %643 = vst [vmem:[%s129 + $0x400] sm:%s121] %v642
                %v644 = vld [vmem:[%s128 + $0x1004] sm:%s121]
                %645 = vst [vmem:[%s129 + $0x404] sm:%s121] %v644
                %v646 = vld [vmem:[%s128 + $0x1008] sm:%s121]
                %647 = vst [vmem:[%s129 + $0x408] sm:%s121] %v646
                %v648 = vld [vmem:[%s128 + $0x100c] sm:%s121]
                %649 = vst [vmem:[%s129 + $0x40c] sm:%s121] %v648
                %v650 = vld [vmem:[%s128 + $0x1010] sm:%s121]
                %651 = vst [vmem:[%s129 + $0x410] sm:%s121] %v650
                %v652 = vld [vmem:[%s128 + $0x1014] sm:%s121]
                %653 = vst [vmem:[%s129 + $0x414] sm:%s121] %v652
                %v654 = vld [vmem:[%s128 + $0x1018] sm:%s121]
                %655 = vst [vmem:[%s129 + $0x418] sm:%s121] %v654
                %v656 = vld [vmem:[%s128 + $0x101c] sm:%s121]
                %657 = vst [vmem:[%s129 + $0x41c] sm:%s121] %v656
                %v658 = vld [vmem:[%s128 + $0x1020] sm:%s121]
                %659 = vst [vmem:[%s129 + $0x420] sm:%s121] %v658
                %v660 = vld [vmem:[%s128 + $0x1024] sm:%s121]
                %661 = vst [vmem:[%s129 + $0x424] sm:%s121] %v660
                %v662 = vld [vmem:[%s128 + $0x1028] sm:%s121]
                %663 = vst [vmem:[%s129 + $0x428] sm:%s121] %v662
                %v664 = vld [vmem:[%s128 + $0x102c] sm:%s121]
                %665 = vst [vmem:[%s129 + $0x42c] sm:%s121] %v664
                %v666 = vld [vmem:[%s128 + $0x1030] sm:%s121]
                %667 = vst [vmem:[%s129 + $0x430] sm:%s121] %v666
                %v668 = vld [vmem:[%s128 + $0x1034] sm:%s121]
                %669 = vst [vmem:[%s129 + $0x434] sm:%s121] %v668
                %v670 = vld [vmem:[%s128 + $0x1038] sm:%s121]
                %671 = vst [vmem:[%s129 + $0x438] sm:%s121] %v670
                %v672 = vld [vmem:[%s128 + $0x103c] sm:%s121]
                %673 = vst [vmem:[%s129 + $0x43c] sm:%s121] %v672
                %v674 = vld [vmem:[%s128 + $0x1100] sm:%s121]
                %675 = vst [vmem:[%s129 + $0x440] sm:%s121] %v674
                %v676 = vld [vmem:[%s128 + $0x1104] sm:%s121]
                %677 = vst [vmem:[%s129 + $0x444] sm:%s121] %v676
                %v678 = vld [vmem:[%s128 + $0x1108] sm:%s121]
                %679 = vst [vmem:[%s129 + $0x448] sm:%s121] %v678
                %v680 = vld [vmem:[%s128 + $0x110c] sm:%s121]
                %681 = vst [vmem:[%s129 + $0x44c] sm:%s121] %v680
                %v682 = vld [vmem:[%s128 + $0x1110] sm:%s121]
                %683 = vst [vmem:[%s129 + $0x450] sm:%s121] %v682
                %v684 = vld [vmem:[%s128 + $0x1114] sm:%s121]
                %685 = vst [vmem:[%s129 + $0x454] sm:%s121] %v684
                %v686 = vld [vmem:[%s128 + $0x1118] sm:%s121]
                %687 = vst [vmem:[%s129 + $0x458] sm:%s121] %v686
                %v688 = vld [vmem:[%s128 + $0x111c] sm:%s121]
                %689 = vst [vmem:[%s129 + $0x45c] sm:%s121] %v688
                %v690 = vld [vmem:[%s128 + $0x1120] sm:%s121]
                %691 = vst [vmem:[%s129 + $0x460] sm:%s121] %v690
                %v692 = vld [vmem:[%s128 + $0x1124] sm:%s121]
                %693 = vst [vmem:[%s129 + $0x464] sm:%s121] %v692
                %v694 = vld [vmem:[%s128 + $0x1128] sm:%s121]
                %695 = vst [vmem:[%s129 + $0x468] sm:%s121] %v694
                %v696 = vld [vmem:[%s128 + $0x112c] sm:%s121]
                %697 = vst [vmem:[%s129 + $0x46c] sm:%s121] %v696
                %v698 = vld [vmem:[%s128 + $0x1130] sm:%s121]
                %699 = vst [vmem:[%s129 + $0x470] sm:%s121] %v698
                %v700 = vld [vmem:[%s128 + $0x1134] sm:%s121]
                %701 = vst [vmem:[%s129 + $0x474] sm:%s121] %v700
                %v702 = vld [vmem:[%s128 + $0x1138] sm:%s121]
                %703 = vst [vmem:[%s129 + $0x478] sm:%s121] %v702
                %v704 = vld [vmem:[%s128 + $0x113c] sm:%s121]
                %705 = vst [vmem:[%s129 + $0x47c] sm:%s121] %v704
                %v706 = vld [vmem:[%s128 + $0x1200] sm:%s121]
                %707 = vst [vmem:[%s129 + $0x480] sm:%s121] %v706
                %v708 = vld [vmem:[%s128 + $0x1204] sm:%s121]
                %709 = vst [vmem:[%s129 + $0x484] sm:%s121] %v708
                %v710 = vld [vmem:[%s128 + $0x1208] sm:%s121]
                %711 = vst [vmem:[%s129 + $0x488] sm:%s121] %v710
                %v712 = vld [vmem:[%s128 + $0x120c] sm:%s121]
                %713 = vst [vmem:[%s129 + $0x48c] sm:%s121] %v712
                %v714 = vld [vmem:[%s128 + $0x1210] sm:%s121]
                %715 = vst [vmem:[%s129 + $0x490] sm:%s121] %v714
                %v716 = vld [vmem:[%s128 + $0x1214] sm:%s121]
                %717 = vst [vmem:[%s129 + $0x494] sm:%s121] %v716
                %v718 = vld [vmem:[%s128 + $0x1218] sm:%s121]
                %719 = vst [vmem:[%s129 + $0x498] sm:%s121] %v718
                %v720 = vld [vmem:[%s128 + $0x121c] sm:%s121]
                %721 = vst [vmem:[%s129 + $0x49c] sm:%s121] %v720
                %v722 = vld [vmem:[%s128 + $0x1220] sm:%s121]
                %723 = vst [vmem:[%s129 + $0x4a0] sm:%s121] %v722
                %v724 = vld [vmem:[%s128 + $0x1224] sm:%s121]
                %725 = vst [vmem:[%s129 + $0x4a4] sm:%s121] %v724
                %v726 = vld [vmem:[%s128 + $0x1228] sm:%s121]
                %727 = vst [vmem:[%s129 + $0x4a8] sm:%s121] %v726
                %v728 = vld [vmem:[%s128 + $0x122c] sm:%s121]
                %729 = vst [vmem:[%s129 + $0x4ac] sm:%s121] %v728
                %v730 = vld [vmem:[%s128 + $0x1230] sm:%s121]
                %731 = vst [vmem:[%s129 + $0x4b0] sm:%s121] %v730
                %v732 = vld [vmem:[%s128 + $0x1234] sm:%s121]
                %733 = vst [vmem:[%s129 + $0x4b4] sm:%s121] %v732
                %v734 = vld [vmem:[%s128 + $0x1238] sm:%s121]
                %735 = vst [vmem:[%s129 + $0x4b8] sm:%s121] %v734
                %v736 = vld [vmem:[%s128 + $0x123c] sm:%s121]
                %737 = vst [vmem:[%s129 + $0x4bc] sm:%s121] %v736
                %v738 = vld [vmem:[%s128 + $0x1300] sm:%s121]
                %739 = vst [vmem:[%s129 + $0x4c0] sm:%s121] %v738
                %v740 = vld [vmem:[%s128 + $0x1304] sm:%s121]
                %741 = vst [vmem:[%s129 + $0x4c4] sm:%s121] %v740
                %v742 = vld [vmem:[%s128 + $0x1308] sm:%s121]
                %743 = vst [vmem:[%s129 + $0x4c8] sm:%s121] %v742
                %v744 = vld [vmem:[%s128 + $0x130c] sm:%s121]
                %745 = vst [vmem:[%s129 + $0x4cc] sm:%s121] %v744
                %v746 = vld [vmem:[%s128 + $0x1310] sm:%s121]
                %747 = vst [vmem:[%s129 + $0x4d0] sm:%s121] %v746
                %v748 = vld [vmem:[%s128 + $0x1314] sm:%s121]
                %749 = vst [vmem:[%s129 + $0x4d4] sm:%s121] %v748
                %v750 = vld [vmem:[%s128 + $0x1318] sm:%s121]
                %751 = vst [vmem:[%s129 + $0x4d8] sm:%s121] %v750
                %v752 = vld [vmem:[%s128 + $0x131c] sm:%s121]
                %753 = vst [vmem:[%s129 + $0x4dc] sm:%s121] %v752
                %v754 = vld [vmem:[%s128 + $0x1320] sm:%s121]
                %755 = vst [vmem:[%s129 + $0x4e0] sm:%s121] %v754
                %v756 = vld [vmem:[%s128 + $0x1324] sm:%s121]
                %757 = vst [vmem:[%s129 + $0x4e4] sm:%s121] %v756
                %v758 = vld [vmem:[%s128 + $0x1328] sm:%s121]
                %759 = vst [vmem:[%s129 + $0x4e8] sm:%s121] %v758
                %v760 = vld [vmem:[%s128 + $0x132c] sm:%s121]
                %761 = vst [vmem:[%s129 + $0x4ec] sm:%s121] %v760
                %v762 = vld [vmem:[%s128 + $0x1330] sm:%s121]
                %763 = vst [vmem:[%s129 + $0x4f0] sm:%s121] %v762
                %v764 = vld [vmem:[%s128 + $0x1334] sm:%s121]
                %765 = vst [vmem:[%s129 + $0x4f4] sm:%s121] %v764
                %v766 = vld [vmem:[%s128 + $0x1338] sm:%s121]
                %767 = vst [vmem:[%s129 + $0x4f8] sm:%s121] %v766
                %v768 = vld [vmem:[%s128 + $0x133c] sm:%s121]
                %769 = vst [vmem:[%s129 + $0x4fc] sm:%s121] %v768
                %v770 = vld [vmem:[%s128 + $0x1400] sm:%s121]
                %771 = vst [vmem:[%s129 + $0x500] sm:%s121] %v770
                %v772 = vld [vmem:[%s128 + $0x1404] sm:%s121]
                %773 = vst [vmem:[%s129 + $0x504] sm:%s121] %v772
                %v774 = vld [vmem:[%s128 + $0x1408] sm:%s121]
                %775 = vst [vmem:[%s129 + $0x508] sm:%s121] %v774
                %v776 = vld [vmem:[%s128 + $0x140c] sm:%s121]
                %777 = vst [vmem:[%s129 + $0x50c] sm:%s121] %v776
                %v778 = vld [vmem:[%s128 + $0x1410] sm:%s121]
                %779 = vst [vmem:[%s129 + $0x510] sm:%s121] %v778
                %v780 = vld [vmem:[%s128 + $0x1414] sm:%s121]
                %781 = vst [vmem:[%s129 + $0x514] sm:%s121] %v780
                %v782 = vld [vmem:[%s128 + $0x1418] sm:%s121]
                %783 = vst [vmem:[%s129 + $0x518] sm:%s121] %v782
                %v784 = vld [vmem:[%s128 + $0x141c] sm:%s121]
                %785 = vst [vmem:[%s129 + $0x51c] sm:%s121] %v784
                %v786 = vld [vmem:[%s128 + $0x1420] sm:%s121]
                %787 = vst [vmem:[%s129 + $0x520] sm:%s121] %v786
                %v788 = vld [vmem:[%s128 + $0x1424] sm:%s121]
                %789 = vst [vmem:[%s129 + $0x524] sm:%s121] %v788
                %v790 = vld [vmem:[%s128 + $0x1428] sm:%s121]
                %791 = vst [vmem:[%s129 + $0x528] sm:%s121] %v790
                %v792 = vld [vmem:[%s128 + $0x142c] sm:%s121]
                %793 = vst [vmem:[%s129 + $0x52c] sm:%s121] %v792
                %v794 = vld [vmem:[%s128 + $0x1430] sm:%s121]
                %795 = vst [vmem:[%s129 + $0x530] sm:%s121] %v794
                %v796 = vld [vmem:[%s128 + $0x1434] sm:%s121]
                %797 = vst [vmem:[%s129 + $0x534] sm:%s121] %v796
                %v798 = vld [vmem:[%s128 + $0x1438] sm:%s121]
                %799 = vst [vmem:[%s129 + $0x538] sm:%s121] %v798
                %v800 = vld [vmem:[%s128 + $0x143c] sm:%s121]
                %801 = vst [vmem:[%s129 + $0x53c] sm:%s121] %v800
                %v802 = vld [vmem:[%s128 + $0x1500] sm:%s121]
                %803 = vst [vmem:[%s129 + $0x540] sm:%s121] %v802
                %v804 = vld [vmem:[%s128 + $0x1504] sm:%s121]
                %805 = vst [vmem:[%s129 + $0x544] sm:%s121] %v804
                %v806 = vld [vmem:[%s128 + $0x1508] sm:%s121]
                %807 = vst [vmem:[%s129 + $0x548] sm:%s121] %v806
                %v808 = vld [vmem:[%s128 + $0x150c] sm:%s121]
                %809 = vst [vmem:[%s129 + $0x54c] sm:%s121] %v808
                %v810 = vld [vmem:[%s128 + $0x1510] sm:%s121]
                %811 = vst [vmem:[%s129 + $0x550] sm:%s121] %v810
                %v812 = vld [vmem:[%s128 + $0x1514] sm:%s121]
                %813 = vst [vmem:[%s129 + $0x554] sm:%s121] %v812
                %v814 = vld [vmem:[%s128 + $0x1518] sm:%s121]
                %815 = vst [vmem:[%s129 + $0x558] sm:%s121] %v814
                %v816 = vld [vmem:[%s128 + $0x151c] sm:%s121]
                %817 = vst [vmem:[%s129 + $0x55c] sm:%s121] %v816
                %v818 = vld [vmem:[%s128 + $0x1520] sm:%s121]
                %819 = vst [vmem:[%s129 + $0x560] sm:%s121] %v818
                %v820 = vld [vmem:[%s128 + $0x1524] sm:%s121]
                %821 = vst [vmem:[%s129 + $0x564] sm:%s121] %v820
                %v822 = vld [vmem:[%s128 + $0x1528] sm:%s121]
                %823 = vst [vmem:[%s129 + $0x568] sm:%s121] %v822
                %v824 = vld [vmem:[%s128 + $0x152c] sm:%s121]
                %825 = vst [vmem:[%s129 + $0x56c] sm:%s121] %v824
                %v826 = vld [vmem:[%s128 + $0x1530] sm:%s121]
                %827 = vst [vmem:[%s129 + $0x570] sm:%s121] %v826
                %v828 = vld [vmem:[%s128 + $0x1534] sm:%s121]
                %829 = vst [vmem:[%s129 + $0x574] sm:%s121] %v828
                %v830 = vld [vmem:[%s128 + $0x1538] sm:%s121]
                %831 = vst [vmem:[%s129 + $0x578] sm:%s121] %v830
                %v832 = vld [vmem:[%s128 + $0x153c] sm:%s121]
                %833 = vst [vmem:[%s129 + $0x57c] sm:%s121] %v832
                %v834 = vld [vmem:[%s128 + $0x1600] sm:%s121]
                %835 = vst [vmem:[%s129 + $0x580] sm:%s121] %v834
                %v836 = vld [vmem:[%s128 + $0x1604] sm:%s121]
                %837 = vst [vmem:[%s129 + $0x584] sm:%s121] %v836
                %v838 = vld [vmem:[%s128 + $0x1608] sm:%s121]
                %839 = vst [vmem:[%s129 + $0x588] sm:%s121] %v838
                %v840 = vld [vmem:[%s128 + $0x160c] sm:%s121]
                %841 = vst [vmem:[%s129 + $0x58c] sm:%s121] %v840
                %v842 = vld [vmem:[%s128 + $0x1610] sm:%s121]
                %843 = vst [vmem:[%s129 + $0x590] sm:%s121] %v842
                %v844 = vld [vmem:[%s128 + $0x1614] sm:%s121]
                %845 = vst [vmem:[%s129 + $0x594] sm:%s121] %v844
                %v846 = vld [vmem:[%s128 + $0x1618] sm:%s121]
                %847 = vst [vmem:[%s129 + $0x598] sm:%s121] %v846
                %v848 = vld [vmem:[%s128 + $0x161c] sm:%s121]
                %849 = vst [vmem:[%s129 + $0x59c] sm:%s121] %v848
                %v850 = vld [vmem:[%s128 + $0x1620] sm:%s121]
                %851 = vst [vmem:[%s129 + $0x5a0] sm:%s121] %v850
                %v852 = vld [vmem:[%s128 + $0x1624] sm:%s121]
                %853 = vst [vmem:[%s129 + $0x5a4] sm:%s121] %v852
                %v854 = vld [vmem:[%s128 + $0x1628] sm:%s121]
                %855 = vst [vmem:[%s129 + $0x5a8] sm:%s121] %v854
                %v856 = vld [vmem:[%s128 + $0x162c] sm:%s121]
                %857 = vst [vmem:[%s129 + $0x5ac] sm:%s121] %v856
                %v858 = vld [vmem:[%s128 + $0x1630] sm:%s121]
                %859 = vst [vmem:[%s129 + $0x5b0] sm:%s121] %v858
                %v860 = vld [vmem:[%s128 + $0x1634] sm:%s121]
                %861 = vst [vmem:[%s129 + $0x5b4] sm:%s121] %v860
                %v862 = vld [vmem:[%s128 + $0x1638] sm:%s121]
                %863 = vst [vmem:[%s129 + $0x5b8] sm:%s121] %v862
                %v864 = vld [vmem:[%s128 + $0x163c] sm:%s121]
                %865 = vst [vmem:[%s129 + $0x5bc] sm:%s121] %v864
                %v866 = vld [vmem:[%s128 + $0x1700] sm:%s121]
                %867 = vst [vmem:[%s129 + $0x5c0] sm:%s121] %v866
                %v868 = vld [vmem:[%s128 + $0x1704] sm:%s121]
                %869 = vst [vmem:[%s129 + $0x5c4] sm:%s121] %v868
                %v870 = vld [vmem:[%s128 + $0x1708] sm:%s121]
                %871 = vst [vmem:[%s129 + $0x5c8] sm:%s121] %v870
                %v872 = vld [vmem:[%s128 + $0x170c] sm:%s121]
                %873 = vst [vmem:[%s129 + $0x5cc] sm:%s121] %v872
                %v874 = vld [vmem:[%s128 + $0x1710] sm:%s121]
                %875 = vst [vmem:[%s129 + $0x5d0] sm:%s121] %v874
                %v876 = vld [vmem:[%s128 + $0x1714] sm:%s121]
                %877 = vst [vmem:[%s129 + $0x5d4] sm:%s121] %v876
                %v878 = vld [vmem:[%s128 + $0x1718] sm:%s121]
                %879 = vst [vmem:[%s129 + $0x5d8] sm:%s121] %v878
                %v880 = vld [vmem:[%s128 + $0x171c] sm:%s121]
                %881 = vst [vmem:[%s129 + $0x5dc] sm:%s121] %v880
                %v882 = vld [vmem:[%s128 + $0x1720] sm:%s121]
                %883 = vst [vmem:[%s129 + $0x5e0] sm:%s121] %v882
                %v884 = vld [vmem:[%s128 + $0x1724] sm:%s121]
                %885 = vst [vmem:[%s129 + $0x5e4] sm:%s121] %v884
                %v886 = vld [vmem:[%s128 + $0x1728] sm:%s121]
                %887 = vst [vmem:[%s129 + $0x5e8] sm:%s121] %v886
                %v888 = vld [vmem:[%s128 + $0x172c] sm:%s121]
                %889 = vst [vmem:[%s129 + $0x5ec] sm:%s121] %v888
                %v890 = vld [vmem:[%s128 + $0x1730] sm:%s121]
                %891 = vst [vmem:[%s129 + $0x5f0] sm:%s121] %v890
                %v892 = vld [vmem:[%s128 + $0x1734] sm:%s121]
                %893 = vst [vmem:[%s129 + $0x5f4] sm:%s121] %v892
                %v894 = vld [vmem:[%s128 + $0x1738] sm:%s121]
                %895 = vst [vmem:[%s129 + $0x5f8] sm:%s121] %v894
                %v896 = vld [vmem:[%s128 + $0x173c] sm:%s121]
                %897 = vst [vmem:[%s129 + $0x5fc] sm:%s121] %v896
              $region41: #{window_attention_forward.1} parent=35 // loop_footer
                %s127 = sadd.s32 1, %s123
              $region42: #{window_attention_forward.1} parent=35 // loop_footer_branch
                %122 = sbr.rel target = $region38
              $region43: #{window_attention_forward.1} parent=35 // loop_exit
                _
            $region36: #{window_attention_forward.1} parent=27 // pred_fallthru
              _
          $region28: #{window_attention_forward.1} parent=23 // pred_fallthru
            _
          %1686 = vnop
        $region24: #{window_attention_forward.1} parent=19 // pred_fallthru
          _
      $region20: #{window_attention_forward.1} parent=5 // pred_fallthru
        _
      %p1687 = scmp.le.s32.totalorder 1, %s8
      %p1688 = scmp.lt.s32.totalorder %s8, 5
      %p1689 = pnand %p1687, %p1688
      %p1690 = pneg %p1689
      // Predicated region
      $region62: #{window_attention_forward.1} parent=5 // pred_check
        _
      $region63: #{window_attention_forward.1} parent=5 // pred_check_branch
        %1692 = sbr.rel (%p1689) target = $region65
      $region64: #{window_attention_forward.1} parent=5 // pred_region
        %s1693 = ssub.s32 %s8, 1
        %s1694 = sand.u32 %s21, 1
        %s1695 = sand.u32 %s21, 1
        %s1696 = smul.addr %s1695, 1536
        %s1697 = scalar_lea.vmem [#allocation2], %s1696
        // Predicated region
        $region66: #{window_attention_forward.1} parent=64 // pred_check
          %p1698 = pneg %p34
        $region67: #{window_attention_forward.1} parent=64 // pred_check_branch
          %1700 = sbr.rel (%p1698) target = $region69
        $region68: #{window_attention_forward.1} parent=64 // pred_region
          _
        $region69: #{window_attention_forward.1} parent=64 // pred_fallthru
          _
        %s1701 = sand.u32 %s21, 1
        %s1702 = sand.u32 %s21, 1
        %s1703 = smul.addr %s1702, 1536
        %s1704 = scalar_lea.vmem [#allocation2], %s1703
        %p1705 = pneg %p34
        %p1706 = pneg %p31
        %p1707 = pneg %p55
        %p1708 = pneg %p52
        %p1709 = pneg %p81
        %p1710 = pneg %p78
        %s1711 = smul.u32 2, %s13
        %p1712 = scmp.lt.s32.totalorder %s1711, 7
        %s1713 = scalar_select %p1712, %s1711, 7
        %s1714 = smul.addr %s1713, 8
        %s1715 = smul.addr %s1714, 8
        %s1716 = scalar_lea.vmem %s2, %s1715
        %s1717 = smul.u32 2, %s13
        %s1718 = smul.u32 2, %s13
        %p1719 = scmp.lt.s32.totalorder %s1718, 7
        %s1720 = scalar_select %p1719, %s1718, 7
        %s1721 = smul.addr %s1720, 8
        %s1722 = smul.addr %s1721, 8
        %s1723 = scalar_lea.vmem %s2, %s1722
        %s1724 = smul.u32 2, %s13
        %v1727 = vld [vmem:[%s1697] sm:$0xf]
        %v1728 = vld [vmem:[%s1697 + $0x4] sm:$0xf]
        %v1729 = vld [vmem:[%s1697 + $0x8] sm:$0xf]
        %v1730 = vld [vmem:[%s1697 + $0xc] sm:$0xf]
        %v1731 = vld [vmem:[%s1697 + $0x10] sm:$0xf]
        %v1732 = vld [vmem:[%s1697 + $0x14] sm:$0xf]
        %v1733 = vld [vmem:[%s1697 + $0x18] sm:$0xf]
        %v1734 = vld [vmem:[%s1697 + $0x1c] sm:$0xf]
        %v1735 = vld [vmem:[%s1697 + $0x20] sm:$0xf]
        %v1736 = vld [vmem:[%s1697 + $0x24] sm:$0xf]
        %v1737 = vld [vmem:[%s1697 + $0x28] sm:$0xf]
        %v1738 = vld [vmem:[%s1697 + $0x2c] sm:$0xf]
        %v1739 = vld [vmem:[%s1697 + $0x30] sm:$0xf]
        %v1740 = vld [vmem:[%s1697 + $0x34] sm:$0xf]
        %v1741 = vld [vmem:[%s1697 + $0x38] sm:$0xf]
        %v1742 = vld [vmem:[%s1697 + $0x3c] sm:$0xf]
        %v1743 = vld [vmem:[%s1697 + $0x40] sm:$0xf]
        %v1744 = vld [vmem:[%s1697 + $0x44] sm:$0xf]
        %v1745 = vld [vmem:[%s1697 + $0x48] sm:$0xf]
        %v1746 = vld [vmem:[%s1697 + $0x4c] sm:$0xf]
        %v1747 = vld [vmem:[%s1697 + $0x50] sm:$0xf]
        %v1748 = vld [vmem:[%s1697 + $0x54] sm:$0xf]
        %v1749 = vld [vmem:[%s1697 + $0x58] sm:$0xf]
        %v1750 = vld [vmem:[%s1697 + $0x5c] sm:$0xf]
        %v1751 = vld [vmem:[%s1697 + $0x60] sm:$0xf]
        %v1752 = vld [vmem:[%s1697 + $0x64] sm:$0xf]
        %v1753 = vld [vmem:[%s1697 + $0x68] sm:$0xf]
        %v1754 = vld [vmem:[%s1697 + $0x6c] sm:$0xf]
        %v1755 = vld [vmem:[%s1697 + $0x70] sm:$0xf]
        %v1756 = vld [vmem:[%s1697 + $0x74] sm:$0xf]
        %v1757 = vld [vmem:[%s1697 + $0x78] sm:$0xf]
        %v1758 = vld [vmem:[%s1697 + $0x7c] sm:$0xf]
        %v1759 = vld [vmem:[%s1697 + $0x80] sm:$0xf]
        %v1760 = vld [vmem:[%s1697 + $0x84] sm:$0xf]
        %v1761 = vld [vmem:[%s1697 + $0x88] sm:$0xf]
        %v1762 = vld [vmem:[%s1697 + $0x8c] sm:$0xf]
        %v1763 = vld [vmem:[%s1697 + $0x90] sm:$0xf]
        %v1764 = vld [vmem:[%s1697 + $0x94] sm:$0xf]
        %v1765 = vld [vmem:[%s1697 + $0x98] sm:$0xf]
        %v1766 = vld [vmem:[%s1697 + $0x9c] sm:$0xf]
        %v1767 = vld [vmem:[%s1697 + $0xa0] sm:$0xf]
        %v1768 = vld [vmem:[%s1697 + $0xa4] sm:$0xf]
        %v1769 = vld [vmem:[%s1697 + $0xa8] sm:$0xf]
        %v1770 = vld [vmem:[%s1697 + $0xac] sm:$0xf]
        %v1771 = vld [vmem:[%s1697 + $0xb0] sm:$0xf]
        %v1772 = vld [vmem:[%s1697 + $0xb4] sm:$0xf]
        %v1773 = vld [vmem:[%s1697 + $0xb8] sm:$0xf]
        %v1774 = vld [vmem:[%s1697 + $0xbc] sm:$0xf]
        %v1775 = vld [vmem:[%s1697 + $0xc0] sm:$0xf]
        %v1776 = vld [vmem:[%s1697 + $0xc4] sm:$0xf]
        %v1777 = vld [vmem:[%s1697 + $0xc8] sm:$0xf]
        %v1778 = vld [vmem:[%s1697 + $0xcc] sm:$0xf]
        %v1779 = vld [vmem:[%s1697 + $0xd0] sm:$0xf]
        %v1780 = vld [vmem:[%s1697 + $0xd4] sm:$0xf]
        %v1781 = vld [vmem:[%s1697 + $0xd8] sm:$0xf]
        %v1782 = vld [vmem:[%s1697 + $0xdc] sm:$0xf]
        %v1783 = vld [vmem:[%s1697 + $0xe0] sm:$0xf]
        %v1784 = vld [vmem:[%s1697 + $0xe4] sm:$0xf]
        %v1785 = vld [vmem:[%s1697 + $0xe8] sm:$0xf]
        %v1786 = vld [vmem:[%s1697 + $0xec] sm:$0xf]
        %v1787 = vld [vmem:[%s1697 + $0xf0] sm:$0xf]
        %v1788 = vld [vmem:[%s1697 + $0xf4] sm:$0xf]
        %v1789 = vld [vmem:[%s1697 + $0xf8] sm:$0xf]
        %v1790 = vld [vmem:[%s1697 + $0xfc] sm:$0xf]
        %v1791 = vld [vmem:[%s1697 + $0x100] sm:$0xf]
        %v1792 = vld [vmem:[%s1697 + $0x104] sm:$0xf]
        %v1793 = vld [vmem:[%s1697 + $0x108] sm:$0xf]
        %v1794 = vld [vmem:[%s1697 + $0x10c] sm:$0xf]
        %v1795 = vld [vmem:[%s1697 + $0x110] sm:$0xf]
        %v1796 = vld [vmem:[%s1697 + $0x114] sm:$0xf]
        %v1797 = vld [vmem:[%s1697 + $0x118] sm:$0xf]
        %v1798 = vld [vmem:[%s1697 + $0x11c] sm:$0xf]
        %v1799 = vld [vmem:[%s1697 + $0x120] sm:$0xf]
        %v1800 = vld [vmem:[%s1697 + $0x124] sm:$0xf]
        %v1801 = vld [vmem:[%s1697 + $0x128] sm:$0xf]
        %v1802 = vld [vmem:[%s1697 + $0x12c] sm:$0xf]
        %v1803 = vld [vmem:[%s1697 + $0x130] sm:$0xf]
        %v1804 = vld [vmem:[%s1697 + $0x134] sm:$0xf]
        %v1805 = vld [vmem:[%s1697 + $0x138] sm:$0xf]
        %v1806 = vld [vmem:[%s1697 + $0x13c] sm:$0xf]
        %v1807 = vld [vmem:[%s1697 + $0x140] sm:$0xf]
        %v1808 = vld [vmem:[%s1697 + $0x144] sm:$0xf]
        %v1809 = vld [vmem:[%s1697 + $0x148] sm:$0xf]
        %v1810 = vld [vmem:[%s1697 + $0x14c] sm:$0xf]
        %v1811 = vld [vmem:[%s1697 + $0x150] sm:$0xf]
        %v1812 = vld [vmem:[%s1697 + $0x154] sm:$0xf]
        %v1813 = vld [vmem:[%s1697 + $0x158] sm:$0xf]
        %v1814 = vld [vmem:[%s1697 + $0x15c] sm:$0xf]
        %v1815 = vld [vmem:[%s1697 + $0x160] sm:$0xf]
        %v1816 = vld [vmem:[%s1697 + $0x164] sm:$0xf]
        %v1817 = vld [vmem:[%s1697 + $0x168] sm:$0xf]
        %v1818 = vld [vmem:[%s1697 + $0x16c] sm:$0xf]
        %v1819 = vld [vmem:[%s1697 + $0x170] sm:$0xf]
        %v1820 = vld [vmem:[%s1697 + $0x174] sm:$0xf]
        %v1821 = vld [vmem:[%s1697 + $0x178] sm:$0xf]
        %v1822 = vld [vmem:[%s1697 + $0x17c] sm:$0xf]
        %v1823 = vld [vmem:[%s1697 + $0x180] sm:$0xf]
        %v1824 = vld [vmem:[%s1697 + $0x184] sm:$0xf]
        %v1825 = vld [vmem:[%s1697 + $0x188] sm:$0xf]
        %v1826 = vld [vmem:[%s1697 + $0x18c] sm:$0xf]
        %v1827 = vld [vmem:[%s1697 + $0x190] sm:$0xf]
        %v1828 = vld [vmem:[%s1697 + $0x194] sm:$0xf]
        %v1829 = vld [vmem:[%s1697 + $0x198] sm:$0xf]
        %v1830 = vld [vmem:[%s1697 + $0x19c] sm:$0xf]
        %v1831 = vld [vmem:[%s1697 + $0x1a0] sm:$0xf]
        %v1832 = vld [vmem:[%s1697 + $0x1a4] sm:$0xf]
        %v1833 = vld [vmem:[%s1697 + $0x1a8] sm:$0xf]
        %v1834 = vld [vmem:[%s1697 + $0x1ac] sm:$0xf]
        %v1835 = vld [vmem:[%s1697 + $0x1b0] sm:$0xf]
        %v1836 = vld [vmem:[%s1697 + $0x1b4] sm:$0xf]
        %v1837 = vld [vmem:[%s1697 + $0x1b8] sm:$0xf]
        %v1838 = vld [vmem:[%s1697 + $0x1bc] sm:$0xf]
        %v1839 = vld [vmem:[%s1697 + $0x1c0] sm:$0xf]
        %v1840 = vld [vmem:[%s1697 + $0x1c4] sm:$0xf]
        %v1841 = vld [vmem:[%s1697 + $0x1c8] sm:$0xf]
        %v1842 = vld [vmem:[%s1697 + $0x1cc] sm:$0xf]
        %v1843 = vld [vmem:[%s1697 + $0x1d0] sm:$0xf]
        %v1844 = vld [vmem:[%s1697 + $0x1d4] sm:$0xf]
        %v1845 = vld [vmem:[%s1697 + $0x1d8] sm:$0xf]
        %v1846 = vld [vmem:[%s1697 + $0x1dc] sm:$0xf]
        %v1847 = vld [vmem:[%s1697 + $0x1e0] sm:$0xf]
        %v1848 = vld [vmem:[%s1697 + $0x1e4] sm:$0xf]
        %v1849 = vld [vmem:[%s1697 + $0x1e8] sm:$0xf]
        %v1850 = vld [vmem:[%s1697 + $0x1ec] sm:$0xf]
        %v1851 = vld [vmem:[%s1697 + $0x1f0] sm:$0xf]
        %v1852 = vld [vmem:[%s1697 + $0x1f4] sm:$0xf]
        %v1853 = vld [vmem:[%s1697 + $0x1f8] sm:$0xf]
        %v1854 = vld [vmem:[%s1697 + $0x1fc] sm:$0xf]
        %v1855 = vld [vmem:[%s1697 + $0x200] sm:$0xf]
        %v1856 = vld [vmem:[%s1697 + $0x204] sm:$0xf]
        %v1857 = vld [vmem:[%s1697 + $0x208] sm:$0xf]
        %v1858 = vld [vmem:[%s1697 + $0x20c] sm:$0xf]
        %v1859 = vld [vmem:[%s1697 + $0x210] sm:$0xf]
        %v1860 = vld [vmem:[%s1697 + $0x214] sm:$0xf]
        %v1861 = vld [vmem:[%s1697 + $0x218] sm:$0xf]
        %v1862 = vld [vmem:[%s1697 + $0x21c] sm:$0xf]
        %v1863 = vld [vmem:[%s1697 + $0x220] sm:$0xf]
        %v1864 = vld [vmem:[%s1697 + $0x224] sm:$0xf]
        %v1865 = vld [vmem:[%s1697 + $0x228] sm:$0xf]
        %v1866 = vld [vmem:[%s1697 + $0x22c] sm:$0xf]
        %v1867 = vld [vmem:[%s1697 + $0x230] sm:$0xf]
        %v1868 = vld [vmem:[%s1697 + $0x234] sm:$0xf]
        %v1869 = vld [vmem:[%s1697 + $0x238] sm:$0xf]
        %v1870 = vld [vmem:[%s1697 + $0x23c] sm:$0xf]
        %v1871 = vld [vmem:[%s1697 + $0x240] sm:$0xf]
        %v1872 = vld [vmem:[%s1697 + $0x244] sm:$0xf]
        %v1873 = vld [vmem:[%s1697 + $0x248] sm:$0xf]
        %v1874 = vld [vmem:[%s1697 + $0x24c] sm:$0xf]
        %v1875 = vld [vmem:[%s1697 + $0x250] sm:$0xf]
        %v1876 = vld [vmem:[%s1697 + $0x254] sm:$0xf]
        %v1877 = vld [vmem:[%s1697 + $0x258] sm:$0xf]
        %v1878 = vld [vmem:[%s1697 + $0x25c] sm:$0xf]
        %v1879 = vld [vmem:[%s1697 + $0x260] sm:$0xf]
        %v1880 = vld [vmem:[%s1697 + $0x264] sm:$0xf]
        %v1881 = vld [vmem:[%s1697 + $0x268] sm:$0xf]
        %v1882 = vld [vmem:[%s1697 + $0x26c] sm:$0xf]
        %v1883 = vld [vmem:[%s1697 + $0x270] sm:$0xf]
        %v1884 = vld [vmem:[%s1697 + $0x274] sm:$0xf]
        %v1885 = vld [vmem:[%s1697 + $0x278] sm:$0xf]
        %v1886 = vld [vmem:[%s1697 + $0x27c] sm:$0xf]
        %v1887 = vld [vmem:[%s1697 + $0x280] sm:$0xf]
        %v1888 = vld [vmem:[%s1697 + $0x284] sm:$0xf]
        %v1889 = vld [vmem:[%s1697 + $0x288] sm:$0xf]
        %v1890 = vld [vmem:[%s1697 + $0x28c] sm:$0xf]
        %v1891 = vld [vmem:[%s1697 + $0x290] sm:$0xf]
        %v1892 = vld [vmem:[%s1697 + $0x294] sm:$0xf]
        %v1893 = vld [vmem:[%s1697 + $0x298] sm:$0xf]
        %v1894 = vld [vmem:[%s1697 + $0x29c] sm:$0xf]
        %v1895 = vld [vmem:[%s1697 + $0x2a0] sm:$0xf]
        %v1896 = vld [vmem:[%s1697 + $0x2a4] sm:$0xf]
        %v1897 = vld [vmem:[%s1697 + $0x2a8] sm:$0xf]
        %v1898 = vld [vmem:[%s1697 + $0x2ac] sm:$0xf]
        %v1899 = vld [vmem:[%s1697 + $0x2b0] sm:$0xf]
        %v1900 = vld [vmem:[%s1697 + $0x2b4] sm:$0xf]
        %v1901 = vld [vmem:[%s1697 + $0x2b8] sm:$0xf]
        %v1902 = vld [vmem:[%s1697 + $0x2bc] sm:$0xf]
        %v1903 = vld [vmem:[%s1697 + $0x2c0] sm:$0xf]
        %v1904 = vld [vmem:[%s1697 + $0x2c4] sm:$0xf]
        %v1905 = vld [vmem:[%s1697 + $0x2c8] sm:$0xf]
        %v1906 = vld [vmem:[%s1697 + $0x2cc] sm:$0xf]
        %v1907 = vld [vmem:[%s1697 + $0x2d0] sm:$0xf]
        %v1908 = vld [vmem:[%s1697 + $0x2d4] sm:$0xf]
        %v1909 = vld [vmem:[%s1697 + $0x2d8] sm:$0xf]
        %v1910 = vld [vmem:[%s1697 + $0x2dc] sm:$0xf]
        %v1911 = vld [vmem:[%s1697 + $0x2e0] sm:$0xf]
        %v1912 = vld [vmem:[%s1697 + $0x2e4] sm:$0xf]
        %v1913 = vld [vmem:[%s1697 + $0x2e8] sm:$0xf]
        %v1914 = vld [vmem:[%s1697 + $0x2ec] sm:$0xf]
        %v1915 = vld [vmem:[%s1697 + $0x2f0] sm:$0xf]
        %v1916 = vld [vmem:[%s1697 + $0x2f4] sm:$0xf]
        %v1917 = vld [vmem:[%s1697 + $0x2f8] sm:$0xf]
        %v1918 = vld [vmem:[%s1697 + $0x2fc] sm:$0xf]
        %v1919 = vld [vmem:[%s1697 + $0x300] sm:$0xf]
        %v1920 = vld [vmem:[%s1697 + $0x304] sm:$0xf]
        %v1921 = vld [vmem:[%s1697 + $0x308] sm:$0xf]
        %v1922 = vld [vmem:[%s1697 + $0x30c] sm:$0xf]
        %v1923 = vld [vmem:[%s1697 + $0x310] sm:$0xf]
        %v1924 = vld [vmem:[%s1697 + $0x314] sm:$0xf]
        %v1925 = vld [vmem:[%s1697 + $0x318] sm:$0xf]
        %v1926 = vld [vmem:[%s1697 + $0x31c] sm:$0xf]
        %v1927 = vld [vmem:[%s1697 + $0x320] sm:$0xf]
        %v1928 = vld [vmem:[%s1697 + $0x324] sm:$0xf]
        %v1929 = vld [vmem:[%s1697 + $0x328] sm:$0xf]
        %v1930 = vld [vmem:[%s1697 + $0x32c] sm:$0xf]
        %v1931 = vld [vmem:[%s1697 + $0x330] sm:$0xf]
        %v1932 = vld [vmem:[%s1697 + $0x334] sm:$0xf]
        %v1933 = vld [vmem:[%s1697 + $0x338] sm:$0xf]
        %v1934 = vld [vmem:[%s1697 + $0x33c] sm:$0xf]
        %v1935 = vld [vmem:[%s1697 + $0x340] sm:$0xf]
        %v1936 = vld [vmem:[%s1697 + $0x344] sm:$0xf]
        %v1937 = vld [vmem:[%s1697 + $0x348] sm:$0xf]
        %v1938 = vld [vmem:[%s1697 + $0x34c] sm:$0xf]
        %v1939 = vld [vmem:[%s1697 + $0x350] sm:$0xf]
        %v1940 = vld [vmem:[%s1697 + $0x354] sm:$0xf]
        %v1941 = vld [vmem:[%s1697 + $0x358] sm:$0xf]
        %v1942 = vld [vmem:[%s1697 + $0x35c] sm:$0xf]
        %v1943 = vld [vmem:[%s1697 + $0x360] sm:$0xf]
        %v1944 = vld [vmem:[%s1697 + $0x364] sm:$0xf]
        %v1945 = vld [vmem:[%s1697 + $0x368] sm:$0xf]
        %v1946 = vld [vmem:[%s1697 + $0x36c] sm:$0xf]
        %v1947 = vld [vmem:[%s1697 + $0x370] sm:$0xf]
        %v1948 = vld [vmem:[%s1697 + $0x374] sm:$0xf]
        %v1949 = vld [vmem:[%s1697 + $0x378] sm:$0xf]
        %v1950 = vld [vmem:[%s1697 + $0x37c] sm:$0xf]
        %v1951 = vld [vmem:[%s1697 + $0x380] sm:$0xf]
        %v1952 = vld [vmem:[%s1697 + $0x384] sm:$0xf]
        %v1953 = vld [vmem:[%s1697 + $0x388] sm:$0xf]
        %v1954 = vld [vmem:[%s1697 + $0x38c] sm:$0xf]
        %v1955 = vld [vmem:[%s1697 + $0x390] sm:$0xf]
        %v1956 = vld [vmem:[%s1697 + $0x394] sm:$0xf]
        %v1957 = vld [vmem:[%s1697 + $0x398] sm:$0xf]
        %v1958 = vld [vmem:[%s1697 + $0x39c] sm:$0xf]
        %v1959 = vld [vmem:[%s1697 + $0x3a0] sm:$0xf]
        %v1960 = vld [vmem:[%s1697 + $0x3a4] sm:$0xf]
        %v1961 = vld [vmem:[%s1697 + $0x3a8] sm:$0xf]
        %v1962 = vld [vmem:[%s1697 + $0x3ac] sm:$0xf]
        %v1963 = vld [vmem:[%s1697 + $0x3b0] sm:$0xf]
        %v1964 = vld [vmem:[%s1697 + $0x3b4] sm:$0xf]
        %v1965 = vld [vmem:[%s1697 + $0x3b8] sm:$0xf]
        %v1966 = vld [vmem:[%s1697 + $0x3bc] sm:$0xf]
        %v1967 = vld [vmem:[%s1697 + $0x3c0] sm:$0xf]
        %v1968 = vld [vmem:[%s1697 + $0x3c4] sm:$0xf]
        %v1969 = vld [vmem:[%s1697 + $0x3c8] sm:$0xf]
        %v1970 = vld [vmem:[%s1697 + $0x3cc] sm:$0xf]
        %v1971 = vld [vmem:[%s1697 + $0x3d0] sm:$0xf]
        %v1972 = vld [vmem:[%s1697 + $0x3d4] sm:$0xf]
        %v1973 = vld [vmem:[%s1697 + $0x3d8] sm:$0xf]
        %v1974 = vld [vmem:[%s1697 + $0x3dc] sm:$0xf]
        %v1975 = vld [vmem:[%s1697 + $0x3e0] sm:$0xf]
        %v1976 = vld [vmem:[%s1697 + $0x3e4] sm:$0xf]
        %v1977 = vld [vmem:[%s1697 + $0x3e8] sm:$0xf]
        %v1978 = vld [vmem:[%s1697 + $0x3ec] sm:$0xf]
        %v1979 = vld [vmem:[%s1697 + $0x3f0] sm:$0xf]
        %v1980 = vld [vmem:[%s1697 + $0x3f4] sm:$0xf]
        %v1981 = vld [vmem:[%s1697 + $0x3f8] sm:$0xf]
        %v1982 = vld [vmem:[%s1697 + $0x3fc] sm:$0xf]
        %v1983 = vld [vmem:[%s1697 + $0x400] sm:$0xf]
        %v1984 = vld [vmem:[%s1697 + $0x404] sm:$0xf]
        %v1985 = vld [vmem:[%s1697 + $0x408] sm:$0xf]
        %v1986 = vld [vmem:[%s1697 + $0x40c] sm:$0xf]
        %v1987 = vld [vmem:[%s1697 + $0x410] sm:$0xf]
        %v1988 = vld [vmem:[%s1697 + $0x414] sm:$0xf]
        %v1989 = vld [vmem:[%s1697 + $0x418] sm:$0xf]
        %v1990 = vld [vmem:[%s1697 + $0x41c] sm:$0xf]
        %v1991 = vld [vmem:[%s1697 + $0x420] sm:$0xf]
        %v1992 = vld [vmem:[%s1697 + $0x424] sm:$0xf]
        %v1993 = vld [vmem:[%s1697 + $0x428] sm:$0xf]
        %v1994 = vld [vmem:[%s1697 + $0x42c] sm:$0xf]
        %v1995 = vld [vmem:[%s1697 + $0x430] sm:$0xf]
        %v1996 = vld [vmem:[%s1697 + $0x434] sm:$0xf]
        %v1997 = vld [vmem:[%s1697 + $0x438] sm:$0xf]
        %v1998 = vld [vmem:[%s1697 + $0x43c] sm:$0xf]
        %v1999 = vld [vmem:[%s1697 + $0x440] sm:$0xf]
        %v2000 = vld [vmem:[%s1697 + $0x444] sm:$0xf]
        %v2001 = vld [vmem:[%s1697 + $0x448] sm:$0xf]
        %v2002 = vld [vmem:[%s1697 + $0x44c] sm:$0xf]
        %v2003 = vld [vmem:[%s1697 + $0x450] sm:$0xf]
        %v2004 = vld [vmem:[%s1697 + $0x454] sm:$0xf]
        %v2005 = vld [vmem:[%s1697 + $0x458] sm:$0xf]
        %v2006 = vld [vmem:[%s1697 + $0x45c] sm:$0xf]
        %v2007 = vld [vmem:[%s1697 + $0x460] sm:$0xf]
        %v2008 = vld [vmem:[%s1697 + $0x464] sm:$0xf]
        %v2009 = vld [vmem:[%s1697 + $0x468] sm:$0xf]
        %v2010 = vld [vmem:[%s1697 + $0x46c] sm:$0xf]
        %v2011 = vld [vmem:[%s1697 + $0x470] sm:$0xf]
        %v2012 = vld [vmem:[%s1697 + $0x474] sm:$0xf]
        %v2013 = vld [vmem:[%s1697 + $0x478] sm:$0xf]
        %v2014 = vld [vmem:[%s1697 + $0x47c] sm:$0xf]
        %v2015 = vld [vmem:[%s1697 + $0x480] sm:$0xf]
        %v2016 = vld [vmem:[%s1697 + $0x484] sm:$0xf]
        %v2017 = vld [vmem:[%s1697 + $0x488] sm:$0xf]
        %v2018 = vld [vmem:[%s1697 + $0x48c] sm:$0xf]
        %v2019 = vld [vmem:[%s1697 + $0x490] sm:$0xf]
        %v2020 = vld [vmem:[%s1697 + $0x494] sm:$0xf]
        %v2021 = vld [vmem:[%s1697 + $0x498] sm:$0xf]
        %v2022 = vld [vmem:[%s1697 + $0x49c] sm:$0xf]
        %v2023 = vld [vmem:[%s1697 + $0x4a0] sm:$0xf]
        %v2024 = vld [vmem:[%s1697 + $0x4a4] sm:$0xf]
        %v2025 = vld [vmem:[%s1697 + $0x4a8] sm:$0xf]
        %v2026 = vld [vmem:[%s1697 + $0x4ac] sm:$0xf]
        %v2027 = vld [vmem:[%s1697 + $0x4b0] sm:$0xf]
        %v2028 = vld [vmem:[%s1697 + $0x4b4] sm:$0xf]
        %v2029 = vld [vmem:[%s1697 + $0x4b8] sm:$0xf]
        %v2030 = vld [vmem:[%s1697 + $0x4bc] sm:$0xf]
        %v2031 = vld [vmem:[%s1697 + $0x4c0] sm:$0xf]
        %v2032 = vld [vmem:[%s1697 + $0x4c4] sm:$0xf]
        %v2033 = vld [vmem:[%s1697 + $0x4c8] sm:$0xf]
        %v2034 = vld [vmem:[%s1697 + $0x4cc] sm:$0xf]
        %v2035 = vld [vmem:[%s1697 + $0x4d0] sm:$0xf]
        %v2036 = vld [vmem:[%s1697 + $0x4d4] sm:$0xf]
        %v2037 = vld [vmem:[%s1697 + $0x4d8] sm:$0xf]
        %v2038 = vld [vmem:[%s1697 + $0x4dc] sm:$0xf]
        %v2039 = vld [vmem:[%s1697 + $0x4e0] sm:$0xf]
        %v2040 = vld [vmem:[%s1697 + $0x4e4] sm:$0xf]
        %v2041 = vld [vmem:[%s1697 + $0x4e8] sm:$0xf]
        %v2042 = vld [vmem:[%s1697 + $0x4ec] sm:$0xf]
        %v2043 = vld [vmem:[%s1697 + $0x4f0] sm:$0xf]
        %v2044 = vld [vmem:[%s1697 + $0x4f4] sm:$0xf]
        %v2045 = vld [vmem:[%s1697 + $0x4f8] sm:$0xf]
        %v2046 = vld [vmem:[%s1697 + $0x4fc] sm:$0xf]
        %v2047 = vld [vmem:[%s1697 + $0x500] sm:$0xf]
        %v2048 = vld [vmem:[%s1697 + $0x504] sm:$0xf]
        %v2049 = vld [vmem:[%s1697 + $0x508] sm:$0xf]
        %v2050 = vld [vmem:[%s1697 + $0x50c] sm:$0xf]
        %v2051 = vld [vmem:[%s1697 + $0x510] sm:$0xf]
        %v2052 = vld [vmem:[%s1697 + $0x514] sm:$0xf]
        %v2053 = vld [vmem:[%s1697 + $0x518] sm:$0xf]
        %v2054 = vld [vmem:[%s1697 + $0x51c] sm:$0xf]
        %v2055 = vld [vmem:[%s1697 + $0x520] sm:$0xf]
        %v2056 = vld [vmem:[%s1697 + $0x524] sm:$0xf]
        %v2057 = vld [vmem:[%s1697 + $0x528] sm:$0xf]
        %v2058 = vld [vmem:[%s1697 + $0x52c] sm:$0xf]
        %v2059 = vld [vmem:[%s1697 + $0x530] sm:$0xf]
        %v2060 = vld [vmem:[%s1697 + $0x534] sm:$0xf]
        %v2061 = vld [vmem:[%s1697 + $0x538] sm:$0xf]
        %v2062 = vld [vmem:[%s1697 + $0x53c] sm:$0xf]
        %v2063 = vld [vmem:[%s1697 + $0x540] sm:$0xf]
        %v2064 = vld [vmem:[%s1697 + $0x544] sm:$0xf]
        %v2065 = vld [vmem:[%s1697 + $0x548] sm:$0xf]
        %v2066 = vld [vmem:[%s1697 + $0x54c] sm:$0xf]
        %v2067 = vld [vmem:[%s1697 + $0x550] sm:$0xf]
        %v2068 = vld [vmem:[%s1697 + $0x554] sm:$0xf]
        %v2069 = vld [vmem:[%s1697 + $0x558] sm:$0xf]
        %v2070 = vld [vmem:[%s1697 + $0x55c] sm:$0xf]
        %v2071 = vld [vmem:[%s1697 + $0x560] sm:$0xf]
        %v2072 = vld [vmem:[%s1697 + $0x564] sm:$0xf]
        %v2073 = vld [vmem:[%s1697 + $0x568] sm:$0xf]
        %v2074 = vld [vmem:[%s1697 + $0x56c] sm:$0xf]
        %v2075 = vld [vmem:[%s1697 + $0x570] sm:$0xf]
        %v2076 = vld [vmem:[%s1697 + $0x574] sm:$0xf]
        %v2077 = vld [vmem:[%s1697 + $0x578] sm:$0xf]
        %v2078 = vld [vmem:[%s1697 + $0x57c] sm:$0xf]
        %v2079 = vld [vmem:[%s1697 + $0x580] sm:$0xf]
        %v2080 = vld [vmem:[%s1697 + $0x584] sm:$0xf]
        %v2081 = vld [vmem:[%s1697 + $0x588] sm:$0xf]
        %v2082 = vld [vmem:[%s1697 + $0x58c] sm:$0xf]
        %v2083 = vld [vmem:[%s1697 + $0x590] sm:$0xf]
        %v2084 = vld [vmem:[%s1697 + $0x594] sm:$0xf]
        %v2085 = vld [vmem:[%s1697 + $0x598] sm:$0xf]
        %v2086 = vld [vmem:[%s1697 + $0x59c] sm:$0xf]
        %v2087 = vld [vmem:[%s1697 + $0x5a0] sm:$0xf]
        %v2088 = vld [vmem:[%s1697 + $0x5a4] sm:$0xf]
        %v2089 = vld [vmem:[%s1697 + $0x5a8] sm:$0xf]
        %v2090 = vld [vmem:[%s1697 + $0x5ac] sm:$0xf]
        %v2091 = vld [vmem:[%s1697 + $0x5b0] sm:$0xf]
        %v2092 = vld [vmem:[%s1697 + $0x5b4] sm:$0xf]
        %v2093 = vld [vmem:[%s1697 + $0x5b8] sm:$0xf]
        %v2094 = vld [vmem:[%s1697 + $0x5bc] sm:$0xf]
        %v2095 = vld [vmem:[%s1697 + $0x5c0] sm:$0xf]
        %v2096 = vld [vmem:[%s1697 + $0x5c4] sm:$0xf]
        %v2097 = vld [vmem:[%s1697 + $0x5c8] sm:$0xf]
        %v2098 = vld [vmem:[%s1697 + $0x5cc] sm:$0xf]
        %v2099 = vld [vmem:[%s1697 + $0x5d0] sm:$0xf]
        %v2100 = vld [vmem:[%s1697 + $0x5d4] sm:$0xf]
        %v2101 = vld [vmem:[%s1697 + $0x5d8] sm:$0xf]
        %v2102 = vld [vmem:[%s1697 + $0x5dc] sm:$0xf]
        %v2103 = vld [vmem:[%s1697 + $0x5e0] sm:$0xf]
        %v2104 = vld [vmem:[%s1697 + $0x5e4] sm:$0xf]
        %v2105 = vld [vmem:[%s1697 + $0x5e8] sm:$0xf]
        %v2106 = vld [vmem:[%s1697 + $0x5ec] sm:$0xf]
        %v2107 = vld [vmem:[%s1697 + $0x5f0] sm:$0xf]
        %v2108 = vld [vmem:[%s1697 + $0x5f4] sm:$0xf]
        %v2109 = vld [vmem:[%s1697 + $0x5f8] sm:$0xf]
        %v2110 = vld [vmem:[%s1697 + $0x5fc] sm:$0xf]
        %v2111 = vld [vmem:[%s1] sm:$0xff]
        %v2112 = vld [vmem:[%s1 + $0x8] sm:$0xff]
        %v2113 = vld [vmem:[%s1 + $0x10] sm:$0xff]
        %v2114 = vld [vmem:[%s1 + $0x18] sm:$0xff]
        %v2115 = vld [vmem:[%s1 + $0x20] sm:$0xff]
        %v2116 = vld [vmem:[%s1 + $0x28] sm:$0xff]
        %v2117 = vld [vmem:[%s1 + $0x30] sm:$0xff]
        %v2118 = vld [vmem:[%s1 + $0x38] sm:$0xff]
        %v2119 = vld [vmem:[%s1 + $0x40] sm:$0xff]
        %v2120 = vld [vmem:[%s1 + $0x48] sm:$0xff]
        %v2121 = vld [vmem:[%s1 + $0x50] sm:$0xff]
        %v2122 = vld [vmem:[%s1 + $0x58] sm:$0xff]
        %v2123 = vld [vmem:[%s1 + $0x60] sm:$0xff]
        %v2124 = vld [vmem:[%s1 + $0x68] sm:$0xff]
        %v2125 = vld [vmem:[%s1 + $0x70] sm:$0xff]
        %v2126 = vld [vmem:[%s1 + $0x78] sm:$0xff]
        %v2127 = vld [vmem:[%s1 + $0x80] sm:$0xff]
        %v2128 = vld [vmem:[%s1 + $0x88] sm:$0xff]
        %v2129 = vld [vmem:[%s1 + $0x90] sm:$0xff]
        %v2130 = vld [vmem:[%s1 + $0x98] sm:$0xff]
        %v2131 = vld [vmem:[%s1 + $0xa0] sm:$0xff]
        %v2132 = vld [vmem:[%s1 + $0xa8] sm:$0xff]
        %v2133 = vld [vmem:[%s1 + $0xb0] sm:$0xff]
        %v2134 = vld [vmem:[%s1 + $0xb8] sm:$0xff]
        %v2135 = vld [vmem:[%s1 + $0xc0] sm:$0xff]
        %v2136 = vld [vmem:[%s1 + $0xc8] sm:$0xff]
        %v2137 = vld [vmem:[%s1 + $0xd0] sm:$0xff]
        %v2138 = vld [vmem:[%s1 + $0xd8] sm:$0xff]
        %v2139 = vld [vmem:[%s1 + $0xe0] sm:$0xff]
        %v2140 = vld [vmem:[%s1 + $0xe8] sm:$0xff]
        %v2141 = vld [vmem:[%s1 + $0xf0] sm:$0xff]
        %v2142 = vld [vmem:[%s1 + $0xf8] sm:$0xff]
        %v2143 = vmul.bf16 %v1727, 1056980736
        %v2144 = vmul.bf16 %v1728, 1056980736
        %v2145 = vmul.bf16 %v1729, 1056980736
        %v2146 = vmul.bf16 %v1730, 1056980736
        %v2147 = vmul.bf16 %v1731, 1056980736
        %v2148 = vmul.bf16 %v1732, 1056980736
        %v2149 = vmul.bf16 %v1733, 1056980736
        %v2150 = vmul.bf16 %v1734, 1056980736
        %v2151 = vmul.bf16 %v1735, 1056980736
        %v2152 = vmul.bf16 %v1736, 1056980736
        %v2153 = vmul.bf16 %v1737, 1056980736
        %v2154 = vmul.bf16 %v1738, 1056980736
        %v2155 = vmul.bf16 %v1739, 1056980736
        %v2156 = vmul.bf16 %v1740, 1056980736
        %v2157 = vmul.bf16 %v1741, 1056980736
        %v2158 = vmul.bf16 %v1742, 1056980736
        %v2159 = vmul.bf16 %v1743, 1056980736
        %v2160 = vmul.bf16 %v1744, 1056980736
        %v2161 = vmul.bf16 %v1745, 1056980736
        %v2162 = vmul.bf16 %v1746, 1056980736
        %v2163 = vmul.bf16 %v1747, 1056980736
        %v2164 = vmul.bf16 %v1748, 1056980736
        %v2165 = vmul.bf16 %v1749, 1056980736
        %v2166 = vmul.bf16 %v1750, 1056980736
        %v2167 = vmul.bf16 %v1751, 1056980736
        %v2168 = vmul.bf16 %v1752, 1056980736
        %v2169 = vmul.bf16 %v1753, 1056980736
        %v2170 = vmul.bf16 %v1754, 1056980736
        %v2171 = vmul.bf16 %v1755, 1056980736
        %v2172 = vmul.bf16 %v1756, 1056980736
        %v2173 = vmul.bf16 %v1757, 1056980736
        %v2174 = vmul.bf16 %v1758, 1056980736
        %v2175 = vmul.bf16 %v1759, 1056980736
        %v2176 = vmul.bf16 %v1760, 1056980736
        %v2177 = vmul.bf16 %v1761, 1056980736
        %v2178 = vmul.bf16 %v1762, 1056980736
        %v2179 = vmul.bf16 %v1763, 1056980736
        %v2180 = vmul.bf16 %v1764, 1056980736
        %v2181 = vmul.bf16 %v1765, 1056980736
        %v2182 = vmul.bf16 %v1766, 1056980736
        %v2183 = vmul.bf16 %v1767, 1056980736
        %v2184 = vmul.bf16 %v1768, 1056980736
        %v2185 = vmul.bf16 %v1769, 1056980736
        %v2186 = vmul.bf16 %v1770, 1056980736
        %v2187 = vmul.bf16 %v1771, 1056980736
        %v2188 = vmul.bf16 %v1772, 1056980736
        %v2189 = vmul.bf16 %v1773, 1056980736
        %v2190 = vmul.bf16 %v1774, 1056980736
        %v2191 = vmul.bf16 %v1775, 1056980736
        %v2192 = vmul.bf16 %v1776, 1056980736
        %v2193 = vmul.bf16 %v1777, 1056980736
        %v2194 = vmul.bf16 %v1778, 1056980736
        %v2195 = vmul.bf16 %v1779, 1056980736
        %v2196 = vmul.bf16 %v1780, 1056980736
        %v2197 = vmul.bf16 %v1781, 1056980736
        %v2198 = vmul.bf16 %v1782, 1056980736
        %v2199 = vmul.bf16 %v1783, 1056980736
        %v2200 = vmul.bf16 %v1784, 1056980736
        %v2201 = vmul.bf16 %v1785, 1056980736
        %v2202 = vmul.bf16 %v1786, 1056980736
        %v2203 = vmul.bf16 %v1787, 1056980736
        %v2204 = vmul.bf16 %v1788, 1056980736
        %v2205 = vmul.bf16 %v1789, 1056980736
        %v2206 = vmul.bf16 %v1790, 1056980736
        %v2207 = vmul.bf16 %v1791, 1056980736
        %v2208 = vmul.bf16 %v1792, 1056980736
        %v2209 = vmul.bf16 %v1793, 1056980736
        %v2210 = vmul.bf16 %v1794, 1056980736
        %v2211 = vmul.bf16 %v1795, 1056980736
        %v2212 = vmul.bf16 %v1796, 1056980736
        %v2213 = vmul.bf16 %v1797, 1056980736
        %v2214 = vmul.bf16 %v1798, 1056980736
        %v2215 = vmul.bf16 %v1799, 1056980736
        %v2216 = vmul.bf16 %v1800, 1056980736
        %v2217 = vmul.bf16 %v1801, 1056980736
        %v2218 = vmul.bf16 %v1802, 1056980736
        %v2219 = vmul.bf16 %v1803, 1056980736
        %v2220 = vmul.bf16 %v1804, 1056980736
        %v2221 = vmul.bf16 %v1805, 1056980736
        %v2222 = vmul.bf16 %v1806, 1056980736
        %v2223 = vmul.bf16 %v1807, 1056980736
        %v2224 = vmul.bf16 %v1808, 1056980736
        %v2225 = vmul.bf16 %v1809, 1056980736
        %v2226 = vmul.bf16 %v1810, 1056980736
        %v2227 = vmul.bf16 %v1811, 1056980736
        %v2228 = vmul.bf16 %v1812, 1056980736
        %v2229 = vmul.bf16 %v1813, 1056980736
        %v2230 = vmul.bf16 %v1814, 1056980736
        %v2231 = vmul.bf16 %v1815, 1056980736
        %v2232 = vmul.bf16 %v1816, 1056980736
        %v2233 = vmul.bf16 %v1817, 1056980736
        %v2234 = vmul.bf16 %v1818, 1056980736
        %v2235 = vmul.bf16 %v1819, 1056980736
        %v2236 = vmul.bf16 %v1820, 1056980736
        %v2237 = vmul.bf16 %v1821, 1056980736
        %v2238 = vmul.bf16 %v1822, 1056980736
        %v2239 = vmul.bf16 %v1823, 1056980736
        %v2240 = vmul.bf16 %v1824, 1056980736
        %v2241 = vmul.bf16 %v1825, 1056980736
        %v2242 = vmul.bf16 %v1826, 1056980736
        %v2243 = vmul.bf16 %v1827, 1056980736
        %v2244 = vmul.bf16 %v1828, 1056980736
        %v2245 = vmul.bf16 %v1829, 1056980736
        %v2246 = vmul.bf16 %v1830, 1056980736
        %v2247 = vmul.bf16 %v1831, 1056980736
        %v2248 = vmul.bf16 %v1832, 1056980736
        %v2249 = vmul.bf16 %v1833, 1056980736
        %v2250 = vmul.bf16 %v1834, 1056980736
        %v2251 = vmul.bf16 %v1835, 1056980736
        %v2252 = vmul.bf16 %v1836, 1056980736
        %v2253 = vmul.bf16 %v1837, 1056980736
        %v2254 = vmul.bf16 %v1838, 1056980736
        %v2255 = vmul.bf16 %v1839, 1056980736
        %v2256 = vmul.bf16 %v1840, 1056980736
        %v2257 = vmul.bf16 %v1841, 1056980736
        %v2258 = vmul.bf16 %v1842, 1056980736
        %v2259 = vmul.bf16 %v1843, 1056980736
        %v2260 = vmul.bf16 %v1844, 1056980736
        %v2261 = vmul.bf16 %v1845, 1056980736
        %v2262 = vmul.bf16 %v1846, 1056980736
        %v2263 = vmul.bf16 %v1847, 1056980736
        %v2264 = vmul.bf16 %v1848, 1056980736
        %v2265 = vmul.bf16 %v1849, 1056980736
        %v2266 = vmul.bf16 %v1850, 1056980736
        %v2267 = vmul.bf16 %v1851, 1056980736
        %v2268 = vmul.bf16 %v1852, 1056980736
        %v2269 = vmul.bf16 %v1853, 1056980736
        %v2270 = vmul.bf16 %v1854, 1056980736
        %v2279 = vunpack.c.l.b16 %v2143
        %v2280 = vunpack.c.l.b16 %v2144
        %v2281 = vunpack.c.l.b16 %v2145
        %v2282 = vunpack.c.l.b16 %v2146
        %v2283 = vunpack.c.l.b16 %v2147
        %v2284 = vunpack.c.l.b16 %v2148
        %v2285 = vunpack.c.l.b16 %v2149
        %v2286 = vunpack.c.l.b16 %v2150
        %v2287 = vpack.c.b16 %v2280, %v2279
        %v2288 = vpack.c.b16 %v2282, %v2281
        %v2289 = vpack.c.b16 %v2284, %v2283
        %v2290 = vpack.c.b16 %v2286, %v2285
        %v2299 = vunpack.c.l.b16 %v1855
        %v2300 = vunpack.c.l.b16 %v1856
        %v2301 = vunpack.c.l.b16 %v1857
        %v2302 = vunpack.c.l.b16 %v1858
        %v2303 = vunpack.c.l.b16 %v1859
        %v2304 = vunpack.c.l.b16 %v1860
        %v2305 = vunpack.c.l.b16 %v1861
        %v2306 = vunpack.c.l.b16 %v1862
        %v2307 = vpack.c.b16 %v2300, %v2299
        %v2308 = vpack.c.b16 %v2302, %v2301
        %v2309 = vpack.c.b16 %v2304, %v2303
        %v2310 = vpack.c.b16 %v2306, %v2305
        %vm2311 = vcmask 31744
        %v2313 = vsel %vm2311, %v2287, 0
        %v2316 = vsel %vm2311, %v2288, 0
        %v2319 = vsel %vm2311, %v2289, 0
        %v2322 = vsel %vm2311, %v2290, 0
        %v2325 = vsel %vm2311, %v2307, 0
        %v2328 = vsel %vm2311, %v2308, 0
        %v2331 = vsel %vm2311, %v2309, 0
        %v2334 = vsel %vm2311, %v2310, 0
        %2336 = vmatprep.subr.bf16.mxu0 0
        %2337 = vmatpush1.bf16.xpose.msra.mxu0 0
        %2338 = vmatprep.subr.bf16.mxu0 0
        %2339 = vmatpush1.bf16.xpose.msra.mxu0 0
        %2340 = vmatprep.subr.bf16.mxu0 0
        %2341 = vmatpush1.bf16.xpose.msra.mxu0 0
        %2342 = vmatprep.subr.bf16.mxu0 0
        %2343 = vmatpush1.bf16.xpose.msra.mxu0 0
        %2344 = vmatprep.subr.bf16.mxu0 0
        %2345 = vmatpush1.bf16.xpose.msra.mxu0 %v2334
        %2346 = vmatprep.subr.bf16.mxu0 0
        %2347 = vmatpush1.bf16.xpose.msra.mxu0 %v2331
        %2348 = vmatprep.subr.bf16.mxu0 0
        %2349 = vmatpush1.bf16.xpose.msra.mxu0 %v2328
        %2350 = vmatprep.subr.bf16.mxu0 0
        %2351 = vmatpush1.bf16.xpose.msra.mxu0 %v2325
        %2352 = vmatprep.subr.bf16.mxu0 0
        %2353 = vmatpush2.bf16.xpose.msra.mxu0 0
        %2354 = vmatprep.subr.bf16.mxu0 0
        %2355 = vmatpush2.bf16.xpose.msra.mxu0 0
        %2356 = vmatprep.subr.bf16.mxu0 0
        %2357 = vmatpush2.bf16.xpose.msra.mxu0 0
        %2358 = vmatprep.subr.bf16.mxu0 0
        %2359 = vmatpush2.bf16.xpose.msra.mxu0 0
        %2360 = vmatprep.subr.bf16.mxu0 0
        %2361 = vmatpush2.bf16.xpose.msra.mxu0 0
        %2362 = vmatprep.subr.bf16.mxu0 0
        %2363 = vmatpush2.bf16.xpose.msra.mxu0 0
        %2364 = vmatprep.subr.bf16.mxu0 0
        %2365 = vmatpush2.bf16.xpose.msra.mxu0 0
        %2366 = vmatprep.subr.bf16.mxu0 0
        %2367 = vmatpush2.bf16.xpose.msra.mxu0 0
        %2368 = vmatprep.mubr.bf16.mxu0 0
        %2369 = vmatmul.mubr.bf16.gmra.mxu0 %v2313
        %v2370 = vpop.f32.mrf.mxu0
        %v2371 = vadd.f32 0.0, %v2370
        %v2372 = vpop.f32.mrf.mxu0
        %v2373 = vpop.f32.mrf.mxu0
        %v2374 = vadd.f32 0.0, %v2373
        %v2375 = vpop.f32.mrf.mxu0
        %2376 = vmatprep.mubr.bf16.mxu0 0
        %2377 = vmatmul.mubr.bf16.gmra.mxu0 %v2316
        %v2378 = vpop.f32.mrf.mxu0
        %v2379 = vadd.f32 0.0, %v2378
        %v2380 = vpop.f32.mrf.mxu0
        %v2381 = vpop.f32.mrf.mxu0
        %v2382 = vadd.f32 0.0, %v2381
        %v2383 = vpop.f32.mrf.mxu0
        %2384 = vmatprep.mubr.bf16.mxu0 0
        %2385 = vmatmul.mubr.bf16.gmra.mxu0 %v2319
        %v2386 = vpop.f32.mrf.mxu0
        %v2387 = vadd.f32 0.0, %v2386
        %v2388 = vpop.f32.mrf.mxu0
        %v2389 = vpop.f32.mrf.mxu0
        %v2390 = vadd.f32 0.0, %v2389
        %v2391 = vpop.f32.mrf.mxu0
        %2392 = vmatprep.mubr.bf16.mxu0 0
        %2393 = vmatmul.mubr.bf16.gmra.mxu0 %v2322
        %v2394 = vpop.f32.mrf.mxu0
        %v2395 = vadd.f32 0.0, %v2394
        %v2396 = vpop.f32.mrf.mxu0
        %v2397 = vpop.f32.mrf.mxu0
        %v2398 = vadd.f32 0.0, %v2397
        %v2399 = vpop.f32.mrf.mxu0
        %2400 = vdwg.mxu0
        %v2409 = vunpack.c.l.b16 %v2151
        %v2410 = vunpack.c.l.b16 %v2152
        %v2411 = vunpack.c.l.b16 %v2153
        %v2412 = vunpack.c.l.b16 %v2154
        %v2413 = vunpack.c.l.b16 %v2155
        %v2414 = vunpack.c.l.b16 %v2156
        %v2415 = vunpack.c.l.b16 %v2157
        %v2416 = vunpack.c.l.b16 %v2158
        %v2417 = vpack.c.b16 %v2410, %v2409
        %v2418 = vpack.c.b16 %v2412, %v2411
        %v2419 = vpack.c.b16 %v2414, %v2413
        %v2420 = vpack.c.b16 %v2416, %v2415
        %v2429 = vunpack.c.l.b16 %v1863
        %v2430 = vunpack.c.l.b16 %v1864
        %v2431 = vunpack.c.l.b16 %v1865
        %v2432 = vunpack.c.l.b16 %v1866
        %v2433 = vunpack.c.l.b16 %v1867
        %v2434 = vunpack.c.l.b16 %v1868
        %v2435 = vunpack.c.l.b16 %v1869
        %v2436 = vunpack.c.l.b16 %v1870
        %v2437 = vpack.c.b16 %v2430, %v2429
        %v2438 = vpack.c.b16 %v2432, %v2431
        %v2439 = vpack.c.b16 %v2434, %v2433
        %v2440 = vpack.c.b16 %v2436, %v2435
        %v2442 = vsel %vm2311, %v2417, 0
        %v2445 = vsel %vm2311, %v2418, 0
        %v2448 = vsel %vm2311, %v2419, 0
        %v2451 = vsel %vm2311, %v2420, 0
        %v2454 = vsel %vm2311, %v2437, 0
        %v2457 = vsel %vm2311, %v2438, 0
        %v2460 = vsel %vm2311, %v2439, 0
        %v2463 = vsel %vm2311, %v2440, 0
        %2465 = vmatprep.subr.bf16.mxu0 0
        %2466 = vmatpush1.bf16.xpose.msra.mxu0 0
        %2467 = vmatprep.subr.bf16.mxu0 0
        %2468 = vmatpush1.bf16.xpose.msra.mxu0 0
        %2469 = vmatprep.subr.bf16.mxu0 0
        %2470 = vmatpush1.bf16.xpose.msra.mxu0 0
        %2471 = vmatprep.subr.bf16.mxu0 0
        %2472 = vmatpush1.bf16.xpose.msra.mxu0 0
        %2473 = vmatprep.subr.bf16.mxu0 0
        %2474 = vmatpush1.bf16.xpose.msra.mxu0 %v2463
        %2475 = vmatprep.subr.bf16.mxu0 0
        %2476 = vmatpush1.bf16.xpose.msra.mxu0 %v2460
        %2477 = vmatprep.subr.bf16.mxu0 0
        %2478 = vmatpush1.bf16.xpose.msra.mxu0 %v2457
        %2479 = vmatprep.subr.bf16.mxu0 0
        %2480 = vmatpush1.bf16.xpose.msra.mxu0 %v2454
        %2481 = vmatprep.subr.bf16.mxu0 0
        %2482 = vmatpush2.bf16.xpose.msra.mxu0 0
        %2483 = vmatprep.subr.bf16.mxu0 0
        %2484 = vmatpush2.bf16.xpose.msra.mxu0 0
        %2485 = vmatprep.subr.bf16.mxu0 0
        %2486 = vmatpush2.bf16.xpose.msra.mxu0 0
        %2487 = vmatprep.subr.bf16.mxu0 0
        %2488 = vmatpush2.bf16.xpose.msra.mxu0 0
        %2489 = vmatprep.subr.bf16.mxu0 0
        %2490 = vmatpush2.bf16.xpose.msra.mxu0 0
        %2491 = vmatprep.subr.bf16.mxu0 0
        %2492 = vmatpush2.bf16.xpose.msra.mxu0 0
        %2493 = vmatprep.subr.bf16.mxu0 0
        %2494 = vmatpush2.bf16.xpose.msra.mxu0 0
        %2495 = vmatprep.subr.bf16.mxu0 0
        %2496 = vmatpush2.bf16.xpose.msra.mxu0 0
        %2497 = vmatprep.mubr.bf16.mxu0 0
        %2498 = vmatmul.mubr.bf16.gmra.mxu0 %v2442
        %v2499 = vpop.f32.mrf.mxu0
        %v2500 = vadd.f32 0.0, %v2499
        %v2501 = vpop.f32.mrf.mxu0
        %v2502 = vpop.f32.mrf.mxu0
        %v2503 = vadd.f32 0.0, %v2502
        %v2504 = vpop.f32.mrf.mxu0
        %2505 = vmatprep.mubr.bf16.mxu0 0
        %2506 = vmatmul.mubr.bf16.gmra.mxu0 %v2445
        %v2507 = vpop.f32.mrf.mxu0
        %v2508 = vadd.f32 0.0, %v2507
        %v2509 = vpop.f32.mrf.mxu0
        %v2510 = vpop.f32.mrf.mxu0
        %v2511 = vadd.f32 0.0, %v2510
        %v2512 = vpop.f32.mrf.mxu0
        %2513 = vmatprep.mubr.bf16.mxu0 0
        %2514 = vmatmul.mubr.bf16.gmra.mxu0 %v2448
        %v2515 = vpop.f32.mrf.mxu0
        %v2516 = vadd.f32 0.0, %v2515
        %v2517 = vpop.f32.mrf.mxu0
        %v2518 = vpop.f32.mrf.mxu0
        %v2519 = vadd.f32 0.0, %v2518
        %v2520 = vpop.f32.mrf.mxu0
        %2521 = vmatprep.mubr.bf16.mxu0 0
        %2522 = vmatmul.mubr.bf16.gmra.mxu0 %v2451
        %v2523 = vpop.f32.mrf.mxu0
        %v2524 = vadd.f32 0.0, %v2523
        %v2525 = vpop.f32.mrf.mxu0
        %v2526 = vpop.f32.mrf.mxu0
        %v2527 = vadd.f32 0.0, %v2526
        %v2528 = vpop.f32.mrf.mxu0
        %2529 = vdwg.mxu0
        %v2538 = vunpack.c.l.b16 %v2159
        %v2539 = vunpack.c.l.b16 %v2160
        %v2540 = vunpack.c.l.b16 %v2161
        %v2541 = vunpack.c.l.b16 %v2162
        %v2542 = vunpack.c.l.b16 %v2163
        %v2543 = vunpack.c.l.b16 %v2164
        %v2544 = vunpack.c.l.b16 %v2165
        %v2545 = vunpack.c.l.b16 %v2166
        %v2546 = vpack.c.b16 %v2539, %v2538
        %v2547 = vpack.c.b16 %v2541, %v2540
        %v2548 = vpack.c.b16 %v2543, %v2542
        %v2549 = vpack.c.b16 %v2545, %v2544
        %v2558 = vunpack.c.l.b16 %v1871
        %v2559 = vunpack.c.l.b16 %v1872
        %v2560 = vunpack.c.l.b16 %v1873
        %v2561 = vunpack.c.l.b16 %v1874
        %v2562 = vunpack.c.l.b16 %v1875
        %v2563 = vunpack.c.l.b16 %v1876
        %v2564 = vunpack.c.l.b16 %v1877
        %v2565 = vunpack.c.l.b16 %v1878
        %v2566 = vpack.c.b16 %v2559, %v2558
        %v2567 = vpack.c.b16 %v2561, %v2560
        %v2568 = vpack.c.b16 %v2563, %v2562
        %v2569 = vpack.c.b16 %v2565, %v2564
        %v2571 = vsel %vm2311, %v2546, 0
        %v2574 = vsel %vm2311, %v2547, 0
        %v2577 = vsel %vm2311, %v2548, 0
        %v2580 = vsel %vm2311, %v2549, 0
        %v2583 = vsel %vm2311, %v2566, 0
        %v2586 = vsel %vm2311, %v2567, 0
        %v2589 = vsel %vm2311, %v2568, 0
        %v2592 = vsel %vm2311, %v2569, 0
        %2594 = vmatprep.subr.bf16.mxu0 0
        %2595 = vmatpush1.bf16.xpose.msra.mxu0 0
        %2596 = vmatprep.subr.bf16.mxu0 0
        %2597 = vmatpush1.bf16.xpose.msra.mxu0 0
        %2598 = vmatprep.subr.bf16.mxu0 0
        %2599 = vmatpush1.bf16.xpose.msra.mxu0 0
        %2600 = vmatprep.subr.bf16.mxu0 0
        %2601 = vmatpush1.bf16.xpose.msra.mxu0 0
        %2602 = vmatprep.subr.bf16.mxu0 0
        %2603 = vmatpush1.bf16.xpose.msra.mxu0 %v2592
        %2604 = vmatprep.subr.bf16.mxu0 0
        %2605 = vmatpush1.bf16.xpose.msra.mxu0 %v2589
        %2606 = vmatprep.subr.bf16.mxu0 0
        %2607 = vmatpush1.bf16.xpose.msra.mxu0 %v2586
        %2608 = vmatprep.subr.bf16.mxu0 0
        %2609 = vmatpush1.bf16.xpose.msra.mxu0 %v2583
        %2610 = vmatprep.subr.bf16.mxu0 0
        %2611 = vmatpush2.bf16.xpose.msra.mxu0 0
        %2612 = vmatprep.subr.bf16.mxu0 0
        %2613 = vmatpush2.bf16.xpose.msra.mxu0 0
        %2614 = vmatprep.subr.bf16.mxu0 0
        %2615 = vmatpush2.bf16.xpose.msra.mxu0 0
        %2616 = vmatprep.subr.bf16.mxu0 0
        %2617 = vmatpush2.bf16.xpose.msra.mxu0 0
        %2618 = vmatprep.subr.bf16.mxu0 0
        %2619 = vmatpush2.bf16.xpose.msra.mxu0 0
        %2620 = vmatprep.subr.bf16.mxu0 0
        %2621 = vmatpush2.bf16.xpose.msra.mxu0 0
        %2622 = vmatprep.subr.bf16.mxu0 0
        %2623 = vmatpush2.bf16.xpose.msra.mxu0 0
        %2624 = vmatprep.subr.bf16.mxu0 0
        %2625 = vmatpush2.bf16.xpose.msra.mxu0 0
        %2626 = vmatprep.mubr.bf16.mxu0 0
        %2627 = vmatmul.mubr.bf16.gmra.mxu0 %v2571
        %v2628 = vpop.f32.mrf.mxu0
        %v2629 = vadd.f32 0.0, %v2628
        %v2630 = vpop.f32.mrf.mxu0
        %v2631 = vpop.f32.mrf.mxu0
        %v2632 = vadd.f32 0.0, %v2631
        %v2633 = vpop.f32.mrf.mxu0
        %2634 = vmatprep.mubr.bf16.mxu0 0
        %2635 = vmatmul.mubr.bf16.gmra.mxu0 %v2574
        %v2636 = vpop.f32.mrf.mxu0
        %v2637 = vadd.f32 0.0, %v2636
        %v2638 = vpop.f32.mrf.mxu0
        %v2639 = vpop.f32.mrf.mxu0
        %v2640 = vadd.f32 0.0, %v2639
        %v2641 = vpop.f32.mrf.mxu0
        %2642 = vmatprep.mubr.bf16.mxu0 0
        %2643 = vmatmul.mubr.bf16.gmra.mxu0 %v2577
        %v2644 = vpop.f32.mrf.mxu0
        %v2645 = vadd.f32 0.0, %v2644
        %v2646 = vpop.f32.mrf.mxu0
        %v2647 = vpop.f32.mrf.mxu0
        %v2648 = vadd.f32 0.0, %v2647
        %v2649 = vpop.f32.mrf.mxu0
        %2650 = vmatprep.mubr.bf16.mxu0 0
        %2651 = vmatmul.mubr.bf16.gmra.mxu0 %v2580
        %v2652 = vpop.f32.mrf.mxu0
        %v2653 = vadd.f32 0.0, %v2652
        %v2654 = vpop.f32.mrf.mxu0
        %v2655 = vpop.f32.mrf.mxu0
        %v2656 = vadd.f32 0.0, %v2655
        %v2657 = vpop.f32.mrf.mxu0
        %2658 = vdwg.mxu0
        %v2667 = vunpack.c.l.b16 %v2167
        %v2668 = vunpack.c.l.b16 %v2168
        %v2669 = vunpack.c.l.b16 %v2169
        %v2670 = vunpack.c.l.b16 %v2170
        %v2671 = vunpack.c.l.b16 %v2171
        %v2672 = vunpack.c.l.b16 %v2172
        %v2673 = vunpack.c.l.b16 %v2173
        %v2674 = vunpack.c.l.b16 %v2174
        %v2675 = vpack.c.b16 %v2668, %v2667
        %v2676 = vpack.c.b16 %v2670, %v2669
        %v2677 = vpack.c.b16 %v2672, %v2671
        %v2678 = vpack.c.b16 %v2674, %v2673
        %v2687 = vunpack.c.l.b16 %v1879
        %v2688 = vunpack.c.l.b16 %v1880
        %v2689 = vunpack.c.l.b16 %v1881
        %v2690 = vunpack.c.l.b16 %v1882
        %v2691 = vunpack.c.l.b16 %v1883
        %v2692 = vunpack.c.l.b16 %v1884
        %v2693 = vunpack.c.l.b16 %v1885
        %v2694 = vunpack.c.l.b16 %v1886
        %v2695 = vpack.c.b16 %v2688, %v2687
        %v2696 = vpack.c.b16 %v2690, %v2689
        %v2697 = vpack.c.b16 %v2692, %v2691
        %v2698 = vpack.c.b16 %v2694, %v2693
        %v2700 = vsel %vm2311, %v2675, 0
        %v2703 = vsel %vm2311, %v2676, 0
        %v2706 = vsel %vm2311, %v2677, 0
        %v2709 = vsel %vm2311, %v2678, 0
        %v2712 = vsel %vm2311, %v2695, 0
        %v2715 = vsel %vm2311, %v2696, 0
        %v2718 = vsel %vm2311, %v2697, 0
        %v2721 = vsel %vm2311, %v2698, 0
        %2723 = vmatprep.subr.bf16.mxu0 0
        %2724 = vmatpush1.bf16.xpose.msra.mxu0 0
        %2725 = vmatprep.subr.bf16.mxu0 0
        %2726 = vmatpush1.bf16.xpose.msra.mxu0 0
        %2727 = vmatprep.subr.bf16.mxu0 0
        %2728 = vmatpush1.bf16.xpose.msra.mxu0 0
        %2729 = vmatprep.subr.bf16.mxu0 0
        %2730 = vmatpush1.bf16.xpose.msra.mxu0 0
        %2731 = vmatprep.subr.bf16.mxu0 0
        %2732 = vmatpush1.bf16.xpose.msra.mxu0 %v2721
        %2733 = vmatprep.subr.bf16.mxu0 0
        %2734 = vmatpush1.bf16.xpose.msra.mxu0 %v2718
        %2735 = vmatprep.subr.bf16.mxu0 0
        %2736 = vmatpush1.bf16.xpose.msra.mxu0 %v2715
        %2737 = vmatprep.subr.bf16.mxu0 0
        %2738 = vmatpush1.bf16.xpose.msra.mxu0 %v2712
        %2739 = vmatprep.subr.bf16.mxu0 0
        %2740 = vmatpush2.bf16.xpose.msra.mxu0 0
        %2741 = vmatprep.subr.bf16.mxu0 0
        %2742 = vmatpush2.bf16.xpose.msra.mxu0 0
        %2743 = vmatprep.subr.bf16.mxu0 0
        %2744 = vmatpush2.bf16.xpose.msra.mxu0 0
        %2745 = vmatprep.subr.bf16.mxu0 0
        %2746 = vmatpush2.bf16.xpose.msra.mxu0 0
        %2747 = vmatprep.subr.bf16.mxu0 0
        %2748 = vmatpush2.bf16.xpose.msra.mxu0 0
        %2749 = vmatprep.subr.bf16.mxu0 0
        %2750 = vmatpush2.bf16.xpose.msra.mxu0 0
        %2751 = vmatprep.subr.bf16.mxu0 0
        %2752 = vmatpush2.bf16.xpose.msra.mxu0 0
        %2753 = vmatprep.subr.bf16.mxu0 0
        %2754 = vmatpush2.bf16.xpose.msra.mxu0 0
        %2755 = vmatprep.mubr.bf16.mxu0 0
        %2756 = vmatmul.mubr.bf16.gmra.mxu0 %v2700
        %v2757 = vpop.f32.mrf.mxu0
        %v2758 = vadd.f32 0.0, %v2757
        %v2759 = vpop.f32.mrf.mxu0
        %v2760 = vpop.f32.mrf.mxu0
        %v2761 = vadd.f32 0.0, %v2760
        %v2762 = vpop.f32.mrf.mxu0
        %2763 = vmatprep.mubr.bf16.mxu0 0
        %2764 = vmatmul.mubr.bf16.gmra.mxu0 %v2703
        %v2765 = vpop.f32.mrf.mxu0
        %v2766 = vadd.f32 0.0, %v2765
        %v2767 = vpop.f32.mrf.mxu0
        %v2768 = vpop.f32.mrf.mxu0
        %v2769 = vadd.f32 0.0, %v2768
        %v2770 = vpop.f32.mrf.mxu0
        %2771 = vmatprep.mubr.bf16.mxu0 0
        %2772 = vmatmul.mubr.bf16.gmra.mxu0 %v2706
        %v2773 = vpop.f32.mrf.mxu0
        %v2774 = vadd.f32 0.0, %v2773
        %v2775 = vpop.f32.mrf.mxu0
        %v2776 = vpop.f32.mrf.mxu0
        %v2777 = vadd.f32 0.0, %v2776
        %v2778 = vpop.f32.mrf.mxu0
        %2779 = vmatprep.mubr.bf16.mxu0 0
        %2780 = vmatmul.mubr.bf16.gmra.mxu0 %v2709
        %v2781 = vpop.f32.mrf.mxu0
        %v2782 = vadd.f32 0.0, %v2781
        %v2783 = vpop.f32.mrf.mxu0
        %v2784 = vpop.f32.mrf.mxu0
        %v2785 = vadd.f32 0.0, %v2784
        %v2786 = vpop.f32.mrf.mxu0
        %2787 = vdwg.mxu0
        %v2796 = vunpack.c.l.b16 %v2175
        %v2797 = vunpack.c.l.b16 %v2176
        %v2798 = vunpack.c.l.b16 %v2177
        %v2799 = vunpack.c.l.b16 %v2178
        %v2800 = vunpack.c.l.b16 %v2179
        %v2801 = vunpack.c.l.b16 %v2180
        %v2802 = vunpack.c.l.b16 %v2181
        %v2803 = vunpack.c.l.b16 %v2182
        %v2804 = vpack.c.b16 %v2797, %v2796
        %v2805 = vpack.c.b16 %v2799, %v2798
        %v2806 = vpack.c.b16 %v2801, %v2800
        %v2807 = vpack.c.b16 %v2803, %v2802
        %v2816 = vunpack.c.l.b16 %v1887
        %v2817 = vunpack.c.l.b16 %v1888
        %v2818 = vunpack.c.l.b16 %v1889
        %v2819 = vunpack.c.l.b16 %v1890
        %v2820 = vunpack.c.l.b16 %v1891
        %v2821 = vunpack.c.l.b16 %v1892
        %v2822 = vunpack.c.l.b16 %v1893
        %v2823 = vunpack.c.l.b16 %v1894
        %v2824 = vpack.c.b16 %v2817, %v2816
        %v2825 = vpack.c.b16 %v2819, %v2818
        %v2826 = vpack.c.b16 %v2821, %v2820
        %v2827 = vpack.c.b16 %v2823, %v2822
        %v2829 = vsel %vm2311, %v2804, 0
        %v2832 = vsel %vm2311, %v2805, 0
        %v2835 = vsel %vm2311, %v2806, 0
        %v2838 = vsel %vm2311, %v2807, 0
        %v2841 = vsel %vm2311, %v2824, 0
        %v2844 = vsel %vm2311, %v2825, 0
        %v2847 = vsel %vm2311, %v2826, 0
        %v2850 = vsel %vm2311, %v2827, 0
        %2852 = vmatprep.subr.bf16.mxu0 0
        %2853 = vmatpush1.bf16.xpose.msra.mxu0 0
        %2854 = vmatprep.subr.bf16.mxu0 0
        %2855 = vmatpush1.bf16.xpose.msra.mxu0 0
        %2856 = vmatprep.subr.bf16.mxu0 0
        %2857 = vmatpush1.bf16.xpose.msra.mxu0 0
        %2858 = vmatprep.subr.bf16.mxu0 0
        %2859 = vmatpush1.bf16.xpose.msra.mxu0 0
        %2860 = vmatprep.subr.bf16.mxu0 0
        %2861 = vmatpush1.bf16.xpose.msra.mxu0 %v2850
        %2862 = vmatprep.subr.bf16.mxu0 0
        %2863 = vmatpush1.bf16.xpose.msra.mxu0 %v2847
        %2864 = vmatprep.subr.bf16.mxu0 0
        %2865 = vmatpush1.bf16.xpose.msra.mxu0 %v2844
        %2866 = vmatprep.subr.bf16.mxu0 0
        %2867 = vmatpush1.bf16.xpose.msra.mxu0 %v2841
        %2868 = vmatprep.subr.bf16.mxu0 0
        %2869 = vmatpush2.bf16.xpose.msra.mxu0 0
        %2870 = vmatprep.subr.bf16.mxu0 0
        %2871 = vmatpush2.bf16.xpose.msra.mxu0 0
        %2872 = vmatprep.subr.bf16.mxu0 0
        %2873 = vmatpush2.bf16.xpose.msra.mxu0 0
        %2874 = vmatprep.subr.bf16.mxu0 0
        %2875 = vmatpush2.bf16.xpose.msra.mxu0 0
        %2876 = vmatprep.subr.bf16.mxu0 0
        %2877 = vmatpush2.bf16.xpose.msra.mxu0 0
        %2878 = vmatprep.subr.bf16.mxu0 0
        %2879 = vmatpush2.bf16.xpose.msra.mxu0 0
        %2880 = vmatprep.subr.bf16.mxu0 0
        %2881 = vmatpush2.bf16.xpose.msra.mxu0 0
        %2882 = vmatprep.subr.bf16.mxu0 0
        %2883 = vmatpush2.bf16.xpose.msra.mxu0 0
        %2884 = vmatprep.mubr.bf16.mxu0 0
        %2885 = vmatmul.mubr.bf16.gmra.mxu0 %v2829
        %v2886 = vpop.f32.mrf.mxu0
        %v2887 = vadd.f32 0.0, %v2886
        %v2888 = vpop.f32.mrf.mxu0
        %v2889 = vpop.f32.mrf.mxu0
        %v2890 = vadd.f32 0.0, %v2889
        %v2891 = vpop.f32.mrf.mxu0
        %2892 = vmatprep.mubr.bf16.mxu0 0
        %2893 = vmatmul.mubr.bf16.gmra.mxu0 %v2832
        %v2894 = vpop.f32.mrf.mxu0
        %v2895 = vadd.f32 0.0, %v2894
        %v2896 = vpop.f32.mrf.mxu0
        %v2897 = vpop.f32.mrf.mxu0
        %v2898 = vadd.f32 0.0, %v2897
        %v2899 = vpop.f32.mrf.mxu0
        %2900 = vmatprep.mubr.bf16.mxu0 0
        %2901 = vmatmul.mubr.bf16.gmra.mxu0 %v2835
        %v2902 = vpop.f32.mrf.mxu0
        %v2903 = vadd.f32 0.0, %v2902
        %v2904 = vpop.f32.mrf.mxu0
        %v2905 = vpop.f32.mrf.mxu0
        %v2906 = vadd.f32 0.0, %v2905
        %v2907 = vpop.f32.mrf.mxu0
        %2908 = vmatprep.mubr.bf16.mxu0 0
        %2909 = vmatmul.mubr.bf16.gmra.mxu0 %v2838
        %v2910 = vpop.f32.mrf.mxu0
        %v2911 = vadd.f32 0.0, %v2910
        %v2912 = vpop.f32.mrf.mxu0
        %v2913 = vpop.f32.mrf.mxu0
        %v2914 = vadd.f32 0.0, %v2913
        %v2915 = vpop.f32.mrf.mxu0
        %2916 = vdwg.mxu0
        %v2925 = vunpack.c.l.b16 %v2183
        %v2926 = vunpack.c.l.b16 %v2184
        %v2927 = vunpack.c.l.b16 %v2185
        %v2928 = vunpack.c.l.b16 %v2186
        %v2929 = vunpack.c.l.b16 %v2187
        %v2930 = vunpack.c.l.b16 %v2188
        %v2931 = vunpack.c.l.b16 %v2189
        %v2932 = vunpack.c.l.b16 %v2190
        %v2933 = vpack.c.b16 %v2926, %v2925
        %v2934 = vpack.c.b16 %v2928, %v2927
        %v2935 = vpack.c.b16 %v2930, %v2929
        %v2936 = vpack.c.b16 %v2932, %v2931
        %v2945 = vunpack.c.l.b16 %v1895
        %v2946 = vunpack.c.l.b16 %v1896
        %v2947 = vunpack.c.l.b16 %v1897
        %v2948 = vunpack.c.l.b16 %v1898
        %v2949 = vunpack.c.l.b16 %v1899
        %v2950 = vunpack.c.l.b16 %v1900
        %v2951 = vunpack.c.l.b16 %v1901
        %v2952 = vunpack.c.l.b16 %v1902
        %v2953 = vpack.c.b16 %v2946, %v2945
        %v2954 = vpack.c.b16 %v2948, %v2947
        %v2955 = vpack.c.b16 %v2950, %v2949
        %v2956 = vpack.c.b16 %v2952, %v2951
        %v2958 = vsel %vm2311, %v2933, 0
        %v2961 = vsel %vm2311, %v2934, 0
        %v2964 = vsel %vm2311, %v2935, 0
        %v2967 = vsel %vm2311, %v2936, 0
        %v2970 = vsel %vm2311, %v2953, 0
        %v2973 = vsel %vm2311, %v2954, 0
        %v2976 = vsel %vm2311, %v2955, 0
        %v2979 = vsel %vm2311, %v2956, 0
        %2981 = vmatprep.subr.bf16.mxu0 0
        %2982 = vmatpush1.bf16.xpose.msra.mxu0 0
        %2983 = vmatprep.subr.bf16.mxu0 0
        %2984 = vmatpush1.bf16.xpose.msra.mxu0 0
        %2985 = vmatprep.subr.bf16.mxu0 0
        %2986 = vmatpush1.bf16.xpose.msra.mxu0 0
        %2987 = vmatprep.subr.bf16.mxu0 0
        %2988 = vmatpush1.bf16.xpose.msra.mxu0 0
        %2989 = vmatprep.subr.bf16.mxu0 0
        %2990 = vmatpush1.bf16.xpose.msra.mxu0 %v2979
        %2991 = vmatprep.subr.bf16.mxu0 0
        %2992 = vmatpush1.bf16.xpose.msra.mxu0 %v2976
        %2993 = vmatprep.subr.bf16.mxu0 0
        %2994 = vmatpush1.bf16.xpose.msra.mxu0 %v2973
        %2995 = vmatprep.subr.bf16.mxu0 0
        %2996 = vmatpush1.bf16.xpose.msra.mxu0 %v2970
        %2997 = vmatprep.subr.bf16.mxu0 0
        %2998 = vmatpush2.bf16.xpose.msra.mxu0 0
        %2999 = vmatprep.subr.bf16.mxu0 0
        %3000 = vmatpush2.bf16.xpose.msra.mxu0 0
        %3001 = vmatprep.subr.bf16.mxu0 0
        %3002 = vmatpush2.bf16.xpose.msra.mxu0 0
        %3003 = vmatprep.subr.bf16.mxu0 0
        %3004 = vmatpush2.bf16.xpose.msra.mxu0 0
        %3005 = vmatprep.subr.bf16.mxu0 0
        %3006 = vmatpush2.bf16.xpose.msra.mxu0 0
        %3007 = vmatprep.subr.bf16.mxu0 0
        %3008 = vmatpush2.bf16.xpose.msra.mxu0 0
        %3009 = vmatprep.subr.bf16.mxu0 0
        %3010 = vmatpush2.bf16.xpose.msra.mxu0 0
        %3011 = vmatprep.subr.bf16.mxu0 0
        %3012 = vmatpush2.bf16.xpose.msra.mxu0 0
        %3013 = vmatprep.mubr.bf16.mxu0 0
        %3014 = vmatmul.mubr.bf16.gmra.mxu0 %v2958
        %v3015 = vpop.f32.mrf.mxu0
        %v3016 = vadd.f32 0.0, %v3015
        %v3017 = vpop.f32.mrf.mxu0
        %v3018 = vpop.f32.mrf.mxu0
        %v3019 = vadd.f32 0.0, %v3018
        %v3020 = vpop.f32.mrf.mxu0
        %3021 = vmatprep.mubr.bf16.mxu0 0
        %3022 = vmatmul.mubr.bf16.gmra.mxu0 %v2961
        %v3023 = vpop.f32.mrf.mxu0
        %v3024 = vadd.f32 0.0, %v3023
        %v3025 = vpop.f32.mrf.mxu0
        %v3026 = vpop.f32.mrf.mxu0
        %v3027 = vadd.f32 0.0, %v3026
        %v3028 = vpop.f32.mrf.mxu0
        %3029 = vmatprep.mubr.bf16.mxu0 0
        %3030 = vmatmul.mubr.bf16.gmra.mxu0 %v2964
        %v3031 = vpop.f32.mrf.mxu0
        %v3032 = vadd.f32 0.0, %v3031
        %v3033 = vpop.f32.mrf.mxu0
        %v3034 = vpop.f32.mrf.mxu0
        %v3035 = vadd.f32 0.0, %v3034
        %v3036 = vpop.f32.mrf.mxu0
        %3037 = vmatprep.mubr.bf16.mxu0 0
        %3038 = vmatmul.mubr.bf16.gmra.mxu0 %v2967
        %v3039 = vpop.f32.mrf.mxu0
        %v3040 = vadd.f32 0.0, %v3039
        %v3041 = vpop.f32.mrf.mxu0
        %v3042 = vpop.f32.mrf.mxu0
        %v3043 = vadd.f32 0.0, %v3042
        %v3044 = vpop.f32.mrf.mxu0
        %3045 = vdwg.mxu0
        %v3054 = vunpack.c.l.b16 %v2191
        %v3055 = vunpack.c.l.b16 %v2192
        %v3056 = vunpack.c.l.b16 %v2193
        %v3057 = vunpack.c.l.b16 %v2194
        %v3058 = vunpack.c.l.b16 %v2195
        %v3059 = vunpack.c.l.b16 %v2196
        %v3060 = vunpack.c.l.b16 %v2197
        %v3061 = vunpack.c.l.b16 %v2198
        %v3062 = vpack.c.b16 %v3055, %v3054
        %v3063 = vpack.c.b16 %v3057, %v3056
        %v3064 = vpack.c.b16 %v3059, %v3058
        %v3065 = vpack.c.b16 %v3061, %v3060
        %v3074 = vunpack.c.l.b16 %v1903
        %v3075 = vunpack.c.l.b16 %v1904
        %v3076 = vunpack.c.l.b16 %v1905
        %v3077 = vunpack.c.l.b16 %v1906
        %v3078 = vunpack.c.l.b16 %v1907
        %v3079 = vunpack.c.l.b16 %v1908
        %v3080 = vunpack.c.l.b16 %v1909
        %v3081 = vunpack.c.l.b16 %v1910
        %v3082 = vpack.c.b16 %v3075, %v3074
        %v3083 = vpack.c.b16 %v3077, %v3076
        %v3084 = vpack.c.b16 %v3079, %v3078
        %v3085 = vpack.c.b16 %v3081, %v3080
        %v3087 = vsel %vm2311, %v3062, 0
        %v3090 = vsel %vm2311, %v3063, 0
        %v3093 = vsel %vm2311, %v3064, 0
        %v3096 = vsel %vm2311, %v3065, 0
        %v3099 = vsel %vm2311, %v3082, 0
        %v3102 = vsel %vm2311, %v3083, 0
        %v3105 = vsel %vm2311, %v3084, 0
        %v3108 = vsel %vm2311, %v3085, 0
        %3110 = vmatprep.subr.bf16.mxu0 0
        %3111 = vmatpush1.bf16.xpose.msra.mxu0 0
        %3112 = vmatprep.subr.bf16.mxu0 0
        %3113 = vmatpush1.bf16.xpose.msra.mxu0 0
        %3114 = vmatprep.subr.bf16.mxu0 0
        %3115 = vmatpush1.bf16.xpose.msra.mxu0 0
        %3116 = vmatprep.subr.bf16.mxu0 0
        %3117 = vmatpush1.bf16.xpose.msra.mxu0 0
        %3118 = vmatprep.subr.bf16.mxu0 0
        %3119 = vmatpush1.bf16.xpose.msra.mxu0 %v3108
        %3120 = vmatprep.subr.bf16.mxu0 0
        %3121 = vmatpush1.bf16.xpose.msra.mxu0 %v3105
        %3122 = vmatprep.subr.bf16.mxu0 0
        %3123 = vmatpush1.bf16.xpose.msra.mxu0 %v3102
        %3124 = vmatprep.subr.bf16.mxu0 0
        %3125 = vmatpush1.bf16.xpose.msra.mxu0 %v3099
        %3126 = vmatprep.subr.bf16.mxu0 0
        %3127 = vmatpush2.bf16.xpose.msra.mxu0 0
        %3128 = vmatprep.subr.bf16.mxu0 0
        %3129 = vmatpush2.bf16.xpose.msra.mxu0 0
        %3130 = vmatprep.subr.bf16.mxu0 0
        %3131 = vmatpush2.bf16.xpose.msra.mxu0 0
        %3132 = vmatprep.subr.bf16.mxu0 0
        %3133 = vmatpush2.bf16.xpose.msra.mxu0 0
        %3134 = vmatprep.subr.bf16.mxu0 0
        %3135 = vmatpush2.bf16.xpose.msra.mxu0 0
        %3136 = vmatprep.subr.bf16.mxu0 0
        %3137 = vmatpush2.bf16.xpose.msra.mxu0 0
        %3138 = vmatprep.subr.bf16.mxu0 0
        %3139 = vmatpush2.bf16.xpose.msra.mxu0 0
        %3140 = vmatprep.subr.bf16.mxu0 0
        %3141 = vmatpush2.bf16.xpose.msra.mxu0 0
        %3142 = vmatprep.mubr.bf16.mxu0 0
        %3143 = vmatmul.mubr.bf16.gmra.mxu0 %v3087
        %v3144 = vpop.f32.mrf.mxu0
        %v3145 = vadd.f32 0.0, %v3144
        %v3146 = vpop.f32.mrf.mxu0
        %v3147 = vpop.f32.mrf.mxu0
        %v3148 = vadd.f32 0.0, %v3147
        %v3149 = vpop.f32.mrf.mxu0
        %3150 = vmatprep.mubr.bf16.mxu0 0
        %3151 = vmatmul.mubr.bf16.gmra.mxu0 %v3090
        %v3152 = vpop.f32.mrf.mxu0
        %v3153 = vadd.f32 0.0, %v3152
        %v3154 = vpop.f32.mrf.mxu0
        %v3155 = vpop.f32.mrf.mxu0
        %v3156 = vadd.f32 0.0, %v3155
        %v3157 = vpop.f32.mrf.mxu0
        %3158 = vmatprep.mubr.bf16.mxu0 0
        %3159 = vmatmul.mubr.bf16.gmra.mxu0 %v3093
        %v3160 = vpop.f32.mrf.mxu0
        %v3161 = vadd.f32 0.0, %v3160
        %v3162 = vpop.f32.mrf.mxu0
        %v3163 = vpop.f32.mrf.mxu0
        %v3164 = vadd.f32 0.0, %v3163
        %v3165 = vpop.f32.mrf.mxu0
        %3166 = vmatprep.mubr.bf16.mxu0 0
        %3167 = vmatmul.mubr.bf16.gmra.mxu0 %v3096
        %v3168 = vpop.f32.mrf.mxu0
        %v3169 = vadd.f32 0.0, %v3168
        %v3170 = vpop.f32.mrf.mxu0
        %v3171 = vpop.f32.mrf.mxu0
        %v3172 = vadd.f32 0.0, %v3171
        %v3173 = vpop.f32.mrf.mxu0
        %3174 = vdwg.mxu0
        %v3183 = vunpack.c.l.b16 %v2199
        %v3184 = vunpack.c.l.b16 %v2200
        %v3185 = vunpack.c.l.b16 %v2201
        %v3186 = vunpack.c.l.b16 %v2202
        %v3187 = vunpack.c.l.b16 %v2203
        %v3188 = vunpack.c.l.b16 %v2204
        %v3189 = vunpack.c.l.b16 %v2205
        %v3190 = vunpack.c.l.b16 %v2206
        %v3191 = vpack.c.b16 %v3184, %v3183
        %v3192 = vpack.c.b16 %v3186, %v3185
        %v3193 = vpack.c.b16 %v3188, %v3187
        %v3194 = vpack.c.b16 %v3190, %v3189
        %v3203 = vunpack.c.l.b16 %v1911
        %v3204 = vunpack.c.l.b16 %v1912
        %v3205 = vunpack.c.l.b16 %v1913
        %v3206 = vunpack.c.l.b16 %v1914
        %v3207 = vunpack.c.l.b16 %v1915
        %v3208 = vunpack.c.l.b16 %v1916
        %v3209 = vunpack.c.l.b16 %v1917
        %v3210 = vunpack.c.l.b16 %v1918
        %v3211 = vpack.c.b16 %v3204, %v3203
        %v3212 = vpack.c.b16 %v3206, %v3205
        %v3213 = vpack.c.b16 %v3208, %v3207
        %v3214 = vpack.c.b16 %v3210, %v3209
        %v3216 = vsel %vm2311, %v3191, 0
        %v3219 = vsel %vm2311, %v3192, 0
        %v3222 = vsel %vm2311, %v3193, 0
        %v3225 = vsel %vm2311, %v3194, 0
        %v3228 = vsel %vm2311, %v3211, 0
        %v3231 = vsel %vm2311, %v3212, 0
        %v3234 = vsel %vm2311, %v3213, 0
        %v3237 = vsel %vm2311, %v3214, 0
        %3239 = vmatprep.subr.bf16.mxu0 0
        %3240 = vmatpush1.bf16.xpose.msra.mxu0 0
        %3241 = vmatprep.subr.bf16.mxu0 0
        %3242 = vmatpush1.bf16.xpose.msra.mxu0 0
        %3243 = vmatprep.subr.bf16.mxu0 0
        %3244 = vmatpush1.bf16.xpose.msra.mxu0 0
        %3245 = vmatprep.subr.bf16.mxu0 0
        %3246 = vmatpush1.bf16.xpose.msra.mxu0 0
        %3247 = vmatprep.subr.bf16.mxu0 0
        %3248 = vmatpush1.bf16.xpose.msra.mxu0 %v3237
        %3249 = vmatprep.subr.bf16.mxu0 0
        %3250 = vmatpush1.bf16.xpose.msra.mxu0 %v3234
        %3251 = vmatprep.subr.bf16.mxu0 0
        %3252 = vmatpush1.bf16.xpose.msra.mxu0 %v3231
        %3253 = vmatprep.subr.bf16.mxu0 0
        %3254 = vmatpush1.bf16.xpose.msra.mxu0 %v3228
        %3255 = vmatprep.subr.bf16.mxu0 0
        %3256 = vmatpush2.bf16.xpose.msra.mxu0 0
        %3257 = vmatprep.subr.bf16.mxu0 0
        %3258 = vmatpush2.bf16.xpose.msra.mxu0 0
        %3259 = vmatprep.subr.bf16.mxu0 0
        %3260 = vmatpush2.bf16.xpose.msra.mxu0 0
        %3261 = vmatprep.subr.bf16.mxu0 0
        %3262 = vmatpush2.bf16.xpose.msra.mxu0 0
        %3263 = vmatprep.subr.bf16.mxu0 0
        %3264 = vmatpush2.bf16.xpose.msra.mxu0 0
        %3265 = vmatprep.subr.bf16.mxu0 0
        %3266 = vmatpush2.bf16.xpose.msra.mxu0 0
        %3267 = vmatprep.subr.bf16.mxu0 0
        %3268 = vmatpush2.bf16.xpose.msra.mxu0 0
        %3269 = vmatprep.subr.bf16.mxu0 0
        %3270 = vmatpush2.bf16.xpose.msra.mxu0 0
        %3271 = vmatprep.mubr.bf16.mxu0 0
        %3272 = vmatmul.mubr.bf16.gmra.mxu0 %v3216
        %v3273 = vpop.f32.mrf.mxu0
        %v3274 = vadd.f32 0.0, %v3273
        %v3275 = vpop.f32.mrf.mxu0
        %v3276 = vpop.f32.mrf.mxu0
        %v3277 = vadd.f32 0.0, %v3276
        %v3278 = vpop.f32.mrf.mxu0
        %3279 = vmatprep.mubr.bf16.mxu0 0
        %3280 = vmatmul.mubr.bf16.gmra.mxu0 %v3219
        %v3281 = vpop.f32.mrf.mxu0
        %v3282 = vadd.f32 0.0, %v3281
        %v3283 = vpop.f32.mrf.mxu0
        %v3284 = vpop.f32.mrf.mxu0
        %v3285 = vadd.f32 0.0, %v3284
        %v3286 = vpop.f32.mrf.mxu0
        %3287 = vmatprep.mubr.bf16.mxu0 0
        %3288 = vmatmul.mubr.bf16.gmra.mxu0 %v3222
        %v3289 = vpop.f32.mrf.mxu0
        %v3290 = vadd.f32 0.0, %v3289
        %v3291 = vpop.f32.mrf.mxu0
        %v3292 = vpop.f32.mrf.mxu0
        %v3293 = vadd.f32 0.0, %v3292
        %v3294 = vpop.f32.mrf.mxu0
        %3295 = vmatprep.mubr.bf16.mxu0 0
        %3296 = vmatmul.mubr.bf16.gmra.mxu0 %v3225
        %v3297 = vpop.f32.mrf.mxu0
        %v3298 = vadd.f32 0.0, %v3297
        %v3299 = vpop.f32.mrf.mxu0
        %v3300 = vpop.f32.mrf.mxu0
        %v3301 = vadd.f32 0.0, %v3300
        %v3302 = vpop.f32.mrf.mxu0
        %3303 = vdwg.mxu0
        %v3312 = vunpack.c.l.b16 %v2207
        %v3313 = vunpack.c.l.b16 %v2208
        %v3314 = vunpack.c.l.b16 %v2209
        %v3315 = vunpack.c.l.b16 %v2210
        %v3316 = vunpack.c.l.b16 %v2211
        %v3317 = vunpack.c.l.b16 %v2212
        %v3318 = vunpack.c.l.b16 %v2213
        %v3319 = vunpack.c.l.b16 %v2214
        %v3320 = vpack.c.b16 %v3313, %v3312
        %v3321 = vpack.c.b16 %v3315, %v3314
        %v3322 = vpack.c.b16 %v3317, %v3316
        %v3323 = vpack.c.b16 %v3319, %v3318
        %v3332 = vunpack.c.l.b16 %v1919
        %v3333 = vunpack.c.l.b16 %v1920
        %v3334 = vunpack.c.l.b16 %v1921
        %v3335 = vunpack.c.l.b16 %v1922
        %v3336 = vunpack.c.l.b16 %v1923
        %v3337 = vunpack.c.l.b16 %v1924
        %v3338 = vunpack.c.l.b16 %v1925
        %v3339 = vunpack.c.l.b16 %v1926
        %v3340 = vpack.c.b16 %v3333, %v3332
        %v3341 = vpack.c.b16 %v3335, %v3334
        %v3342 = vpack.c.b16 %v3337, %v3336
        %v3343 = vpack.c.b16 %v3339, %v3338
        %v3345 = vsel %vm2311, %v3320, 0
        %v3348 = vsel %vm2311, %v3321, 0
        %v3351 = vsel %vm2311, %v3322, 0
        %v3354 = vsel %vm2311, %v3323, 0
        %v3357 = vsel %vm2311, %v3340, 0
        %v3360 = vsel %vm2311, %v3341, 0
        %v3363 = vsel %vm2311, %v3342, 0
        %v3366 = vsel %vm2311, %v3343, 0
        %3368 = vmatprep.subr.bf16.mxu0 0
        %3369 = vmatpush1.bf16.xpose.msra.mxu0 0
        %3370 = vmatprep.subr.bf16.mxu0 0
        %3371 = vmatpush1.bf16.xpose.msra.mxu0 0
        %3372 = vmatprep.subr.bf16.mxu0 0
        %3373 = vmatpush1.bf16.xpose.msra.mxu0 0
        %3374 = vmatprep.subr.bf16.mxu0 0
        %3375 = vmatpush1.bf16.xpose.msra.mxu0 0
        %3376 = vmatprep.subr.bf16.mxu0 0
        %3377 = vmatpush1.bf16.xpose.msra.mxu0 %v3366
        %3378 = vmatprep.subr.bf16.mxu0 0
        %3379 = vmatpush1.bf16.xpose.msra.mxu0 %v3363
        %3380 = vmatprep.subr.bf16.mxu0 0
        %3381 = vmatpush1.bf16.xpose.msra.mxu0 %v3360
        %3382 = vmatprep.subr.bf16.mxu0 0
        %3383 = vmatpush1.bf16.xpose.msra.mxu0 %v3357
        %3384 = vmatprep.subr.bf16.mxu0 0
        %3385 = vmatpush2.bf16.xpose.msra.mxu0 0
        %3386 = vmatprep.subr.bf16.mxu0 0
        %3387 = vmatpush2.bf16.xpose.msra.mxu0 0
        %3388 = vmatprep.subr.bf16.mxu0 0
        %3389 = vmatpush2.bf16.xpose.msra.mxu0 0
        %3390 = vmatprep.subr.bf16.mxu0 0
        %3391 = vmatpush2.bf16.xpose.msra.mxu0 0
        %3392 = vmatprep.subr.bf16.mxu0 0
        %3393 = vmatpush2.bf16.xpose.msra.mxu0 0
        %3394 = vmatprep.subr.bf16.mxu0 0
        %3395 = vmatpush2.bf16.xpose.msra.mxu0 0
        %3396 = vmatprep.subr.bf16.mxu0 0
        %3397 = vmatpush2.bf16.xpose.msra.mxu0 0
        %3398 = vmatprep.subr.bf16.mxu0 0
        %3399 = vmatpush2.bf16.xpose.msra.mxu0 0
        %3400 = vmatprep.mubr.bf16.mxu0 0
        %3401 = vmatmul.mubr.bf16.gmra.mxu0 %v3345
        %v3402 = vpop.f32.mrf.mxu0
        %v3403 = vadd.f32 0.0, %v3402
        %v3404 = vpop.f32.mrf.mxu0
        %v3405 = vpop.f32.mrf.mxu0
        %v3406 = vadd.f32 0.0, %v3405
        %v3407 = vpop.f32.mrf.mxu0
        %3408 = vmatprep.mubr.bf16.mxu0 0
        %3409 = vmatmul.mubr.bf16.gmra.mxu0 %v3348
        %v3410 = vpop.f32.mrf.mxu0
        %v3411 = vadd.f32 0.0, %v3410
        %v3412 = vpop.f32.mrf.mxu0
        %v3413 = vpop.f32.mrf.mxu0
        %v3414 = vadd.f32 0.0, %v3413
        %v3415 = vpop.f32.mrf.mxu0
        %3416 = vmatprep.mubr.bf16.mxu0 0
        %3417 = vmatmul.mubr.bf16.gmra.mxu0 %v3351
        %v3418 = vpop.f32.mrf.mxu0
        %v3419 = vadd.f32 0.0, %v3418
        %v3420 = vpop.f32.mrf.mxu0
        %v3421 = vpop.f32.mrf.mxu0
        %v3422 = vadd.f32 0.0, %v3421
        %v3423 = vpop.f32.mrf.mxu0
        %3424 = vmatprep.mubr.bf16.mxu0 0
        %3425 = vmatmul.mubr.bf16.gmra.mxu0 %v3354
        %v3426 = vpop.f32.mrf.mxu0
        %v3427 = vadd.f32 0.0, %v3426
        %v3428 = vpop.f32.mrf.mxu0
        %v3429 = vpop.f32.mrf.mxu0
        %v3430 = vadd.f32 0.0, %v3429
        %v3431 = vpop.f32.mrf.mxu0
        %3432 = vdwg.mxu0
        %v3441 = vunpack.c.l.b16 %v2215
        %v3442 = vunpack.c.l.b16 %v2216
        %v3443 = vunpack.c.l.b16 %v2217
        %v3444 = vunpack.c.l.b16 %v2218
        %v3445 = vunpack.c.l.b16 %v2219
        %v3446 = vunpack.c.l.b16 %v2220
        %v3447 = vunpack.c.l.b16 %v2221
        %v3448 = vunpack.c.l.b16 %v2222
        %v3449 = vpack.c.b16 %v3442, %v3441
        %v3450 = vpack.c.b16 %v3444, %v3443
        %v3451 = vpack.c.b16 %v3446, %v3445
        %v3452 = vpack.c.b16 %v3448, %v3447
        %v3461 = vunpack.c.l.b16 %v1927
        %v3462 = vunpack.c.l.b16 %v1928
        %v3463 = vunpack.c.l.b16 %v1929
        %v3464 = vunpack.c.l.b16 %v1930
        %v3465 = vunpack.c.l.b16 %v1931
        %v3466 = vunpack.c.l.b16 %v1932
        %v3467 = vunpack.c.l.b16 %v1933
        %v3468 = vunpack.c.l.b16 %v1934
        %v3469 = vpack.c.b16 %v3462, %v3461
        %v3470 = vpack.c.b16 %v3464, %v3463
        %v3471 = vpack.c.b16 %v3466, %v3465
        %v3472 = vpack.c.b16 %v3468, %v3467
        %v3474 = vsel %vm2311, %v3449, 0
        %v3477 = vsel %vm2311, %v3450, 0
        %v3480 = vsel %vm2311, %v3451, 0
        %v3483 = vsel %vm2311, %v3452, 0
        %v3486 = vsel %vm2311, %v3469, 0
        %v3489 = vsel %vm2311, %v3470, 0
        %v3492 = vsel %vm2311, %v3471, 0
        %v3495 = vsel %vm2311, %v3472, 0
        %3497 = vmatprep.subr.bf16.mxu0 0
        %3498 = vmatpush1.bf16.xpose.msra.mxu0 0
        %3499 = vmatprep.subr.bf16.mxu0 0
        %3500 = vmatpush1.bf16.xpose.msra.mxu0 0
        %3501 = vmatprep.subr.bf16.mxu0 0
        %3502 = vmatpush1.bf16.xpose.msra.mxu0 0
        %3503 = vmatprep.subr.bf16.mxu0 0
        %3504 = vmatpush1.bf16.xpose.msra.mxu0 0
        %3505 = vmatprep.subr.bf16.mxu0 0
        %3506 = vmatpush1.bf16.xpose.msra.mxu0 %v3495
        %3507 = vmatprep.subr.bf16.mxu0 0
        %3508 = vmatpush1.bf16.xpose.msra.mxu0 %v3492
        %3509 = vmatprep.subr.bf16.mxu0 0
        %3510 = vmatpush1.bf16.xpose.msra.mxu0 %v3489
        %3511 = vmatprep.subr.bf16.mxu0 0
        %3512 = vmatpush1.bf16.xpose.msra.mxu0 %v3486
        %3513 = vmatprep.subr.bf16.mxu0 0
        %3514 = vmatpush2.bf16.xpose.msra.mxu0 0
        %3515 = vmatprep.subr.bf16.mxu0 0
        %3516 = vmatpush2.bf16.xpose.msra.mxu0 0
        %3517 = vmatprep.subr.bf16.mxu0 0
        %3518 = vmatpush2.bf16.xpose.msra.mxu0 0
        %3519 = vmatprep.subr.bf16.mxu0 0
        %3520 = vmatpush2.bf16.xpose.msra.mxu0 0
        %3521 = vmatprep.subr.bf16.mxu0 0
        %3522 = vmatpush2.bf16.xpose.msra.mxu0 0
        %3523 = vmatprep.subr.bf16.mxu0 0
        %3524 = vmatpush2.bf16.xpose.msra.mxu0 0
        %3525 = vmatprep.subr.bf16.mxu0 0
        %3526 = vmatpush2.bf16.xpose.msra.mxu0 0
        %3527 = vmatprep.subr.bf16.mxu0 0
        %3528 = vmatpush2.bf16.xpose.msra.mxu0 0
        %3529 = vmatprep.mubr.bf16.mxu0 0
        %3530 = vmatmul.mubr.bf16.gmra.mxu0 %v3474
        %v3531 = vpop.f32.mrf.mxu0
        %v3532 = vadd.f32 0.0, %v3531
        %v3533 = vpop.f32.mrf.mxu0
        %v3534 = vpop.f32.mrf.mxu0
        %v3535 = vadd.f32 0.0, %v3534
        %v3536 = vpop.f32.mrf.mxu0
        %3537 = vmatprep.mubr.bf16.mxu0 0
        %3538 = vmatmul.mubr.bf16.gmra.mxu0 %v3477
        %v3539 = vpop.f32.mrf.mxu0
        %v3540 = vadd.f32 0.0, %v3539
        %v3541 = vpop.f32.mrf.mxu0
        %v3542 = vpop.f32.mrf.mxu0
        %v3543 = vadd.f32 0.0, %v3542
        %v3544 = vpop.f32.mrf.mxu0
        %3545 = vmatprep.mubr.bf16.mxu0 0
        %3546 = vmatmul.mubr.bf16.gmra.mxu0 %v3480
        %v3547 = vpop.f32.mrf.mxu0
        %v3548 = vadd.f32 0.0, %v3547
        %v3549 = vpop.f32.mrf.mxu0
        %v3550 = vpop.f32.mrf.mxu0
        %v3551 = vadd.f32 0.0, %v3550
        %v3552 = vpop.f32.mrf.mxu0
        %3553 = vmatprep.mubr.bf16.mxu0 0
        %3554 = vmatmul.mubr.bf16.gmra.mxu0 %v3483
        %v3555 = vpop.f32.mrf.mxu0
        %v3556 = vadd.f32 0.0, %v3555
        %v3557 = vpop.f32.mrf.mxu0
        %v3558 = vpop.f32.mrf.mxu0
        %v3559 = vadd.f32 0.0, %v3558
        %v3560 = vpop.f32.mrf.mxu0
        %3561 = vdwg.mxu0
        %v3570 = vunpack.c.l.b16 %v2223
        %v3571 = vunpack.c.l.b16 %v2224
        %v3572 = vunpack.c.l.b16 %v2225
        %v3573 = vunpack.c.l.b16 %v2226
        %v3574 = vunpack.c.l.b16 %v2227
        %v3575 = vunpack.c.l.b16 %v2228
        %v3576 = vunpack.c.l.b16 %v2229
        %v3577 = vunpack.c.l.b16 %v2230
        %v3578 = vpack.c.b16 %v3571, %v3570
        %v3579 = vpack.c.b16 %v3573, %v3572
        %v3580 = vpack.c.b16 %v3575, %v3574
        %v3581 = vpack.c.b16 %v3577, %v3576
        %v3590 = vunpack.c.l.b16 %v1935
        %v3591 = vunpack.c.l.b16 %v1936
        %v3592 = vunpack.c.l.b16 %v1937
        %v3593 = vunpack.c.l.b16 %v1938
        %v3594 = vunpack.c.l.b16 %v1939
        %v3595 = vunpack.c.l.b16 %v1940
        %v3596 = vunpack.c.l.b16 %v1941
        %v3597 = vunpack.c.l.b16 %v1942
        %v3598 = vpack.c.b16 %v3591, %v3590
        %v3599 = vpack.c.b16 %v3593, %v3592
        %v3600 = vpack.c.b16 %v3595, %v3594
        %v3601 = vpack.c.b16 %v3597, %v3596
        %v3603 = vsel %vm2311, %v3578, 0
        %v3606 = vsel %vm2311, %v3579, 0
        %v3609 = vsel %vm2311, %v3580, 0
        %v3612 = vsel %vm2311, %v3581, 0
        %v3615 = vsel %vm2311, %v3598, 0
        %v3618 = vsel %vm2311, %v3599, 0
        %v3621 = vsel %vm2311, %v3600, 0
        %v3624 = vsel %vm2311, %v3601, 0
        %3626 = vmatprep.subr.bf16.mxu0 0
        %3627 = vmatpush1.bf16.xpose.msra.mxu0 0
        %3628 = vmatprep.subr.bf16.mxu0 0
        %3629 = vmatpush1.bf16.xpose.msra.mxu0 0
        %3630 = vmatprep.subr.bf16.mxu0 0
        %3631 = vmatpush1.bf16.xpose.msra.mxu0 0
        %3632 = vmatprep.subr.bf16.mxu0 0
        %3633 = vmatpush1.bf16.xpose.msra.mxu0 0
        %3634 = vmatprep.subr.bf16.mxu0 0
        %3635 = vmatpush1.bf16.xpose.msra.mxu0 %v3624
        %3636 = vmatprep.subr.bf16.mxu0 0
        %3637 = vmatpush1.bf16.xpose.msra.mxu0 %v3621
        %3638 = vmatprep.subr.bf16.mxu0 0
        %3639 = vmatpush1.bf16.xpose.msra.mxu0 %v3618
        %3640 = vmatprep.subr.bf16.mxu0 0
        %3641 = vmatpush1.bf16.xpose.msra.mxu0 %v3615
        %3642 = vmatprep.subr.bf16.mxu0 0
        %3643 = vmatpush2.bf16.xpose.msra.mxu0 0
        %3644 = vmatprep.subr.bf16.mxu0 0
        %3645 = vmatpush2.bf16.xpose.msra.mxu0 0
        %3646 = vmatprep.subr.bf16.mxu0 0
        %3647 = vmatpush2.bf16.xpose.msra.mxu0 0
        %3648 = vmatprep.subr.bf16.mxu0 0
        %3649 = vmatpush2.bf16.xpose.msra.mxu0 0
        %3650 = vmatprep.subr.bf16.mxu0 0
        %3651 = vmatpush2.bf16.xpose.msra.mxu0 0
        %3652 = vmatprep.subr.bf16.mxu0 0
        %3653 = vmatpush2.bf16.xpose.msra.mxu0 0
        %3654 = vmatprep.subr.bf16.mxu0 0
        %3655 = vmatpush2.bf16.xpose.msra.mxu0 0
        %3656 = vmatprep.subr.bf16.mxu0 0
        %3657 = vmatpush2.bf16.xpose.msra.mxu0 0
        %3658 = vmatprep.mubr.bf16.mxu0 0
        %3659 = vmatmul.mubr.bf16.gmra.mxu0 %v3603
        %v3660 = vpop.f32.mrf.mxu0
        %v3661 = vadd.f32 0.0, %v3660
        %v3662 = vpop.f32.mrf.mxu0
        %v3663 = vpop.f32.mrf.mxu0
        %v3664 = vadd.f32 0.0, %v3663
        %v3665 = vpop.f32.mrf.mxu0
        %3666 = vmatprep.mubr.bf16.mxu0 0
        %3667 = vmatmul.mubr.bf16.gmra.mxu0 %v3606
        %v3668 = vpop.f32.mrf.mxu0
        %v3669 = vadd.f32 0.0, %v3668
        %v3670 = vpop.f32.mrf.mxu0
        %v3671 = vpop.f32.mrf.mxu0
        %v3672 = vadd.f32 0.0, %v3671
        %v3673 = vpop.f32.mrf.mxu0
        %3674 = vmatprep.mubr.bf16.mxu0 0
        %3675 = vmatmul.mubr.bf16.gmra.mxu0 %v3609
        %v3676 = vpop.f32.mrf.mxu0
        %v3677 = vadd.f32 0.0, %v3676
        %v3678 = vpop.f32.mrf.mxu0
        %v3679 = vpop.f32.mrf.mxu0
        %v3680 = vadd.f32 0.0, %v3679
        %v3681 = vpop.f32.mrf.mxu0
        %3682 = vmatprep.mubr.bf16.mxu0 0
        %3683 = vmatmul.mubr.bf16.gmra.mxu0 %v3612
        %v3684 = vpop.f32.mrf.mxu0
        %v3685 = vadd.f32 0.0, %v3684
        %v3686 = vpop.f32.mrf.mxu0
        %v3687 = vpop.f32.mrf.mxu0
        %v3688 = vadd.f32 0.0, %v3687
        %v3689 = vpop.f32.mrf.mxu0
        %3690 = vdwg.mxu0
        %v3699 = vunpack.c.l.b16 %v2231
        %v3700 = vunpack.c.l.b16 %v2232
        %v3701 = vunpack.c.l.b16 %v2233
        %v3702 = vunpack.c.l.b16 %v2234
        %v3703 = vunpack.c.l.b16 %v2235
        %v3704 = vunpack.c.l.b16 %v2236
        %v3705 = vunpack.c.l.b16 %v2237
        %v3706 = vunpack.c.l.b16 %v2238
        %v3707 = vpack.c.b16 %v3700, %v3699
        %v3708 = vpack.c.b16 %v3702, %v3701
        %v3709 = vpack.c.b16 %v3704, %v3703
        %v3710 = vpack.c.b16 %v3706, %v3705
        %v3719 = vunpack.c.l.b16 %v1943
        %v3720 = vunpack.c.l.b16 %v1944
        %v3721 = vunpack.c.l.b16 %v1945
        %v3722 = vunpack.c.l.b16 %v1946
        %v3723 = vunpack.c.l.b16 %v1947
        %v3724 = vunpack.c.l.b16 %v1948
        %v3725 = vunpack.c.l.b16 %v1949
        %v3726 = vunpack.c.l.b16 %v1950
        %v3727 = vpack.c.b16 %v3720, %v3719
        %v3728 = vpack.c.b16 %v3722, %v3721
        %v3729 = vpack.c.b16 %v3724, %v3723
        %v3730 = vpack.c.b16 %v3726, %v3725
        %v3732 = vsel %vm2311, %v3707, 0
        %v3735 = vsel %vm2311, %v3708, 0
        %v3738 = vsel %vm2311, %v3709, 0
        %v3741 = vsel %vm2311, %v3710, 0
        %v3744 = vsel %vm2311, %v3727, 0
        %v3747 = vsel %vm2311, %v3728, 0
        %v3750 = vsel %vm2311, %v3729, 0
        %v3753 = vsel %vm2311, %v3730, 0
        %3755 = vmatprep.subr.bf16.mxu0 0
        %3756 = vmatpush1.bf16.xpose.msra.mxu0 0
        %3757 = vmatprep.subr.bf16.mxu0 0
        %3758 = vmatpush1.bf16.xpose.msra.mxu0 0
        %3759 = vmatprep.subr.bf16.mxu0 0
        %3760 = vmatpush1.bf16.xpose.msra.mxu0 0
        %3761 = vmatprep.subr.bf16.mxu0 0
        %3762 = vmatpush1.bf16.xpose.msra.mxu0 0
        %3763 = vmatprep.subr.bf16.mxu0 0
        %3764 = vmatpush1.bf16.xpose.msra.mxu0 %v3753
        %3765 = vmatprep.subr.bf16.mxu0 0
        %3766 = vmatpush1.bf16.xpose.msra.mxu0 %v3750
        %3767 = vmatprep.subr.bf16.mxu0 0
        %3768 = vmatpush1.bf16.xpose.msra.mxu0 %v3747
        %3769 = vmatprep.subr.bf16.mxu0 0
        %3770 = vmatpush1.bf16.xpose.msra.mxu0 %v3744
        %3771 = vmatprep.subr.bf16.mxu0 0
        %3772 = vmatpush2.bf16.xpose.msra.mxu0 0
        %3773 = vmatprep.subr.bf16.mxu0 0
        %3774 = vmatpush2.bf16.xpose.msra.mxu0 0
        %3775 = vmatprep.subr.bf16.mxu0 0
        %3776 = vmatpush2.bf16.xpose.msra.mxu0 0
        %3777 = vmatprep.subr.bf16.mxu0 0
        %3778 = vmatpush2.bf16.xpose.msra.mxu0 0
        %3779 = vmatprep.subr.bf16.mxu0 0
        %3780 = vmatpush2.bf16.xpose.msra.mxu0 0
        %3781 = vmatprep.subr.bf16.mxu0 0
        %3782 = vmatpush2.bf16.xpose.msra.mxu0 0
        %3783 = vmatprep.subr.bf16.mxu0 0
        %3784 = vmatpush2.bf16.xpose.msra.mxu0 0
        %3785 = vmatprep.subr.bf16.mxu0 0
        %3786 = vmatpush2.bf16.xpose.msra.mxu0 0
        %3787 = vmatprep.mubr.bf16.mxu0 0
        %3788 = vmatmul.mubr.bf16.gmra.mxu0 %v3732
        %v3789 = vpop.f32.mrf.mxu0
        %v3790 = vadd.f32 0.0, %v3789
        %v3791 = vpop.f32.mrf.mxu0
        %v3792 = vpop.f32.mrf.mxu0
        %v3793 = vadd.f32 0.0, %v3792
        %v3794 = vpop.f32.mrf.mxu0
        %3795 = vmatprep.mubr.bf16.mxu0 0
        %3796 = vmatmul.mubr.bf16.gmra.mxu0 %v3735
        %v3797 = vpop.f32.mrf.mxu0
        %v3798 = vadd.f32 0.0, %v3797
        %v3799 = vpop.f32.mrf.mxu0
        %v3800 = vpop.f32.mrf.mxu0
        %v3801 = vadd.f32 0.0, %v3800
        %v3802 = vpop.f32.mrf.mxu0
        %3803 = vmatprep.mubr.bf16.mxu0 0
        %3804 = vmatmul.mubr.bf16.gmra.mxu0 %v3738
        %v3805 = vpop.f32.mrf.mxu0
        %v3806 = vadd.f32 0.0, %v3805
        %v3807 = vpop.f32.mrf.mxu0
        %v3808 = vpop.f32.mrf.mxu0
        %v3809 = vadd.f32 0.0, %v3808
        %v3810 = vpop.f32.mrf.mxu0
        %3811 = vmatprep.mubr.bf16.mxu0 0
        %3812 = vmatmul.mubr.bf16.gmra.mxu0 %v3741
        %v3813 = vpop.f32.mrf.mxu0
        %v3814 = vadd.f32 0.0, %v3813
        %v3815 = vpop.f32.mrf.mxu0
        %v3816 = vpop.f32.mrf.mxu0
        %v3817 = vadd.f32 0.0, %v3816
        %v3818 = vpop.f32.mrf.mxu0
        %3819 = vdwg.mxu0
        %v3828 = vunpack.c.l.b16 %v2239
        %v3829 = vunpack.c.l.b16 %v2240
        %v3830 = vunpack.c.l.b16 %v2241
        %v3831 = vunpack.c.l.b16 %v2242
        %v3832 = vunpack.c.l.b16 %v2243
        %v3833 = vunpack.c.l.b16 %v2244
        %v3834 = vunpack.c.l.b16 %v2245
        %v3835 = vunpack.c.l.b16 %v2246
        %v3836 = vpack.c.b16 %v3829, %v3828
        %v3837 = vpack.c.b16 %v3831, %v3830
        %v3838 = vpack.c.b16 %v3833, %v3832
        %v3839 = vpack.c.b16 %v3835, %v3834
        %v3848 = vunpack.c.l.b16 %v1951
        %v3849 = vunpack.c.l.b16 %v1952
        %v3850 = vunpack.c.l.b16 %v1953
        %v3851 = vunpack.c.l.b16 %v1954
        %v3852 = vunpack.c.l.b16 %v1955
        %v3853 = vunpack.c.l.b16 %v1956
        %v3854 = vunpack.c.l.b16 %v1957
        %v3855 = vunpack.c.l.b16 %v1958
        %v3856 = vpack.c.b16 %v3849, %v3848
        %v3857 = vpack.c.b16 %v3851, %v3850
        %v3858 = vpack.c.b16 %v3853, %v3852
        %v3859 = vpack.c.b16 %v3855, %v3854
        %v3861 = vsel %vm2311, %v3836, 0
        %v3864 = vsel %vm2311, %v3837, 0
        %v3867 = vsel %vm2311, %v3838, 0
        %v3870 = vsel %vm2311, %v3839, 0
        %v3873 = vsel %vm2311, %v3856, 0
        %v3876 = vsel %vm2311, %v3857, 0
        %v3879 = vsel %vm2311, %v3858, 0
        %v3882 = vsel %vm2311, %v3859, 0
        %3884 = vmatprep.subr.bf16.mxu0 0
        %3885 = vmatpush1.bf16.xpose.msra.mxu0 0
        %3886 = vmatprep.subr.bf16.mxu0 0
        %3887 = vmatpush1.bf16.xpose.msra.mxu0 0
        %3888 = vmatprep.subr.bf16.mxu0 0
        %3889 = vmatpush1.bf16.xpose.msra.mxu0 0
        %3890 = vmatprep.subr.bf16.mxu0 0
        %3891 = vmatpush1.bf16.xpose.msra.mxu0 0
        %3892 = vmatprep.subr.bf16.mxu0 0
        %3893 = vmatpush1.bf16.xpose.msra.mxu0 %v3882
        %3894 = vmatprep.subr.bf16.mxu0 0
        %3895 = vmatpush1.bf16.xpose.msra.mxu0 %v3879
        %3896 = vmatprep.subr.bf16.mxu0 0
        %3897 = vmatpush1.bf16.xpose.msra.mxu0 %v3876
        %3898 = vmatprep.subr.bf16.mxu0 0
        %3899 = vmatpush1.bf16.xpose.msra.mxu0 %v3873
        %3900 = vmatprep.subr.bf16.mxu0 0
        %3901 = vmatpush2.bf16.xpose.msra.mxu0 0
        %3902 = vmatprep.subr.bf16.mxu0 0
        %3903 = vmatpush2.bf16.xpose.msra.mxu0 0
        %3904 = vmatprep.subr.bf16.mxu0 0
        %3905 = vmatpush2.bf16.xpose.msra.mxu0 0
        %3906 = vmatprep.subr.bf16.mxu0 0
        %3907 = vmatpush2.bf16.xpose.msra.mxu0 0
        %3908 = vmatprep.subr.bf16.mxu0 0
        %3909 = vmatpush2.bf16.xpose.msra.mxu0 0
        %3910 = vmatprep.subr.bf16.mxu0 0
        %3911 = vmatpush2.bf16.xpose.msra.mxu0 0
        %3912 = vmatprep.subr.bf16.mxu0 0
        %3913 = vmatpush2.bf16.xpose.msra.mxu0 0
        %3914 = vmatprep.subr.bf16.mxu0 0
        %3915 = vmatpush2.bf16.xpose.msra.mxu0 0
        %3916 = vmatprep.mubr.bf16.mxu0 0
        %3917 = vmatmul.mubr.bf16.gmra.mxu0 %v3861
        %v3918 = vpop.f32.mrf.mxu0
        %v3919 = vadd.f32 0.0, %v3918
        %v3920 = vpop.f32.mrf.mxu0
        %v3921 = vpop.f32.mrf.mxu0
        %v3922 = vadd.f32 0.0, %v3921
        %v3923 = vpop.f32.mrf.mxu0
        %3924 = vmatprep.mubr.bf16.mxu0 0
        %3925 = vmatmul.mubr.bf16.gmra.mxu0 %v3864
        %v3926 = vpop.f32.mrf.mxu0
        %v3927 = vadd.f32 0.0, %v3926
        %v3928 = vpop.f32.mrf.mxu0
        %v3929 = vpop.f32.mrf.mxu0
        %v3930 = vadd.f32 0.0, %v3929
        %v3931 = vpop.f32.mrf.mxu0
        %3932 = vmatprep.mubr.bf16.mxu0 0
        %3933 = vmatmul.mubr.bf16.gmra.mxu0 %v3867
        %v3934 = vpop.f32.mrf.mxu0
        %v3935 = vadd.f32 0.0, %v3934
        %v3936 = vpop.f32.mrf.mxu0
        %v3937 = vpop.f32.mrf.mxu0
        %v3938 = vadd.f32 0.0, %v3937
        %v3939 = vpop.f32.mrf.mxu0
        %3940 = vmatprep.mubr.bf16.mxu0 0
        %3941 = vmatmul.mubr.bf16.gmra.mxu0 %v3870
        %v3942 = vpop.f32.mrf.mxu0
        %v3943 = vadd.f32 0.0, %v3942
        %v3944 = vpop.f32.mrf.mxu0
        %v3945 = vpop.f32.mrf.mxu0
        %v3946 = vadd.f32 0.0, %v3945
        %v3947 = vpop.f32.mrf.mxu0
        %3948 = vdwg.mxu0
        %v3957 = vunpack.c.l.b16 %v2247
        %v3958 = vunpack.c.l.b16 %v2248
        %v3959 = vunpack.c.l.b16 %v2249
        %v3960 = vunpack.c.l.b16 %v2250
        %v3961 = vunpack.c.l.b16 %v2251
        %v3962 = vunpack.c.l.b16 %v2252
        %v3963 = vunpack.c.l.b16 %v2253
        %v3964 = vunpack.c.l.b16 %v2254
        %v3965 = vpack.c.b16 %v3958, %v3957
        %v3966 = vpack.c.b16 %v3960, %v3959
        %v3967 = vpack.c.b16 %v3962, %v3961
        %v3968 = vpack.c.b16 %v3964, %v3963
        %v3977 = vunpack.c.l.b16 %v1959
        %v3978 = vunpack.c.l.b16 %v1960
        %v3979 = vunpack.c.l.b16 %v1961
        %v3980 = vunpack.c.l.b16 %v1962
        %v3981 = vunpack.c.l.b16 %v1963
        %v3982 = vunpack.c.l.b16 %v1964
        %v3983 = vunpack.c.l.b16 %v1965
        %v3984 = vunpack.c.l.b16 %v1966
        %v3985 = vpack.c.b16 %v3978, %v3977
        %v3986 = vpack.c.b16 %v3980, %v3979
        %v3987 = vpack.c.b16 %v3982, %v3981
        %v3988 = vpack.c.b16 %v3984, %v3983
        %v3990 = vsel %vm2311, %v3965, 0
        %v3993 = vsel %vm2311, %v3966, 0
        %v3996 = vsel %vm2311, %v3967, 0
        %v3999 = vsel %vm2311, %v3968, 0
        %v4002 = vsel %vm2311, %v3985, 0
        %v4005 = vsel %vm2311, %v3986, 0
        %v4008 = vsel %vm2311, %v3987, 0
        %v4011 = vsel %vm2311, %v3988, 0
        %4013 = vmatprep.subr.bf16.mxu0 0
        %4014 = vmatpush1.bf16.xpose.msra.mxu0 0
        %4015 = vmatprep.subr.bf16.mxu0 0
        %4016 = vmatpush1.bf16.xpose.msra.mxu0 0
        %4017 = vmatprep.subr.bf16.mxu0 0
        %4018 = vmatpush1.bf16.xpose.msra.mxu0 0
        %4019 = vmatprep.subr.bf16.mxu0 0
        %4020 = vmatpush1.bf16.xpose.msra.mxu0 0
        %4021 = vmatprep.subr.bf16.mxu0 0
        %4022 = vmatpush1.bf16.xpose.msra.mxu0 %v4011
        %4023 = vmatprep.subr.bf16.mxu0 0
        %4024 = vmatpush1.bf16.xpose.msra.mxu0 %v4008
        %4025 = vmatprep.subr.bf16.mxu0 0
        %4026 = vmatpush1.bf16.xpose.msra.mxu0 %v4005
        %4027 = vmatprep.subr.bf16.mxu0 0
        %4028 = vmatpush1.bf16.xpose.msra.mxu0 %v4002
        %4029 = vmatprep.subr.bf16.mxu0 0
        %4030 = vmatpush2.bf16.xpose.msra.mxu0 0
        %4031 = vmatprep.subr.bf16.mxu0 0
        %4032 = vmatpush2.bf16.xpose.msra.mxu0 0
        %4033 = vmatprep.subr.bf16.mxu0 0
        %4034 = vmatpush2.bf16.xpose.msra.mxu0 0
        %4035 = vmatprep.subr.bf16.mxu0 0
        %4036 = vmatpush2.bf16.xpose.msra.mxu0 0
        %4037 = vmatprep.subr.bf16.mxu0 0
        %4038 = vmatpush2.bf16.xpose.msra.mxu0 0
        %4039 = vmatprep.subr.bf16.mxu0 0
        %4040 = vmatpush2.bf16.xpose.msra.mxu0 0
        %4041 = vmatprep.subr.bf16.mxu0 0
        %4042 = vmatpush2.bf16.xpose.msra.mxu0 0
        %4043 = vmatprep.subr.bf16.mxu0 0
        %4044 = vmatpush2.bf16.xpose.msra.mxu0 0
        %4045 = vmatprep.mubr.bf16.mxu0 0
        %4046 = vmatmul.mubr.bf16.gmra.mxu0 %v3990
        %v4047 = vpop.f32.mrf.mxu0
        %v4048 = vadd.f32 0.0, %v4047
        %v4049 = vpop.f32.mrf.mxu0
        %v4050 = vpop.f32.mrf.mxu0
        %v4051 = vadd.f32 0.0, %v4050
        %v4052 = vpop.f32.mrf.mxu0
        %4053 = vmatprep.mubr.bf16.mxu0 0
        %4054 = vmatmul.mubr.bf16.gmra.mxu0 %v3993
        %v4055 = vpop.f32.mrf.mxu0
        %v4056 = vadd.f32 0.0, %v4055
        %v4057 = vpop.f32.mrf.mxu0
        %v4058 = vpop.f32.mrf.mxu0
        %v4059 = vadd.f32 0.0, %v4058
        %v4060 = vpop.f32.mrf.mxu0
        %4061 = vmatprep.mubr.bf16.mxu0 0
        %4062 = vmatmul.mubr.bf16.gmra.mxu0 %v3996
        %v4063 = vpop.f32.mrf.mxu0
        %v4064 = vadd.f32 0.0, %v4063
        %v4065 = vpop.f32.mrf.mxu0
        %v4066 = vpop.f32.mrf.mxu0
        %v4067 = vadd.f32 0.0, %v4066
        %v4068 = vpop.f32.mrf.mxu0
        %4069 = vmatprep.mubr.bf16.mxu0 0
        %4070 = vmatmul.mubr.bf16.gmra.mxu0 %v3999
        %v4071 = vpop.f32.mrf.mxu0
        %v4072 = vadd.f32 0.0, %v4071
        %v4073 = vpop.f32.mrf.mxu0
        %v4074 = vpop.f32.mrf.mxu0
        %v4075 = vadd.f32 0.0, %v4074
        %v4076 = vpop.f32.mrf.mxu0
        %4077 = vdwg.mxu0
        %v4086 = vunpack.c.l.b16 %v2255
        %v4087 = vunpack.c.l.b16 %v2256
        %v4088 = vunpack.c.l.b16 %v2257
        %v4089 = vunpack.c.l.b16 %v2258
        %v4090 = vunpack.c.l.b16 %v2259
        %v4091 = vunpack.c.l.b16 %v2260
        %v4092 = vunpack.c.l.b16 %v2261
        %v4093 = vunpack.c.l.b16 %v2262
        %v4094 = vpack.c.b16 %v4087, %v4086
        %v4095 = vpack.c.b16 %v4089, %v4088
        %v4096 = vpack.c.b16 %v4091, %v4090
        %v4097 = vpack.c.b16 %v4093, %v4092
        %v4106 = vunpack.c.l.b16 %v1967
        %v4107 = vunpack.c.l.b16 %v1968
        %v4108 = vunpack.c.l.b16 %v1969
        %v4109 = vunpack.c.l.b16 %v1970
        %v4110 = vunpack.c.l.b16 %v1971
        %v4111 = vunpack.c.l.b16 %v1972
        %v4112 = vunpack.c.l.b16 %v1973
        %v4113 = vunpack.c.l.b16 %v1974
        %v4114 = vpack.c.b16 %v4107, %v4106
        %v4115 = vpack.c.b16 %v4109, %v4108
        %v4116 = vpack.c.b16 %v4111, %v4110
        %v4117 = vpack.c.b16 %v4113, %v4112
        %v4119 = vsel %vm2311, %v4094, 0
        %v4122 = vsel %vm2311, %v4095, 0
        %v4125 = vsel %vm2311, %v4096, 0
        %v4128 = vsel %vm2311, %v4097, 0
        %v4131 = vsel %vm2311, %v4114, 0
        %v4134 = vsel %vm2311, %v4115, 0
        %v4137 = vsel %vm2311, %v4116, 0
        %v4140 = vsel %vm2311, %v4117, 0
        %4142 = vmatprep.subr.bf16.mxu0 0
        %4143 = vmatpush1.bf16.xpose.msra.mxu0 0
        %4144 = vmatprep.subr.bf16.mxu0 0
        %4145 = vmatpush1.bf16.xpose.msra.mxu0 0
        %4146 = vmatprep.subr.bf16.mxu0 0
        %4147 = vmatpush1.bf16.xpose.msra.mxu0 0
        %4148 = vmatprep.subr.bf16.mxu0 0
        %4149 = vmatpush1.bf16.xpose.msra.mxu0 0
        %4150 = vmatprep.subr.bf16.mxu0 0
        %4151 = vmatpush1.bf16.xpose.msra.mxu0 %v4140
        %4152 = vmatprep.subr.bf16.mxu0 0
        %4153 = vmatpush1.bf16.xpose.msra.mxu0 %v4137
        %4154 = vmatprep.subr.bf16.mxu0 0
        %4155 = vmatpush1.bf16.xpose.msra.mxu0 %v4134
        %4156 = vmatprep.subr.bf16.mxu0 0
        %4157 = vmatpush1.bf16.xpose.msra.mxu0 %v4131
        %4158 = vmatprep.subr.bf16.mxu0 0
        %4159 = vmatpush2.bf16.xpose.msra.mxu0 0
        %4160 = vmatprep.subr.bf16.mxu0 0
        %4161 = vmatpush2.bf16.xpose.msra.mxu0 0
        %4162 = vmatprep.subr.bf16.mxu0 0
        %4163 = vmatpush2.bf16.xpose.msra.mxu0 0
        %4164 = vmatprep.subr.bf16.mxu0 0
        %4165 = vmatpush2.bf16.xpose.msra.mxu0 0
        %4166 = vmatprep.subr.bf16.mxu0 0
        %4167 = vmatpush2.bf16.xpose.msra.mxu0 0
        %4168 = vmatprep.subr.bf16.mxu0 0
        %4169 = vmatpush2.bf16.xpose.msra.mxu0 0
        %4170 = vmatprep.subr.bf16.mxu0 0
        %4171 = vmatpush2.bf16.xpose.msra.mxu0 0
        %4172 = vmatprep.subr.bf16.mxu0 0
        %4173 = vmatpush2.bf16.xpose.msra.mxu0 0
        %4174 = vmatprep.mubr.bf16.mxu0 0
        %4175 = vmatmul.mubr.bf16.gmra.mxu0 %v4119
        %v4176 = vpop.f32.mrf.mxu0
        %v4177 = vadd.f32 0.0, %v4176
        %v4178 = vpop.f32.mrf.mxu0
        %v4179 = vpop.f32.mrf.mxu0
        %v4180 = vadd.f32 0.0, %v4179
        %v4181 = vpop.f32.mrf.mxu0
        %4182 = vmatprep.mubr.bf16.mxu0 0
        %4183 = vmatmul.mubr.bf16.gmra.mxu0 %v4122
        %v4184 = vpop.f32.mrf.mxu0
        %v4185 = vadd.f32 0.0, %v4184
        %v4186 = vpop.f32.mrf.mxu0
        %v4187 = vpop.f32.mrf.mxu0
        %v4188 = vadd.f32 0.0, %v4187
        %v4189 = vpop.f32.mrf.mxu0
        %4190 = vmatprep.mubr.bf16.mxu0 0
        %4191 = vmatmul.mubr.bf16.gmra.mxu0 %v4125
        %v4192 = vpop.f32.mrf.mxu0
        %v4193 = vadd.f32 0.0, %v4192
        %v4194 = vpop.f32.mrf.mxu0
        %v4195 = vpop.f32.mrf.mxu0
        %v4196 = vadd.f32 0.0, %v4195
        %v4197 = vpop.f32.mrf.mxu0
        %4198 = vmatprep.mubr.bf16.mxu0 0
        %4199 = vmatmul.mubr.bf16.gmra.mxu0 %v4128
        %v4200 = vpop.f32.mrf.mxu0
        %v4201 = vadd.f32 0.0, %v4200
        %v4202 = vpop.f32.mrf.mxu0
        %v4203 = vpop.f32.mrf.mxu0
        %v4204 = vadd.f32 0.0, %v4203
        %v4205 = vpop.f32.mrf.mxu0
        %4206 = vdwg.mxu0
        %v4215 = vunpack.c.l.b16 %v2263
        %v4216 = vunpack.c.l.b16 %v2264
        %v4217 = vunpack.c.l.b16 %v2265
        %v4218 = vunpack.c.l.b16 %v2266
        %v4219 = vunpack.c.l.b16 %v2267
        %v4220 = vunpack.c.l.b16 %v2268
        %v4221 = vunpack.c.l.b16 %v2269
        %v4222 = vunpack.c.l.b16 %v2270
        %v4223 = vpack.c.b16 %v4216, %v4215
        %v4224 = vpack.c.b16 %v4218, %v4217
        %v4225 = vpack.c.b16 %v4220, %v4219
        %v4226 = vpack.c.b16 %v4222, %v4221
        %v4235 = vunpack.c.l.b16 %v1975
        %v4236 = vunpack.c.l.b16 %v1976
        %v4237 = vunpack.c.l.b16 %v1977
        %v4238 = vunpack.c.l.b16 %v1978
        %v4239 = vunpack.c.l.b16 %v1979
        %v4240 = vunpack.c.l.b16 %v1980
        %v4241 = vunpack.c.l.b16 %v1981
        %v4242 = vunpack.c.l.b16 %v1982
        %v4243 = vpack.c.b16 %v4236, %v4235
        %v4244 = vpack.c.b16 %v4238, %v4237
        %v4245 = vpack.c.b16 %v4240, %v4239
        %v4246 = vpack.c.b16 %v4242, %v4241
        %v4248 = vsel %vm2311, %v4223, 0
        %v4251 = vsel %vm2311, %v4224, 0
        %v4254 = vsel %vm2311, %v4225, 0
        %v4257 = vsel %vm2311, %v4226, 0
        %v4260 = vsel %vm2311, %v4243, 0
        %v4263 = vsel %vm2311, %v4244, 0
        %v4266 = vsel %vm2311, %v4245, 0
        %v4269 = vsel %vm2311, %v4246, 0
        %4271 = vmatprep.subr.bf16.mxu0 0
        %4272 = vmatpush1.bf16.xpose.msra.mxu0 0
        %4273 = vmatprep.subr.bf16.mxu0 0
        %4274 = vmatpush1.bf16.xpose.msra.mxu0 0
        %4275 = vmatprep.subr.bf16.mxu0 0
        %4276 = vmatpush1.bf16.xpose.msra.mxu0 0
        %4277 = vmatprep.subr.bf16.mxu0 0
        %4278 = vmatpush1.bf16.xpose.msra.mxu0 0
        %4279 = vmatprep.subr.bf16.mxu0 0
        %4280 = vmatpush1.bf16.xpose.msra.mxu0 %v4269
        %4281 = vmatprep.subr.bf16.mxu0 0
        %4282 = vmatpush1.bf16.xpose.msra.mxu0 %v4266
        %4283 = vmatprep.subr.bf16.mxu0 0
        %4284 = vmatpush1.bf16.xpose.msra.mxu0 %v4263
        %4285 = vmatprep.subr.bf16.mxu0 0
        %4286 = vmatpush1.bf16.xpose.msra.mxu0 %v4260
        %4287 = vmatprep.subr.bf16.mxu0 0
        %4288 = vmatpush2.bf16.xpose.msra.mxu0 0
        %4289 = vmatprep.subr.bf16.mxu0 0
        %4290 = vmatpush2.bf16.xpose.msra.mxu0 0
        %4291 = vmatprep.subr.bf16.mxu0 0
        %4292 = vmatpush2.bf16.xpose.msra.mxu0 0
        %4293 = vmatprep.subr.bf16.mxu0 0
        %4294 = vmatpush2.bf16.xpose.msra.mxu0 0
        %4295 = vmatprep.subr.bf16.mxu0 0
        %4296 = vmatpush2.bf16.xpose.msra.mxu0 0
        %4297 = vmatprep.subr.bf16.mxu0 0
        %4298 = vmatpush2.bf16.xpose.msra.mxu0 0
        %4299 = vmatprep.subr.bf16.mxu0 0
        %4300 = vmatpush2.bf16.xpose.msra.mxu0 0
        %4301 = vmatprep.subr.bf16.mxu0 0
        %4302 = vmatpush2.bf16.xpose.msra.mxu0 0
        %4303 = vmatprep.mubr.bf16.mxu0 0
        %4304 = vmatmul.mubr.bf16.gmra.mxu0 %v4248
        %v4305 = vpop.f32.mrf.mxu0
        %v4306 = vadd.f32 0.0, %v4305
        %v4307 = vpop.f32.mrf.mxu0
        %v4308 = vpop.f32.mrf.mxu0
        %v4309 = vadd.f32 0.0, %v4308
        %v4310 = vpop.f32.mrf.mxu0
        %4311 = vmatprep.mubr.bf16.mxu0 0
        %4312 = vmatmul.mubr.bf16.gmra.mxu0 %v4251
        %v4313 = vpop.f32.mrf.mxu0
        %v4314 = vadd.f32 0.0, %v4313
        %v4315 = vpop.f32.mrf.mxu0
        %v4316 = vpop.f32.mrf.mxu0
        %v4317 = vadd.f32 0.0, %v4316
        %v4318 = vpop.f32.mrf.mxu0
        %4319 = vmatprep.mubr.bf16.mxu0 0
        %4320 = vmatmul.mubr.bf16.gmra.mxu0 %v4254
        %v4321 = vpop.f32.mrf.mxu0
        %v4322 = vadd.f32 0.0, %v4321
        %v4323 = vpop.f32.mrf.mxu0
        %v4324 = vpop.f32.mrf.mxu0
        %v4325 = vadd.f32 0.0, %v4324
        %v4326 = vpop.f32.mrf.mxu0
        %4327 = vmatprep.mubr.bf16.mxu0 0
        %4328 = vmatmul.mubr.bf16.gmra.mxu0 %v4257
        %v4329 = vpop.f32.mrf.mxu0
        %v4330 = vadd.f32 0.0, %v4329
        %v4331 = vpop.f32.mrf.mxu0
        %v4332 = vpop.f32.mrf.mxu0
        %v4333 = vadd.f32 0.0, %v4332
        %v4334 = vpop.f32.mrf.mxu0
        %4335 = vdwg.mxu0
        %v4336 = vadd.f32 %v2371, %v2111
        %v4337 = vadd.f32 %v2374, %v2112
        %v4338 = vadd.f32 %v2379, %v2113
        %v4339 = vadd.f32 %v2382, %v2114
        %v4340 = vadd.f32 %v2387, %v2115
        %v4341 = vadd.f32 %v2390, %v2116
        %v4342 = vadd.f32 %v2395, %v2117
        %v4343 = vadd.f32 %v2398, %v2118
        %v4344 = vadd.f32 %v2500, %v2111
        %v4345 = vadd.f32 %v2503, %v2112
        %v4346 = vadd.f32 %v2508, %v2113
        %v4347 = vadd.f32 %v2511, %v2114
        %v4348 = vadd.f32 %v2516, %v2115
        %v4349 = vadd.f32 %v2519, %v2116
        %v4350 = vadd.f32 %v2524, %v2117
        %v4351 = vadd.f32 %v2527, %v2118
        %v4352 = vadd.f32 %v2629, %v2119
        %v4353 = vadd.f32 %v2632, %v2120
        %v4354 = vadd.f32 %v2637, %v2121
        %v4355 = vadd.f32 %v2640, %v2122
        %v4356 = vadd.f32 %v2645, %v2123
        %v4357 = vadd.f32 %v2648, %v2124
        %v4358 = vadd.f32 %v2653, %v2125
        %v4359 = vadd.f32 %v2656, %v2126
        %v4360 = vadd.f32 %v2758, %v2119
        %v4361 = vadd.f32 %v2761, %v2120
        %v4362 = vadd.f32 %v2766, %v2121
        %v4363 = vadd.f32 %v2769, %v2122
        %v4364 = vadd.f32 %v2774, %v2123
        %v4365 = vadd.f32 %v2777, %v2124
        %v4366 = vadd.f32 %v2782, %v2125
        %v4367 = vadd.f32 %v2785, %v2126
        %v4368 = vadd.f32 %v2887, %v2127
        %v4369 = vadd.f32 %v2890, %v2128
        %v4370 = vadd.f32 %v2895, %v2129
        %v4371 = vadd.f32 %v2898, %v2130
        %v4372 = vadd.f32 %v2903, %v2131
        %v4373 = vadd.f32 %v2906, %v2132
        %v4374 = vadd.f32 %v2911, %v2133
        %v4375 = vadd.f32 %v2914, %v2134
        %v4376 = vadd.f32 %v3016, %v2127
        %v4377 = vadd.f32 %v3019, %v2128
        %v4378 = vadd.f32 %v3024, %v2129
        %v4379 = vadd.f32 %v3027, %v2130
        %v4380 = vadd.f32 %v3032, %v2131
        %v4381 = vadd.f32 %v3035, %v2132
        %v4382 = vadd.f32 %v3040, %v2133
        %v4383 = vadd.f32 %v3043, %v2134
        %v4384 = vadd.f32 %v3145, %v2135
        %v4385 = vadd.f32 %v3148, %v2136
        %v4386 = vadd.f32 %v3153, %v2137
        %v4387 = vadd.f32 %v3156, %v2138
        %v4388 = vadd.f32 %v3161, %v2139
        %v4389 = vadd.f32 %v3164, %v2140
        %v4390 = vadd.f32 %v3169, %v2141
        %v4391 = vadd.f32 %v3172, %v2142
        %v4392 = vadd.f32 %v3274, %v2135
        %v4393 = vadd.f32 %v3277, %v2136
        %v4394 = vadd.f32 %v3282, %v2137
        %v4395 = vadd.f32 %v3285, %v2138
        %v4396 = vadd.f32 %v3290, %v2139
        %v4397 = vadd.f32 %v3293, %v2140
        %v4398 = vadd.f32 %v3298, %v2141
        %v4399 = vadd.f32 %v3301, %v2142
        %v4400 = vadd.f32 %v3403, %v2111
        %v4401 = vadd.f32 %v3406, %v2112
        %v4402 = vadd.f32 %v3411, %v2113
        %v4403 = vadd.f32 %v3414, %v2114
        %v4404 = vadd.f32 %v3419, %v2115
        %v4405 = vadd.f32 %v3422, %v2116
        %v4406 = vadd.f32 %v3427, %v2117
        %v4407 = vadd.f32 %v3430, %v2118
        %v4408 = vadd.f32 %v3532, %v2111
        %v4409 = vadd.f32 %v3535, %v2112
        %v4410 = vadd.f32 %v3540, %v2113
        %v4411 = vadd.f32 %v3543, %v2114
        %v4412 = vadd.f32 %v3548, %v2115
        %v4413 = vadd.f32 %v3551, %v2116
        %v4414 = vadd.f32 %v3556, %v2117
        %v4415 = vadd.f32 %v3559, %v2118
        %v4416 = vadd.f32 %v3661, %v2119
        %v4417 = vadd.f32 %v3664, %v2120
        %v4418 = vadd.f32 %v3669, %v2121
        %v4419 = vadd.f32 %v3672, %v2122
        %v4420 = vadd.f32 %v3677, %v2123
        %v4421 = vadd.f32 %v3680, %v2124
        %v4422 = vadd.f32 %v3685, %v2125
        %v4423 = vadd.f32 %v3688, %v2126
        %v4424 = vadd.f32 %v3790, %v2119
        %v4425 = vadd.f32 %v3793, %v2120
        %v4426 = vadd.f32 %v3798, %v2121
        %v4427 = vadd.f32 %v3801, %v2122
        %v4428 = vadd.f32 %v3806, %v2123
        %v4429 = vadd.f32 %v3809, %v2124
        %v4430 = vadd.f32 %v3814, %v2125
        %v4431 = vadd.f32 %v3817, %v2126
        %v4432 = vadd.f32 %v3919, %v2127
        %v4433 = vadd.f32 %v3922, %v2128
        %v4434 = vadd.f32 %v3927, %v2129
        %v4435 = vadd.f32 %v3930, %v2130
        %v4436 = vadd.f32 %v3935, %v2131
        %v4437 = vadd.f32 %v3938, %v2132
        %v4438 = vadd.f32 %v3943, %v2133
        %v4439 = vadd.f32 %v3946, %v2134
        %v4440 = vadd.f32 %v4048, %v2127
        %v4441 = vadd.f32 %v4051, %v2128
        %v4442 = vadd.f32 %v4056, %v2129
        %v4443 = vadd.f32 %v4059, %v2130
        %v4444 = vadd.f32 %v4064, %v2131
        %v4445 = vadd.f32 %v4067, %v2132
        %v4446 = vadd.f32 %v4072, %v2133
        %v4447 = vadd.f32 %v4075, %v2134
        %v4448 = vadd.f32 %v4177, %v2135
        %v4449 = vadd.f32 %v4180, %v2136
        %v4450 = vadd.f32 %v4185, %v2137
        %v4451 = vadd.f32 %v4188, %v2138
        %v4452 = vadd.f32 %v4193, %v2139
        %v4453 = vadd.f32 %v4196, %v2140
        %v4454 = vadd.f32 %v4201, %v2141
        %v4455 = vadd.f32 %v4204, %v2142
        %v4456 = vadd.f32 %v4306, %v2135
        %v4457 = vadd.f32 %v4309, %v2136
        %v4458 = vadd.f32 %v4314, %v2137
        %v4459 = vadd.f32 %v4317, %v2138
        %v4460 = vadd.f32 %v4322, %v2139
        %v4461 = vadd.f32 %v4325, %v2140
        %v4462 = vadd.f32 %v4330, %v2141
        %v4463 = vadd.f32 %v4333, %v2142
        %vm4464 = vcmask 523264
        %v4465 = vsel %vm4464, %v4336, -inf
        %4466 = vmax.xlane.f32.xlu0 %v4465
        %v4467 = vpop.xlane.xlu0 %4466
        %v4468 = vsel %vm4464, %v4337, -inf
        %4469 = vmax.xlane.f32.xlu0 %v4468
        %v4470 = vpop.xlane.xlu0 %4469
        %v4471 = vsel %vm4464, %v4338, -inf
        %4472 = vmax.xlane.f32.xlu0 %v4471
        %v4473 = vpop.xlane.xlu0 %4472
        %v4474 = vsel %vm4464, %v4339, -inf
        %4475 = vmax.xlane.f32.xlu0 %v4474
        %v4476 = vpop.xlane.xlu0 %4475
        %v4477 = vsel %vm4464, %v4340, -inf
        %4478 = vmax.xlane.f32.xlu0 %v4477
        %v4479 = vpop.xlane.xlu0 %4478
        %v4480 = vsel %vm4464, %v4341, -inf
        %4481 = vmax.xlane.f32.xlu0 %v4480
        %v4482 = vpop.xlane.xlu0 %4481
        %v4483 = vsel %vm4464, %v4342, -inf
        %4484 = vmax.xlane.f32.xlu0 %v4483
        %v4485 = vpop.xlane.xlu0 %4484
        %v4486 = vsel %vm4464, %v4343, -inf
        %4487 = vmax.xlane.f32.xlu0 %v4486
        %v4488 = vpop.xlane.xlu0 %4487
        %v4489 = vsel %vm4464, %v4344, -inf
        %4490 = vmax.xlane.f32.xlu0 %v4489
        %v4491 = vpop.xlane.xlu0 %4490
        %v4492 = vsel %vm4464, %v4345, -inf
        %4493 = vmax.xlane.f32.xlu0 %v4492
        %v4494 = vpop.xlane.xlu0 %4493
        %v4495 = vsel %vm4464, %v4346, -inf
        %4496 = vmax.xlane.f32.xlu0 %v4495
        %v4497 = vpop.xlane.xlu0 %4496
        %v4498 = vsel %vm4464, %v4347, -inf
        %4499 = vmax.xlane.f32.xlu0 %v4498
        %v4500 = vpop.xlane.xlu0 %4499
        %v4501 = vsel %vm4464, %v4348, -inf
        %4502 = vmax.xlane.f32.xlu0 %v4501
        %v4503 = vpop.xlane.xlu0 %4502
        %v4504 = vsel %vm4464, %v4349, -inf
        %4505 = vmax.xlane.f32.xlu0 %v4504
        %v4506 = vpop.xlane.xlu0 %4505
        %v4507 = vsel %vm4464, %v4350, -inf
        %4508 = vmax.xlane.f32.xlu0 %v4507
        %v4509 = vpop.xlane.xlu0 %4508
        %v4510 = vsel %vm4464, %v4351, -inf
        %4511 = vmax.xlane.f32.xlu0 %v4510
        %v4512 = vpop.xlane.xlu0 %4511
        %v4513 = vsel %vm4464, %v4352, -inf
        %4514 = vmax.xlane.f32.xlu0 %v4513
        %v4515 = vpop.xlane.xlu0 %4514
        %v4516 = vsel %vm4464, %v4353, -inf
        %4517 = vmax.xlane.f32.xlu0 %v4516
        %v4518 = vpop.xlane.xlu0 %4517
        %v4519 = vsel %vm4464, %v4354, -inf
        %4520 = vmax.xlane.f32.xlu0 %v4519
        %v4521 = vpop.xlane.xlu0 %4520
        %v4522 = vsel %vm4464, %v4355, -inf
        %4523 = vmax.xlane.f32.xlu0 %v4522
        %v4524 = vpop.xlane.xlu0 %4523
        %v4525 = vsel %vm4464, %v4356, -inf
        %4526 = vmax.xlane.f32.xlu0 %v4525
        %v4527 = vpop.xlane.xlu0 %4526
        %v4528 = vsel %vm4464, %v4357, -inf
        %4529 = vmax.xlane.f32.xlu0 %v4528
        %v4530 = vpop.xlane.xlu0 %4529
        %v4531 = vsel %vm4464, %v4358, -inf
        %4532 = vmax.xlane.f32.xlu0 %v4531
        %v4533 = vpop.xlane.xlu0 %4532
        %v4534 = vsel %vm4464, %v4359, -inf
        %4535 = vmax.xlane.f32.xlu0 %v4534
        %v4536 = vpop.xlane.xlu0 %4535
        %v4537 = vsel %vm4464, %v4360, -inf
        %4538 = vmax.xlane.f32.xlu0 %v4537
        %v4539 = vpop.xlane.xlu0 %4538
        %v4540 = vsel %vm4464, %v4361, -inf
        %4541 = vmax.xlane.f32.xlu0 %v4540
        %v4542 = vpop.xlane.xlu0 %4541
        %v4543 = vsel %vm4464, %v4362, -inf
        %4544 = vmax.xlane.f32.xlu0 %v4543
        %v4545 = vpop.xlane.xlu0 %4544
        %v4546 = vsel %vm4464, %v4363, -inf
        %4547 = vmax.xlane.f32.xlu0 %v4546
        %v4548 = vpop.xlane.xlu0 %4547
        %v4549 = vsel %vm4464, %v4364, -inf
        %4550 = vmax.xlane.f32.xlu0 %v4549
        %v4551 = vpop.xlane.xlu0 %4550
        %v4552 = vsel %vm4464, %v4365, -inf
        %4553 = vmax.xlane.f32.xlu0 %v4552
        %v4554 = vpop.xlane.xlu0 %4553
        %v4555 = vsel %vm4464, %v4366, -inf
        %4556 = vmax.xlane.f32.xlu0 %v4555
        %v4557 = vpop.xlane.xlu0 %4556
        %v4558 = vsel %vm4464, %v4367, -inf
        %4559 = vmax.xlane.f32.xlu0 %v4558
        %v4560 = vpop.xlane.xlu0 %4559
        %v4561 = vsel %vm4464, %v4368, -inf
        %4562 = vmax.xlane.f32.xlu0 %v4561
        %v4563 = vpop.xlane.xlu0 %4562
        %v4564 = vsel %vm4464, %v4369, -inf
        %4565 = vmax.xlane.f32.xlu0 %v4564
        %v4566 = vpop.xlane.xlu0 %4565
        %v4567 = vsel %vm4464, %v4370, -inf
        %4568 = vmax.xlane.f32.xlu0 %v4567
        %v4569 = vpop.xlane.xlu0 %4568
        %v4570 = vsel %vm4464, %v4371, -inf
        %4571 = vmax.xlane.f32.xlu0 %v4570
        %v4572 = vpop.xlane.xlu0 %4571
        %v4573 = vsel %vm4464, %v4372, -inf
        %4574 = vmax.xlane.f32.xlu0 %v4573
        %v4575 = vpop.xlane.xlu0 %4574
        %v4576 = vsel %vm4464, %v4373, -inf
        %4577 = vmax.xlane.f32.xlu0 %v4576
        %v4578 = vpop.xlane.xlu0 %4577
        %v4579 = vsel %vm4464, %v4374, -inf
        %4580 = vmax.xlane.f32.xlu0 %v4579
        %v4581 = vpop.xlane.xlu0 %4580
        %v4582 = vsel %vm4464, %v4375, -inf
        %4583 = vmax.xlane.f32.xlu0 %v4582
        %v4584 = vpop.xlane.xlu0 %4583
        %v4585 = vsel %vm4464, %v4376, -inf
        %4586 = vmax.xlane.f32.xlu0 %v4585
        %v4587 = vpop.xlane.xlu0 %4586
        %v4588 = vsel %vm4464, %v4377, -inf
        %4589 = vmax.xlane.f32.xlu0 %v4588
        %v4590 = vpop.xlane.xlu0 %4589
        %v4591 = vsel %vm4464, %v4378, -inf
        %4592 = vmax.xlane.f32.xlu0 %v4591
        %v4593 = vpop.xlane.xlu0 %4592
        %v4594 = vsel %vm4464, %v4379, -inf
        %4595 = vmax.xlane.f32.xlu0 %v4594
        %v4596 = vpop.xlane.xlu0 %4595
        %v4597 = vsel %vm4464, %v4380, -inf
        %4598 = vmax.xlane.f32.xlu0 %v4597
        %v4599 = vpop.xlane.xlu0 %4598
        %v4600 = vsel %vm4464, %v4381, -inf
        %4601 = vmax.xlane.f32.xlu0 %v4600
        %v4602 = vpop.xlane.xlu0 %4601
        %v4603 = vsel %vm4464, %v4382, -inf
        %4604 = vmax.xlane.f32.xlu0 %v4603
        %v4605 = vpop.xlane.xlu0 %4604
        %v4606 = vsel %vm4464, %v4383, -inf
        %4607 = vmax.xlane.f32.xlu0 %v4606
        %v4608 = vpop.xlane.xlu0 %4607
        %v4609 = vsel %vm4464, %v4384, -inf
        %4610 = vmax.xlane.f32.xlu0 %v4609
        %v4611 = vpop.xlane.xlu0 %4610
        %v4612 = vsel %vm4464, %v4385, -inf
        %4613 = vmax.xlane.f32.xlu0 %v4612
        %v4614 = vpop.xlane.xlu0 %4613
        %v4615 = vsel %vm4464, %v4386, -inf
        %4616 = vmax.xlane.f32.xlu0 %v4615
        %v4617 = vpop.xlane.xlu0 %4616
        %v4618 = vsel %vm4464, %v4387, -inf
        %4619 = vmax.xlane.f32.xlu0 %v4618
        %v4620 = vpop.xlane.xlu0 %4619
        %v4621 = vsel %vm4464, %v4388, -inf
        %4622 = vmax.xlane.f32.xlu0 %v4621
        %v4623 = vpop.xlane.xlu0 %4622
        %v4624 = vsel %vm4464, %v4389, -inf
        %4625 = vmax.xlane.f32.xlu0 %v4624
        %v4626 = vpop.xlane.xlu0 %4625
        %v4627 = vsel %vm4464, %v4390, -inf
        %4628 = vmax.xlane.f32.xlu0 %v4627
        %v4629 = vpop.xlane.xlu0 %4628
        %v4630 = vsel %vm4464, %v4391, -inf
        %4631 = vmax.xlane.f32.xlu0 %v4630
        %v4632 = vpop.xlane.xlu0 %4631
        %v4633 = vsel %vm4464, %v4392, -inf
        %4634 = vmax.xlane.f32.xlu0 %v4633
        %v4635 = vpop.xlane.xlu0 %4634
        %v4636 = vsel %vm4464, %v4393, -inf
        %4637 = vmax.xlane.f32.xlu0 %v4636
        %v4638 = vpop.xlane.xlu0 %4637
        %v4639 = vsel %vm4464, %v4394, -inf
        %4640 = vmax.xlane.f32.xlu0 %v4639
        %v4641 = vpop.xlane.xlu0 %4640
        %v4642 = vsel %vm4464, %v4395, -inf
        %4643 = vmax.xlane.f32.xlu0 %v4642
        %v4644 = vpop.xlane.xlu0 %4643
        %v4645 = vsel %vm4464, %v4396, -inf
        %4646 = vmax.xlane.f32.xlu0 %v4645
        %v4647 = vpop.xlane.xlu0 %4646
        %v4648 = vsel %vm4464, %v4397, -inf
        %4649 = vmax.xlane.f32.xlu0 %v4648
        %v4650 = vpop.xlane.xlu0 %4649
        %v4651 = vsel %vm4464, %v4398, -inf
        %4652 = vmax.xlane.f32.xlu0 %v4651
        %v4653 = vpop.xlane.xlu0 %4652
        %v4654 = vsel %vm4464, %v4399, -inf
        %4655 = vmax.xlane.f32.xlu0 %v4654
        %v4656 = vpop.xlane.xlu0 %4655
        %v4657 = vsel %vm4464, %v4400, -inf
        %4658 = vmax.xlane.f32.xlu0 %v4657
        %v4659 = vpop.xlane.xlu0 %4658
        %v4660 = vsel %vm4464, %v4401, -inf
        %4661 = vmax.xlane.f32.xlu0 %v4660
        %v4662 = vpop.xlane.xlu0 %4661
        %v4663 = vsel %vm4464, %v4402, -inf
        %4664 = vmax.xlane.f32.xlu0 %v4663
        %v4665 = vpop.xlane.xlu0 %4664
        %v4666 = vsel %vm4464, %v4403, -inf
        %4667 = vmax.xlane.f32.xlu0 %v4666
        %v4668 = vpop.xlane.xlu0 %4667
        %v4669 = vsel %vm4464, %v4404, -inf
        %4670 = vmax.xlane.f32.xlu0 %v4669
        %v4671 = vpop.xlane.xlu0 %4670
        %v4672 = vsel %vm4464, %v4405, -inf
        %4673 = vmax.xlane.f32.xlu0 %v4672
        %v4674 = vpop.xlane.xlu0 %4673
        %v4675 = vsel %vm4464, %v4406, -inf
        %4676 = vmax.xlane.f32.xlu0 %v4675
        %v4677 = vpop.xlane.xlu0 %4676
        %v4678 = vsel %vm4464, %v4407, -inf
        %4679 = vmax.xlane.f32.xlu0 %v4678
        %v4680 = vpop.xlane.xlu0 %4679
        %v4681 = vsel %vm4464, %v4408, -inf
        %4682 = vmax.xlane.f32.xlu0 %v4681
        %v4683 = vpop.xlane.xlu0 %4682
        %v4684 = vsel %vm4464, %v4409, -inf
        %4685 = vmax.xlane.f32.xlu0 %v4684
        %v4686 = vpop.xlane.xlu0 %4685
        %v4687 = vsel %vm4464, %v4410, -inf
        %4688 = vmax.xlane.f32.xlu0 %v4687
        %v4689 = vpop.xlane.xlu0 %4688
        %v4690 = vsel %vm4464, %v4411, -inf
        %4691 = vmax.xlane.f32.xlu0 %v4690
        %v4692 = vpop.xlane.xlu0 %4691
        %v4693 = vsel %vm4464, %v4412, -inf
        %4694 = vmax.xlane.f32.xlu0 %v4693
        %v4695 = vpop.xlane.xlu0 %4694
        %v4696 = vsel %vm4464, %v4413, -inf
        %4697 = vmax.xlane.f32.xlu0 %v4696
        %v4698 = vpop.xlane.xlu0 %4697
        %v4699 = vsel %vm4464, %v4414, -inf
        %4700 = vmax.xlane.f32.xlu0 %v4699
        %v4701 = vpop.xlane.xlu0 %4700
        %v4702 = vsel %vm4464, %v4415, -inf
        %4703 = vmax.xlane.f32.xlu0 %v4702
        %v4704 = vpop.xlane.xlu0 %4703
        %v4705 = vsel %vm4464, %v4416, -inf
        %4706 = vmax.xlane.f32.xlu0 %v4705
        %v4707 = vpop.xlane.xlu0 %4706
        %v4708 = vsel %vm4464, %v4417, -inf
        %4709 = vmax.xlane.f32.xlu0 %v4708
        %v4710 = vpop.xlane.xlu0 %4709
        %v4711 = vsel %vm4464, %v4418, -inf
        %4712 = vmax.xlane.f32.xlu0 %v4711
        %v4713 = vpop.xlane.xlu0 %4712
        %v4714 = vsel %vm4464, %v4419, -inf
        %4715 = vmax.xlane.f32.xlu0 %v4714
        %v4716 = vpop.xlane.xlu0 %4715
        %v4717 = vsel %vm4464, %v4420, -inf
        %4718 = vmax.xlane.f32.xlu0 %v4717
        %v4719 = vpop.xlane.xlu0 %4718
        %v4720 = vsel %vm4464, %v4421, -inf
        %4721 = vmax.xlane.f32.xlu0 %v4720
        %v4722 = vpop.xlane.xlu0 %4721
        %v4723 = vsel %vm4464, %v4422, -inf
        %4724 = vmax.xlane.f32.xlu0 %v4723
        %v4725 = vpop.xlane.xlu0 %4724
        %v4726 = vsel %vm4464, %v4423, -inf
        %4727 = vmax.xlane.f32.xlu0 %v4726
        %v4728 = vpop.xlane.xlu0 %4727
        %v4729 = vsel %vm4464, %v4424, -inf
        %4730 = vmax.xlane.f32.xlu0 %v4729
        %v4731 = vpop.xlane.xlu0 %4730
        %v4732 = vsel %vm4464, %v4425, -inf
        %4733 = vmax.xlane.f32.xlu0 %v4732
        %v4734 = vpop.xlane.xlu0 %4733
        %v4735 = vsel %vm4464, %v4426, -inf
        %4736 = vmax.xlane.f32.xlu0 %v4735
        %v4737 = vpop.xlane.xlu0 %4736
        %v4738 = vsel %vm4464, %v4427, -inf
        %4739 = vmax.xlane.f32.xlu0 %v4738
        %v4740 = vpop.xlane.xlu0 %4739
        %v4741 = vsel %vm4464, %v4428, -inf
        %4742 = vmax.xlane.f32.xlu0 %v4741
        %v4743 = vpop.xlane.xlu0 %4742
        %v4744 = vsel %vm4464, %v4429, -inf
        %4745 = vmax.xlane.f32.xlu0 %v4744
        %v4746 = vpop.xlane.xlu0 %4745
        %v4747 = vsel %vm4464, %v4430, -inf
        %4748 = vmax.xlane.f32.xlu0 %v4747
        %v4749 = vpop.xlane.xlu0 %4748
        %v4750 = vsel %vm4464, %v4431, -inf
        %4751 = vmax.xlane.f32.xlu0 %v4750
        %v4752 = vpop.xlane.xlu0 %4751
        %v4753 = vsel %vm4464, %v4432, -inf
        %4754 = vmax.xlane.f32.xlu0 %v4753
        %v4755 = vpop.xlane.xlu0 %4754
        %v4756 = vsel %vm4464, %v4433, -inf
        %4757 = vmax.xlane.f32.xlu0 %v4756
        %v4758 = vpop.xlane.xlu0 %4757
        %v4759 = vsel %vm4464, %v4434, -inf
        %4760 = vmax.xlane.f32.xlu0 %v4759
        %v4761 = vpop.xlane.xlu0 %4760
        %v4762 = vsel %vm4464, %v4435, -inf
        %4763 = vmax.xlane.f32.xlu0 %v4762
        %v4764 = vpop.xlane.xlu0 %4763
        %v4765 = vsel %vm4464, %v4436, -inf
        %4766 = vmax.xlane.f32.xlu0 %v4765
        %v4767 = vpop.xlane.xlu0 %4766
        %v4768 = vsel %vm4464, %v4437, -inf
        %4769 = vmax.xlane.f32.xlu0 %v4768
        %v4770 = vpop.xlane.xlu0 %4769
        %v4771 = vsel %vm4464, %v4438, -inf
        %4772 = vmax.xlane.f32.xlu0 %v4771
        %v4773 = vpop.xlane.xlu0 %4772
        %v4774 = vsel %vm4464, %v4439, -inf
        %4775 = vmax.xlane.f32.xlu0 %v4774
        %v4776 = vpop.xlane.xlu0 %4775
        %v4777 = vsel %vm4464, %v4440, -inf
        %4778 = vmax.xlane.f32.xlu0 %v4777
        %v4779 = vpop.xlane.xlu0 %4778
        %v4780 = vsel %vm4464, %v4441, -inf
        %4781 = vmax.xlane.f32.xlu0 %v4780
        %v4782 = vpop.xlane.xlu0 %4781
        %v4783 = vsel %vm4464, %v4442, -inf
        %4784 = vmax.xlane.f32.xlu0 %v4783
        %v4785 = vpop.xlane.xlu0 %4784
        %v4786 = vsel %vm4464, %v4443, -inf
        %4787 = vmax.xlane.f32.xlu0 %v4786
        %v4788 = vpop.xlane.xlu0 %4787
        %v4789 = vsel %vm4464, %v4444, -inf
        %4790 = vmax.xlane.f32.xlu0 %v4789
        %v4791 = vpop.xlane.xlu0 %4790
        %v4792 = vsel %vm4464, %v4445, -inf
        %4793 = vmax.xlane.f32.xlu0 %v4792
        %v4794 = vpop.xlane.xlu0 %4793
        %v4795 = vsel %vm4464, %v4446, -inf
        %4796 = vmax.xlane.f32.xlu0 %v4795
        %v4797 = vpop.xlane.xlu0 %4796
        %v4798 = vsel %vm4464, %v4447, -inf
        %4799 = vmax.xlane.f32.xlu0 %v4798
        %v4800 = vpop.xlane.xlu0 %4799
        %v4801 = vsel %vm4464, %v4448, -inf
        %4802 = vmax.xlane.f32.xlu0 %v4801
        %v4803 = vpop.xlane.xlu0 %4802
        %v4804 = vsel %vm4464, %v4449, -inf
        %4805 = vmax.xlane.f32.xlu0 %v4804
        %v4806 = vpop.xlane.xlu0 %4805
        %v4807 = vsel %vm4464, %v4450, -inf
        %4808 = vmax.xlane.f32.xlu0 %v4807
        %v4809 = vpop.xlane.xlu0 %4808
        %v4810 = vsel %vm4464, %v4451, -inf
        %4811 = vmax.xlane.f32.xlu0 %v4810
        %v4812 = vpop.xlane.xlu0 %4811
        %v4813 = vsel %vm4464, %v4452, -inf
        %4814 = vmax.xlane.f32.xlu0 %v4813
        %v4815 = vpop.xlane.xlu0 %4814
        %v4816 = vsel %vm4464, %v4453, -inf
        %4817 = vmax.xlane.f32.xlu0 %v4816
        %v4818 = vpop.xlane.xlu0 %4817
        %v4819 = vsel %vm4464, %v4454, -inf
        %4820 = vmax.xlane.f32.xlu0 %v4819
        %v4821 = vpop.xlane.xlu0 %4820
        %v4822 = vsel %vm4464, %v4455, -inf
        %4823 = vmax.xlane.f32.xlu0 %v4822
        %v4824 = vpop.xlane.xlu0 %4823
        %v4825 = vsel %vm4464, %v4456, -inf
        %4826 = vmax.xlane.f32.xlu0 %v4825
        %v4827 = vpop.xlane.xlu0 %4826
        %v4828 = vsel %vm4464, %v4457, -inf
        %4829 = vmax.xlane.f32.xlu0 %v4828
        %v4830 = vpop.xlane.xlu0 %4829
        %v4831 = vsel %vm4464, %v4458, -inf
        %4832 = vmax.xlane.f32.xlu0 %v4831
        %v4833 = vpop.xlane.xlu0 %4832
        %v4834 = vsel %vm4464, %v4459, -inf
        %4835 = vmax.xlane.f32.xlu0 %v4834
        %v4836 = vpop.xlane.xlu0 %4835
        %v4837 = vsel %vm4464, %v4460, -inf
        %4838 = vmax.xlane.f32.xlu0 %v4837
        %v4839 = vpop.xlane.xlu0 %4838
        %v4840 = vsel %vm4464, %v4461, -inf
        %4841 = vmax.xlane.f32.xlu0 %v4840
        %v4842 = vpop.xlane.xlu0 %4841
        %v4843 = vsel %vm4464, %v4462, -inf
        %4844 = vmax.xlane.f32.xlu0 %v4843
        %v4845 = vpop.xlane.xlu0 %4844
        %v4846 = vsel %vm4464, %v4463, -inf
        %4847 = vmax.xlane.f32.xlu0 %v4846
        %v4848 = vpop.xlane.xlu0 %4847
        %v4849 = vsub.f32 %v4336, %v4467
        %v4850 = vsub.f32 %v4337, %v4470
        %v4851 = vsub.f32 %v4338, %v4473
        %v4852 = vsub.f32 %v4339, %v4476
        %v4853 = vsub.f32 %v4340, %v4479
        %v4854 = vsub.f32 %v4341, %v4482
        %v4855 = vsub.f32 %v4342, %v4485
        %v4856 = vsub.f32 %v4343, %v4488
        %v4857 = vsub.f32 %v4344, %v4491
        %v4858 = vsub.f32 %v4345, %v4494
        %v4859 = vsub.f32 %v4346, %v4497
        %v4860 = vsub.f32 %v4347, %v4500
        %v4861 = vsub.f32 %v4348, %v4503
        %v4862 = vsub.f32 %v4349, %v4506
        %v4863 = vsub.f32 %v4350, %v4509
        %v4864 = vsub.f32 %v4351, %v4512
        %v4865 = vsub.f32 %v4352, %v4515
        %v4866 = vsub.f32 %v4353, %v4518
        %v4867 = vsub.f32 %v4354, %v4521
        %v4868 = vsub.f32 %v4355, %v4524
        %v4869 = vsub.f32 %v4356, %v4527
        %v4870 = vsub.f32 %v4357, %v4530
        %v4871 = vsub.f32 %v4358, %v4533
        %v4872 = vsub.f32 %v4359, %v4536
        %v4873 = vsub.f32 %v4360, %v4539
        %v4874 = vsub.f32 %v4361, %v4542
        %v4875 = vsub.f32 %v4362, %v4545
        %v4876 = vsub.f32 %v4363, %v4548
        %v4877 = vsub.f32 %v4364, %v4551
        %v4878 = vsub.f32 %v4365, %v4554
        %v4879 = vsub.f32 %v4366, %v4557
        %v4880 = vsub.f32 %v4367, %v4560
        %v4881 = vsub.f32 %v4368, %v4563
        %v4882 = vsub.f32 %v4369, %v4566
        %v4883 = vsub.f32 %v4370, %v4569
        %v4884 = vsub.f32 %v4371, %v4572
        %v4885 = vsub.f32 %v4372, %v4575
        %v4886 = vsub.f32 %v4373, %v4578
        %v4887 = vsub.f32 %v4374, %v4581
        %v4888 = vsub.f32 %v4375, %v4584
        %v4889 = vsub.f32 %v4376, %v4587
        %v4890 = vsub.f32 %v4377, %v4590
        %v4891 = vsub.f32 %v4378, %v4593
        %v4892 = vsub.f32 %v4379, %v4596
        %v4893 = vsub.f32 %v4380, %v4599
        %v4894 = vsub.f32 %v4381, %v4602
        %v4895 = vsub.f32 %v4382, %v4605
        %v4896 = vsub.f32 %v4383, %v4608
        %v4897 = vsub.f32 %v4384, %v4611
        %v4898 = vsub.f32 %v4385, %v4614
        %v4899 = vsub.f32 %v4386, %v4617
        %v4900 = vsub.f32 %v4387, %v4620
        %v4901 = vsub.f32 %v4388, %v4623
        %v4902 = vsub.f32 %v4389, %v4626
        %v4903 = vsub.f32 %v4390, %v4629
        %v4904 = vsub.f32 %v4391, %v4632
        %v4905 = vsub.f32 %v4392, %v4635
        %v4906 = vsub.f32 %v4393, %v4638
        %v4907 = vsub.f32 %v4394, %v4641
        %v4908 = vsub.f32 %v4395, %v4644
        %v4909 = vsub.f32 %v4396, %v4647
        %v4910 = vsub.f32 %v4397, %v4650
        %v4911 = vsub.f32 %v4398, %v4653
        %v4912 = vsub.f32 %v4399, %v4656
        %v4913 = vsub.f32 %v4400, %v4659
        %v4914 = vsub.f32 %v4401, %v4662
        %v4915 = vsub.f32 %v4402, %v4665
        %v4916 = vsub.f32 %v4403, %v4668
        %v4917 = vsub.f32 %v4404, %v4671
        %v4918 = vsub.f32 %v4405, %v4674
        %v4919 = vsub.f32 %v4406, %v4677
        %v4920 = vsub.f32 %v4407, %v4680
        %v4921 = vsub.f32 %v4408, %v4683
        %v4922 = vsub.f32 %v4409, %v4686
        %v4923 = vsub.f32 %v4410, %v4689
        %v4924 = vsub.f32 %v4411, %v4692
        %v4925 = vsub.f32 %v4412, %v4695
        %v4926 = vsub.f32 %v4413, %v4698
        %v4927 = vsub.f32 %v4414, %v4701
        %v4928 = vsub.f32 %v4415, %v4704
        %v4929 = vsub.f32 %v4416, %v4707
        %v4930 = vsub.f32 %v4417, %v4710
        %v4931 = vsub.f32 %v4418, %v4713
        %v4932 = vsub.f32 %v4419, %v4716
        %v4933 = vsub.f32 %v4420, %v4719
        %v4934 = vsub.f32 %v4421, %v4722
        %v4935 = vsub.f32 %v4422, %v4725
        %v4936 = vsub.f32 %v4423, %v4728
        %v4937 = vsub.f32 %v4424, %v4731
        %v4938 = vsub.f32 %v4425, %v4734
        %v4939 = vsub.f32 %v4426, %v4737
        %v4940 = vsub.f32 %v4427, %v4740
        %v4941 = vsub.f32 %v4428, %v4743
        %v4942 = vsub.f32 %v4429, %v4746
        %v4943 = vsub.f32 %v4430, %v4749
        %v4944 = vsub.f32 %v4431, %v4752
        %v4945 = vsub.f32 %v4432, %v4755
        %v4946 = vsub.f32 %v4433, %v4758
        %v4947 = vsub.f32 %v4434, %v4761
        %v4948 = vsub.f32 %v4435, %v4764
        %v4949 = vsub.f32 %v4436, %v4767
        %v4950 = vsub.f32 %v4437, %v4770
        %v4951 = vsub.f32 %v4438, %v4773
        %v4952 = vsub.f32 %v4439, %v4776
        %v4953 = vsub.f32 %v4440, %v4779
        %v4954 = vsub.f32 %v4441, %v4782
        %v4955 = vsub.f32 %v4442, %v4785
        %v4956 = vsub.f32 %v4443, %v4788
        %v4957 = vsub.f32 %v4444, %v4791
        %v4958 = vsub.f32 %v4445, %v4794
        %v4959 = vsub.f32 %v4446, %v4797
        %v4960 = vsub.f32 %v4447, %v4800
        %v4961 = vsub.f32 %v4448, %v4803
        %v4962 = vsub.f32 %v4449, %v4806
        %v4963 = vsub.f32 %v4450, %v4809
        %v4964 = vsub.f32 %v4451, %v4812
        %v4965 = vsub.f32 %v4452, %v4815
        %v4966 = vsub.f32 %v4453, %v4818
        %v4967 = vsub.f32 %v4454, %v4821
        %v4968 = vsub.f32 %v4455, %v4824
        %v4969 = vsub.f32 %v4456, %v4827
        %v4970 = vsub.f32 %v4457, %v4830
        %v4971 = vsub.f32 %v4458, %v4833
        %v4972 = vsub.f32 %v4459, %v4836
        %v4973 = vsub.f32 %v4460, %v4839
        %v4974 = vsub.f32 %v4461, %v4842
        %v4975 = vsub.f32 %v4462, %v4845
        %v4976 = vsub.f32 %v4463, %v4848
        %v4977 = vmul.f32 %v4849, 1.442695
        %v4978 = vpow.pop %v4977
        %v4979 = vmul.f32 %v4850, 1.442695
        %v4980 = vpow.pop %v4979
        %v4981 = vmul.f32 %v4851, 1.442695
        %v4982 = vpow.pop %v4981
        %v4983 = vmul.f32 %v4852, 1.442695
        %v4984 = vpow.pop %v4983
        %v4985 = vmul.f32 %v4853, 1.442695
        %v4986 = vpow.pop %v4985
        %v4987 = vmul.f32 %v4854, 1.442695
        %v4988 = vpow.pop %v4987
        %v4989 = vmul.f32 %v4855, 1.442695
        %v4990 = vpow.pop %v4989
        %v4991 = vmul.f32 %v4856, 1.442695
        %v4992 = vpow.pop %v4991
        %v4993 = vmul.f32 %v4857, 1.442695
        %v4994 = vpow.pop %v4993
        %v4995 = vmul.f32 %v4858, 1.442695
        %v4996 = vpow.pop %v4995
        %v4997 = vmul.f32 %v4859, 1.442695
        %v4998 = vpow.pop %v4997
        %v4999 = vmul.f32 %v4860, 1.442695
        %v5000 = vpow.pop %v4999
        %v5001 = vmul.f32 %v4861, 1.442695
        %v5002 = vpow.pop %v5001
        %v5003 = vmul.f32 %v4862, 1.442695
        %v5004 = vpow.pop %v5003
        %v5005 = vmul.f32 %v4863, 1.442695
        %v5006 = vpow.pop %v5005
        %v5007 = vmul.f32 %v4864, 1.442695
        %v5008 = vpow.pop %v5007
        %v5009 = vmul.f32 %v4865, 1.442695
        %v5010 = vpow.pop %v5009
        %v5011 = vmul.f32 %v4866, 1.442695
        %v5012 = vpow.pop %v5011
        %v5013 = vmul.f32 %v4867, 1.442695
        %v5014 = vpow.pop %v5013
        %v5015 = vmul.f32 %v4868, 1.442695
        %v5016 = vpow.pop %v5015
        %v5017 = vmul.f32 %v4869, 1.442695
        %v5018 = vpow.pop %v5017
        %v5019 = vmul.f32 %v4870, 1.442695
        %v5020 = vpow.pop %v5019
        %v5021 = vmul.f32 %v4871, 1.442695
        %v5022 = vpow.pop %v5021
        %v5023 = vmul.f32 %v4872, 1.442695
        %v5024 = vpow.pop %v5023
        %v5025 = vmul.f32 %v4873, 1.442695
        %v5026 = vpow.pop %v5025
        %v5027 = vmul.f32 %v4874, 1.442695
        %v5028 = vpow.pop %v5027
        %v5029 = vmul.f32 %v4875, 1.442695
        %v5030 = vpow.pop %v5029
        %v5031 = vmul.f32 %v4876, 1.442695
        %v5032 = vpow.pop %v5031
        %v5033 = vmul.f32 %v4877, 1.442695
        %v5034 = vpow.pop %v5033
        %v5035 = vmul.f32 %v4878, 1.442695
        %v5036 = vpow.pop %v5035
        %v5037 = vmul.f32 %v4879, 1.442695
        %v5038 = vpow.pop %v5037
        %v5039 = vmul.f32 %v4880, 1.442695
        %v5040 = vpow.pop %v5039
        %v5041 = vmul.f32 %v4881, 1.442695
        %v5042 = vpow.pop %v5041
        %v5043 = vmul.f32 %v4882, 1.442695
        %v5044 = vpow.pop %v5043
        %v5045 = vmul.f32 %v4883, 1.442695
        %v5046 = vpow.pop %v5045
        %v5047 = vmul.f32 %v4884, 1.442695
        %v5048 = vpow.pop %v5047
        %v5049 = vmul.f32 %v4885, 1.442695
        %v5050 = vpow.pop %v5049
        %v5051 = vmul.f32 %v4886, 1.442695
        %v5052 = vpow.pop %v5051
        %v5053 = vmul.f32 %v4887, 1.442695
        %v5054 = vpow.pop %v5053
        %v5055 = vmul.f32 %v4888, 1.442695
        %v5056 = vpow.pop %v5055
        %v5057 = vmul.f32 %v4889, 1.442695
        %v5058 = vpow.pop %v5057
        %v5059 = vmul.f32 %v4890, 1.442695
        %v5060 = vpow.pop %v5059
        %v5061 = vmul.f32 %v4891, 1.442695
        %v5062 = vpow.pop %v5061
        %v5063 = vmul.f32 %v4892, 1.442695
        %v5064 = vpow.pop %v5063
        %v5065 = vmul.f32 %v4893, 1.442695
        %v5066 = vpow.pop %v5065
        %v5067 = vmul.f32 %v4894, 1.442695
        %v5068 = vpow.pop %v5067
        %v5069 = vmul.f32 %v4895, 1.442695
        %v5070 = vpow.pop %v5069
        %v5071 = vmul.f32 %v4896, 1.442695
        %v5072 = vpow.pop %v5071
        %v5073 = vmul.f32 %v4897, 1.442695
        %v5074 = vpow.pop %v5073
        %v5075 = vmul.f32 %v4898, 1.442695
        %v5076 = vpow.pop %v5075
        %v5077 = vmul.f32 %v4899, 1.442695
        %v5078 = vpow.pop %v5077
        %v5079 = vmul.f32 %v4900, 1.442695
        %v5080 = vpow.pop %v5079
        %v5081 = vmul.f32 %v4901, 1.442695
        %v5082 = vpow.pop %v5081
        %v5083 = vmul.f32 %v4902, 1.442695
        %v5084 = vpow.pop %v5083
        %v5085 = vmul.f32 %v4903, 1.442695
        %v5086 = vpow.pop %v5085
        %v5087 = vmul.f32 %v4904, 1.442695
        %v5088 = vpow.pop %v5087
        %v5089 = vmul.f32 %v4905, 1.442695
        %v5090 = vpow.pop %v5089
        %v5091 = vmul.f32 %v4906, 1.442695
        %v5092 = vpow.pop %v5091
        %v5093 = vmul.f32 %v4907, 1.442695
        %v5094 = vpow.pop %v5093
        %v5095 = vmul.f32 %v4908, 1.442695
        %v5096 = vpow.pop %v5095
        %v5097 = vmul.f32 %v4909, 1.442695
        %v5098 = vpow.pop %v5097
        %v5099 = vmul.f32 %v4910, 1.442695
        %v5100 = vpow.pop %v5099
        %v5101 = vmul.f32 %v4911, 1.442695
        %v5102 = vpow.pop %v5101
        %v5103 = vmul.f32 %v4912, 1.442695
        %v5104 = vpow.pop %v5103
        %v5105 = vmul.f32 %v4913, 1.442695
        %v5106 = vpow.pop %v5105
        %v5107 = vmul.f32 %v4914, 1.442695
        %v5108 = vpow.pop %v5107
        %v5109 = vmul.f32 %v4915, 1.442695
        %v5110 = vpow.pop %v5109
        %v5111 = vmul.f32 %v4916, 1.442695
        %v5112 = vpow.pop %v5111
        %v5113 = vmul.f32 %v4917, 1.442695
        %v5114 = vpow.pop %v5113
        %v5115 = vmul.f32 %v4918, 1.442695
        %v5116 = vpow.pop %v5115
        %v5117 = vmul.f32 %v4919, 1.442695
        %v5118 = vpow.pop %v5117
        %v5119 = vmul.f32 %v4920, 1.442695
        %v5120 = vpow.pop %v5119
        %v5121 = vmul.f32 %v4921, 1.442695
        %v5122 = vpow.pop %v5121
        %v5123 = vmul.f32 %v4922, 1.442695
        %v5124 = vpow.pop %v5123
        %v5125 = vmul.f32 %v4923, 1.442695
        %v5126 = vpow.pop %v5125
        %v5127 = vmul.f32 %v4924, 1.442695
        %v5128 = vpow.pop %v5127
        %v5129 = vmul.f32 %v4925, 1.442695
        %v5130 = vpow.pop %v5129
        %v5131 = vmul.f32 %v4926, 1.442695
        %v5132 = vpow.pop %v5131
        %v5133 = vmul.f32 %v4927, 1.442695
        %v5134 = vpow.pop %v5133
        %v5135 = vmul.f32 %v4928, 1.442695
        %v5136 = vpow.pop %v5135
        %v5137 = vmul.f32 %v4929, 1.442695
        %v5138 = vpow.pop %v5137
        %v5139 = vmul.f32 %v4930, 1.442695
        %v5140 = vpow.pop %v5139
        %v5141 = vmul.f32 %v4931, 1.442695
        %v5142 = vpow.pop %v5141
        %v5143 = vmul.f32 %v4932, 1.442695
        %v5144 = vpow.pop %v5143
        %v5145 = vmul.f32 %v4933, 1.442695
        %v5146 = vpow.pop %v5145
        %v5147 = vmul.f32 %v4934, 1.442695
        %v5148 = vpow.pop %v5147
        %v5149 = vmul.f32 %v4935, 1.442695
        %v5150 = vpow.pop %v5149
        %v5151 = vmul.f32 %v4936, 1.442695
        %v5152 = vpow.pop %v5151
        %v5153 = vmul.f32 %v4937, 1.442695
        %v5154 = vpow.pop %v5153
        %v5155 = vmul.f32 %v4938, 1.442695
        %v5156 = vpow.pop %v5155
        %v5157 = vmul.f32 %v4939, 1.442695
        %v5158 = vpow.pop %v5157
        %v5159 = vmul.f32 %v4940, 1.442695
        %v5160 = vpow.pop %v5159
        %v5161 = vmul.f32 %v4941, 1.442695
        %v5162 = vpow.pop %v5161
        %v5163 = vmul.f32 %v4942, 1.442695
        %v5164 = vpow.pop %v5163
        %v5165 = vmul.f32 %v4943, 1.442695
        %v5166 = vpow.pop %v5165
        %v5167 = vmul.f32 %v4944, 1.442695
        %v5168 = vpow.pop %v5167
        %v5169 = vmul.f32 %v4945, 1.442695
        %v5170 = vpow.pop %v5169
        %v5171 = vmul.f32 %v4946, 1.442695
        %v5172 = vpow.pop %v5171
        %v5173 = vmul.f32 %v4947, 1.442695
        %v5174 = vpow.pop %v5173
        %v5175 = vmul.f32 %v4948, 1.442695
        %v5176 = vpow.pop %v5175
        %v5177 = vmul.f32 %v4949, 1.442695
        %v5178 = vpow.pop %v5177
        %v5179 = vmul.f32 %v4950, 1.442695
        %v5180 = vpow.pop %v5179
        %v5181 = vmul.f32 %v4951, 1.442695
        %v5182 = vpow.pop %v5181
        %v5183 = vmul.f32 %v4952, 1.442695
        %v5184 = vpow.pop %v5183
        %v5185 = vmul.f32 %v4953, 1.442695
        %v5186 = vpow.pop %v5185
        %v5187 = vmul.f32 %v4954, 1.442695
        %v5188 = vpow.pop %v5187
        %v5189 = vmul.f32 %v4955, 1.442695
        %v5190 = vpow.pop %v5189
        %v5191 = vmul.f32 %v4956, 1.442695
        %v5192 = vpow.pop %v5191
        %v5193 = vmul.f32 %v4957, 1.442695
        %v5194 = vpow.pop %v5193
        %v5195 = vmul.f32 %v4958, 1.442695
        %v5196 = vpow.pop %v5195
        %v5197 = vmul.f32 %v4959, 1.442695
        %v5198 = vpow.pop %v5197
        %v5199 = vmul.f32 %v4960, 1.442695
        %v5200 = vpow.pop %v5199
        %v5201 = vmul.f32 %v4961, 1.442695
        %v5202 = vpow.pop %v5201
        %v5203 = vmul.f32 %v4962, 1.442695
        %v5204 = vpow.pop %v5203
        %v5205 = vmul.f32 %v4963, 1.442695
        %v5206 = vpow.pop %v5205
        %v5207 = vmul.f32 %v4964, 1.442695
        %v5208 = vpow.pop %v5207
        %v5209 = vmul.f32 %v4965, 1.442695
        %v5210 = vpow.pop %v5209
        %v5211 = vmul.f32 %v4966, 1.442695
        %v5212 = vpow.pop %v5211
        %v5213 = vmul.f32 %v4967, 1.442695
        %v5214 = vpow.pop %v5213
        %v5215 = vmul.f32 %v4968, 1.442695
        %v5216 = vpow.pop %v5215
        %v5217 = vmul.f32 %v4969, 1.442695
        %v5218 = vpow.pop %v5217
        %v5219 = vmul.f32 %v4970, 1.442695
        %v5220 = vpow.pop %v5219
        %v5221 = vmul.f32 %v4971, 1.442695
        %v5222 = vpow.pop %v5221
        %v5223 = vmul.f32 %v4972, 1.442695
        %v5224 = vpow.pop %v5223
        %v5225 = vmul.f32 %v4973, 1.442695
        %v5226 = vpow.pop %v5225
        %v5227 = vmul.f32 %v4974, 1.442695
        %v5228 = vpow.pop %v5227
        %v5229 = vmul.f32 %v4975, 1.442695
        %v5230 = vpow.pop %v5229
        %v5231 = vmul.f32 %v4976, 1.442695
        %v5232 = vpow.pop %v5231
        %v5233 = vsel %vm4464, %v4978, 0.0
        %5234 = vadd.xlane.f32.xlu0 %v5233
        %v5235 = vpop.xlane.xlu0 %5234
        %v5236 = vsel %vm4464, %v4980, 0.0
        %5237 = vadd.xlane.f32.xlu0 %v5236
        %v5238 = vpop.xlane.xlu0 %5237
        %v5239 = vsel %vm4464, %v4982, 0.0
        %5240 = vadd.xlane.f32.xlu0 %v5239
        %v5241 = vpop.xlane.xlu0 %5240
        %v5242 = vsel %vm4464, %v4984, 0.0
        %5243 = vadd.xlane.f32.xlu0 %v5242
        %v5244 = vpop.xlane.xlu0 %5243
        %v5245 = vsel %vm4464, %v4986, 0.0
        %5246 = vadd.xlane.f32.xlu0 %v5245
        %v5247 = vpop.xlane.xlu0 %5246
        %v5248 = vsel %vm4464, %v4988, 0.0
        %5249 = vadd.xlane.f32.xlu0 %v5248
        %v5250 = vpop.xlane.xlu0 %5249
        %v5251 = vsel %vm4464, %v4990, 0.0
        %5252 = vadd.xlane.f32.xlu0 %v5251
        %v5253 = vpop.xlane.xlu0 %5252
        %v5254 = vsel %vm4464, %v4992, 0.0
        %5255 = vadd.xlane.f32.xlu0 %v5254
        %v5256 = vpop.xlane.xlu0 %5255
        %v5257 = vsel %vm4464, %v4994, 0.0
        %5258 = vadd.xlane.f32.xlu0 %v5257
        %v5259 = vpop.xlane.xlu0 %5258
        %v5260 = vsel %vm4464, %v4996, 0.0
        %5261 = vadd.xlane.f32.xlu0 %v5260
        %v5262 = vpop.xlane.xlu0 %5261
        %v5263 = vsel %vm4464, %v4998, 0.0
        %5264 = vadd.xlane.f32.xlu0 %v5263
        %v5265 = vpop.xlane.xlu0 %5264
        %v5266 = vsel %vm4464, %v5000, 0.0
        %5267 = vadd.xlane.f32.xlu0 %v5266
        %v5268 = vpop.xlane.xlu0 %5267
        %v5269 = vsel %vm4464, %v5002, 0.0
        %5270 = vadd.xlane.f32.xlu0 %v5269
        %v5271 = vpop.xlane.xlu0 %5270
        %v5272 = vsel %vm4464, %v5004, 0.0
        %5273 = vadd.xlane.f32.xlu0 %v5272
        %v5274 = vpop.xlane.xlu0 %5273
        %v5275 = vsel %vm4464, %v5006, 0.0
        %5276 = vadd.xlane.f32.xlu0 %v5275
        %v5277 = vpop.xlane.xlu0 %5276
        %v5278 = vsel %vm4464, %v5008, 0.0
        %5279 = vadd.xlane.f32.xlu0 %v5278
        %v5280 = vpop.xlane.xlu0 %5279
        %v5281 = vsel %vm4464, %v5010, 0.0
        %5282 = vadd.xlane.f32.xlu0 %v5281
        %v5283 = vpop.xlane.xlu0 %5282
        %v5284 = vsel %vm4464, %v5012, 0.0
        %5285 = vadd.xlane.f32.xlu0 %v5284
        %v5286 = vpop.xlane.xlu0 %5285
        %v5287 = vsel %vm4464, %v5014, 0.0
        %5288 = vadd.xlane.f32.xlu0 %v5287
        %v5289 = vpop.xlane.xlu0 %5288
        %v5290 = vsel %vm4464, %v5016, 0.0
        %5291 = vadd.xlane.f32.xlu0 %v5290
        %v5292 = vpop.xlane.xlu0 %5291
        %v5293 = vsel %vm4464, %v5018, 0.0
        %5294 = vadd.xlane.f32.xlu0 %v5293
        %v5295 = vpop.xlane.xlu0 %5294
        %v5296 = vsel %vm4464, %v5020, 0.0
        %5297 = vadd.xlane.f32.xlu0 %v5296
        %v5298 = vpop.xlane.xlu0 %5297
        %v5299 = vsel %vm4464, %v5022, 0.0
        %5300 = vadd.xlane.f32.xlu0 %v5299
        %v5301 = vpop.xlane.xlu0 %5300
        %v5302 = vsel %vm4464, %v5024, 0.0
        %5303 = vadd.xlane.f32.xlu0 %v5302
        %v5304 = vpop.xlane.xlu0 %5303
        %v5305 = vsel %vm4464, %v5026, 0.0
        %5306 = vadd.xlane.f32.xlu0 %v5305
        %v5307 = vpop.xlane.xlu0 %5306
        %v5308 = vsel %vm4464, %v5028, 0.0
        %5309 = vadd.xlane.f32.xlu0 %v5308
        %v5310 = vpop.xlane.xlu0 %5309
        %v5311 = vsel %vm4464, %v5030, 0.0
        %5312 = vadd.xlane.f32.xlu0 %v5311
        %v5313 = vpop.xlane.xlu0 %5312
        %v5314 = vsel %vm4464, %v5032, 0.0
        %5315 = vadd.xlane.f32.xlu0 %v5314
        %v5316 = vpop.xlane.xlu0 %5315
        %v5317 = vsel %vm4464, %v5034, 0.0
        %5318 = vadd.xlane.f32.xlu0 %v5317
        %v5319 = vpop.xlane.xlu0 %5318
        %v5320 = vsel %vm4464, %v5036, 0.0
        %5321 = vadd.xlane.f32.xlu0 %v5320
        %v5322 = vpop.xlane.xlu0 %5321
        %v5323 = vsel %vm4464, %v5038, 0.0
        %5324 = vadd.xlane.f32.xlu0 %v5323
        %v5325 = vpop.xlane.xlu0 %5324
        %v5326 = vsel %vm4464, %v5040, 0.0
        %5327 = vadd.xlane.f32.xlu0 %v5326
        %v5328 = vpop.xlane.xlu0 %5327
        %v5329 = vsel %vm4464, %v5042, 0.0
        %5330 = vadd.xlane.f32.xlu0 %v5329
        %v5331 = vpop.xlane.xlu0 %5330
        %v5332 = vsel %vm4464, %v5044, 0.0
        %5333 = vadd.xlane.f32.xlu0 %v5332
        %v5334 = vpop.xlane.xlu0 %5333
        %v5335 = vsel %vm4464, %v5046, 0.0
        %5336 = vadd.xlane.f32.xlu0 %v5335
        %v5337 = vpop.xlane.xlu0 %5336
        %v5338 = vsel %vm4464, %v5048, 0.0
        %5339 = vadd.xlane.f32.xlu0 %v5338
        %v5340 = vpop.xlane.xlu0 %5339
        %v5341 = vsel %vm4464, %v5050, 0.0
        %5342 = vadd.xlane.f32.xlu0 %v5341
        %v5343 = vpop.xlane.xlu0 %5342
        %v5344 = vsel %vm4464, %v5052, 0.0
        %5345 = vadd.xlane.f32.xlu0 %v5344
        %v5346 = vpop.xlane.xlu0 %5345
        %v5347 = vsel %vm4464, %v5054, 0.0
        %5348 = vadd.xlane.f32.xlu0 %v5347
        %v5349 = vpop.xlane.xlu0 %5348
        %v5350 = vsel %vm4464, %v5056, 0.0
        %5351 = vadd.xlane.f32.xlu0 %v5350
        %v5352 = vpop.xlane.xlu0 %5351
        %v5353 = vsel %vm4464, %v5058, 0.0
        %5354 = vadd.xlane.f32.xlu0 %v5353
        %v5355 = vpop.xlane.xlu0 %5354
        %v5356 = vsel %vm4464, %v5060, 0.0
        %5357 = vadd.xlane.f32.xlu0 %v5356
        %v5358 = vpop.xlane.xlu0 %5357
        %v5359 = vsel %vm4464, %v5062, 0.0
        %5360 = vadd.xlane.f32.xlu0 %v5359
        %v5361 = vpop.xlane.xlu0 %5360
        %v5362 = vsel %vm4464, %v5064, 0.0
        %5363 = vadd.xlane.f32.xlu0 %v5362
        %v5364 = vpop.xlane.xlu0 %5363
        %v5365 = vsel %vm4464, %v5066, 0.0
        %5366 = vadd.xlane.f32.xlu0 %v5365
        %v5367 = vpop.xlane.xlu0 %5366
        %v5368 = vsel %vm4464, %v5068, 0.0
        %5369 = vadd.xlane.f32.xlu0 %v5368
        %v5370 = vpop.xlane.xlu0 %5369
        %v5371 = vsel %vm4464, %v5070, 0.0
        %5372 = vadd.xlane.f32.xlu0 %v5371
        %v5373 = vpop.xlane.xlu0 %5372
        %v5374 = vsel %vm4464, %v5072, 0.0
        %5375 = vadd.xlane.f32.xlu0 %v5374
        %v5376 = vpop.xlane.xlu0 %5375
        %v5377 = vsel %vm4464, %v5074, 0.0
        %5378 = vadd.xlane.f32.xlu0 %v5377
        %v5379 = vpop.xlane.xlu0 %5378
        %v5380 = vsel %vm4464, %v5076, 0.0
        %5381 = vadd.xlane.f32.xlu0 %v5380
        %v5382 = vpop.xlane.xlu0 %5381
        %v5383 = vsel %vm4464, %v5078, 0.0
        %5384 = vadd.xlane.f32.xlu0 %v5383
        %v5385 = vpop.xlane.xlu0 %5384
        %v5386 = vsel %vm4464, %v5080, 0.0
        %5387 = vadd.xlane.f32.xlu0 %v5386
        %v5388 = vpop.xlane.xlu0 %5387
        %v5389 = vsel %vm4464, %v5082, 0.0
        %5390 = vadd.xlane.f32.xlu0 %v5389
        %v5391 = vpop.xlane.xlu0 %5390
        %v5392 = vsel %vm4464, %v5084, 0.0
        %5393 = vadd.xlane.f32.xlu0 %v5392
        %v5394 = vpop.xlane.xlu0 %5393
        %v5395 = vsel %vm4464, %v5086, 0.0
        %5396 = vadd.xlane.f32.xlu0 %v5395
        %v5397 = vpop.xlane.xlu0 %5396
        %v5398 = vsel %vm4464, %v5088, 0.0
        %5399 = vadd.xlane.f32.xlu0 %v5398
        %v5400 = vpop.xlane.xlu0 %5399
        %v5401 = vsel %vm4464, %v5090, 0.0
        %5402 = vadd.xlane.f32.xlu0 %v5401
        %v5403 = vpop.xlane.xlu0 %5402
        %v5404 = vsel %vm4464, %v5092, 0.0
        %5405 = vadd.xlane.f32.xlu0 %v5404
        %v5406 = vpop.xlane.xlu0 %5405
        %v5407 = vsel %vm4464, %v5094, 0.0
        %5408 = vadd.xlane.f32.xlu0 %v5407
        %v5409 = vpop.xlane.xlu0 %5408
        %v5410 = vsel %vm4464, %v5096, 0.0
        %5411 = vadd.xlane.f32.xlu0 %v5410
        %v5412 = vpop.xlane.xlu0 %5411
        %v5413 = vsel %vm4464, %v5098, 0.0
        %5414 = vadd.xlane.f32.xlu0 %v5413
        %v5415 = vpop.xlane.xlu0 %5414
        %v5416 = vsel %vm4464, %v5100, 0.0
        %5417 = vadd.xlane.f32.xlu0 %v5416
        %v5418 = vpop.xlane.xlu0 %5417
        %v5419 = vsel %vm4464, %v5102, 0.0
        %5420 = vadd.xlane.f32.xlu0 %v5419
        %v5421 = vpop.xlane.xlu0 %5420
        %v5422 = vsel %vm4464, %v5104, 0.0
        %5423 = vadd.xlane.f32.xlu0 %v5422
        %v5424 = vpop.xlane.xlu0 %5423
        %v5425 = vsel %vm4464, %v5106, 0.0
        %5426 = vadd.xlane.f32.xlu0 %v5425
        %v5427 = vpop.xlane.xlu0 %5426
        %v5428 = vsel %vm4464, %v5108, 0.0
        %5429 = vadd.xlane.f32.xlu0 %v5428
        %v5430 = vpop.xlane.xlu0 %5429
        %v5431 = vsel %vm4464, %v5110, 0.0
        %5432 = vadd.xlane.f32.xlu0 %v5431
        %v5433 = vpop.xlane.xlu0 %5432
        %v5434 = vsel %vm4464, %v5112, 0.0
        %5435 = vadd.xlane.f32.xlu0 %v5434
        %v5436 = vpop.xlane.xlu0 %5435
        %v5437 = vsel %vm4464, %v5114, 0.0
        %5438 = vadd.xlane.f32.xlu0 %v5437
        %v5439 = vpop.xlane.xlu0 %5438
        %v5440 = vsel %vm4464, %v5116, 0.0
        %5441 = vadd.xlane.f32.xlu0 %v5440
        %v5442 = vpop.xlane.xlu0 %5441
        %v5443 = vsel %vm4464, %v5118, 0.0
        %5444 = vadd.xlane.f32.xlu0 %v5443
        %v5445 = vpop.xlane.xlu0 %5444
        %v5446 = vsel %vm4464, %v5120, 0.0
        %5447 = vadd.xlane.f32.xlu0 %v5446
        %v5448 = vpop.xlane.xlu0 %5447
        %v5449 = vsel %vm4464, %v5122, 0.0
        %5450 = vadd.xlane.f32.xlu0 %v5449
        %v5451 = vpop.xlane.xlu0 %5450
        %v5452 = vsel %vm4464, %v5124, 0.0
        %5453 = vadd.xlane.f32.xlu0 %v5452
        %v5454 = vpop.xlane.xlu0 %5453
        %v5455 = vsel %vm4464, %v5126, 0.0
        %5456 = vadd.xlane.f32.xlu0 %v5455
        %v5457 = vpop.xlane.xlu0 %5456
        %v5458 = vsel %vm4464, %v5128, 0.0
        %5459 = vadd.xlane.f32.xlu0 %v5458
        %v5460 = vpop.xlane.xlu0 %5459
        %v5461 = vsel %vm4464, %v5130, 0.0
        %5462 = vadd.xlane.f32.xlu0 %v5461
        %v5463 = vpop.xlane.xlu0 %5462
        %v5464 = vsel %vm4464, %v5132, 0.0
        %5465 = vadd.xlane.f32.xlu0 %v5464
        %v5466 = vpop.xlane.xlu0 %5465
        %v5467 = vsel %vm4464, %v5134, 0.0
        %5468 = vadd.xlane.f32.xlu0 %v5467
        %v5469 = vpop.xlane.xlu0 %5468
        %v5470 = vsel %vm4464, %v5136, 0.0
        %5471 = vadd.xlane.f32.xlu0 %v5470
        %v5472 = vpop.xlane.xlu0 %5471
        %v5473 = vsel %vm4464, %v5138, 0.0
        %5474 = vadd.xlane.f32.xlu0 %v5473
        %v5475 = vpop.xlane.xlu0 %5474
        %v5476 = vsel %vm4464, %v5140, 0.0
        %5477 = vadd.xlane.f32.xlu0 %v5476
        %v5478 = vpop.xlane.xlu0 %5477
        %v5479 = vsel %vm4464, %v5142, 0.0
        %5480 = vadd.xlane.f32.xlu0 %v5479
        %v5481 = vpop.xlane.xlu0 %5480
        %v5482 = vsel %vm4464, %v5144, 0.0
        %5483 = vadd.xlane.f32.xlu0 %v5482
        %v5484 = vpop.xlane.xlu0 %5483
        %v5485 = vsel %vm4464, %v5146, 0.0
        %5486 = vadd.xlane.f32.xlu0 %v5485
        %v5487 = vpop.xlane.xlu0 %5486
        %v5488 = vsel %vm4464, %v5148, 0.0
        %5489 = vadd.xlane.f32.xlu0 %v5488
        %v5490 = vpop.xlane.xlu0 %5489
        %v5491 = vsel %vm4464, %v5150, 0.0
        %5492 = vadd.xlane.f32.xlu0 %v5491
        %v5493 = vpop.xlane.xlu0 %5492
        %v5494 = vsel %vm4464, %v5152, 0.0
        %5495 = vadd.xlane.f32.xlu0 %v5494
        %v5496 = vpop.xlane.xlu0 %5495
        %v5497 = vsel %vm4464, %v5154, 0.0
        %5498 = vadd.xlane.f32.xlu0 %v5497
        %v5499 = vpop.xlane.xlu0 %5498
        %v5500 = vsel %vm4464, %v5156, 0.0
        %5501 = vadd.xlane.f32.xlu0 %v5500
        %v5502 = vpop.xlane.xlu0 %5501
        %v5503 = vsel %vm4464, %v5158, 0.0
        %5504 = vadd.xlane.f32.xlu0 %v5503
        %v5505 = vpop.xlane.xlu0 %5504
        %v5506 = vsel %vm4464, %v5160, 0.0
        %5507 = vadd.xlane.f32.xlu0 %v5506
        %v5508 = vpop.xlane.xlu0 %5507
        %v5509 = vsel %vm4464, %v5162, 0.0
        %5510 = vadd.xlane.f32.xlu0 %v5509
        %v5511 = vpop.xlane.xlu0 %5510
        %v5512 = vsel %vm4464, %v5164, 0.0
        %5513 = vadd.xlane.f32.xlu0 %v5512
        %v5514 = vpop.xlane.xlu0 %5513
        %v5515 = vsel %vm4464, %v5166, 0.0
        %5516 = vadd.xlane.f32.xlu0 %v5515
        %v5517 = vpop.xlane.xlu0 %5516
        %v5518 = vsel %vm4464, %v5168, 0.0
        %5519 = vadd.xlane.f32.xlu0 %v5518
        %v5520 = vpop.xlane.xlu0 %5519
        %v5521 = vsel %vm4464, %v5170, 0.0
        %5522 = vadd.xlane.f32.xlu0 %v5521
        %v5523 = vpop.xlane.xlu0 %5522
        %v5524 = vsel %vm4464, %v5172, 0.0
        %5525 = vadd.xlane.f32.xlu0 %v5524
        %v5526 = vpop.xlane.xlu0 %5525
        %v5527 = vsel %vm4464, %v5174, 0.0
        %5528 = vadd.xlane.f32.xlu0 %v5527
        %v5529 = vpop.xlane.xlu0 %5528
        %v5530 = vsel %vm4464, %v5176, 0.0
        %5531 = vadd.xlane.f32.xlu0 %v5530
        %v5532 = vpop.xlane.xlu0 %5531
        %v5533 = vsel %vm4464, %v5178, 0.0
        %5534 = vadd.xlane.f32.xlu0 %v5533
        %v5535 = vpop.xlane.xlu0 %5534
        %v5536 = vsel %vm4464, %v5180, 0.0
        %5537 = vadd.xlane.f32.xlu0 %v5536
        %v5538 = vpop.xlane.xlu0 %5537
        %v5539 = vsel %vm4464, %v5182, 0.0
        %5540 = vadd.xlane.f32.xlu0 %v5539
        %v5541 = vpop.xlane.xlu0 %5540
        %v5542 = vsel %vm4464, %v5184, 0.0
        %5543 = vadd.xlane.f32.xlu0 %v5542
        %v5544 = vpop.xlane.xlu0 %5543
        %v5545 = vsel %vm4464, %v5186, 0.0
        %5546 = vadd.xlane.f32.xlu0 %v5545
        %v5547 = vpop.xlane.xlu0 %5546
        %v5548 = vsel %vm4464, %v5188, 0.0
        %5549 = vadd.xlane.f32.xlu0 %v5548
        %v5550 = vpop.xlane.xlu0 %5549
        %v5551 = vsel %vm4464, %v5190, 0.0
        %5552 = vadd.xlane.f32.xlu0 %v5551
        %v5553 = vpop.xlane.xlu0 %5552
        %v5554 = vsel %vm4464, %v5192, 0.0
        %5555 = vadd.xlane.f32.xlu0 %v5554
        %v5556 = vpop.xlane.xlu0 %5555
        %v5557 = vsel %vm4464, %v5194, 0.0
        %5558 = vadd.xlane.f32.xlu0 %v5557
        %v5559 = vpop.xlane.xlu0 %5558
        %v5560 = vsel %vm4464, %v5196, 0.0
        %5561 = vadd.xlane.f32.xlu0 %v5560
        %v5562 = vpop.xlane.xlu0 %5561
        %v5563 = vsel %vm4464, %v5198, 0.0
        %5564 = vadd.xlane.f32.xlu0 %v5563
        %v5565 = vpop.xlane.xlu0 %5564
        %v5566 = vsel %vm4464, %v5200, 0.0
        %5567 = vadd.xlane.f32.xlu0 %v5566
        %v5568 = vpop.xlane.xlu0 %5567
        %v5569 = vsel %vm4464, %v5202, 0.0
        %5570 = vadd.xlane.f32.xlu0 %v5569
        %v5571 = vpop.xlane.xlu0 %5570
        %v5572 = vsel %vm4464, %v5204, 0.0
        %5573 = vadd.xlane.f32.xlu0 %v5572
        %v5574 = vpop.xlane.xlu0 %5573
        %v5575 = vsel %vm4464, %v5206, 0.0
        %5576 = vadd.xlane.f32.xlu0 %v5575
        %v5577 = vpop.xlane.xlu0 %5576
        %v5578 = vsel %vm4464, %v5208, 0.0
        %5579 = vadd.xlane.f32.xlu0 %v5578
        %v5580 = vpop.xlane.xlu0 %5579
        %v5581 = vsel %vm4464, %v5210, 0.0
        %5582 = vadd.xlane.f32.xlu0 %v5581
        %v5583 = vpop.xlane.xlu0 %5582
        %v5584 = vsel %vm4464, %v5212, 0.0
        %5585 = vadd.xlane.f32.xlu0 %v5584
        %v5586 = vpop.xlane.xlu0 %5585
        %v5587 = vsel %vm4464, %v5214, 0.0
        %5588 = vadd.xlane.f32.xlu0 %v5587
        %v5589 = vpop.xlane.xlu0 %5588
        %v5590 = vsel %vm4464, %v5216, 0.0
        %5591 = vadd.xlane.f32.xlu0 %v5590
        %v5592 = vpop.xlane.xlu0 %5591
        %v5593 = vsel %vm4464, %v5218, 0.0
        %5594 = vadd.xlane.f32.xlu0 %v5593
        %v5595 = vpop.xlane.xlu0 %5594
        %v5596 = vsel %vm4464, %v5220, 0.0
        %5597 = vadd.xlane.f32.xlu0 %v5596
        %v5598 = vpop.xlane.xlu0 %5597
        %v5599 = vsel %vm4464, %v5222, 0.0
        %5600 = vadd.xlane.f32.xlu0 %v5599
        %v5601 = vpop.xlane.xlu0 %5600
        %v5602 = vsel %vm4464, %v5224, 0.0
        %5603 = vadd.xlane.f32.xlu0 %v5602
        %v5604 = vpop.xlane.xlu0 %5603
        %v5605 = vsel %vm4464, %v5226, 0.0
        %5606 = vadd.xlane.f32.xlu0 %v5605
        %v5607 = vpop.xlane.xlu0 %5606
        %v5608 = vsel %vm4464, %v5228, 0.0
        %5609 = vadd.xlane.f32.xlu0 %v5608
        %v5610 = vpop.xlane.xlu0 %5609
        %v5611 = vsel %vm4464, %v5230, 0.0
        %5612 = vadd.xlane.f32.xlu0 %v5611
        %v5613 = vpop.xlane.xlu0 %5612
        %v5614 = vsel %vm4464, %v5232, 0.0
        %5615 = vadd.xlane.f32.xlu0 %v5614
        %v5616 = vpop.xlane.xlu0 %5615
        %v5617 = vrcp.pop %v5235
        %v5618 = vrcp.pop %v5238
        %v5619 = vrcp.pop %v5241
        %v5620 = vrcp.pop %v5244
        %v5621 = vrcp.pop %v5247
        %v5622 = vrcp.pop %v5250
        %v5623 = vrcp.pop %v5253
        %v5624 = vrcp.pop %v5256
        %v5625 = vrcp.pop %v5259
        %v5626 = vrcp.pop %v5262
        %v5627 = vrcp.pop %v5265
        %v5628 = vrcp.pop %v5268
        %v5629 = vrcp.pop %v5271
        %v5630 = vrcp.pop %v5274
        %v5631 = vrcp.pop %v5277
        %v5632 = vrcp.pop %v5280
        %v5633 = vrcp.pop %v5283
        %v5634 = vrcp.pop %v5286
        %v5635 = vrcp.pop %v5289
        %v5636 = vrcp.pop %v5292
        %v5637 = vrcp.pop %v5295
        %v5638 = vrcp.pop %v5298
        %v5639 = vrcp.pop %v5301
        %v5640 = vrcp.pop %v5304
        %v5641 = vrcp.pop %v5307
        %v5642 = vrcp.pop %v5310
        %v5643 = vrcp.pop %v5313
        %v5644 = vrcp.pop %v5316
        %v5645 = vrcp.pop %v5319
        %v5646 = vrcp.pop %v5322
        %v5647 = vrcp.pop %v5325
        %v5648 = vrcp.pop %v5328
        %v5649 = vrcp.pop %v5331
        %v5650 = vrcp.pop %v5334
        %v5651 = vrcp.pop %v5337
        %v5652 = vrcp.pop %v5340
        %v5653 = vrcp.pop %v5343
        %v5654 = vrcp.pop %v5346
        %v5655 = vrcp.pop %v5349
        %v5656 = vrcp.pop %v5352
        %v5657 = vrcp.pop %v5355
        %v5658 = vrcp.pop %v5358
        %v5659 = vrcp.pop %v5361
        %v5660 = vrcp.pop %v5364
        %v5661 = vrcp.pop %v5367
        %v5662 = vrcp.pop %v5370
        %v5663 = vrcp.pop %v5373
        %v5664 = vrcp.pop %v5376
        %v5665 = vrcp.pop %v5379
        %v5666 = vrcp.pop %v5382
        %v5667 = vrcp.pop %v5385
        %v5668 = vrcp.pop %v5388
        %v5669 = vrcp.pop %v5391
        %v5670 = vrcp.pop %v5394
        %v5671 = vrcp.pop %v5397
        %v5672 = vrcp.pop %v5400
        %v5673 = vrcp.pop %v5403
        %v5674 = vrcp.pop %v5406
        %v5675 = vrcp.pop %v5409
        %v5676 = vrcp.pop %v5412
        %v5677 = vrcp.pop %v5415
        %v5678 = vrcp.pop %v5418
        %v5679 = vrcp.pop %v5421
        %v5680 = vrcp.pop %v5424
        %v5681 = vrcp.pop %v5427
        %v5682 = vrcp.pop %v5430
        %v5683 = vrcp.pop %v5433
        %v5684 = vrcp.pop %v5436
        %v5685 = vrcp.pop %v5439
        %v5686 = vrcp.pop %v5442
        %v5687 = vrcp.pop %v5445
        %v5688 = vrcp.pop %v5448
        %v5689 = vrcp.pop %v5451
        %v5690 = vrcp.pop %v5454
        %v5691 = vrcp.pop %v5457
        %v5692 = vrcp.pop %v5460
        %v5693 = vrcp.pop %v5463
        %v5694 = vrcp.pop %v5466
        %v5695 = vrcp.pop %v5469
        %v5696 = vrcp.pop %v5472
        %v5697 = vrcp.pop %v5475
        %v5698 = vrcp.pop %v5478
        %v5699 = vrcp.pop %v5481
        %v5700 = vrcp.pop %v5484
        %v5701 = vrcp.pop %v5487
        %v5702 = vrcp.pop %v5490
        %v5703 = vrcp.pop %v5493
        %v5704 = vrcp.pop %v5496
        %v5705 = vrcp.pop %v5499
        %v5706 = vrcp.pop %v5502
        %v5707 = vrcp.pop %v5505
        %v5708 = vrcp.pop %v5508
        %v5709 = vrcp.pop %v5511
        %v5710 = vrcp.pop %v5514
        %v5711 = vrcp.pop %v5517
        %v5712 = vrcp.pop %v5520
        %v5713 = vrcp.pop %v5523
        %v5714 = vrcp.pop %v5526
        %v5715 = vrcp.pop %v5529
        %v5716 = vrcp.pop %v5532
        %v5717 = vrcp.pop %v5535
        %v5718 = vrcp.pop %v5538
        %v5719 = vrcp.pop %v5541
        %v5720 = vrcp.pop %v5544
        %v5721 = vrcp.pop %v5547
        %v5722 = vrcp.pop %v5550
        %v5723 = vrcp.pop %v5553
        %v5724 = vrcp.pop %v5556
        %v5725 = vrcp.pop %v5559
        %v5726 = vrcp.pop %v5562
        %v5727 = vrcp.pop %v5565
        %v5728 = vrcp.pop %v5568
        %v5729 = vrcp.pop %v5571
        %v5730 = vrcp.pop %v5574
        %v5731 = vrcp.pop %v5577
        %v5732 = vrcp.pop %v5580
        %v5733 = vrcp.pop %v5583
        %v5734 = vrcp.pop %v5586
        %v5735 = vrcp.pop %v5589
        %v5736 = vrcp.pop %v5592
        %v5737 = vrcp.pop %v5595
        %v5738 = vrcp.pop %v5598
        %v5739 = vrcp.pop %v5601
        %v5740 = vrcp.pop %v5604
        %v5741 = vrcp.pop %v5607
        %v5742 = vrcp.pop %v5610
        %v5743 = vrcp.pop %v5613
        %v5744 = vrcp.pop %v5616
        %v5745 = vmul.f32 %v4978, %v5617
        %v5746 = vmul.f32 %v4980, %v5618
        %v5747 = vmul.f32 %v4982, %v5619
        %v5748 = vmul.f32 %v4984, %v5620
        %v5749 = vmul.f32 %v4986, %v5621
        %v5750 = vmul.f32 %v4988, %v5622
        %v5751 = vmul.f32 %v4990, %v5623
        %v5752 = vmul.f32 %v4992, %v5624
        %v5753 = vmul.f32 %v4994, %v5625
        %v5754 = vmul.f32 %v4996, %v5626
        %v5755 = vmul.f32 %v4998, %v5627
        %v5756 = vmul.f32 %v5000, %v5628
        %v5757 = vmul.f32 %v5002, %v5629
        %v5758 = vmul.f32 %v5004, %v5630
        %v5759 = vmul.f32 %v5006, %v5631
        %v5760 = vmul.f32 %v5008, %v5632
        %v5761 = vmul.f32 %v5010, %v5633
        %v5762 = vmul.f32 %v5012, %v5634
        %v5763 = vmul.f32 %v5014, %v5635
        %v5764 = vmul.f32 %v5016, %v5636
        %v5765 = vmul.f32 %v5018, %v5637
        %v5766 = vmul.f32 %v5020, %v5638
        %v5767 = vmul.f32 %v5022, %v5639
        %v5768 = vmul.f32 %v5024, %v5640
        %v5769 = vmul.f32 %v5026, %v5641
        %v5770 = vmul.f32 %v5028, %v5642
        %v5771 = vmul.f32 %v5030, %v5643
        %v5772 = vmul.f32 %v5032, %v5644
        %v5773 = vmul.f32 %v5034, %v5645
        %v5774 = vmul.f32 %v5036, %v5646
        %v5775 = vmul.f32 %v5038, %v5647
        %v5776 = vmul.f32 %v5040, %v5648
        %v5777 = vmul.f32 %v5042, %v5649
        %v5778 = vmul.f32 %v5044, %v5650
        %v5779 = vmul.f32 %v5046, %v5651
        %v5780 = vmul.f32 %v5048, %v5652
        %v5781 = vmul.f32 %v5050, %v5653
        %v5782 = vmul.f32 %v5052, %v5654
        %v5783 = vmul.f32 %v5054, %v5655
        %v5784 = vmul.f32 %v5056, %v5656
        %v5785 = vmul.f32 %v5058, %v5657
        %v5786 = vmul.f32 %v5060, %v5658
        %v5787 = vmul.f32 %v5062, %v5659
        %v5788 = vmul.f32 %v5064, %v5660
        %v5789 = vmul.f32 %v5066, %v5661
        %v5790 = vmul.f32 %v5068, %v5662
        %v5791 = vmul.f32 %v5070, %v5663
        %v5792 = vmul.f32 %v5072, %v5664
        %v5793 = vmul.f32 %v5074, %v5665
        %v5794 = vmul.f32 %v5076, %v5666
        %v5795 = vmul.f32 %v5078, %v5667
        %v5796 = vmul.f32 %v5080, %v5668
        %v5797 = vmul.f32 %v5082, %v5669
        %v5798 = vmul.f32 %v5084, %v5670
        %v5799 = vmul.f32 %v5086, %v5671
        %v5800 = vmul.f32 %v5088, %v5672
        %v5801 = vmul.f32 %v5090, %v5673
        %v5802 = vmul.f32 %v5092, %v5674
        %v5803 = vmul.f32 %v5094, %v5675
        %v5804 = vmul.f32 %v5096, %v5676
        %v5805 = vmul.f32 %v5098, %v5677
        %v5806 = vmul.f32 %v5100, %v5678
        %v5807 = vmul.f32 %v5102, %v5679
        %v5808 = vmul.f32 %v5104, %v5680
        %v5809 = vmul.f32 %v5106, %v5681
        %v5810 = vmul.f32 %v5108, %v5682
        %v5811 = vmul.f32 %v5110, %v5683
        %v5812 = vmul.f32 %v5112, %v5684
        %v5813 = vmul.f32 %v5114, %v5685
        %v5814 = vmul.f32 %v5116, %v5686
        %v5815 = vmul.f32 %v5118, %v5687
        %v5816 = vmul.f32 %v5120, %v5688
        %v5817 = vmul.f32 %v5122, %v5689
        %v5818 = vmul.f32 %v5124, %v5690
        %v5819 = vmul.f32 %v5126, %v5691
        %v5820 = vmul.f32 %v5128, %v5692
        %v5821 = vmul.f32 %v5130, %v5693
        %v5822 = vmul.f32 %v5132, %v5694
        %v5823 = vmul.f32 %v5134, %v5695
        %v5824 = vmul.f32 %v5136, %v5696
        %v5825 = vmul.f32 %v5138, %v5697
        %v5826 = vmul.f32 %v5140, %v5698
        %v5827 = vmul.f32 %v5142, %v5699
        %v5828 = vmul.f32 %v5144, %v5700
        %v5829 = vmul.f32 %v5146, %v5701
        %v5830 = vmul.f32 %v5148, %v5702
        %v5831 = vmul.f32 %v5150, %v5703
        %v5832 = vmul.f32 %v5152, %v5704
        %v5833 = vmul.f32 %v5154, %v5705
        %v5834 = vmul.f32 %v5156, %v5706
        %v5835 = vmul.f32 %v5158, %v5707
        %v5836 = vmul.f32 %v5160, %v5708
        %v5837 = vmul.f32 %v5162, %v5709
        %v5838 = vmul.f32 %v5164, %v5710
        %v5839 = vmul.f32 %v5166, %v5711
        %v5840 = vmul.f32 %v5168, %v5712
        %v5841 = vmul.f32 %v5170, %v5713
        %v5842 = vmul.f32 %v5172, %v5714
        %v5843 = vmul.f32 %v5174, %v5715
        %v5844 = vmul.f32 %v5176, %v5716
        %v5845 = vmul.f32 %v5178, %v5717
        %v5846 = vmul.f32 %v5180, %v5718
        %v5847 = vmul.f32 %v5182, %v5719
        %v5848 = vmul.f32 %v5184, %v5720
        %v5849 = vmul.f32 %v5186, %v5721
        %v5850 = vmul.f32 %v5188, %v5722
        %v5851 = vmul.f32 %v5190, %v5723
        %v5852 = vmul.f32 %v5192, %v5724
        %v5853 = vmul.f32 %v5194, %v5725
        %v5854 = vmul.f32 %v5196, %v5726
        %v5855 = vmul.f32 %v5198, %v5727
        %v5856 = vmul.f32 %v5200, %v5728
        %v5857 = vmul.f32 %v5202, %v5729
        %v5858 = vmul.f32 %v5204, %v5730
        %v5859 = vmul.f32 %v5206, %v5731
        %v5860 = vmul.f32 %v5208, %v5732
        %v5861 = vmul.f32 %v5210, %v5733
        %v5862 = vmul.f32 %v5212, %v5734
        %v5863 = vmul.f32 %v5214, %v5735
        %v5864 = vmul.f32 %v5216, %v5736
        %v5865 = vmul.f32 %v5218, %v5737
        %v5866 = vmul.f32 %v5220, %v5738
        %v5867 = vmul.f32 %v5222, %v5739
        %v5868 = vmul.f32 %v5224, %v5740
        %v5869 = vmul.f32 %v5226, %v5741
        %v5870 = vmul.f32 %v5228, %v5742
        %v5871 = vmul.f32 %v5230, %v5743
        %v5872 = vmul.f32 %v5232, %v5744
        %v5873 = vpack.c.bf16 %v5746, %v5745
        %v5874 = vpack.c.bf16 %v5748, %v5747
        %v5875 = vpack.c.bf16 %v5750, %v5749
        %v5876 = vpack.c.bf16 %v5752, %v5751
        %v5877 = vpack.c.bf16 %v5754, %v5753
        %v5878 = vpack.c.bf16 %v5756, %v5755
        %v5879 = vpack.c.bf16 %v5758, %v5757
        %v5880 = vpack.c.bf16 %v5760, %v5759
        %v5881 = vpack.c.bf16 %v5762, %v5761
        %v5882 = vpack.c.bf16 %v5764, %v5763
        %v5883 = vpack.c.bf16 %v5766, %v5765
        %v5884 = vpack.c.bf16 %v5768, %v5767
        %v5885 = vpack.c.bf16 %v5770, %v5769
        %v5886 = vpack.c.bf16 %v5772, %v5771
        %v5887 = vpack.c.bf16 %v5774, %v5773
        %v5888 = vpack.c.bf16 %v5776, %v5775
        %v5889 = vpack.c.bf16 %v5778, %v5777
        %v5890 = vpack.c.bf16 %v5780, %v5779
        %v5891 = vpack.c.bf16 %v5782, %v5781
        %v5892 = vpack.c.bf16 %v5784, %v5783
        %v5893 = vpack.c.bf16 %v5786, %v5785
        %v5894 = vpack.c.bf16 %v5788, %v5787
        %v5895 = vpack.c.bf16 %v5790, %v5789
        %v5896 = vpack.c.bf16 %v5792, %v5791
        %v5897 = vpack.c.bf16 %v5794, %v5793
        %v5898 = vpack.c.bf16 %v5796, %v5795
        %v5899 = vpack.c.bf16 %v5798, %v5797
        %v5900 = vpack.c.bf16 %v5800, %v5799
        %v5901 = vpack.c.bf16 %v5802, %v5801
        %v5902 = vpack.c.bf16 %v5804, %v5803
        %v5903 = vpack.c.bf16 %v5806, %v5805
        %v5904 = vpack.c.bf16 %v5808, %v5807
        %v5905 = vpack.c.bf16 %v5810, %v5809
        %v5906 = vpack.c.bf16 %v5812, %v5811
        %v5907 = vpack.c.bf16 %v5814, %v5813
        %v5908 = vpack.c.bf16 %v5816, %v5815
        %v5909 = vpack.c.bf16 %v5818, %v5817
        %v5910 = vpack.c.bf16 %v5820, %v5819
        %v5911 = vpack.c.bf16 %v5822, %v5821
        %v5912 = vpack.c.bf16 %v5824, %v5823
        %v5913 = vpack.c.bf16 %v5826, %v5825
        %v5914 = vpack.c.bf16 %v5828, %v5827
        %v5915 = vpack.c.bf16 %v5830, %v5829
        %v5916 = vpack.c.bf16 %v5832, %v5831
        %v5917 = vpack.c.bf16 %v5834, %v5833
        %v5918 = vpack.c.bf16 %v5836, %v5835
        %v5919 = vpack.c.bf16 %v5838, %v5837
        %v5920 = vpack.c.bf16 %v5840, %v5839
        %v5921 = vpack.c.bf16 %v5842, %v5841
        %v5922 = vpack.c.bf16 %v5844, %v5843
        %v5923 = vpack.c.bf16 %v5846, %v5845
        %v5924 = vpack.c.bf16 %v5848, %v5847
        %v5925 = vpack.c.bf16 %v5850, %v5849
        %v5926 = vpack.c.bf16 %v5852, %v5851
        %v5927 = vpack.c.bf16 %v5854, %v5853
        %v5928 = vpack.c.bf16 %v5856, %v5855
        %v5929 = vpack.c.bf16 %v5858, %v5857
        %v5930 = vpack.c.bf16 %v5860, %v5859
        %v5931 = vpack.c.bf16 %v5862, %v5861
        %v5932 = vpack.c.bf16 %v5864, %v5863
        %v5933 = vpack.c.bf16 %v5866, %v5865
        %v5934 = vpack.c.bf16 %v5868, %v5867
        %v5935 = vpack.c.bf16 %v5870, %v5869
        %v5936 = vpack.c.bf16 %v5872, %v5871
        %v5945 = vunpack.c.l.b16 %v1983
        %v5946 = vunpack.c.l.b16 %v1984
        %v5947 = vunpack.c.l.b16 %v1985
        %v5948 = vunpack.c.l.b16 %v1986
        %v5949 = vunpack.c.l.b16 %v1987
        %v5950 = vunpack.c.l.b16 %v1988
        %v5951 = vunpack.c.l.b16 %v1989
        %v5952 = vunpack.c.l.b16 %v1990
        %v5953 = vpack.c.b16 %v5946, %v5945
        %v5954 = vpack.c.b16 %v5948, %v5947
        %v5955 = vpack.c.b16 %v5950, %v5949
        %v5956 = vpack.c.b16 %v5952, %v5951
        %v5962 = vsel %vm4464, %v5873, 0
        %v5965 = vsel %vm4464, %v5874, 0
        %v5968 = vsel %vm4464, %v5875, 0
        %v5971 = vsel %vm4464, %v5876, 0
        %5973 = vmatprep.subr.bf16.mxu0 0
        %5974 = vmatpush1.bf16.msra.mxu0 0
        %5975 = vmatprep.subr.bf16.mxu0 0
        %5976 = vmatpush1.bf16.msra.mxu0 0
        %5977 = vmatprep.subr.bf16.mxu0 0
        %5978 = vmatpush1.bf16.msra.mxu0 0
        %5979 = vmatprep.subr.bf16.mxu0 0
        %5980 = vmatpush1.bf16.msra.mxu0 0
        %5981 = vmatprep.subr.bf16.mxu0 0
        %5982 = vmatpush1.bf16.msra.mxu0 %v5956
        %5983 = vmatprep.subr.bf16.mxu0 0
        %5984 = vmatpush1.bf16.msra.mxu0 %v5955
        %5985 = vmatprep.subr.bf16.mxu0 0
        %5986 = vmatpush1.bf16.msra.mxu0 %v5954
        %5987 = vmatprep.subr.bf16.mxu0 0
        %5988 = vmatpush1.bf16.msra.mxu0 %v5953
        %5989 = vmatprep.subr.bf16.mxu0 0
        %5990 = vmatpush2.bf16.msra.mxu0 0
        %5991 = vmatprep.subr.bf16.mxu0 0
        %5992 = vmatpush2.bf16.msra.mxu0 0
        %5993 = vmatprep.subr.bf16.mxu0 0
        %5994 = vmatpush2.bf16.msra.mxu0 0
        %5995 = vmatprep.subr.bf16.mxu0 0
        %5996 = vmatpush2.bf16.msra.mxu0 0
        %5997 = vmatprep.subr.bf16.mxu0 0
        %5998 = vmatpush2.bf16.msra.mxu0 0
        %5999 = vmatprep.subr.bf16.mxu0 0
        %6000 = vmatpush2.bf16.msra.mxu0 0
        %6001 = vmatprep.subr.bf16.mxu0 0
        %6002 = vmatpush2.bf16.msra.mxu0 0
        %6003 = vmatprep.subr.bf16.mxu0 0
        %6004 = vmatpush2.bf16.msra.mxu0 0
        %6005 = vmatprep.mubr.bf16.mxu0 0
        %6006 = vmatmul.mubr.bf16.gmra.mxu0 %v5962
        %v6007 = vpop.f32.mrf.mxu0
        %v6008 = vadd.f32 0.0, %v6007
        %v6009 = vpop.f32.mrf.mxu0
        %v6010 = vpop.f32.mrf.mxu0
        %v6011 = vadd.f32 0.0, %v6010
        %v6012 = vpop.f32.mrf.mxu0
        %6013 = vmatprep.mubr.bf16.mxu0 0
        %6014 = vmatmul.mubr.bf16.gmra.mxu0 %v5965
        %v6015 = vpop.f32.mrf.mxu0
        %v6016 = vadd.f32 0.0, %v6015
        %v6017 = vpop.f32.mrf.mxu0
        %v6018 = vpop.f32.mrf.mxu0
        %v6019 = vadd.f32 0.0, %v6018
        %v6020 = vpop.f32.mrf.mxu0
        %6021 = vmatprep.mubr.bf16.mxu0 0
        %6022 = vmatmul.mubr.bf16.gmra.mxu0 %v5968
        %v6023 = vpop.f32.mrf.mxu0
        %v6024 = vadd.f32 0.0, %v6023
        %v6025 = vpop.f32.mrf.mxu0
        %v6026 = vpop.f32.mrf.mxu0
        %v6027 = vadd.f32 0.0, %v6026
        %v6028 = vpop.f32.mrf.mxu0
        %6029 = vmatprep.mubr.bf16.mxu0 0
        %6030 = vmatmul.mubr.bf16.gmra.mxu0 %v5971
        %v6031 = vpop.f32.mrf.mxu0
        %v6032 = vadd.f32 0.0, %v6031
        %v6033 = vpop.f32.mrf.mxu0
        %v6034 = vpop.f32.mrf.mxu0
        %v6035 = vadd.f32 0.0, %v6034
        %v6036 = vpop.f32.mrf.mxu0
        %6037 = vdwg.mxu0
        %v6046 = vunpack.c.l.b16 %v1991
        %v6047 = vunpack.c.l.b16 %v1992
        %v6048 = vunpack.c.l.b16 %v1993
        %v6049 = vunpack.c.l.b16 %v1994
        %v6050 = vunpack.c.l.b16 %v1995
        %v6051 = vunpack.c.l.b16 %v1996
        %v6052 = vunpack.c.l.b16 %v1997
        %v6053 = vunpack.c.l.b16 %v1998
        %v6054 = vpack.c.b16 %v6047, %v6046
        %v6055 = vpack.c.b16 %v6049, %v6048
        %v6056 = vpack.c.b16 %v6051, %v6050
        %v6057 = vpack.c.b16 %v6053, %v6052
        %v6063 = vsel %vm4464, %v5877, 0
        %v6066 = vsel %vm4464, %v5878, 0
        %v6069 = vsel %vm4464, %v5879, 0
        %v6072 = vsel %vm4464, %v5880, 0
        %6074 = vmatprep.subr.bf16.mxu0 0
        %6075 = vmatpush1.bf16.msra.mxu0 0
        %6076 = vmatprep.subr.bf16.mxu0 0
        %6077 = vmatpush1.bf16.msra.mxu0 0
        %6078 = vmatprep.subr.bf16.mxu0 0
        %6079 = vmatpush1.bf16.msra.mxu0 0
        %6080 = vmatprep.subr.bf16.mxu0 0
        %6081 = vmatpush1.bf16.msra.mxu0 0
        %6082 = vmatprep.subr.bf16.mxu0 0
        %6083 = vmatpush1.bf16.msra.mxu0 %v6057
        %6084 = vmatprep.subr.bf16.mxu0 0
        %6085 = vmatpush1.bf16.msra.mxu0 %v6056
        %6086 = vmatprep.subr.bf16.mxu0 0
        %6087 = vmatpush1.bf16.msra.mxu0 %v6055
        %6088 = vmatprep.subr.bf16.mxu0 0
        %6089 = vmatpush1.bf16.msra.mxu0 %v6054
        %6090 = vmatprep.subr.bf16.mxu0 0
        %6091 = vmatpush2.bf16.msra.mxu0 0
        %6092 = vmatprep.subr.bf16.mxu0 0
        %6093 = vmatpush2.bf16.msra.mxu0 0
        %6094 = vmatprep.subr.bf16.mxu0 0
        %6095 = vmatpush2.bf16.msra.mxu0 0
        %6096 = vmatprep.subr.bf16.mxu0 0
        %6097 = vmatpush2.bf16.msra.mxu0 0
        %6098 = vmatprep.subr.bf16.mxu0 0
        %6099 = vmatpush2.bf16.msra.mxu0 0
        %6100 = vmatprep.subr.bf16.mxu0 0
        %6101 = vmatpush2.bf16.msra.mxu0 0
        %6102 = vmatprep.subr.bf16.mxu0 0
        %6103 = vmatpush2.bf16.msra.mxu0 0
        %6104 = vmatprep.subr.bf16.mxu0 0
        %6105 = vmatpush2.bf16.msra.mxu0 0
        %6106 = vmatprep.mubr.bf16.mxu0 0
        %6107 = vmatmul.mubr.bf16.gmra.mxu0 %v6063
        %v6108 = vpop.f32.mrf.mxu0
        %v6109 = vadd.f32 0.0, %v6108
        %v6110 = vpop.f32.mrf.mxu0
        %v6111 = vpop.f32.mrf.mxu0
        %v6112 = vadd.f32 0.0, %v6111
        %v6113 = vpop.f32.mrf.mxu0
        %6114 = vmatprep.mubr.bf16.mxu0 0
        %6115 = vmatmul.mubr.bf16.gmra.mxu0 %v6066
        %v6116 = vpop.f32.mrf.mxu0
        %v6117 = vadd.f32 0.0, %v6116
        %v6118 = vpop.f32.mrf.mxu0
        %v6119 = vpop.f32.mrf.mxu0
        %v6120 = vadd.f32 0.0, %v6119
        %v6121 = vpop.f32.mrf.mxu0
        %6122 = vmatprep.mubr.bf16.mxu0 0
        %6123 = vmatmul.mubr.bf16.gmra.mxu0 %v6069
        %v6124 = vpop.f32.mrf.mxu0
        %v6125 = vadd.f32 0.0, %v6124
        %v6126 = vpop.f32.mrf.mxu0
        %v6127 = vpop.f32.mrf.mxu0
        %v6128 = vadd.f32 0.0, %v6127
        %v6129 = vpop.f32.mrf.mxu0
        %6130 = vmatprep.mubr.bf16.mxu0 0
        %6131 = vmatmul.mubr.bf16.gmra.mxu0 %v6072
        %v6132 = vpop.f32.mrf.mxu0
        %v6133 = vadd.f32 0.0, %v6132
        %v6134 = vpop.f32.mrf.mxu0
        %v6135 = vpop.f32.mrf.mxu0
        %v6136 = vadd.f32 0.0, %v6135
        %v6137 = vpop.f32.mrf.mxu0
        %6138 = vdwg.mxu0
        %v6147 = vunpack.c.l.b16 %v1999
        %v6148 = vunpack.c.l.b16 %v2000
        %v6149 = vunpack.c.l.b16 %v2001
        %v6150 = vunpack.c.l.b16 %v2002
        %v6151 = vunpack.c.l.b16 %v2003
        %v6152 = vunpack.c.l.b16 %v2004
        %v6153 = vunpack.c.l.b16 %v2005
        %v6154 = vunpack.c.l.b16 %v2006
        %v6155 = vpack.c.b16 %v6148, %v6147
        %v6156 = vpack.c.b16 %v6150, %v6149
        %v6157 = vpack.c.b16 %v6152, %v6151
        %v6158 = vpack.c.b16 %v6154, %v6153
        %v6164 = vsel %vm4464, %v5881, 0
        %v6167 = vsel %vm4464, %v5882, 0
        %v6170 = vsel %vm4464, %v5883, 0
        %v6173 = vsel %vm4464, %v5884, 0
        %6175 = vmatprep.subr.bf16.mxu0 0
        %6176 = vmatpush1.bf16.msra.mxu0 0
        %6177 = vmatprep.subr.bf16.mxu0 0
        %6178 = vmatpush1.bf16.msra.mxu0 0
        %6179 = vmatprep.subr.bf16.mxu0 0
        %6180 = vmatpush1.bf16.msra.mxu0 0
        %6181 = vmatprep.subr.bf16.mxu0 0
        %6182 = vmatpush1.bf16.msra.mxu0 0
        %6183 = vmatprep.subr.bf16.mxu0 0
        %6184 = vmatpush1.bf16.msra.mxu0 %v6158
        %6185 = vmatprep.subr.bf16.mxu0 0
        %6186 = vmatpush1.bf16.msra.mxu0 %v6157
        %6187 = vmatprep.subr.bf16.mxu0 0
        %6188 = vmatpush1.bf16.msra.mxu0 %v6156
        %6189 = vmatprep.subr.bf16.mxu0 0
        %6190 = vmatpush1.bf16.msra.mxu0 %v6155
        %6191 = vmatprep.subr.bf16.mxu0 0
        %6192 = vmatpush2.bf16.msra.mxu0 0
        %6193 = vmatprep.subr.bf16.mxu0 0
        %6194 = vmatpush2.bf16.msra.mxu0 0
        %6195 = vmatprep.subr.bf16.mxu0 0
        %6196 = vmatpush2.bf16.msra.mxu0 0
        %6197 = vmatprep.subr.bf16.mxu0 0
        %6198 = vmatpush2.bf16.msra.mxu0 0
        %6199 = vmatprep.subr.bf16.mxu0 0
        %6200 = vmatpush2.bf16.msra.mxu0 0
        %6201 = vmatprep.subr.bf16.mxu0 0
        %6202 = vmatpush2.bf16.msra.mxu0 0
        %6203 = vmatprep.subr.bf16.mxu0 0
        %6204 = vmatpush2.bf16.msra.mxu0 0
        %6205 = vmatprep.subr.bf16.mxu0 0
        %6206 = vmatpush2.bf16.msra.mxu0 0
        %6207 = vmatprep.mubr.bf16.mxu0 0
        %6208 = vmatmul.mubr.bf16.gmra.mxu0 %v6164
        %v6209 = vpop.f32.mrf.mxu0
        %v6210 = vadd.f32 0.0, %v6209
        %v6211 = vpop.f32.mrf.mxu0
        %v6212 = vpop.f32.mrf.mxu0
        %v6213 = vadd.f32 0.0, %v6212
        %v6214 = vpop.f32.mrf.mxu0
        %6215 = vmatprep.mubr.bf16.mxu0 0
        %6216 = vmatmul.mubr.bf16.gmra.mxu0 %v6167
        %v6217 = vpop.f32.mrf.mxu0
        %v6218 = vadd.f32 0.0, %v6217
        %v6219 = vpop.f32.mrf.mxu0
        %v6220 = vpop.f32.mrf.mxu0
        %v6221 = vadd.f32 0.0, %v6220
        %v6222 = vpop.f32.mrf.mxu0
        %6223 = vmatprep.mubr.bf16.mxu0 0
        %6224 = vmatmul.mubr.bf16.gmra.mxu0 %v6170
        %v6225 = vpop.f32.mrf.mxu0
        %v6226 = vadd.f32 0.0, %v6225
        %v6227 = vpop.f32.mrf.mxu0
        %v6228 = vpop.f32.mrf.mxu0
        %v6229 = vadd.f32 0.0, %v6228
        %v6230 = vpop.f32.mrf.mxu0
        %6231 = vmatprep.mubr.bf16.mxu0 0
        %6232 = vmatmul.mubr.bf16.gmra.mxu0 %v6173
        %v6233 = vpop.f32.mrf.mxu0
        %v6234 = vadd.f32 0.0, %v6233
        %v6235 = vpop.f32.mrf.mxu0
        %v6236 = vpop.f32.mrf.mxu0
        %v6237 = vadd.f32 0.0, %v6236
        %v6238 = vpop.f32.mrf.mxu0
        %6239 = vdwg.mxu0
        %v6248 = vunpack.c.l.b16 %v2007
        %v6249 = vunpack.c.l.b16 %v2008
        %v6250 = vunpack.c.l.b16 %v2009
        %v6251 = vunpack.c.l.b16 %v2010
        %v6252 = vunpack.c.l.b16 %v2011
        %v6253 = vunpack.c.l.b16 %v2012
        %v6254 = vunpack.c.l.b16 %v2013
        %v6255 = vunpack.c.l.b16 %v2014
        %v6256 = vpack.c.b16 %v6249, %v6248
        %v6257 = vpack.c.b16 %v6251, %v6250
        %v6258 = vpack.c.b16 %v6253, %v6252
        %v6259 = vpack.c.b16 %v6255, %v6254
        %v6265 = vsel %vm4464, %v5885, 0
        %v6268 = vsel %vm4464, %v5886, 0
        %v6271 = vsel %vm4464, %v5887, 0
        %v6274 = vsel %vm4464, %v5888, 0
        %6276 = vmatprep.subr.bf16.mxu0 0
        %6277 = vmatpush1.bf16.msra.mxu0 0
        %6278 = vmatprep.subr.bf16.mxu0 0
        %6279 = vmatpush1.bf16.msra.mxu0 0
        %6280 = vmatprep.subr.bf16.mxu0 0
        %6281 = vmatpush1.bf16.msra.mxu0 0
        %6282 = vmatprep.subr.bf16.mxu0 0
        %6283 = vmatpush1.bf16.msra.mxu0 0
        %6284 = vmatprep.subr.bf16.mxu0 0
        %6285 = vmatpush1.bf16.msra.mxu0 %v6259
        %6286 = vmatprep.subr.bf16.mxu0 0
        %6287 = vmatpush1.bf16.msra.mxu0 %v6258
        %6288 = vmatprep.subr.bf16.mxu0 0
        %6289 = vmatpush1.bf16.msra.mxu0 %v6257
        %6290 = vmatprep.subr.bf16.mxu0 0
        %6291 = vmatpush1.bf16.msra.mxu0 %v6256
        %6292 = vmatprep.subr.bf16.mxu0 0
        %6293 = vmatpush2.bf16.msra.mxu0 0
        %6294 = vmatprep.subr.bf16.mxu0 0
        %6295 = vmatpush2.bf16.msra.mxu0 0
        %6296 = vmatprep.subr.bf16.mxu0 0
        %6297 = vmatpush2.bf16.msra.mxu0 0
        %6298 = vmatprep.subr.bf16.mxu0 0
        %6299 = vmatpush2.bf16.msra.mxu0 0
        %6300 = vmatprep.subr.bf16.mxu0 0
        %6301 = vmatpush2.bf16.msra.mxu0 0
        %6302 = vmatprep.subr.bf16.mxu0 0
        %6303 = vmatpush2.bf16.msra.mxu0 0
        %6304 = vmatprep.subr.bf16.mxu0 0
        %6305 = vmatpush2.bf16.msra.mxu0 0
        %6306 = vmatprep.subr.bf16.mxu0 0
        %6307 = vmatpush2.bf16.msra.mxu0 0
        %6308 = vmatprep.mubr.bf16.mxu0 0
        %6309 = vmatmul.mubr.bf16.gmra.mxu0 %v6265
        %v6310 = vpop.f32.mrf.mxu0
        %v6311 = vadd.f32 0.0, %v6310
        %v6312 = vpop.f32.mrf.mxu0
        %v6313 = vpop.f32.mrf.mxu0
        %v6314 = vadd.f32 0.0, %v6313
        %v6315 = vpop.f32.mrf.mxu0
        %6316 = vmatprep.mubr.bf16.mxu0 0
        %6317 = vmatmul.mubr.bf16.gmra.mxu0 %v6268
        %v6318 = vpop.f32.mrf.mxu0
        %v6319 = vadd.f32 0.0, %v6318
        %v6320 = vpop.f32.mrf.mxu0
        %v6321 = vpop.f32.mrf.mxu0
        %v6322 = vadd.f32 0.0, %v6321
        %v6323 = vpop.f32.mrf.mxu0
        %6324 = vmatprep.mubr.bf16.mxu0 0
        %6325 = vmatmul.mubr.bf16.gmra.mxu0 %v6271
        %v6326 = vpop.f32.mrf.mxu0
        %v6327 = vadd.f32 0.0, %v6326
        %v6328 = vpop.f32.mrf.mxu0
        %v6329 = vpop.f32.mrf.mxu0
        %v6330 = vadd.f32 0.0, %v6329
        %v6331 = vpop.f32.mrf.mxu0
        %6332 = vmatprep.mubr.bf16.mxu0 0
        %6333 = vmatmul.mubr.bf16.gmra.mxu0 %v6274
        %v6334 = vpop.f32.mrf.mxu0
        %v6335 = vadd.f32 0.0, %v6334
        %v6336 = vpop.f32.mrf.mxu0
        %v6337 = vpop.f32.mrf.mxu0
        %v6338 = vadd.f32 0.0, %v6337
        %v6339 = vpop.f32.mrf.mxu0
        %6340 = vdwg.mxu0
        %v6349 = vunpack.c.l.b16 %v2015
        %v6350 = vunpack.c.l.b16 %v2016
        %v6351 = vunpack.c.l.b16 %v2017
        %v6352 = vunpack.c.l.b16 %v2018
        %v6353 = vunpack.c.l.b16 %v2019
        %v6354 = vunpack.c.l.b16 %v2020
        %v6355 = vunpack.c.l.b16 %v2021
        %v6356 = vunpack.c.l.b16 %v2022
        %v6357 = vpack.c.b16 %v6350, %v6349
        %v6358 = vpack.c.b16 %v6352, %v6351
        %v6359 = vpack.c.b16 %v6354, %v6353
        %v6360 = vpack.c.b16 %v6356, %v6355
        %v6366 = vsel %vm4464, %v5889, 0
        %v6369 = vsel %vm4464, %v5890, 0
        %v6372 = vsel %vm4464, %v5891, 0
        %v6375 = vsel %vm4464, %v5892, 0
        %6377 = vmatprep.subr.bf16.mxu0 0
        %6378 = vmatpush1.bf16.msra.mxu0 0
        %6379 = vmatprep.subr.bf16.mxu0 0
        %6380 = vmatpush1.bf16.msra.mxu0 0
        %6381 = vmatprep.subr.bf16.mxu0 0
        %6382 = vmatpush1.bf16.msra.mxu0 0
        %6383 = vmatprep.subr.bf16.mxu0 0
        %6384 = vmatpush1.bf16.msra.mxu0 0
        %6385 = vmatprep.subr.bf16.mxu0 0
        %6386 = vmatpush1.bf16.msra.mxu0 %v6360
        %6387 = vmatprep.subr.bf16.mxu0 0
        %6388 = vmatpush1.bf16.msra.mxu0 %v6359
        %6389 = vmatprep.subr.bf16.mxu0 0
        %6390 = vmatpush1.bf16.msra.mxu0 %v6358
        %6391 = vmatprep.subr.bf16.mxu0 0
        %6392 = vmatpush1.bf16.msra.mxu0 %v6357
        %6393 = vmatprep.subr.bf16.mxu0 0
        %6394 = vmatpush2.bf16.msra.mxu0 0
        %6395 = vmatprep.subr.bf16.mxu0 0
        %6396 = vmatpush2.bf16.msra.mxu0 0
        %6397 = vmatprep.subr.bf16.mxu0 0
        %6398 = vmatpush2.bf16.msra.mxu0 0
        %6399 = vmatprep.subr.bf16.mxu0 0
        %6400 = vmatpush2.bf16.msra.mxu0 0
        %6401 = vmatprep.subr.bf16.mxu0 0
        %6402 = vmatpush2.bf16.msra.mxu0 0
        %6403 = vmatprep.subr.bf16.mxu0 0
        %6404 = vmatpush2.bf16.msra.mxu0 0
        %6405 = vmatprep.subr.bf16.mxu0 0
        %6406 = vmatpush2.bf16.msra.mxu0 0
        %6407 = vmatprep.subr.bf16.mxu0 0
        %6408 = vmatpush2.bf16.msra.mxu0 0
        %6409 = vmatprep.mubr.bf16.mxu0 0
        %6410 = vmatmul.mubr.bf16.gmra.mxu0 %v6366
        %v6411 = vpop.f32.mrf.mxu0
        %v6412 = vadd.f32 0.0, %v6411
        %v6413 = vpop.f32.mrf.mxu0
        %v6414 = vpop.f32.mrf.mxu0
        %v6415 = vadd.f32 0.0, %v6414
        %v6416 = vpop.f32.mrf.mxu0
        %6417 = vmatprep.mubr.bf16.mxu0 0
        %6418 = vmatmul.mubr.bf16.gmra.mxu0 %v6369
        %v6419 = vpop.f32.mrf.mxu0
        %v6420 = vadd.f32 0.0, %v6419
        %v6421 = vpop.f32.mrf.mxu0
        %v6422 = vpop.f32.mrf.mxu0
        %v6423 = vadd.f32 0.0, %v6422
        %v6424 = vpop.f32.mrf.mxu0
        %6425 = vmatprep.mubr.bf16.mxu0 0
        %6426 = vmatmul.mubr.bf16.gmra.mxu0 %v6372
        %v6427 = vpop.f32.mrf.mxu0
        %v6428 = vadd.f32 0.0, %v6427
        %v6429 = vpop.f32.mrf.mxu0
        %v6430 = vpop.f32.mrf.mxu0
        %v6431 = vadd.f32 0.0, %v6430
        %v6432 = vpop.f32.mrf.mxu0
        %6433 = vmatprep.mubr.bf16.mxu0 0
        %6434 = vmatmul.mubr.bf16.gmra.mxu0 %v6375
        %v6435 = vpop.f32.mrf.mxu0
        %v6436 = vadd.f32 0.0, %v6435
        %v6437 = vpop.f32.mrf.mxu0
        %v6438 = vpop.f32.mrf.mxu0
        %v6439 = vadd.f32 0.0, %v6438
        %v6440 = vpop.f32.mrf.mxu0
        %6441 = vdwg.mxu0
        %v6450 = vunpack.c.l.b16 %v2023
        %v6451 = vunpack.c.l.b16 %v2024
        %v6452 = vunpack.c.l.b16 %v2025
        %v6453 = vunpack.c.l.b16 %v2026
        %v6454 = vunpack.c.l.b16 %v2027
        %v6455 = vunpack.c.l.b16 %v2028
        %v6456 = vunpack.c.l.b16 %v2029
        %v6457 = vunpack.c.l.b16 %v2030
        %v6458 = vpack.c.b16 %v6451, %v6450
        %v6459 = vpack.c.b16 %v6453, %v6452
        %v6460 = vpack.c.b16 %v6455, %v6454
        %v6461 = vpack.c.b16 %v6457, %v6456
        %v6467 = vsel %vm4464, %v5893, 0
        %v6470 = vsel %vm4464, %v5894, 0
        %v6473 = vsel %vm4464, %v5895, 0
        %v6476 = vsel %vm4464, %v5896, 0
        %6478 = vmatprep.subr.bf16.mxu0 0
        %6479 = vmatpush1.bf16.msra.mxu0 0
        %6480 = vmatprep.subr.bf16.mxu0 0
        %6481 = vmatpush1.bf16.msra.mxu0 0
        %6482 = vmatprep.subr.bf16.mxu0 0
        %6483 = vmatpush1.bf16.msra.mxu0 0
        %6484 = vmatprep.subr.bf16.mxu0 0
        %6485 = vmatpush1.bf16.msra.mxu0 0
        %6486 = vmatprep.subr.bf16.mxu0 0
        %6487 = vmatpush1.bf16.msra.mxu0 %v6461
        %6488 = vmatprep.subr.bf16.mxu0 0
        %6489 = vmatpush1.bf16.msra.mxu0 %v6460
        %6490 = vmatprep.subr.bf16.mxu0 0
        %6491 = vmatpush1.bf16.msra.mxu0 %v6459
        %6492 = vmatprep.subr.bf16.mxu0 0
        %6493 = vmatpush1.bf16.msra.mxu0 %v6458
        %6494 = vmatprep.subr.bf16.mxu0 0
        %6495 = vmatpush2.bf16.msra.mxu0 0
        %6496 = vmatprep.subr.bf16.mxu0 0
        %6497 = vmatpush2.bf16.msra.mxu0 0
        %6498 = vmatprep.subr.bf16.mxu0 0
        %6499 = vmatpush2.bf16.msra.mxu0 0
        %6500 = vmatprep.subr.bf16.mxu0 0
        %6501 = vmatpush2.bf16.msra.mxu0 0
        %6502 = vmatprep.subr.bf16.mxu0 0
        %6503 = vmatpush2.bf16.msra.mxu0 0
        %6504 = vmatprep.subr.bf16.mxu0 0
        %6505 = vmatpush2.bf16.msra.mxu0 0
        %6506 = vmatprep.subr.bf16.mxu0 0
        %6507 = vmatpush2.bf16.msra.mxu0 0
        %6508 = vmatprep.subr.bf16.mxu0 0
        %6509 = vmatpush2.bf16.msra.mxu0 0
        %6510 = vmatprep.mubr.bf16.mxu0 0
        %6511 = vmatmul.mubr.bf16.gmra.mxu0 %v6467
        %v6512 = vpop.f32.mrf.mxu0
        %v6513 = vadd.f32 0.0, %v6512
        %v6514 = vpop.f32.mrf.mxu0
        %v6515 = vpop.f32.mrf.mxu0
        %v6516 = vadd.f32 0.0, %v6515
        %v6517 = vpop.f32.mrf.mxu0
        %6518 = vmatprep.mubr.bf16.mxu0 0
        %6519 = vmatmul.mubr.bf16.gmra.mxu0 %v6470
        %v6520 = vpop.f32.mrf.mxu0
        %v6521 = vadd.f32 0.0, %v6520
        %v6522 = vpop.f32.mrf.mxu0
        %v6523 = vpop.f32.mrf.mxu0
        %v6524 = vadd.f32 0.0, %v6523
        %v6525 = vpop.f32.mrf.mxu0
        %6526 = vmatprep.mubr.bf16.mxu0 0
        %6527 = vmatmul.mubr.bf16.gmra.mxu0 %v6473
        %v6528 = vpop.f32.mrf.mxu0
        %v6529 = vadd.f32 0.0, %v6528
        %v6530 = vpop.f32.mrf.mxu0
        %v6531 = vpop.f32.mrf.mxu0
        %v6532 = vadd.f32 0.0, %v6531
        %v6533 = vpop.f32.mrf.mxu0
        %6534 = vmatprep.mubr.bf16.mxu0 0
        %6535 = vmatmul.mubr.bf16.gmra.mxu0 %v6476
        %v6536 = vpop.f32.mrf.mxu0
        %v6537 = vadd.f32 0.0, %v6536
        %v6538 = vpop.f32.mrf.mxu0
        %v6539 = vpop.f32.mrf.mxu0
        %v6540 = vadd.f32 0.0, %v6539
        %v6541 = vpop.f32.mrf.mxu0
        %6542 = vdwg.mxu0
        %v6551 = vunpack.c.l.b16 %v2031
        %v6552 = vunpack.c.l.b16 %v2032
        %v6553 = vunpack.c.l.b16 %v2033
        %v6554 = vunpack.c.l.b16 %v2034
        %v6555 = vunpack.c.l.b16 %v2035
        %v6556 = vunpack.c.l.b16 %v2036
        %v6557 = vunpack.c.l.b16 %v2037
        %v6558 = vunpack.c.l.b16 %v2038
        %v6559 = vpack.c.b16 %v6552, %v6551
        %v6560 = vpack.c.b16 %v6554, %v6553
        %v6561 = vpack.c.b16 %v6556, %v6555
        %v6562 = vpack.c.b16 %v6558, %v6557
        %v6568 = vsel %vm4464, %v5897, 0
        %v6571 = vsel %vm4464, %v5898, 0
        %v6574 = vsel %vm4464, %v5899, 0
        %v6577 = vsel %vm4464, %v5900, 0
        %6579 = vmatprep.subr.bf16.mxu0 0
        %6580 = vmatpush1.bf16.msra.mxu0 0
        %6581 = vmatprep.subr.bf16.mxu0 0
        %6582 = vmatpush1.bf16.msra.mxu0 0
        %6583 = vmatprep.subr.bf16.mxu0 0
        %6584 = vmatpush1.bf16.msra.mxu0 0
        %6585 = vmatprep.subr.bf16.mxu0 0
        %6586 = vmatpush1.bf16.msra.mxu0 0
        %6587 = vmatprep.subr.bf16.mxu0 0
        %6588 = vmatpush1.bf16.msra.mxu0 %v6562
        %6589 = vmatprep.subr.bf16.mxu0 0
        %6590 = vmatpush1.bf16.msra.mxu0 %v6561
        %6591 = vmatprep.subr.bf16.mxu0 0
        %6592 = vmatpush1.bf16.msra.mxu0 %v6560
        %6593 = vmatprep.subr.bf16.mxu0 0
        %6594 = vmatpush1.bf16.msra.mxu0 %v6559
        %6595 = vmatprep.subr.bf16.mxu0 0
        %6596 = vmatpush2.bf16.msra.mxu0 0
        %6597 = vmatprep.subr.bf16.mxu0 0
        %6598 = vmatpush2.bf16.msra.mxu0 0
        %6599 = vmatprep.subr.bf16.mxu0 0
        %6600 = vmatpush2.bf16.msra.mxu0 0
        %6601 = vmatprep.subr.bf16.mxu0 0
        %6602 = vmatpush2.bf16.msra.mxu0 0
        %6603 = vmatprep.subr.bf16.mxu0 0
        %6604 = vmatpush2.bf16.msra.mxu0 0
        %6605 = vmatprep.subr.bf16.mxu0 0
        %6606 = vmatpush2.bf16.msra.mxu0 0
        %6607 = vmatprep.subr.bf16.mxu0 0
        %6608 = vmatpush2.bf16.msra.mxu0 0
        %6609 = vmatprep.subr.bf16.mxu0 0
        %6610 = vmatpush2.bf16.msra.mxu0 0
        %6611 = vmatprep.mubr.bf16.mxu0 0
        %6612 = vmatmul.mubr.bf16.gmra.mxu0 %v6568
        %v6613 = vpop.f32.mrf.mxu0
        %v6614 = vadd.f32 0.0, %v6613
        %v6615 = vpop.f32.mrf.mxu0
        %v6616 = vpop.f32.mrf.mxu0
        %v6617 = vadd.f32 0.0, %v6616
        %v6618 = vpop.f32.mrf.mxu0
        %6619 = vmatprep.mubr.bf16.mxu0 0
        %6620 = vmatmul.mubr.bf16.gmra.mxu0 %v6571
        %v6621 = vpop.f32.mrf.mxu0
        %v6622 = vadd.f32 0.0, %v6621
        %v6623 = vpop.f32.mrf.mxu0
        %v6624 = vpop.f32.mrf.mxu0
        %v6625 = vadd.f32 0.0, %v6624
        %v6626 = vpop.f32.mrf.mxu0
        %6627 = vmatprep.mubr.bf16.mxu0 0
        %6628 = vmatmul.mubr.bf16.gmra.mxu0 %v6574
        %v6629 = vpop.f32.mrf.mxu0
        %v6630 = vadd.f32 0.0, %v6629
        %v6631 = vpop.f32.mrf.mxu0
        %v6632 = vpop.f32.mrf.mxu0
        %v6633 = vadd.f32 0.0, %v6632
        %v6634 = vpop.f32.mrf.mxu0
        %6635 = vmatprep.mubr.bf16.mxu0 0
        %6636 = vmatmul.mubr.bf16.gmra.mxu0 %v6577
        %v6637 = vpop.f32.mrf.mxu0
        %v6638 = vadd.f32 0.0, %v6637
        %v6639 = vpop.f32.mrf.mxu0
        %v6640 = vpop.f32.mrf.mxu0
        %v6641 = vadd.f32 0.0, %v6640
        %v6642 = vpop.f32.mrf.mxu0
        %6643 = vdwg.mxu0
        %v6652 = vunpack.c.l.b16 %v2039
        %v6653 = vunpack.c.l.b16 %v2040
        %v6654 = vunpack.c.l.b16 %v2041
        %v6655 = vunpack.c.l.b16 %v2042
        %v6656 = vunpack.c.l.b16 %v2043
        %v6657 = vunpack.c.l.b16 %v2044
        %v6658 = vunpack.c.l.b16 %v2045
        %v6659 = vunpack.c.l.b16 %v2046
        %v6660 = vpack.c.b16 %v6653, %v6652
        %v6661 = vpack.c.b16 %v6655, %v6654
        %v6662 = vpack.c.b16 %v6657, %v6656
        %v6663 = vpack.c.b16 %v6659, %v6658
        %v6669 = vsel %vm4464, %v5901, 0
        %v6672 = vsel %vm4464, %v5902, 0
        %v6675 = vsel %vm4464, %v5903, 0
        %v6678 = vsel %vm4464, %v5904, 0
        %6680 = vmatprep.subr.bf16.mxu0 0
        %6681 = vmatpush1.bf16.msra.mxu0 0
        %6682 = vmatprep.subr.bf16.mxu0 0
        %6683 = vmatpush1.bf16.msra.mxu0 0
        %6684 = vmatprep.subr.bf16.mxu0 0
        %6685 = vmatpush1.bf16.msra.mxu0 0
        %6686 = vmatprep.subr.bf16.mxu0 0
        %6687 = vmatpush1.bf16.msra.mxu0 0
        %6688 = vmatprep.subr.bf16.mxu0 0
        %6689 = vmatpush1.bf16.msra.mxu0 %v6663
        %6690 = vmatprep.subr.bf16.mxu0 0
        %6691 = vmatpush1.bf16.msra.mxu0 %v6662
        %6692 = vmatprep.subr.bf16.mxu0 0
        %6693 = vmatpush1.bf16.msra.mxu0 %v6661
        %6694 = vmatprep.subr.bf16.mxu0 0
        %6695 = vmatpush1.bf16.msra.mxu0 %v6660
        %6696 = vmatprep.subr.bf16.mxu0 0
        %6697 = vmatpush2.bf16.msra.mxu0 0
        %6698 = vmatprep.subr.bf16.mxu0 0
        %6699 = vmatpush2.bf16.msra.mxu0 0
        %6700 = vmatprep.subr.bf16.mxu0 0
        %6701 = vmatpush2.bf16.msra.mxu0 0
        %6702 = vmatprep.subr.bf16.mxu0 0
        %6703 = vmatpush2.bf16.msra.mxu0 0
        %6704 = vmatprep.subr.bf16.mxu0 0
        %6705 = vmatpush2.bf16.msra.mxu0 0
        %6706 = vmatprep.subr.bf16.mxu0 0
        %6707 = vmatpush2.bf16.msra.mxu0 0
        %6708 = vmatprep.subr.bf16.mxu0 0
        %6709 = vmatpush2.bf16.msra.mxu0 0
        %6710 = vmatprep.subr.bf16.mxu0 0
        %6711 = vmatpush2.bf16.msra.mxu0 0
        %6712 = vmatprep.mubr.bf16.mxu0 0
        %6713 = vmatmul.mubr.bf16.gmra.mxu0 %v6669
        %v6714 = vpop.f32.mrf.mxu0
        %v6715 = vadd.f32 0.0, %v6714
        %v6716 = vpop.f32.mrf.mxu0
        %v6717 = vpop.f32.mrf.mxu0
        %v6718 = vadd.f32 0.0, %v6717
        %v6719 = vpop.f32.mrf.mxu0
        %6720 = vmatprep.mubr.bf16.mxu0 0
        %6721 = vmatmul.mubr.bf16.gmra.mxu0 %v6672
        %v6722 = vpop.f32.mrf.mxu0
        %v6723 = vadd.f32 0.0, %v6722
        %v6724 = vpop.f32.mrf.mxu0
        %v6725 = vpop.f32.mrf.mxu0
        %v6726 = vadd.f32 0.0, %v6725
        %v6727 = vpop.f32.mrf.mxu0
        %6728 = vmatprep.mubr.bf16.mxu0 0
        %6729 = vmatmul.mubr.bf16.gmra.mxu0 %v6675
        %v6730 = vpop.f32.mrf.mxu0
        %v6731 = vadd.f32 0.0, %v6730
        %v6732 = vpop.f32.mrf.mxu0
        %v6733 = vpop.f32.mrf.mxu0
        %v6734 = vadd.f32 0.0, %v6733
        %v6735 = vpop.f32.mrf.mxu0
        %6736 = vmatprep.mubr.bf16.mxu0 0
        %6737 = vmatmul.mubr.bf16.gmra.mxu0 %v6678
        %v6738 = vpop.f32.mrf.mxu0
        %v6739 = vadd.f32 0.0, %v6738
        %v6740 = vpop.f32.mrf.mxu0
        %v6741 = vpop.f32.mrf.mxu0
        %v6742 = vadd.f32 0.0, %v6741
        %v6743 = vpop.f32.mrf.mxu0
        %6744 = vdwg.mxu0
        %v6753 = vunpack.c.l.b16 %v2047
        %v6754 = vunpack.c.l.b16 %v2048
        %v6755 = vunpack.c.l.b16 %v2049
        %v6756 = vunpack.c.l.b16 %v2050
        %v6757 = vunpack.c.l.b16 %v2051
        %v6758 = vunpack.c.l.b16 %v2052
        %v6759 = vunpack.c.l.b16 %v2053
        %v6760 = vunpack.c.l.b16 %v2054
        %v6761 = vpack.c.b16 %v6754, %v6753
        %v6762 = vpack.c.b16 %v6756, %v6755
        %v6763 = vpack.c.b16 %v6758, %v6757
        %v6764 = vpack.c.b16 %v6760, %v6759
        %v6770 = vsel %vm4464, %v5905, 0
        %v6773 = vsel %vm4464, %v5906, 0
        %v6776 = vsel %vm4464, %v5907, 0
        %v6779 = vsel %vm4464, %v5908, 0
        %6781 = vmatprep.subr.bf16.mxu0 0
        %6782 = vmatpush1.bf16.msra.mxu0 0
        %6783 = vmatprep.subr.bf16.mxu0 0
        %6784 = vmatpush1.bf16.msra.mxu0 0
        %6785 = vmatprep.subr.bf16.mxu0 0
        %6786 = vmatpush1.bf16.msra.mxu0 0
        %6787 = vmatprep.subr.bf16.mxu0 0
        %6788 = vmatpush1.bf16.msra.mxu0 0
        %6789 = vmatprep.subr.bf16.mxu0 0
        %6790 = vmatpush1.bf16.msra.mxu0 %v6764
        %6791 = vmatprep.subr.bf16.mxu0 0
        %6792 = vmatpush1.bf16.msra.mxu0 %v6763
        %6793 = vmatprep.subr.bf16.mxu0 0
        %6794 = vmatpush1.bf16.msra.mxu0 %v6762
        %6795 = vmatprep.subr.bf16.mxu0 0
        %6796 = vmatpush1.bf16.msra.mxu0 %v6761
        %6797 = vmatprep.subr.bf16.mxu0 0
        %6798 = vmatpush2.bf16.msra.mxu0 0
        %6799 = vmatprep.subr.bf16.mxu0 0
        %6800 = vmatpush2.bf16.msra.mxu0 0
        %6801 = vmatprep.subr.bf16.mxu0 0
        %6802 = vmatpush2.bf16.msra.mxu0 0
        %6803 = vmatprep.subr.bf16.mxu0 0
        %6804 = vmatpush2.bf16.msra.mxu0 0
        %6805 = vmatprep.subr.bf16.mxu0 0
        %6806 = vmatpush2.bf16.msra.mxu0 0
        %6807 = vmatprep.subr.bf16.mxu0 0
        %6808 = vmatpush2.bf16.msra.mxu0 0
        %6809 = vmatprep.subr.bf16.mxu0 0
        %6810 = vmatpush2.bf16.msra.mxu0 0
        %6811 = vmatprep.subr.bf16.mxu0 0
        %6812 = vmatpush2.bf16.msra.mxu0 0
        %6813 = vmatprep.mubr.bf16.mxu0 0
        %6814 = vmatmul.mubr.bf16.gmra.mxu0 %v6770
        %v6815 = vpop.f32.mrf.mxu0
        %v6816 = vadd.f32 0.0, %v6815
        %v6817 = vpop.f32.mrf.mxu0
        %v6818 = vpop.f32.mrf.mxu0
        %v6819 = vadd.f32 0.0, %v6818
        %v6820 = vpop.f32.mrf.mxu0
        %6821 = vmatprep.mubr.bf16.mxu0 0
        %6822 = vmatmul.mubr.bf16.gmra.mxu0 %v6773
        %v6823 = vpop.f32.mrf.mxu0
        %v6824 = vadd.f32 0.0, %v6823
        %v6825 = vpop.f32.mrf.mxu0
        %v6826 = vpop.f32.mrf.mxu0
        %v6827 = vadd.f32 0.0, %v6826
        %v6828 = vpop.f32.mrf.mxu0
        %6829 = vmatprep.mubr.bf16.mxu0 0
        %6830 = vmatmul.mubr.bf16.gmra.mxu0 %v6776
        %v6831 = vpop.f32.mrf.mxu0
        %v6832 = vadd.f32 0.0, %v6831
        %v6833 = vpop.f32.mrf.mxu0
        %v6834 = vpop.f32.mrf.mxu0
        %v6835 = vadd.f32 0.0, %v6834
        %v6836 = vpop.f32.mrf.mxu0
        %6837 = vmatprep.mubr.bf16.mxu0 0
        %6838 = vmatmul.mubr.bf16.gmra.mxu0 %v6779
        %v6839 = vpop.f32.mrf.mxu0
        %v6840 = vadd.f32 0.0, %v6839
        %v6841 = vpop.f32.mrf.mxu0
        %v6842 = vpop.f32.mrf.mxu0
        %v6843 = vadd.f32 0.0, %v6842
        %v6844 = vpop.f32.mrf.mxu0
        %6845 = vdwg.mxu0
        %v6854 = vunpack.c.l.b16 %v2055
        %v6855 = vunpack.c.l.b16 %v2056
        %v6856 = vunpack.c.l.b16 %v2057
        %v6857 = vunpack.c.l.b16 %v2058
        %v6858 = vunpack.c.l.b16 %v2059
        %v6859 = vunpack.c.l.b16 %v2060
        %v6860 = vunpack.c.l.b16 %v2061
        %v6861 = vunpack.c.l.b16 %v2062
        %v6862 = vpack.c.b16 %v6855, %v6854
        %v6863 = vpack.c.b16 %v6857, %v6856
        %v6864 = vpack.c.b16 %v6859, %v6858
        %v6865 = vpack.c.b16 %v6861, %v6860
        %v6871 = vsel %vm4464, %v5909, 0
        %v6874 = vsel %vm4464, %v5910, 0
        %v6877 = vsel %vm4464, %v5911, 0
        %v6880 = vsel %vm4464, %v5912, 0
        %6882 = vmatprep.subr.bf16.mxu0 0
        %6883 = vmatpush1.bf16.msra.mxu0 0
        %6884 = vmatprep.subr.bf16.mxu0 0
        %6885 = vmatpush1.bf16.msra.mxu0 0
        %6886 = vmatprep.subr.bf16.mxu0 0
        %6887 = vmatpush1.bf16.msra.mxu0 0
        %6888 = vmatprep.subr.bf16.mxu0 0
        %6889 = vmatpush1.bf16.msra.mxu0 0
        %6890 = vmatprep.subr.bf16.mxu0 0
        %6891 = vmatpush1.bf16.msra.mxu0 %v6865
        %6892 = vmatprep.subr.bf16.mxu0 0
        %6893 = vmatpush1.bf16.msra.mxu0 %v6864
        %6894 = vmatprep.subr.bf16.mxu0 0
        %6895 = vmatpush1.bf16.msra.mxu0 %v6863
        %6896 = vmatprep.subr.bf16.mxu0 0
        %6897 = vmatpush1.bf16.msra.mxu0 %v6862
        %6898 = vmatprep.subr.bf16.mxu0 0
        %6899 = vmatpush2.bf16.msra.mxu0 0
        %6900 = vmatprep.subr.bf16.mxu0 0
        %6901 = vmatpush2.bf16.msra.mxu0 0
        %6902 = vmatprep.subr.bf16.mxu0 0
        %6903 = vmatpush2.bf16.msra.mxu0 0
        %6904 = vmatprep.subr.bf16.mxu0 0
        %6905 = vmatpush2.bf16.msra.mxu0 0
        %6906 = vmatprep.subr.bf16.mxu0 0
        %6907 = vmatpush2.bf16.msra.mxu0 0
        %6908 = vmatprep.subr.bf16.mxu0 0
        %6909 = vmatpush2.bf16.msra.mxu0 0
        %6910 = vmatprep.subr.bf16.mxu0 0
        %6911 = vmatpush2.bf16.msra.mxu0 0
        %6912 = vmatprep.subr.bf16.mxu0 0
        %6913 = vmatpush2.bf16.msra.mxu0 0
        %6914 = vmatprep.mubr.bf16.mxu0 0
        %6915 = vmatmul.mubr.bf16.gmra.mxu0 %v6871
        %v6916 = vpop.f32.mrf.mxu0
        %v6917 = vadd.f32 0.0, %v6916
        %v6918 = vpop.f32.mrf.mxu0
        %v6919 = vpop.f32.mrf.mxu0
        %v6920 = vadd.f32 0.0, %v6919
        %v6921 = vpop.f32.mrf.mxu0
        %6922 = vmatprep.mubr.bf16.mxu0 0
        %6923 = vmatmul.mubr.bf16.gmra.mxu0 %v6874
        %v6924 = vpop.f32.mrf.mxu0
        %v6925 = vadd.f32 0.0, %v6924
        %v6926 = vpop.f32.mrf.mxu0
        %v6927 = vpop.f32.mrf.mxu0
        %v6928 = vadd.f32 0.0, %v6927
        %v6929 = vpop.f32.mrf.mxu0
        %6930 = vmatprep.mubr.bf16.mxu0 0
        %6931 = vmatmul.mubr.bf16.gmra.mxu0 %v6877
        %v6932 = vpop.f32.mrf.mxu0
        %v6933 = vadd.f32 0.0, %v6932
        %v6934 = vpop.f32.mrf.mxu0
        %v6935 = vpop.f32.mrf.mxu0
        %v6936 = vadd.f32 0.0, %v6935
        %v6937 = vpop.f32.mrf.mxu0
        %6938 = vmatprep.mubr.bf16.mxu0 0
        %6939 = vmatmul.mubr.bf16.gmra.mxu0 %v6880
        %v6940 = vpop.f32.mrf.mxu0
        %v6941 = vadd.f32 0.0, %v6940
        %v6942 = vpop.f32.mrf.mxu0
        %v6943 = vpop.f32.mrf.mxu0
        %v6944 = vadd.f32 0.0, %v6943
        %v6945 = vpop.f32.mrf.mxu0
        %6946 = vdwg.mxu0
        %v6955 = vunpack.c.l.b16 %v2063
        %v6956 = vunpack.c.l.b16 %v2064
        %v6957 = vunpack.c.l.b16 %v2065
        %v6958 = vunpack.c.l.b16 %v2066
        %v6959 = vunpack.c.l.b16 %v2067
        %v6960 = vunpack.c.l.b16 %v2068
        %v6961 = vunpack.c.l.b16 %v2069
        %v6962 = vunpack.c.l.b16 %v2070
        %v6963 = vpack.c.b16 %v6956, %v6955
        %v6964 = vpack.c.b16 %v6958, %v6957
        %v6965 = vpack.c.b16 %v6960, %v6959
        %v6966 = vpack.c.b16 %v6962, %v6961
        %v6972 = vsel %vm4464, %v5913, 0
        %v6975 = vsel %vm4464, %v5914, 0
        %v6978 = vsel %vm4464, %v5915, 0
        %v6981 = vsel %vm4464, %v5916, 0
        %6983 = vmatprep.subr.bf16.mxu0 0
        %6984 = vmatpush1.bf16.msra.mxu0 0
        %6985 = vmatprep.subr.bf16.mxu0 0
        %6986 = vmatpush1.bf16.msra.mxu0 0
        %6987 = vmatprep.subr.bf16.mxu0 0
        %6988 = vmatpush1.bf16.msra.mxu0 0
        %6989 = vmatprep.subr.bf16.mxu0 0
        %6990 = vmatpush1.bf16.msra.mxu0 0
        %6991 = vmatprep.subr.bf16.mxu0 0
        %6992 = vmatpush1.bf16.msra.mxu0 %v6966
        %6993 = vmatprep.subr.bf16.mxu0 0
        %6994 = vmatpush1.bf16.msra.mxu0 %v6965
        %6995 = vmatprep.subr.bf16.mxu0 0
        %6996 = vmatpush1.bf16.msra.mxu0 %v6964
        %6997 = vmatprep.subr.bf16.mxu0 0
        %6998 = vmatpush1.bf16.msra.mxu0 %v6963
        %6999 = vmatprep.subr.bf16.mxu0 0
        %7000 = vmatpush2.bf16.msra.mxu0 0
        %7001 = vmatprep.subr.bf16.mxu0 0
        %7002 = vmatpush2.bf16.msra.mxu0 0
        %7003 = vmatprep.subr.bf16.mxu0 0
        %7004 = vmatpush2.bf16.msra.mxu0 0
        %7005 = vmatprep.subr.bf16.mxu0 0
        %7006 = vmatpush2.bf16.msra.mxu0 0
        %7007 = vmatprep.subr.bf16.mxu0 0
        %7008 = vmatpush2.bf16.msra.mxu0 0
        %7009 = vmatprep.subr.bf16.mxu0 0
        %7010 = vmatpush2.bf16.msra.mxu0 0
        %7011 = vmatprep.subr.bf16.mxu0 0
        %7012 = vmatpush2.bf16.msra.mxu0 0
        %7013 = vmatprep.subr.bf16.mxu0 0
        %7014 = vmatpush2.bf16.msra.mxu0 0
        %7015 = vmatprep.mubr.bf16.mxu0 0
        %7016 = vmatmul.mubr.bf16.gmra.mxu0 %v6972
        %v7017 = vpop.f32.mrf.mxu0
        %v7018 = vadd.f32 0.0, %v7017
        %v7019 = vpop.f32.mrf.mxu0
        %v7020 = vpop.f32.mrf.mxu0
        %v7021 = vadd.f32 0.0, %v7020
        %v7022 = vpop.f32.mrf.mxu0
        %7023 = vmatprep.mubr.bf16.mxu0 0
        %7024 = vmatmul.mubr.bf16.gmra.mxu0 %v6975
        %v7025 = vpop.f32.mrf.mxu0
        %v7026 = vadd.f32 0.0, %v7025
        %v7027 = vpop.f32.mrf.mxu0
        %v7028 = vpop.f32.mrf.mxu0
        %v7029 = vadd.f32 0.0, %v7028
        %v7030 = vpop.f32.mrf.mxu0
        %7031 = vmatprep.mubr.bf16.mxu0 0
        %7032 = vmatmul.mubr.bf16.gmra.mxu0 %v6978
        %v7033 = vpop.f32.mrf.mxu0
        %v7034 = vadd.f32 0.0, %v7033
        %v7035 = vpop.f32.mrf.mxu0
        %v7036 = vpop.f32.mrf.mxu0
        %v7037 = vadd.f32 0.0, %v7036
        %v7038 = vpop.f32.mrf.mxu0
        %7039 = vmatprep.mubr.bf16.mxu0 0
        %7040 = vmatmul.mubr.bf16.gmra.mxu0 %v6981
        %v7041 = vpop.f32.mrf.mxu0
        %v7042 = vadd.f32 0.0, %v7041
        %v7043 = vpop.f32.mrf.mxu0
        %v7044 = vpop.f32.mrf.mxu0
        %v7045 = vadd.f32 0.0, %v7044
        %v7046 = vpop.f32.mrf.mxu0
        %7047 = vdwg.mxu0
        %v7056 = vunpack.c.l.b16 %v2071
        %v7057 = vunpack.c.l.b16 %v2072
        %v7058 = vunpack.c.l.b16 %v2073
        %v7059 = vunpack.c.l.b16 %v2074
        %v7060 = vunpack.c.l.b16 %v2075
        %v7061 = vunpack.c.l.b16 %v2076
        %v7062 = vunpack.c.l.b16 %v2077
        %v7063 = vunpack.c.l.b16 %v2078
        %v7064 = vpack.c.b16 %v7057, %v7056
        %v7065 = vpack.c.b16 %v7059, %v7058
        %v7066 = vpack.c.b16 %v7061, %v7060
        %v7067 = vpack.c.b16 %v7063, %v7062
        %v7073 = vsel %vm4464, %v5917, 0
        %v7076 = vsel %vm4464, %v5918, 0
        %v7079 = vsel %vm4464, %v5919, 0
        %v7082 = vsel %vm4464, %v5920, 0
        %7084 = vmatprep.subr.bf16.mxu0 0
        %7085 = vmatpush1.bf16.msra.mxu0 0
        %7086 = vmatprep.subr.bf16.mxu0 0
        %7087 = vmatpush1.bf16.msra.mxu0 0
        %7088 = vmatprep.subr.bf16.mxu0 0
        %7089 = vmatpush1.bf16.msra.mxu0 0
        %7090 = vmatprep.subr.bf16.mxu0 0
        %7091 = vmatpush1.bf16.msra.mxu0 0
        %7092 = vmatprep.subr.bf16.mxu0 0
        %7093 = vmatpush1.bf16.msra.mxu0 %v7067
        %7094 = vmatprep.subr.bf16.mxu0 0
        %7095 = vmatpush1.bf16.msra.mxu0 %v7066
        %7096 = vmatprep.subr.bf16.mxu0 0
        %7097 = vmatpush1.bf16.msra.mxu0 %v7065
        %7098 = vmatprep.subr.bf16.mxu0 0
        %7099 = vmatpush1.bf16.msra.mxu0 %v7064
        %7100 = vmatprep.subr.bf16.mxu0 0
        %7101 = vmatpush2.bf16.msra.mxu0 0
        %7102 = vmatprep.subr.bf16.mxu0 0
        %7103 = vmatpush2.bf16.msra.mxu0 0
        %7104 = vmatprep.subr.bf16.mxu0 0
        %7105 = vmatpush2.bf16.msra.mxu0 0
        %7106 = vmatprep.subr.bf16.mxu0 0
        %7107 = vmatpush2.bf16.msra.mxu0 0
        %7108 = vmatprep.subr.bf16.mxu0 0
        %7109 = vmatpush2.bf16.msra.mxu0 0
        %7110 = vmatprep.subr.bf16.mxu0 0
        %7111 = vmatpush2.bf16.msra.mxu0 0
        %7112 = vmatprep.subr.bf16.mxu0 0
        %7113 = vmatpush2.bf16.msra.mxu0 0
        %7114 = vmatprep.subr.bf16.mxu0 0
        %7115 = vmatpush2.bf16.msra.mxu0 0
        %7116 = vmatprep.mubr.bf16.mxu0 0
        %7117 = vmatmul.mubr.bf16.gmra.mxu0 %v7073
        %v7118 = vpop.f32.mrf.mxu0
        %v7119 = vadd.f32 0.0, %v7118
        %v7120 = vpop.f32.mrf.mxu0
        %v7121 = vpop.f32.mrf.mxu0
        %v7122 = vadd.f32 0.0, %v7121
        %v7123 = vpop.f32.mrf.mxu0
        %7124 = vmatprep.mubr.bf16.mxu0 0
        %7125 = vmatmul.mubr.bf16.gmra.mxu0 %v7076
        %v7126 = vpop.f32.mrf.mxu0
        %v7127 = vadd.f32 0.0, %v7126
        %v7128 = vpop.f32.mrf.mxu0
        %v7129 = vpop.f32.mrf.mxu0
        %v7130 = vadd.f32 0.0, %v7129
        %v7131 = vpop.f32.mrf.mxu0
        %7132 = vmatprep.mubr.bf16.mxu0 0
        %7133 = vmatmul.mubr.bf16.gmra.mxu0 %v7079
        %v7134 = vpop.f32.mrf.mxu0
        %v7135 = vadd.f32 0.0, %v7134
        %v7136 = vpop.f32.mrf.mxu0
        %v7137 = vpop.f32.mrf.mxu0
        %v7138 = vadd.f32 0.0, %v7137
        %v7139 = vpop.f32.mrf.mxu0
        %7140 = vmatprep.mubr.bf16.mxu0 0
        %7141 = vmatmul.mubr.bf16.gmra.mxu0 %v7082
        %v7142 = vpop.f32.mrf.mxu0
        %v7143 = vadd.f32 0.0, %v7142
        %v7144 = vpop.f32.mrf.mxu0
        %v7145 = vpop.f32.mrf.mxu0
        %v7146 = vadd.f32 0.0, %v7145
        %v7147 = vpop.f32.mrf.mxu0
        %7148 = vdwg.mxu0
        %v7157 = vunpack.c.l.b16 %v2079
        %v7158 = vunpack.c.l.b16 %v2080
        %v7159 = vunpack.c.l.b16 %v2081
        %v7160 = vunpack.c.l.b16 %v2082
        %v7161 = vunpack.c.l.b16 %v2083
        %v7162 = vunpack.c.l.b16 %v2084
        %v7163 = vunpack.c.l.b16 %v2085
        %v7164 = vunpack.c.l.b16 %v2086
        %v7165 = vpack.c.b16 %v7158, %v7157
        %v7166 = vpack.c.b16 %v7160, %v7159
        %v7167 = vpack.c.b16 %v7162, %v7161
        %v7168 = vpack.c.b16 %v7164, %v7163
        %v7174 = vsel %vm4464, %v5921, 0
        %v7177 = vsel %vm4464, %v5922, 0
        %v7180 = vsel %vm4464, %v5923, 0
        %v7183 = vsel %vm4464, %v5924, 0
        %7185 = vmatprep.subr.bf16.mxu0 0
        %7186 = vmatpush1.bf16.msra.mxu0 0
        %7187 = vmatprep.subr.bf16.mxu0 0
        %7188 = vmatpush1.bf16.msra.mxu0 0
        %7189 = vmatprep.subr.bf16.mxu0 0
        %7190 = vmatpush1.bf16.msra.mxu0 0
        %7191 = vmatprep.subr.bf16.mxu0 0
        %7192 = vmatpush1.bf16.msra.mxu0 0
        %7193 = vmatprep.subr.bf16.mxu0 0
        %7194 = vmatpush1.bf16.msra.mxu0 %v7168
        %7195 = vmatprep.subr.bf16.mxu0 0
        %7196 = vmatpush1.bf16.msra.mxu0 %v7167
        %7197 = vmatprep.subr.bf16.mxu0 0
        %7198 = vmatpush1.bf16.msra.mxu0 %v7166
        %7199 = vmatprep.subr.bf16.mxu0 0
        %7200 = vmatpush1.bf16.msra.mxu0 %v7165
        %7201 = vmatprep.subr.bf16.mxu0 0
        %7202 = vmatpush2.bf16.msra.mxu0 0
        %7203 = vmatprep.subr.bf16.mxu0 0
        %7204 = vmatpush2.bf16.msra.mxu0 0
        %7205 = vmatprep.subr.bf16.mxu0 0
        %7206 = vmatpush2.bf16.msra.mxu0 0
        %7207 = vmatprep.subr.bf16.mxu0 0
        %7208 = vmatpush2.bf16.msra.mxu0 0
        %7209 = vmatprep.subr.bf16.mxu0 0
        %7210 = vmatpush2.bf16.msra.mxu0 0
        %7211 = vmatprep.subr.bf16.mxu0 0
        %7212 = vmatpush2.bf16.msra.mxu0 0
        %7213 = vmatprep.subr.bf16.mxu0 0
        %7214 = vmatpush2.bf16.msra.mxu0 0
        %7215 = vmatprep.subr.bf16.mxu0 0
        %7216 = vmatpush2.bf16.msra.mxu0 0
        %7217 = vmatprep.mubr.bf16.mxu0 0
        %7218 = vmatmul.mubr.bf16.gmra.mxu0 %v7174
        %v7219 = vpop.f32.mrf.mxu0
        %v7220 = vadd.f32 0.0, %v7219
        %v7221 = vpop.f32.mrf.mxu0
        %v7222 = vpop.f32.mrf.mxu0
        %v7223 = vadd.f32 0.0, %v7222
        %v7224 = vpop.f32.mrf.mxu0
        %7225 = vmatprep.mubr.bf16.mxu0 0
        %7226 = vmatmul.mubr.bf16.gmra.mxu0 %v7177
        %v7227 = vpop.f32.mrf.mxu0
        %v7228 = vadd.f32 0.0, %v7227
        %v7229 = vpop.f32.mrf.mxu0
        %v7230 = vpop.f32.mrf.mxu0
        %v7231 = vadd.f32 0.0, %v7230
        %v7232 = vpop.f32.mrf.mxu0
        %7233 = vmatprep.mubr.bf16.mxu0 0
        %7234 = vmatmul.mubr.bf16.gmra.mxu0 %v7180
        %v7235 = vpop.f32.mrf.mxu0
        %v7236 = vadd.f32 0.0, %v7235
        %v7237 = vpop.f32.mrf.mxu0
        %v7238 = vpop.f32.mrf.mxu0
        %v7239 = vadd.f32 0.0, %v7238
        %v7240 = vpop.f32.mrf.mxu0
        %7241 = vmatprep.mubr.bf16.mxu0 0
        %7242 = vmatmul.mubr.bf16.gmra.mxu0 %v7183
        %v7243 = vpop.f32.mrf.mxu0
        %v7244 = vadd.f32 0.0, %v7243
        %v7245 = vpop.f32.mrf.mxu0
        %v7246 = vpop.f32.mrf.mxu0
        %v7247 = vadd.f32 0.0, %v7246
        %v7248 = vpop.f32.mrf.mxu0
        %7249 = vdwg.mxu0
        %v7258 = vunpack.c.l.b16 %v2087
        %v7259 = vunpack.c.l.b16 %v2088
        %v7260 = vunpack.c.l.b16 %v2089
        %v7261 = vunpack.c.l.b16 %v2090
        %v7262 = vunpack.c.l.b16 %v2091
        %v7263 = vunpack.c.l.b16 %v2092
        %v7264 = vunpack.c.l.b16 %v2093
        %v7265 = vunpack.c.l.b16 %v2094
        %v7266 = vpack.c.b16 %v7259, %v7258
        %v7267 = vpack.c.b16 %v7261, %v7260
        %v7268 = vpack.c.b16 %v7263, %v7262
        %v7269 = vpack.c.b16 %v7265, %v7264
        %v7275 = vsel %vm4464, %v5925, 0
        %v7278 = vsel %vm4464, %v5926, 0
        %v7281 = vsel %vm4464, %v5927, 0
        %v7284 = vsel %vm4464, %v5928, 0
        %7286 = vmatprep.subr.bf16.mxu0 0
        %7287 = vmatpush1.bf16.msra.mxu0 0
        %7288 = vmatprep.subr.bf16.mxu0 0
        %7289 = vmatpush1.bf16.msra.mxu0 0
        %7290 = vmatprep.subr.bf16.mxu0 0
        %7291 = vmatpush1.bf16.msra.mxu0 0
        %7292 = vmatprep.subr.bf16.mxu0 0
        %7293 = vmatpush1.bf16.msra.mxu0 0
        %7294 = vmatprep.subr.bf16.mxu0 0
        %7295 = vmatpush1.bf16.msra.mxu0 %v7269
        %7296 = vmatprep.subr.bf16.mxu0 0
        %7297 = vmatpush1.bf16.msra.mxu0 %v7268
        %7298 = vmatprep.subr.bf16.mxu0 0
        %7299 = vmatpush1.bf16.msra.mxu0 %v7267
        %7300 = vmatprep.subr.bf16.mxu0 0
        %7301 = vmatpush1.bf16.msra.mxu0 %v7266
        %7302 = vmatprep.subr.bf16.mxu0 0
        %7303 = vmatpush2.bf16.msra.mxu0 0
        %7304 = vmatprep.subr.bf16.mxu0 0
        %7305 = vmatpush2.bf16.msra.mxu0 0
        %7306 = vmatprep.subr.bf16.mxu0 0
        %7307 = vmatpush2.bf16.msra.mxu0 0
        %7308 = vmatprep.subr.bf16.mxu0 0
        %7309 = vmatpush2.bf16.msra.mxu0 0
        %7310 = vmatprep.subr.bf16.mxu0 0
        %7311 = vmatpush2.bf16.msra.mxu0 0
        %7312 = vmatprep.subr.bf16.mxu0 0
        %7313 = vmatpush2.bf16.msra.mxu0 0
        %7314 = vmatprep.subr.bf16.mxu0 0
        %7315 = vmatpush2.bf16.msra.mxu0 0
        %7316 = vmatprep.subr.bf16.mxu0 0
        %7317 = vmatpush2.bf16.msra.mxu0 0
        %7318 = vmatprep.mubr.bf16.mxu0 0
        %7319 = vmatmul.mubr.bf16.gmra.mxu0 %v7275
        %v7320 = vpop.f32.mrf.mxu0
        %v7321 = vadd.f32 0.0, %v7320
        %v7322 = vpop.f32.mrf.mxu0
        %v7323 = vpop.f32.mrf.mxu0
        %v7324 = vadd.f32 0.0, %v7323
        %v7325 = vpop.f32.mrf.mxu0
        %7326 = vmatprep.mubr.bf16.mxu0 0
        %7327 = vmatmul.mubr.bf16.gmra.mxu0 %v7278
        %v7328 = vpop.f32.mrf.mxu0
        %v7329 = vadd.f32 0.0, %v7328
        %v7330 = vpop.f32.mrf.mxu0
        %v7331 = vpop.f32.mrf.mxu0
        %v7332 = vadd.f32 0.0, %v7331
        %v7333 = vpop.f32.mrf.mxu0
        %7334 = vmatprep.mubr.bf16.mxu0 0
        %7335 = vmatmul.mubr.bf16.gmra.mxu0 %v7281
        %v7336 = vpop.f32.mrf.mxu0
        %v7337 = vadd.f32 0.0, %v7336
        %v7338 = vpop.f32.mrf.mxu0
        %v7339 = vpop.f32.mrf.mxu0
        %v7340 = vadd.f32 0.0, %v7339
        %v7341 = vpop.f32.mrf.mxu0
        %7342 = vmatprep.mubr.bf16.mxu0 0
        %7343 = vmatmul.mubr.bf16.gmra.mxu0 %v7284
        %v7344 = vpop.f32.mrf.mxu0
        %v7345 = vadd.f32 0.0, %v7344
        %v7346 = vpop.f32.mrf.mxu0
        %v7347 = vpop.f32.mrf.mxu0
        %v7348 = vadd.f32 0.0, %v7347
        %v7349 = vpop.f32.mrf.mxu0
        %7350 = vdwg.mxu0
        %v7359 = vunpack.c.l.b16 %v2095
        %v7360 = vunpack.c.l.b16 %v2096
        %v7361 = vunpack.c.l.b16 %v2097
        %v7362 = vunpack.c.l.b16 %v2098
        %v7363 = vunpack.c.l.b16 %v2099
        %v7364 = vunpack.c.l.b16 %v2100
        %v7365 = vunpack.c.l.b16 %v2101
        %v7366 = vunpack.c.l.b16 %v2102
        %v7367 = vpack.c.b16 %v7360, %v7359
        %v7368 = vpack.c.b16 %v7362, %v7361
        %v7369 = vpack.c.b16 %v7364, %v7363
        %v7370 = vpack.c.b16 %v7366, %v7365
        %v7376 = vsel %vm4464, %v5929, 0
        %v7379 = vsel %vm4464, %v5930, 0
        %v7382 = vsel %vm4464, %v5931, 0
        %v7385 = vsel %vm4464, %v5932, 0
        %7387 = vmatprep.subr.bf16.mxu0 0
        %7388 = vmatpush1.bf16.msra.mxu0 0
        %7389 = vmatprep.subr.bf16.mxu0 0
        %7390 = vmatpush1.bf16.msra.mxu0 0
        %7391 = vmatprep.subr.bf16.mxu0 0
        %7392 = vmatpush1.bf16.msra.mxu0 0
        %7393 = vmatprep.subr.bf16.mxu0 0
        %7394 = vmatpush1.bf16.msra.mxu0 0
        %7395 = vmatprep.subr.bf16.mxu0 0
        %7396 = vmatpush1.bf16.msra.mxu0 %v7370
        %7397 = vmatprep.subr.bf16.mxu0 0
        %7398 = vmatpush1.bf16.msra.mxu0 %v7369
        %7399 = vmatprep.subr.bf16.mxu0 0
        %7400 = vmatpush1.bf16.msra.mxu0 %v7368
        %7401 = vmatprep.subr.bf16.mxu0 0
        %7402 = vmatpush1.bf16.msra.mxu0 %v7367
        %7403 = vmatprep.subr.bf16.mxu0 0
        %7404 = vmatpush2.bf16.msra.mxu0 0
        %7405 = vmatprep.subr.bf16.mxu0 0
        %7406 = vmatpush2.bf16.msra.mxu0 0
        %7407 = vmatprep.subr.bf16.mxu0 0
        %7408 = vmatpush2.bf16.msra.mxu0 0
        %7409 = vmatprep.subr.bf16.mxu0 0
        %7410 = vmatpush2.bf16.msra.mxu0 0
        %7411 = vmatprep.subr.bf16.mxu0 0
        %7412 = vmatpush2.bf16.msra.mxu0 0
        %7413 = vmatprep.subr.bf16.mxu0 0
        %7414 = vmatpush2.bf16.msra.mxu0 0
        %7415 = vmatprep.subr.bf16.mxu0 0
        %7416 = vmatpush2.bf16.msra.mxu0 0
        %7417 = vmatprep.subr.bf16.mxu0 0
        %7418 = vmatpush2.bf16.msra.mxu0 0
        %7419 = vmatprep.mubr.bf16.mxu0 0
        %7420 = vmatmul.mubr.bf16.gmra.mxu0 %v7376
        %v7421 = vpop.f32.mrf.mxu0
        %v7422 = vadd.f32 0.0, %v7421
        %v7423 = vpop.f32.mrf.mxu0
        %v7424 = vpop.f32.mrf.mxu0
        %v7425 = vadd.f32 0.0, %v7424
        %v7426 = vpop.f32.mrf.mxu0
        %7427 = vmatprep.mubr.bf16.mxu0 0
        %7428 = vmatmul.mubr.bf16.gmra.mxu0 %v7379
        %v7429 = vpop.f32.mrf.mxu0
        %v7430 = vadd.f32 0.0, %v7429
        %v7431 = vpop.f32.mrf.mxu0
        %v7432 = vpop.f32.mrf.mxu0
        %v7433 = vadd.f32 0.0, %v7432
        %v7434 = vpop.f32.mrf.mxu0
        %7435 = vmatprep.mubr.bf16.mxu0 0
        %7436 = vmatmul.mubr.bf16.gmra.mxu0 %v7382
        %v7437 = vpop.f32.mrf.mxu0
        %v7438 = vadd.f32 0.0, %v7437
        %v7439 = vpop.f32.mrf.mxu0
        %v7440 = vpop.f32.mrf.mxu0
        %v7441 = vadd.f32 0.0, %v7440
        %v7442 = vpop.f32.mrf.mxu0
        %7443 = vmatprep.mubr.bf16.mxu0 0
        %7444 = vmatmul.mubr.bf16.gmra.mxu0 %v7385
        %v7445 = vpop.f32.mrf.mxu0
        %v7446 = vadd.f32 0.0, %v7445
        %v7447 = vpop.f32.mrf.mxu0
        %v7448 = vpop.f32.mrf.mxu0
        %v7449 = vadd.f32 0.0, %v7448
        %v7450 = vpop.f32.mrf.mxu0
        %7451 = vdwg.mxu0
        %v7460 = vunpack.c.l.b16 %v2103
        %v7461 = vunpack.c.l.b16 %v2104
        %v7462 = vunpack.c.l.b16 %v2105
        %v7463 = vunpack.c.l.b16 %v2106
        %v7464 = vunpack.c.l.b16 %v2107
        %v7465 = vunpack.c.l.b16 %v2108
        %v7466 = vunpack.c.l.b16 %v2109
        %v7467 = vunpack.c.l.b16 %v2110
        %v7468 = vpack.c.b16 %v7461, %v7460
        %v7469 = vpack.c.b16 %v7463, %v7462
        %v7470 = vpack.c.b16 %v7465, %v7464
        %v7471 = vpack.c.b16 %v7467, %v7466
        %v7477 = vsel %vm4464, %v5933, 0
        %v7480 = vsel %vm4464, %v5934, 0
        %v7483 = vsel %vm4464, %v5935, 0
        %v7486 = vsel %vm4464, %v5936, 0
        %7488 = vmatprep.subr.bf16.mxu0 0
        %7489 = vmatpush1.bf16.msra.mxu0 0
        %7490 = vmatprep.subr.bf16.mxu0 0
        %7491 = vmatpush1.bf16.msra.mxu0 0
        %7492 = vmatprep.subr.bf16.mxu0 0
        %7493 = vmatpush1.bf16.msra.mxu0 0
        %7494 = vmatprep.subr.bf16.mxu0 0
        %7495 = vmatpush1.bf16.msra.mxu0 0
        %7496 = vmatprep.subr.bf16.mxu0 0
        %7497 = vmatpush1.bf16.msra.mxu0 %v7471
        %7498 = vmatprep.subr.bf16.mxu0 0
        %7499 = vmatpush1.bf16.msra.mxu0 %v7470
        %7500 = vmatprep.subr.bf16.mxu0 0
        %7501 = vmatpush1.bf16.msra.mxu0 %v7469
        %7502 = vmatprep.subr.bf16.mxu0 0
        %7503 = vmatpush1.bf16.msra.mxu0 %v7468
        %7504 = vmatprep.subr.bf16.mxu0 0
        %7505 = vmatpush2.bf16.msra.mxu0 0
        %7506 = vmatprep.subr.bf16.mxu0 0
        %7507 = vmatpush2.bf16.msra.mxu0 0
        %7508 = vmatprep.subr.bf16.mxu0 0
        %7509 = vmatpush2.bf16.msra.mxu0 0
        %7510 = vmatprep.subr.bf16.mxu0 0
        %7511 = vmatpush2.bf16.msra.mxu0 0
        %7512 = vmatprep.subr.bf16.mxu0 0
        %7513 = vmatpush2.bf16.msra.mxu0 0
        %7514 = vmatprep.subr.bf16.mxu0 0
        %7515 = vmatpush2.bf16.msra.mxu0 0
        %7516 = vmatprep.subr.bf16.mxu0 0
        %7517 = vmatpush2.bf16.msra.mxu0 0
        %7518 = vmatprep.subr.bf16.mxu0 0
        %7519 = vmatpush2.bf16.msra.mxu0 0
        %7520 = vmatprep.mubr.bf16.mxu0 0
        %7521 = vmatmul.mubr.bf16.gmra.mxu0 %v7477
        %v7522 = vpop.f32.mrf.mxu0
        %v7523 = vadd.f32 0.0, %v7522
        %v7524 = vpop.f32.mrf.mxu0
        %v7525 = vpop.f32.mrf.mxu0
        %v7526 = vadd.f32 0.0, %v7525
        %v7527 = vpop.f32.mrf.mxu0
        %7528 = vmatprep.mubr.bf16.mxu0 0
        %7529 = vmatmul.mubr.bf16.gmra.mxu0 %v7480
        %v7530 = vpop.f32.mrf.mxu0
        %v7531 = vadd.f32 0.0, %v7530
        %v7532 = vpop.f32.mrf.mxu0
        %v7533 = vpop.f32.mrf.mxu0
        %v7534 = vadd.f32 0.0, %v7533
        %v7535 = vpop.f32.mrf.mxu0
        %7536 = vmatprep.mubr.bf16.mxu0 0
        %7537 = vmatmul.mubr.bf16.gmra.mxu0 %v7483
        %v7538 = vpop.f32.mrf.mxu0
        %v7539 = vadd.f32 0.0, %v7538
        %v7540 = vpop.f32.mrf.mxu0
        %v7541 = vpop.f32.mrf.mxu0
        %v7542 = vadd.f32 0.0, %v7541
        %v7543 = vpop.f32.mrf.mxu0
        %7544 = vmatprep.mubr.bf16.mxu0 0
        %7545 = vmatmul.mubr.bf16.gmra.mxu0 %v7486
        %v7546 = vpop.f32.mrf.mxu0
        %v7547 = vadd.f32 0.0, %v7546
        %v7548 = vpop.f32.mrf.mxu0
        %v7549 = vpop.f32.mrf.mxu0
        %v7550 = vadd.f32 0.0, %v7549
        %v7551 = vpop.f32.mrf.mxu0
        %7552 = vdwg.mxu0
        %7569 = vrot.lane.b32.xlu0 %v6210, 4
        %v7570 = vpop.permute.xlu0 %7569
        %7571 = vrot.lane.b32.xlu0 %v6213, 4
        %v7572 = vpop.permute.xlu0 %7571
        %7573 = vrot.lane.b32.xlu0 %v6218, 4
        %v7574 = vpop.permute.xlu0 %7573
        %7575 = vrot.lane.b32.xlu0 %v6221, 4
        %v7576 = vpop.permute.xlu0 %7575
        %7577 = vrot.lane.b32.xlu0 %v6226, 4
        %v7578 = vpop.permute.xlu0 %7577
        %7579 = vrot.lane.b32.xlu0 %v6229, 4
        %v7580 = vpop.permute.xlu0 %7579
        %7581 = vrot.lane.b32.xlu0 %v6234, 4
        %v7582 = vpop.permute.xlu0 %7581
        %7583 = vrot.lane.b32.xlu0 %v6237, 4
        %v7584 = vpop.permute.xlu0 %7583
        %7585 = vrot.lane.b32.xlu0 %v6311, 4
        %v7586 = vpop.permute.xlu0 %7585
        %7587 = vrot.lane.b32.xlu0 %v6314, 4
        %v7588 = vpop.permute.xlu0 %7587
        %7589 = vrot.lane.b32.xlu0 %v6319, 4
        %v7590 = vpop.permute.xlu0 %7589
        %7591 = vrot.lane.b32.xlu0 %v6322, 4
        %v7592 = vpop.permute.xlu0 %7591
        %7593 = vrot.lane.b32.xlu0 %v6327, 4
        %v7594 = vpop.permute.xlu0 %7593
        %7595 = vrot.lane.b32.xlu0 %v6330, 4
        %v7596 = vpop.permute.xlu0 %7595
        %7597 = vrot.lane.b32.xlu0 %v6335, 4
        %v7598 = vpop.permute.xlu0 %7597
        %7599 = vrot.lane.b32.xlu0 %v6338, 4
        %v7600 = vpop.permute.xlu0 %7599
        %7633 = vrot.lane.b32.xlu0 %v6412, 8
        %v7634 = vpop.permute.xlu0 %7633
        %7635 = vrot.lane.b32.xlu0 %v6415, 8
        %v7636 = vpop.permute.xlu0 %7635
        %7637 = vrot.lane.b32.xlu0 %v6420, 8
        %v7638 = vpop.permute.xlu0 %7637
        %7639 = vrot.lane.b32.xlu0 %v6423, 8
        %v7640 = vpop.permute.xlu0 %7639
        %7641 = vrot.lane.b32.xlu0 %v6428, 8
        %v7642 = vpop.permute.xlu0 %7641
        %7643 = vrot.lane.b32.xlu0 %v6431, 8
        %v7644 = vpop.permute.xlu0 %7643
        %7645 = vrot.lane.b32.xlu0 %v6436, 8
        %v7646 = vpop.permute.xlu0 %7645
        %7647 = vrot.lane.b32.xlu0 %v6439, 8
        %v7648 = vpop.permute.xlu0 %7647
        %7649 = vrot.lane.b32.xlu0 %v6513, 8
        %v7650 = vpop.permute.xlu0 %7649
        %7651 = vrot.lane.b32.xlu0 %v6516, 8
        %v7652 = vpop.permute.xlu0 %7651
        %7653 = vrot.lane.b32.xlu0 %v6521, 8
        %v7654 = vpop.permute.xlu0 %7653
        %7655 = vrot.lane.b32.xlu0 %v6524, 8
        %v7656 = vpop.permute.xlu0 %7655
        %7657 = vrot.lane.b32.xlu0 %v6529, 8
        %v7658 = vpop.permute.xlu0 %7657
        %7659 = vrot.lane.b32.xlu0 %v6532, 8
        %v7660 = vpop.permute.xlu0 %7659
        %7661 = vrot.lane.b32.xlu0 %v6537, 8
        %v7662 = vpop.permute.xlu0 %7661
        %7663 = vrot.lane.b32.xlu0 %v6540, 8
        %v7664 = vpop.permute.xlu0 %7663
        %7697 = vrot.lane.b32.xlu0 %v6614, 12
        %v7698 = vpop.permute.xlu0 %7697
        %7699 = vrot.lane.b32.xlu0 %v6617, 12
        %v7700 = vpop.permute.xlu0 %7699
        %7701 = vrot.lane.b32.xlu0 %v6622, 12
        %v7702 = vpop.permute.xlu0 %7701
        %7703 = vrot.lane.b32.xlu0 %v6625, 12
        %v7704 = vpop.permute.xlu0 %7703
        %7705 = vrot.lane.b32.xlu0 %v6630, 12
        %v7706 = vpop.permute.xlu0 %7705
        %7707 = vrot.lane.b32.xlu0 %v6633, 12
        %v7708 = vpop.permute.xlu0 %7707
        %7709 = vrot.lane.b32.xlu0 %v6638, 12
        %v7710 = vpop.permute.xlu0 %7709
        %7711 = vrot.lane.b32.xlu0 %v6641, 12
        %v7712 = vpop.permute.xlu0 %7711
        %7713 = vrot.lane.b32.xlu0 %v6715, 12
        %v7714 = vpop.permute.xlu0 %7713
        %7715 = vrot.lane.b32.xlu0 %v6718, 12
        %v7716 = vpop.permute.xlu0 %7715
        %7717 = vrot.lane.b32.xlu0 %v6723, 12
        %v7718 = vpop.permute.xlu0 %7717
        %7719 = vrot.lane.b32.xlu0 %v6726, 12
        %v7720 = vpop.permute.xlu0 %7719
        %7721 = vrot.lane.b32.xlu0 %v6731, 12
        %v7722 = vpop.permute.xlu0 %7721
        %7723 = vrot.lane.b32.xlu0 %v6734, 12
        %v7724 = vpop.permute.xlu0 %7723
        %7725 = vrot.lane.b32.xlu0 %v6739, 12
        %v7726 = vpop.permute.xlu0 %7725
        %7727 = vrot.lane.b32.xlu0 %v6742, 12
        %v7728 = vpop.permute.xlu0 %7727
        %7761 = vrot.lane.b32.xlu0 %v6816, 16
        %v7762 = vpop.permute.xlu0 %7761
        %7763 = vrot.lane.b32.xlu0 %v6819, 16
        %v7764 = vpop.permute.xlu0 %7763
        %7765 = vrot.lane.b32.xlu0 %v6824, 16
        %v7766 = vpop.permute.xlu0 %7765
        %7767 = vrot.lane.b32.xlu0 %v6827, 16
        %v7768 = vpop.permute.xlu0 %7767
        %7769 = vrot.lane.b32.xlu0 %v6832, 16
        %v7770 = vpop.permute.xlu0 %7769
        %7771 = vrot.lane.b32.xlu0 %v6835, 16
        %v7772 = vpop.permute.xlu0 %7771
        %7773 = vrot.lane.b32.xlu0 %v6840, 16
        %v7774 = vpop.permute.xlu0 %7773
        %7775 = vrot.lane.b32.xlu0 %v6843, 16
        %v7776 = vpop.permute.xlu0 %7775
        %7777 = vrot.lane.b32.xlu0 %v6917, 16
        %v7778 = vpop.permute.xlu0 %7777
        %7779 = vrot.lane.b32.xlu0 %v6920, 16
        %v7780 = vpop.permute.xlu0 %7779
        %7781 = vrot.lane.b32.xlu0 %v6925, 16
        %v7782 = vpop.permute.xlu0 %7781
        %7783 = vrot.lane.b32.xlu0 %v6928, 16
        %v7784 = vpop.permute.xlu0 %7783
        %7785 = vrot.lane.b32.xlu0 %v6933, 16
        %v7786 = vpop.permute.xlu0 %7785
        %7787 = vrot.lane.b32.xlu0 %v6936, 16
        %v7788 = vpop.permute.xlu0 %7787
        %7789 = vrot.lane.b32.xlu0 %v6941, 16
        %v7790 = vpop.permute.xlu0 %7789
        %7791 = vrot.lane.b32.xlu0 %v6944, 16
        %v7792 = vpop.permute.xlu0 %7791
        %7825 = vrot.lane.b32.xlu0 %v7018, 20
        %v7826 = vpop.permute.xlu0 %7825
        %7827 = vrot.lane.b32.xlu0 %v7021, 20
        %v7828 = vpop.permute.xlu0 %7827
        %7829 = vrot.lane.b32.xlu0 %v7026, 20
        %v7830 = vpop.permute.xlu0 %7829
        %7831 = vrot.lane.b32.xlu0 %v7029, 20
        %v7832 = vpop.permute.xlu0 %7831
        %7833 = vrot.lane.b32.xlu0 %v7034, 20
        %v7834 = vpop.permute.xlu0 %7833
        %7835 = vrot.lane.b32.xlu0 %v7037, 20
        %v7836 = vpop.permute.xlu0 %7835
        %7837 = vrot.lane.b32.xlu0 %v7042, 20
        %v7838 = vpop.permute.xlu0 %7837
        %7839 = vrot.lane.b32.xlu0 %v7045, 20
        %v7840 = vpop.permute.xlu0 %7839
        %7841 = vrot.lane.b32.xlu0 %v7119, 20
        %v7842 = vpop.permute.xlu0 %7841
        %7843 = vrot.lane.b32.xlu0 %v7122, 20
        %v7844 = vpop.permute.xlu0 %7843
        %7845 = vrot.lane.b32.xlu0 %v7127, 20
        %v7846 = vpop.permute.xlu0 %7845
        %7847 = vrot.lane.b32.xlu0 %v7130, 20
        %v7848 = vpop.permute.xlu0 %7847
        %7849 = vrot.lane.b32.xlu0 %v7135, 20
        %v7850 = vpop.permute.xlu0 %7849
        %7851 = vrot.lane.b32.xlu0 %v7138, 20
        %v7852 = vpop.permute.xlu0 %7851
        %7853 = vrot.lane.b32.xlu0 %v7143, 20
        %v7854 = vpop.permute.xlu0 %7853
        %7855 = vrot.lane.b32.xlu0 %v7146, 20
        %v7856 = vpop.permute.xlu0 %7855
        %7889 = vrot.lane.b32.xlu0 %v7220, 24
        %v7890 = vpop.permute.xlu0 %7889
        %7891 = vrot.lane.b32.xlu0 %v7223, 24
        %v7892 = vpop.permute.xlu0 %7891
        %7893 = vrot.lane.b32.xlu0 %v7228, 24
        %v7894 = vpop.permute.xlu0 %7893
        %7895 = vrot.lane.b32.xlu0 %v7231, 24
        %v7896 = vpop.permute.xlu0 %7895
        %7897 = vrot.lane.b32.xlu0 %v7236, 24
        %v7898 = vpop.permute.xlu0 %7897
        %7899 = vrot.lane.b32.xlu0 %v7239, 24
        %v7900 = vpop.permute.xlu0 %7899
        %7901 = vrot.lane.b32.xlu0 %v7244, 24
        %v7902 = vpop.permute.xlu0 %7901
        %7903 = vrot.lane.b32.xlu0 %v7247, 24
        %v7904 = vpop.permute.xlu0 %7903
        %7905 = vrot.lane.b32.xlu0 %v7321, 24
        %v7906 = vpop.permute.xlu0 %7905
        %7907 = vrot.lane.b32.xlu0 %v7324, 24
        %v7908 = vpop.permute.xlu0 %7907
        %7909 = vrot.lane.b32.xlu0 %v7329, 24
        %v7910 = vpop.permute.xlu0 %7909
        %7911 = vrot.lane.b32.xlu0 %v7332, 24
        %v7912 = vpop.permute.xlu0 %7911
        %7913 = vrot.lane.b32.xlu0 %v7337, 24
        %v7914 = vpop.permute.xlu0 %7913
        %7915 = vrot.lane.b32.xlu0 %v7340, 24
        %v7916 = vpop.permute.xlu0 %7915
        %7917 = vrot.lane.b32.xlu0 %v7345, 24
        %v7918 = vpop.permute.xlu0 %7917
        %7919 = vrot.lane.b32.xlu0 %v7348, 24
        %v7920 = vpop.permute.xlu0 %7919
        %7953 = vrot.lane.b32.xlu0 %v7422, 28
        %v7954 = vpop.permute.xlu0 %7953
        %7955 = vrot.lane.b32.xlu0 %v7425, 28
        %v7956 = vpop.permute.xlu0 %7955
        %7957 = vrot.lane.b32.xlu0 %v7430, 28
        %v7958 = vpop.permute.xlu0 %7957
        %7959 = vrot.lane.b32.xlu0 %v7433, 28
        %v7960 = vpop.permute.xlu0 %7959
        %7961 = vrot.lane.b32.xlu0 %v7438, 28
        %v7962 = vpop.permute.xlu0 %7961
        %7963 = vrot.lane.b32.xlu0 %v7441, 28
        %v7964 = vpop.permute.xlu0 %7963
        %7965 = vrot.lane.b32.xlu0 %v7446, 28
        %v7966 = vpop.permute.xlu0 %7965
        %7967 = vrot.lane.b32.xlu0 %v7449, 28
        %v7968 = vpop.permute.xlu0 %7967
        %7969 = vrot.lane.b32.xlu0 %v7523, 28
        %v7970 = vpop.permute.xlu0 %7969
        %7971 = vrot.lane.b32.xlu0 %v7526, 28
        %v7972 = vpop.permute.xlu0 %7971
        %7973 = vrot.lane.b32.xlu0 %v7531, 28
        %v7974 = vpop.permute.xlu0 %7973
        %7975 = vrot.lane.b32.xlu0 %v7534, 28
        %v7976 = vpop.permute.xlu0 %7975
        %7977 = vrot.lane.b32.xlu0 %v7539, 28
        %v7978 = vpop.permute.xlu0 %7977
        %7979 = vrot.lane.b32.xlu0 %v7542, 28
        %v7980 = vpop.permute.xlu0 %7979
        %7981 = vrot.lane.b32.xlu0 %v7547, 28
        %v7982 = vpop.permute.xlu0 %7981
        %7983 = vrot.lane.b32.xlu0 %v7550, 28
        %v7984 = vpop.permute.xlu0 %7983
        %v8001 = vsel %vm2311, %v6008, %v7570
        %v8002 = vsel %vm2311, %v6011, %v7572
        %v8003 = vsel %vm2311, %v6016, %v7574
        %v8004 = vsel %vm2311, %v6019, %v7576
        %v8005 = vsel %vm2311, %v6024, %v7578
        %v8006 = vsel %vm2311, %v6027, %v7580
        %v8007 = vsel %vm2311, %v6032, %v7582
        %v8008 = vsel %vm2311, %v6035, %v7584
        %v8009 = vsel %vm2311, %v6109, %v7586
        %v8010 = vsel %vm2311, %v6112, %v7588
        %v8011 = vsel %vm2311, %v6117, %v7590
        %v8012 = vsel %vm2311, %v6120, %v7592
        %v8013 = vsel %vm2311, %v6125, %v7594
        %v8014 = vsel %vm2311, %v6128, %v7596
        %v8015 = vsel %vm2311, %v6133, %v7598
        %v8016 = vsel %vm2311, %v6136, %v7600
        %vm8017 = vcmask 64512
        %v8018 = vsel %vm8017, %v8001, %v7634
        %v8019 = vsel %vm8017, %v8002, %v7636
        %v8020 = vsel %vm8017, %v8003, %v7638
        %v8021 = vsel %vm8017, %v8004, %v7640
        %v8022 = vsel %vm8017, %v8005, %v7642
        %v8023 = vsel %vm8017, %v8006, %v7644
        %v8024 = vsel %vm8017, %v8007, %v7646
        %v8025 = vsel %vm8017, %v8008, %v7648
        %v8026 = vsel %vm8017, %v8009, %v7650
        %v8027 = vsel %vm8017, %v8010, %v7652
        %v8028 = vsel %vm8017, %v8011, %v7654
        %v8029 = vsel %vm8017, %v8012, %v7656
        %v8030 = vsel %vm8017, %v8013, %v7658
        %v8031 = vsel %vm8017, %v8014, %v7660
        %v8032 = vsel %vm8017, %v8015, %v7662
        %v8033 = vsel %vm8017, %v8016, %v7664
        %vm8034 = vcmask 97280
        %v8035 = vsel %vm8034, %v8018, %v7698
        %v8036 = vsel %vm8034, %v8019, %v7700
        %v8037 = vsel %vm8034, %v8020, %v7702
        %v8038 = vsel %vm8034, %v8021, %v7704
        %v8039 = vsel %vm8034, %v8022, %v7706
        %v8040 = vsel %vm8034, %v8023, %v7708
        %v8041 = vsel %vm8034, %v8024, %v7710
        %v8042 = vsel %vm8034, %v8025, %v7712
        %v8043 = vsel %vm8034, %v8026, %v7714
        %v8044 = vsel %vm8034, %v8027, %v7716
        %v8045 = vsel %vm8034, %v8028, %v7718
        %v8046 = vsel %vm8034, %v8029, %v7720
        %v8047 = vsel %vm8034, %v8030, %v7722
        %v8048 = vsel %vm8034, %v8031, %v7724
        %v8049 = vsel %vm8034, %v8032, %v7726
        %v8050 = vsel %vm8034, %v8033, %v7728
        %vm8051 = vcmask 130048
        %v8052 = vsel %vm8051, %v8035, %v7762
        %v8053 = vsel %vm8051, %v8036, %v7764
        %v8054 = vsel %vm8051, %v8037, %v7766
        %v8055 = vsel %vm8051, %v8038, %v7768
        %v8056 = vsel %vm8051, %v8039, %v7770
        %v8057 = vsel %vm8051, %v8040, %v7772
        %v8058 = vsel %vm8051, %v8041, %v7774
        %v8059 = vsel %vm8051, %v8042, %v7776
        %v8060 = vsel %vm8051, %v8043, %v7778
        %v8061 = vsel %vm8051, %v8044, %v7780
        %v8062 = vsel %vm8051, %v8045, %v7782
        %v8063 = vsel %vm8051, %v8046, %v7784
        %v8064 = vsel %vm8051, %v8047, %v7786
        %v8065 = vsel %vm8051, %v8048, %v7788
        %v8066 = vsel %vm8051, %v8049, %v7790
        %v8067 = vsel %vm8051, %v8050, %v7792
        %vm8068 = vcmask 162816
        %v8069 = vsel %vm8068, %v8052, %v7826
        %v8070 = vsel %vm8068, %v8053, %v7828
        %v8071 = vsel %vm8068, %v8054, %v7830
        %v8072 = vsel %vm8068, %v8055, %v7832
        %v8073 = vsel %vm8068, %v8056, %v7834
        %v8074 = vsel %vm8068, %v8057, %v7836
        %v8075 = vsel %vm8068, %v8058, %v7838
        %v8076 = vsel %vm8068, %v8059, %v7840
        %v8077 = vsel %vm8068, %v8060, %v7842
        %v8078 = vsel %vm8068, %v8061, %v7844
        %v8079 = vsel %vm8068, %v8062, %v7846
        %v8080 = vsel %vm8068, %v8063, %v7848
        %v8081 = vsel %vm8068, %v8064, %v7850
        %v8082 = vsel %vm8068, %v8065, %v7852
        %v8083 = vsel %vm8068, %v8066, %v7854
        %v8084 = vsel %vm8068, %v8067, %v7856
        %vm8085 = vcmask 195584
        %v8086 = vsel %vm8085, %v8069, %v7890
        %v8087 = vsel %vm8085, %v8070, %v7892
        %v8088 = vsel %vm8085, %v8071, %v7894
        %v8089 = vsel %vm8085, %v8072, %v7896
        %v8090 = vsel %vm8085, %v8073, %v7898
        %v8091 = vsel %vm8085, %v8074, %v7900
        %v8092 = vsel %vm8085, %v8075, %v7902
        %v8093 = vsel %vm8085, %v8076, %v7904
        %v8094 = vsel %vm8085, %v8077, %v7906
        %v8095 = vsel %vm8085, %v8078, %v7908
        %v8096 = vsel %vm8085, %v8079, %v7910
        %v8097 = vsel %vm8085, %v8080, %v7912
        %v8098 = vsel %vm8085, %v8081, %v7914
        %v8099 = vsel %vm8085, %v8082, %v7916
        %v8100 = vsel %vm8085, %v8083, %v7918
        %v8101 = vsel %vm8085, %v8084, %v7920
        %vm8102 = vcmask 228352
        %v8103 = vsel %vm8102, %v8086, %v7954
        %v8104 = vsel %vm8102, %v8087, %v7956
        %v8105 = vsel %vm8102, %v8088, %v7958
        %v8106 = vsel %vm8102, %v8089, %v7960
        %v8107 = vsel %vm8102, %v8090, %v7962
        %v8108 = vsel %vm8102, %v8091, %v7964
        %v8109 = vsel %vm8102, %v8092, %v7966
        %v8110 = vsel %vm8102, %v8093, %v7968
        %v8111 = vsel %vm8102, %v8094, %v7970
        %v8112 = vsel %vm8102, %v8095, %v7972
        %v8113 = vsel %vm8102, %v8096, %v7974
        %v8114 = vsel %vm8102, %v8097, %v7976
        %v8115 = vsel %vm8102, %v8098, %v7978
        %v8116 = vsel %vm8102, %v8099, %v7980
        %v8117 = vsel %vm8102, %v8100, %v7982
        %v8118 = vsel %vm8102, %v8101, %v7984
        %vm8119 = vcmask 261120
        %8120 = vst.msk [vmem:[%s1723] sm:$0xff] %vm8119, %v8103
        %8121 = vst.msk [vmem:[%s1723 + $0x8] sm:$0xff] %vm8119, %v8104
        %8122 = vst.msk [vmem:[%s1723 + $0x10] sm:$0xff] %vm8119, %v8105
        %8123 = vst.msk [vmem:[%s1723 + $0x18] sm:$0xff] %vm8119, %v8106
        %8124 = vst.msk [vmem:[%s1723 + $0x20] sm:$0xff] %vm8119, %v8107
        %8125 = vst.msk [vmem:[%s1723 + $0x28] sm:$0xff] %vm8119, %v8108
        %8126 = vst.msk [vmem:[%s1723 + $0x30] sm:$0xff] %vm8119, %v8109
        %8127 = vst.msk [vmem:[%s1723 + $0x38] sm:$0xff] %vm8119, %v8110
        %8128 = vst.msk [vmem:[%s1723 + $0x40] sm:$0xff] %vm8119, %v8111
        %8129 = vst.msk [vmem:[%s1723 + $0x48] sm:$0xff] %vm8119, %v8112
        %8130 = vst.msk [vmem:[%s1723 + $0x50] sm:$0xff] %vm8119, %v8113
        %8131 = vst.msk [vmem:[%s1723 + $0x58] sm:$0xff] %vm8119, %v8114
        %8132 = vst.msk [vmem:[%s1723 + $0x60] sm:$0xff] %vm8119, %v8115
        %8133 = vst.msk [vmem:[%s1723 + $0x68] sm:$0xff] %vm8119, %v8116
        %8134 = vst.msk [vmem:[%s1723 + $0x70] sm:$0xff] %vm8119, %v8117
        %8135 = vst.msk [vmem:[%s1723 + $0x78] sm:$0xff] %vm8119, %v8118
        %s8136 = smul.u32 2, %s13
        %p8137 = scmp.lt.s32.totalorder %s8136, 7
        %s8138 = scalar_select %p8137, %s8136, 7
        %s8139 = smul.addr %s8138, 8
        %s8140 = smul.addr %s8139, 8
        %s8141 = scalar_lea.vmem %s2, %s8140
        // Predicated region
        $region70: #{window_attention_forward.1} parent=64 // pred_check
          %p8142 = pneg %p78
        $region71: #{window_attention_forward.1} parent=64 // pred_check_branch
          %8144 = sbr.rel (%p8142) target = $region73
        $region72: #{window_attention_forward.1} parent=64 // pred_region
          %s8145 = smul.u32 2, %s13
        $region73: #{window_attention_forward.1} parent=64 // pred_fallthru
          _
      $region65: #{window_attention_forward.1} parent=5 // pred_fallthru
        _
      %p8146 = scmp.le.s32.totalorder 2, %s8
      // Predicated region
      $region74: #{window_attention_forward.1} parent=5 // pred_check
        %p8147 = pneg %p8146
      $region75: #{window_attention_forward.1} parent=5 // pred_check_branch
        %8149 = sbr.rel (%p8147) target = $region77
      $region76: #{window_attention_forward.1} parent=5 // pred_region
        %s8150 = ssub.s32 %s8, 2
        // Predicated region
        $region78: #{window_attention_forward.1} parent=76 // pred_check
          %p8151 = pneg %p84
        $region79: #{window_attention_forward.1} parent=76 // pred_check_branch
          %8153 = sbr.rel (%p8151) target = $region81
        $region80: #{window_attention_forward.1} parent=76 // pred_region
          %s8154 = smul.u32 2, %s14
          %p8155 = scmp.lt.s32.totalorder %s8154, 7
          %s8156 = scalar_select %p8155, %s8154, 7
          %s8157 = smul.addr %s8156, 8
          %s8158 = smul.addr %s8157, 8
          %s8159 = scalar_lea.vmem %s2, %s8158
        $region81: #{window_attention_forward.1} parent=76 // pred_fallthru
          _
      $region77: #{window_attention_forward.1} parent=5 // pred_fallthru
        _
    $region6: #{window_attention_forward.1} parent=1 // loop_footer
      %s12 = sadd.s32 1, %s8
    $region7: #{window_attention_forward.1} parent=1 // loop_footer_branch
      %7 = sbr.rel target = $region3
    $region8: #{window_attention_forward.1} parent=1 // loop_exit
      _

</llo_original>
